<compile_context>
chip_gen: v7x
topology: tpu7x:2x2x1
jax: 0.10.0
libtpu: 0.0.40
codegen_flags: <defaults>
</compile_context>

<pallas_src>
import functools

import jax
import jax.numpy as jnp
from jax.experimental import pallas as pl
from jax.experimental.pallas import tpu as pltpu

LANE = 128


def _round_up(v, m):
    return (v + m - 1) // m * m


# --------------------------------------------------------------------------
# Stage 1: per-hyperedge pass
#   edge_h[e, :] = ReLU([mean_{n in e} x[n], ef[e]] @ We + be)   (lane padded)
# grid = (E tiles, N tiles);  N is the contraction axis (last, "arbitrary").
# --------------------------------------------------------------------------
def edge_kernel(h_ref, x_ref, recip_ref, efs_ref, we_ref, be_ref,
                eh_ref, acc_ref):
    @pl.when(pl.program_id(1) == 0)
    def _init():
        acc_ref[...] = jnp.zeros_like(acc_ref)

    # bf16 x bf16 MXU contraction, f32 accumulation (H counts exact in bf16).
    acc_ref[...] += jnp.dot(h_ref[...], x_ref[...],
                            preferred_element_type=jnp.float32)

    @pl.when(pl.program_id(1) == pl.num_programs(1) - 1)
    def _finalize():
        edge_aggr = acc_ref[...] * recip_ref[...]      # scatter-mean over nodes
        edge_cat = edge_aggr + efs_ref[...]            # concat folded via lane shift
        eh = jnp.dot(edge_cat, we_ref[...],
                     preferred_element_type=jnp.float32) + be_ref[...]
        eh_ref[...] = jnp.maximum(eh, 0.0).astype(eh_ref.dtype)   # ReLU, bf16 store


# --------------------------------------------------------------------------
# Stage 2: per-node pass
#   out[n, :] = L2norm([x[n], mean_{e ∋ n} edge_h[e]] @ Wn + bn)
# grid = (N tiles, E tiles);  E is the contraction axis (last, "arbitrary").
# --------------------------------------------------------------------------
def node_kernel(ht_ref, eh_ref, recip_ref, xs_ref, wn_ref, bn_ref,
                o_ref, acc_ref):
    @pl.when(pl.program_id(1) == 0)
    def _init():
        acc_ref[...] = jnp.zeros_like(acc_ref)

    # bf16 x bf16 MXU contraction, f32 accumulation.
    acc_ref[...] += jnp.dot(ht_ref[...], eh_ref[...],
                            preferred_element_type=jnp.float32)

    @pl.when(pl.program_id(1) == pl.num_programs(1) - 1)
    def _finalize():
        node_feats = acc_ref[...] * recip_ref[...]     # scatter-mean over edges
        node_cat = node_feats + xs_ref[...]            # concat folded via lane shift
        out = jnp.dot(node_cat, wn_ref[...],
                      preferred_element_type=jnp.float32) + bn_ref[...]
        # Row-wise L2 normalization; padded lanes of `out` are exactly zero so
        # summing over the full slab equals summing over the real out_dim.
        sumsq = jnp.sum(out * out, axis=1, keepdims=True)
        o_ref[...] = out * jax.lax.rsqrt(jnp.maximum(sumsq, 1e-24))


@functools.partial(jax.jit, static_argnames=("num_edges", "tile_e", "tile_n"))
def hyper_gnn_conv(x, h_edge_index, h_edge_feats, params, num_edges,
                   tile_e=512, tile_n=512):
    """HyperGNNConv forward (edge_net path, edge_aggr='mean', node_aggr='mean')."""
    # TODO(synk): hidden_dim=0 (no edge_net) variant of the module is not implemented.
    we_x, we_f, be, wn_x, wn_h, bn = params
    N, in_dim = x.shape
    E = num_edges
    ef_dim = h_edge_feats.shape[1]
    hidden_dim = we_x.shape[1]
    out_dim = wn_x.shape[1]

    # Padded (lane-dense) widths.
    dk_e = _round_up(in_dim + ef_dim, LANE)       # K of merged edge linear
    dh_p = _round_up(hidden_dim + in_dim, LANE)   # edge_h slab == K of merged node linear
    do_p = _round_up(out_dim, LANE)               # lane-dense output slab

    # Pad node / edge counts up to tile multiples (zero rows/cols are inert).
    e_p = _round_up(max(E, tile_e), tile_e)
    n_p = _round_up(max(N, tile_n), tile_n)

    ei, ni = h_edge_index[0], h_edge_index[1]
    # Dense incidence, built directly in bf16 (integer counts <= 256 are exact
    # in bf16).  H and H^T get their own scatter: no f32 pass, no transpose.
    H_bf = jnp.zeros((e_p, n_p), jnp.bfloat16).at[ei, ni].add(1.0)
    Ht_bf = jnp.zeros((n_p, e_p), jnp.bfloat16).at[ni, ei].add(1.0)

    # Mean-denominator reciprocals from cheap 1-D scatters (no dense H sums).
    cnt_e = jnp.zeros((e_p,), jnp.float32).at[ei].add(1.0)
    cnt_n = jnp.zeros((n_p,), jnp.float32).at[ni].add(1.0)
    recip_e = (1.0 / jnp.maximum(cnt_e, 1.0))[:, None]   # [e_p, 1]
    recip_n = (1.0 / jnp.maximum(cnt_n, 1.0))[:, None]   # [n_p, 1]

    # Lane-shifted / zero-padded activations and merged, zero-padded weights.
    # x_pad is the big streamed operand of stage 1 -> bf16.
    x_pad = jnp.zeros((n_p, dk_e), jnp.bfloat16).at[:N, :in_dim].set(
        x.astype(jnp.bfloat16))
    ef_shift = jnp.zeros((e_p, dk_e), jnp.float32).at[
        :E, in_dim:in_dim + ef_dim].set(h_edge_feats)
    we_cat = jnp.zeros((dk_e, dh_p), jnp.float32)
    we_cat = we_cat.at[:in_dim, :hidden_dim].set(we_x)
    we_cat = we_cat.at[in_dim:in_dim + ef_dim, :hidden_dim].set(we_f)
    be_pad = jnp.zeros((1, dh_p), jnp.float32).at[:, :hidden_dim].set(be)

    x_shift = jnp.zeros((n_p, dh_p), jnp.float32).at[
        :N, hidden_dim:hidden_dim + in_dim].set(x)
    wn_cat = jnp.zeros((dh_p, do_p), jnp.float32)
    wn_cat = wn_cat.at[:hidden_dim, :out_dim].set(wn_h)
    wn_cat = wn_cat.at[hidden_dim:hidden_dim + in_dim, :out_dim].set(wn_x)
    bn_pad = jnp.zeros((1, do_p), jnp.float32).at[:, :out_dim].set(bn)

    cparams = pltpu.CompilerParams(
        dimension_semantics=("parallel", "arbitrary"),
        vmem_limit_bytes=48 * 1024 * 1024,
    )

    # ---------------- Stage 1: edge pass ----------------
    # edge_h is written once then re-read many times by stage 2 -> bf16.
    edge_h = pl.pallas_call(
        edge_kernel,
        out_shape=jax.ShapeDtypeStruct((e_p, dh_p), jnp.bfloat16),
        grid_spec=pltpu.PrefetchScalarGridSpec(
            num_scalar_prefetch=0,
            grid=(e_p // tile_e, n_p // tile_n),
            in_specs=[
                pl.BlockSpec((tile_e, tile_n), lambda e, n: (e, n)),  # H (bf16)
                pl.BlockSpec((tile_n, dk_e), lambda e, n: (n, 0)),    # x_pad (bf16)
                pl.BlockSpec((tile_e, 1), lambda e, n: (e, 0)),       # 1/edge_cnt
                pl.BlockSpec((tile_e, dk_e), lambda e, n: (e, 0)),    # ef (shifted)
                pl.BlockSpec((dk_e, dh_p), lambda e, n: (0, 0)),      # We (merged)
                pl.BlockSpec((1, dh_p), lambda e, n: (0, 0)),         # be
            ],
            out_specs=pl.BlockSpec((tile_e, dh_p), lambda e, n: (e, 0)),
            scratch_shapes=[pltpu.VMEM((tile_e, dk_e), jnp.float32)],
        ),
        compiler_params=cparams,
    )(H_bf, x_pad, recip_e, ef_shift, we_cat, be_pad)

    # ---------------- Stage 2: node pass ----------------
    out_pad = pl.pallas_call(
        node_kernel,
        out_shape=jax.ShapeDtypeStruct((n_p, do_p), jnp.float32),
        grid_spec=pltpu.PrefetchScalarGridSpec(
            num_scalar_prefetch=0,
            grid=(n_p // tile_n, e_p // tile_e),
            in_specs=[
                pl.BlockSpec((tile_n, tile_e), lambda i, j: (i, j)),  # H^T (bf16)
                pl.BlockSpec((tile_e, dh_p), lambda i, j: (j, 0)),    # edge_h (bf16)
                pl.BlockSpec((tile_n, 1), lambda i, j: (i, 0)),       # 1/node_cnt
                pl.BlockSpec((tile_n, dh_p), lambda i, j: (i, 0)),    # x (shifted)
                pl.BlockSpec((dh_p, do_p), lambda i, j: (0, 0)),      # Wn (merged)
                pl.BlockSpec((1, do_p), lambda i, j: (0, 0)),         # bn
            ],
            out_specs=pl.BlockSpec((tile_n, do_p), lambda i, j: (i, 0)),
            scratch_shapes=[pltpu.VMEM((tile_n, dh_p), jnp.float32)],
        ),
        compiler_params=cparams,
    )(Ht_bf, edge_h, recip_n, x_shift, wn_cat, bn_pad)

    return out_pad[:N, :out_dim]


def _reference(H, x, ef, params):
    """Pure-JAX f32 reference of the same forward (for the correctness check)."""
    we_x, we_f, be, wn_x, wn_h, bn = params
    edge_cnt = H.sum(1, keepdims=True)
    edge_aggr = (H @ x) / jnp.maximum(edge_cnt, 1.0)
    edge_h = jnp.maximum(edge_aggr @ we_x + ef @ we_f + be, 0.0)
    node_cnt = H.sum(0)[:, None]
    node_feats = (H.T @ edge_h) / jnp.maximum(node_cnt, 1.0)
    out = x @ wn_x + node_feats @ wn_h + bn
    return out / jnp.linalg.norm(out, axis=1, keepdims=True)


if __name__ == "__main__":
    # Small, module-consistent shapes (multiple tiles along the grids at the
    # new 512-class tile defaults).
    N, E = 1024, 512                # nodes, hyperedges
    in_dim, ef_dim = 16, 8          # node feature dim, hyperedge feature dim
    hidden_dim, out_dim = 32, 16
    num_incidences = 4096

    key = jax.random.PRNGKey(0)
    ks = jax.random.split(key, 10)

    x = jax.random.normal(ks[0], (N, in_dim), jnp.float32)
    edge_ids = jax.random.randint(ks[1], (num_incidences,), 0, E)
    node_ids = jax.random.randint(ks[2], (num_incidences,), 0, N)
    h_edge_index = jnp.stack([edge_ids, node_ids])           # [2, num_incidences]
    h_edge_feats = jax.random.normal(ks[3], (E, ef_dim), jnp.float32)

    # Deterministic parameter init (edge_net Linear + node_net Linear) stored
    # in [in, out] layout with the concat split into separate weight blocks.
    s_e = 1.0 / jnp.sqrt(in_dim + ef_dim)
    s_n = 1.0 / jnp.sqrt(in_dim + hidden_dim)
    we_x = s_e * jax.random.normal(ks[4], (in_dim, hidden_dim), jnp.float32)
    we_f = s_e * jax.random.normal(ks[5], (ef_dim, hidden_dim), jnp.float32)
    be = s_e * jax.random.normal(ks[6], (1, hidden_dim), jnp.float32)
    wn_x = s_n * jax.random.normal(ks[7], (in_dim, out_dim), jnp.float32)
    wn_h = s_n * jax.random.normal(ks[8], (hidden_dim, out_dim), jnp.float32)
    bn = s_n * jax.random.normal(ks[9], (1, out_dim), jnp.float32)
    params = (we_x, we_f, be, wn_x, wn_h, bn)

    out = hyper_gnn_conv(x, h_edge_index, h_edge_feats, params, num_edges=E)
    out = jax.block_until_ready(out)

    # Silent correctness check against the pure-JAX f32 reference.  bf16
    # streamed operands (x, edge_h) introduce ~2^-8 relative error, so the
    # tolerance is loosened to 2e-2 (deliberate precision/bandwidth tradeoff).
    H_ref = jnp.zeros((E, N), jnp.float32).at[
        h_edge_index[0], h_edge_index[1]].add(1.0)
    ref = _reference(H_ref, x, h_edge_feats, params)
    assert out.shape == (N, out_dim)
    assert jnp.allclose(out, ref, atol=2e-2, rtol=2e-2), (
        float(jnp.max(jnp.abs(out - ref))))

    print("KERNEL_OK")
</pallas_src>

<mosaic_0001>
module attributes {stable_mosaic.version = 11 : i64} {
  func.func private @main(%arg0: i32) attributes {dimension_semantics = [#tpu.dimension_semantics<core_parallel>], iteration_bounds = array<i64: 2>, tpu.core_type = #tpu.core_type<sc_scalar_subcore>, window_params = []} {
    return
  }
}

module attributes {stable_mosaic.version = 11 : i64} {
  func.func private @main(%arg0: i32) attributes {dimension_semantics = [#tpu.dimension_semantics<core_parallel>], iteration_bounds = array<i64: 2>, tpu.core_type = #tpu.core_type<sc_scalar_subcore>, window_params = []} {
    return
  }
}

module attributes {stable_mosaic.version = 11 : i64} {
  func.func @node_kernel(%arg0: i32, %arg1: i32, %arg2: memref<512x512xbf16, #tpu.memory_space<vmem>>, %arg3: memref<512x128xbf16, #tpu.memory_space<vmem>>, %arg4: memref<512x1xf32, #tpu.memory_space<vmem>>, %arg5: memref<512x128xf32, #tpu.memory_space<vmem>>, %arg6: memref<128x128xf32, #tpu.memory_space<vmem>>, %arg7: memref<1x128xf32, #tpu.memory_space<vmem>>, %arg8: memref<512x128xf32, #tpu.memory_space<vmem>>, %arg9: memref<512x128xf32, #tpu.memory_space<vmem>>) attributes {dimension_semantics = [#tpu.dimension_semantics<parallel>, #tpu.dimension_semantics<arbitrary>], iteration_bounds = array<i64: 2, 1>, scalar_prefetch = 0 : i64, scratch_operands = 1 : i64, tpu.core_type = #tpu.core_type<tc>, window_params = [{transform_indices = @transform_0, window_bounds = array<i64: 512, 512>}, {transform_indices = @transform_1, window_bounds = array<i64: 512, 128>}, {transform_indices = @transform_2, window_bounds = array<i64: 512, 1>}, {transform_indices = @transform_3, window_bounds = array<i64: 512, 128>}, {pipeline_mode = #tpu.pipeline_mode<synchronous>, transform_indices = @transform_4, window_bounds = array<i64: 128, 128>}, {pipeline_mode = #tpu.pipeline_mode<synchronous>, transform_indices = @transform_5, window_bounds = array<i64: 1, 128>}, {transform_indices = @transform_6, window_bounds = array<i64: 512, 128>}]} {
    %c0_i32 = arith.constant 0 : i32
    %0 = arith.cmpi eq, %arg1, %c0_i32 : i32
    %1 = arith.extui %0 : i1 to i32
    %c0_i32_0 = arith.constant 0 : i32
    %2 = arith.cmpi ne, %1, %c0_i32_0 : i32
    scf.if %2 {
      %cst_10 = arith.constant 0.000000e+00 : f32
      %12 = vector.broadcast %cst_10 : f32 to vector<512x128xf32>
      %c0_11 = arith.constant 0 : index
      %c0_12 = arith.constant 0 : index
      %13 = vector.load %arg9[%c0_11, %c0_12] : memref<512x128xf32, #tpu.memory_space<vmem>>, vector<512x128xf32>
      tpu.vector_store %arg9[%c0_11, %c0_12], %12 {strides = array<i32>} : memref<512x128xf32, #tpu.memory_space<vmem>>, vector<512x128xf32>,
    } else {
    }
    %c0 = arith.constant 0 : index
    %c0_1 = arith.constant 0 : index
    %3 = vector.load %arg9[%c0, %c0_1] : memref<512x128xf32, #tpu.memory_space<vmem>>, vector<512x128xf32>
    %c0_2 = arith.constant 0 : index
    %c0_3 = arith.constant 0 : index
    %4 = vector.load %arg2[%c0_2, %c0_3] : memref<512x512xbf16, #tpu.memory_space<vmem>>, vector<512x512xbf16>
    %c0_4 = arith.constant 0 : index
    %c0_5 = arith.constant 0 : index
    %5 = vector.load %arg3[%c0_4, %c0_5] : memref<512x128xbf16, #tpu.memory_space<vmem>>, vector<512x128xbf16>
    %cst = arith.constant dense<0.000000e+00> : vector<512x128xf32>
    %6 = tpu.matmul %4, %5, %cst {dimension_numbers = #tpu.dot_dimension_numbers<[1], [0], [0], [1], [0, 0, 1, 1], [], []>} : vector<512x512xbf16>, vector<512x128xbf16>, vector<512x128xf32> -> vector<512x128xf32>
    %7 = arith.addf %3, %6 : vector<512x128xf32>
    %c0_6 = arith.constant 0 : index
    %c0_7 = arith.constant 0 : index
    %8 = vector.load %arg9[%c0_6, %c0_7] : memref<512x128xf32, #tpu.memory_space<vmem>>, vector<512x128xf32>
    tpu.vector_store %arg9[%c0_6, %c0_7], %7 {strides = array<i32>} : memref<512x128xf32, #tpu.memory_space<vmem>>, vector<512x128xf32>,
    %c0_i32_8 = arith.constant 0 : i32
    %9 = arith.cmpi eq, %arg1, %c0_i32_8 : i32
    %10 = arith.extui %9 : i1 to i32
    %c0_i32_9 = arith.constant 0 : i32
    %11 = arith.cmpi ne, %10, %c0_i32_9 : i32
    scf.if %11 {
      %c0_10 = arith.constant 0 : index
      %c0_11 = arith.constant 0 : index
      %12 = vector.load %arg9[%c0_10, %c0_11] : memref<512x128xf32, #tpu.memory_space<vmem>>, vector<512x128xf32>
      %c0_12 = arith.constant 0 : index
      %c0_13 = arith.constant 0 : index
      %13 = vector.load %arg4[%c0_12, %c0_13] : memref<512x1xf32, #tpu.memory_space<vmem>>, vector<512x1xf32>
      %14 = vector.broadcast %13 : vector<512x1xf32> to vector<512x128xf32>
      %15 = arith.mulf %12, %14 : vector<512x128xf32>
      %c0_14 = arith.constant 0 : index
      %c0_15 = arith.constant 0 : index
      %16 = vector.load %arg5[%c0_14, %c0_15] : memref<512x128xf32, #tpu.memory_space<vmem>>, vector<512x128xf32>
      %17 = arith.addf %15, %16 : vector<512x128xf32>
      %c0_16 = arith.constant 0 : index
      %c0_17 = arith.constant 0 : index
      %18 = vector.load %arg6[%c0_16, %c0_17] : memref<128x128xf32, #tpu.memory_space<vmem>>, vector<128x128xf32>
      %cst_18 = arith.constant dense<0.000000e+00> : vector<512x128xf32>
      %19 = tpu.matmul %17, %18, %cst_18 {dimension_numbers = #tpu.dot_dimension_numbers<[1], [0], [0], [1], [0, 0, 1, 1], [], []>} : vector<512x128xf32>, vector<128x128xf32>, vector<512x128xf32> -> vector<512x128xf32>
      %c0_19 = arith.constant 0 : index
      %c0_20 = arith.constant 0 : index
      %20 = vector.load %arg7[%c0_19, %c0_20] : memref<1x128xf32, #tpu.memory_space<vmem>>, vector<1x128xf32>
      %21 = vector.broadcast %20 : vector<1x128xf32> to vector<512x128xf32>
      %22 = arith.addf %19, %21 : vector<512x128xf32>
      %23 = arith.mulf %22, %22 : vector<512x128xf32>
      %cst_21 = arith.constant dense<0.000000e+00> : vector<512xf32>
      %24 = vector.multi_reduction <add>, %23, %cst_21 [1] : vector<512x128xf32> to vector<512xf32>
      %25 = vector.shape_cast %24 : vector<512xf32> to vector<512x1xf32>
      %cst_22 = arith.constant 1.000000e-24 : f32
      %26 = vector.broadcast %cst_22 : f32 to vector<512x1xf32>
      %27 = arith.maximumf %25, %26 : vector<512x1xf32>
      %28 = math.rsqrt %27 : vector<512x1xf32>
      %29 = vector.broadcast %28 : vector<512x1xf32> to vector<512x128xf32>
      %30 = arith.mulf %22, %29 : vector<512x128xf32>
      %c0_23 = arith.constant 0 : index
      %c0_24 = arith.constant 0 : index
      %31 = vector.load %arg8[%c0_23, %c0_24] : memref<512x128xf32, #tpu.memory_space<vmem>>, vector<512x128xf32>
      tpu.vector_store %arg8[%c0_23, %c0_24], %30 {strides = array<i32>} : memref<512x128xf32, #tpu.memory_space<vmem>>, vector<512x128xf32>,
    } else {
    }
    return
  }
  func.func @transform_0(%arg0: i32, %arg1: i32) -> (i32, i32) {
    %c0_i32 = arith.constant 0 : i32
    return %arg0, %arg1 : i32, i32
  }
  func.func @transform_1(%arg0: i32, %arg1: i32) -> (i32, i32) {
    %c0_i32 = arith.constant 0 : i32
    %c0_i32_0 = arith.constant 0 : i32
    return %arg1, %c0_i32 : i32, i32
  }
  func.func @transform_2(%arg0: i32, %arg1: i32) -> (i32, i32) {
    %c0_i32 = arith.constant 0 : i32
    %c0_i32_0 = arith.constant 0 : i32
    return %arg0, %c0_i32 : i32, i32
  }
  func.func @transform_3(%arg0: i32, %arg1: i32) -> (i32, i32) {
    %c0_i32 = arith.constant 0 : i32
    %c0_i32_0 = arith.constant 0 : i32
    return %arg0, %c0_i32 : i32, i32
  }
  func.func @transform_4(%arg0: i32, %arg1: i32) -> (i32, i32) {
    %c0_i32 = arith.constant 0 : i32
    %c0_i32_0 = arith.constant 0 : i32
    %c0_i32_1 = arith.constant 0 : i32
    return %c0_i32, %c0_i32_0 : i32, i32
  }
  func.func @transform_5(%arg0: i32, %arg1: i32) -> (i32, i32) {
    %c0_i32 = arith.constant 0 : i32
    %c0_i32_0 = arith.constant 0 : i32
    %c0_i32_1 = arith.constant 0 : i32
    return %c0_i32, %c0_i32_0 : i32, i32
  }
  func.func @transform_6(%arg0: i32, %arg1: i32) -> (i32, i32) {
    %c0_i32 = arith.constant 0 : i32
    %c0_i32_0 = arith.constant 0 : i32
    return %arg0, %c0_i32 : i32, i32
  }
}

module attributes {stable_mosaic.version = 11 : i64} {
  func.func @edge_kernel(%arg0: i32, %arg1: i32, %arg2: memref<512x512xbf16, #tpu.memory_space<vmem>>, %arg3: memref<512x128xbf16, #tpu.memory_space<vmem>>, %arg4: memref<512x1xf32, #tpu.memory_space<vmem>>, %arg5: memref<512x128xf32, #tpu.memory_space<vmem>>, %arg6: memref<128x128xf32, #tpu.memory_space<vmem>>, %arg7: memref<1x128xf32, #tpu.memory_space<vmem>>, %arg8: memref<512x128xbf16, #tpu.memory_space<vmem>>, %arg9: memref<512x128xf32, #tpu.memory_space<vmem>>) attributes {dimension_semantics = [#tpu.dimension_semantics<parallel>, #tpu.dimension_semantics<arbitrary>], iteration_bounds = array<i64: 1, 2>, scalar_prefetch = 0 : i64, scratch_operands = 1 : i64, tpu.core_type = #tpu.core_type<tc>, window_params = [{transform_indices = @transform_0, window_bounds = array<i64: 512, 512>}, {transform_indices = @transform_1, window_bounds = array<i64: 512, 128>}, {transform_indices = @transform_2, window_bounds = array<i64: 512, 1>}, {transform_indices = @transform_3, window_bounds = array<i64: 512, 128>}, {pipeline_mode = #tpu.pipeline_mode<synchronous>, transform_indices = @transform_4, window_bounds = array<i64: 128, 128>}, {pipeline_mode = #tpu.pipeline_mode<synchronous>, transform_indices = @transform_5, window_bounds = array<i64: 1, 128>}, {transform_indices = @transform_6, window_bounds = array<i64: 512, 128>}]} {
    %c0_i32 = arith.constant 0 : i32
    %0 = arith.cmpi eq, %arg1, %c0_i32 : i32
    %1 = arith.extui %0 : i1 to i32
    %c0_i32_0 = arith.constant 0 : i32
    %2 = arith.cmpi ne, %1, %c0_i32_0 : i32
    scf.if %2 {
      %cst_9 = arith.constant 0.000000e+00 : f32
      %12 = vector.broadcast %cst_9 : f32 to vector<512x128xf32>
      %c0_10 = arith.constant 0 : index
      %c0_11 = arith.constant 0 : index
      %13 = vector.load %arg9[%c0_10, %c0_11] : memref<512x128xf32, #tpu.memory_space<vmem>>, vector<512x128xf32>
      tpu.vector_store %arg9[%c0_10, %c0_11], %12 {strides = array<i32>} : memref<512x128xf32, #tpu.memory_space<vmem>>, vector<512x128xf32>,
    } else {
    }
    %c0 = arith.constant 0 : index
    %c0_1 = arith.constant 0 : index
    %3 = vector.load %arg9[%c0, %c0_1] : memref<512x128xf32, #tpu.memory_space<vmem>>, vector<512x128xf32>
    %c0_2 = arith.constant 0 : index
    %c0_3 = arith.constant 0 : index
    %4 = vector.load %arg2[%c0_2, %c0_3] : memref<512x512xbf16, #tpu.memory_space<vmem>>, vector<512x512xbf16>
    %c0_4 = arith.constant 0 : index
    %c0_5 = arith.constant 0 : index
    %5 = vector.load %arg3[%c0_4, %c0_5] : memref<512x128xbf16, #tpu.memory_space<vmem>>, vector<512x128xbf16>
    %cst = arith.constant dense<0.000000e+00> : vector<512x128xf32>
    %6 = tpu.matmul %4, %5, %cst {dimension_numbers = #tpu.dot_dimension_numbers<[1], [0], [0], [1], [0, 0, 1, 1], [], []>} : vector<512x512xbf16>, vector<512x128xbf16>, vector<512x128xf32> -> vector<512x128xf32>
    %7 = arith.addf %3, %6 : vector<512x128xf32>
    %c0_6 = arith.constant 0 : index
    %c0_7 = arith.constant 0 : index
    %8 = vector.load %arg9[%c0_6, %c0_7] : memref<512x128xf32, #tpu.memory_space<vmem>>, vector<512x128xf32>
    tpu.vector_store %arg9[%c0_6, %c0_7], %7 {strides = array<i32>} : memref<512x128xf32, #tpu.memory_space<vmem>>, vector<512x128xf32>,
    %c1_i32 = arith.constant 1 : i32
    %9 = arith.cmpi eq, %arg1, %c1_i32 : i32
    %10 = arith.extui %9 : i1 to i32
    %c0_i32_8 = arith.constant 0 : i32
    %11 = arith.cmpi ne, %10, %c0_i32_8 : i32
    scf.if %11 {
      %c0_9 = arith.constant 0 : index
      %c0_10 = arith.constant 0 : index
      %12 = vector.load %arg9[%c0_9, %c0_10] : memref<512x128xf32, #tpu.memory_space<vmem>>, vector<512x128xf32>
      %c0_11 = arith.constant 0 : index
      %c0_12 = arith.constant 0 : index
      %13 = vector.load %arg4[%c0_11, %c0_12] : memref<512x1xf32, #tpu.memory_space<vmem>>, vector<512x1xf32>
      %14 = vector.broadcast %13 : vector<512x1xf32> to vector<512x128xf32>
      %15 = arith.mulf %12, %14 : vector<512x128xf32>
      %c0_13 = arith.constant 0 : index
      %c0_14 = arith.constant 0 : index
      %16 = vector.load %arg5[%c0_13, %c0_14] : memref<512x128xf32, #tpu.memory_space<vmem>>, vector<512x128xf32>
      %17 = arith.addf %15, %16 : vector<512x128xf32>
      %c0_15 = arith.constant 0 : index
      %c0_16 = arith.constant 0 : index
      %18 = vector.load %arg6[%c0_15, %c0_16] : memref<128x128xf32, #tpu.memory_space<vmem>>, vector<128x128xf32>
      %cst_17 = arith.constant dense<0.000000e+00> : vector<512x128xf32>
      %19 = tpu.matmul %17, %18, %cst_17 {dimension_numbers = #tpu.dot_dimension_numbers<[1], [0], [0], [1], [0, 0, 1, 1], [], []>} : vector<512x128xf32>, vector<128x128xf32>, vector<512x128xf32> -> vector<512x128xf32>
      %c0_18 = arith.constant 0 : index
      %c0_19 = arith.constant 0 : index
      %20 = vector.load %arg7[%c0_18, %c0_19] : memref<1x128xf32, #tpu.memory_space<vmem>>, vector<1x128xf32>
      %21 = vector.broadcast %20 : vector<1x128xf32> to vector<512x128xf32>
      %22 = arith.addf %19, %21 : vector<512x128xf32>
      %cst_20 = arith.constant 0.000000e+00 : f32
      %23 = vector.broadcast %cst_20 : f32 to vector<512x128xf32>
      %24 = arith.maximumf %22, %23 : vector<512x128xf32>
      %25 = arith.truncf %24 : vector<512x128xf32> to vector<512x128xbf16>
      %c0_21 = arith.constant 0 : index
      %c0_22 = arith.constant 0 : index
      %26 = vector.load %arg8[%c0_21, %c0_22] : memref<512x128xbf16, #tpu.memory_space<vmem>>, vector<512x128xbf16>
      tpu.vector_store %arg8[%c0_21, %c0_22], %25 {strides = array<i32>} : memref<512x128xbf16, #tpu.memory_space<vmem>>, vector<512x128xbf16>,
    } else {
    }
    return
  }
  func.func @transform_0(%arg0: i32, %arg1: i32) -> (i32, i32) {
    %c0_i32 = arith.constant 0 : i32
    return %arg0, %arg1 : i32, i32
  }
  func.func @transform_1(%arg0: i32, %arg1: i32) -> (i32, i32) {
    %c0_i32 = arith.constant 0 : i32
    %c0_i32_0 = arith.constant 0 : i32
    return %arg1, %c0_i32 : i32, i32
  }
  func.func @transform_2(%arg0: i32, %arg1: i32) -> (i32, i32) {
    %c0_i32 = arith.constant 0 : i32
    %c0_i32_0 = arith.constant 0 : i32
    return %arg0, %c0_i32 : i32, i32
  }
  func.func @transform_3(%arg0: i32, %arg1: i32) -> (i32, i32) {
    %c0_i32 = arith.constant 0 : i32
    %c0_i32_0 = arith.constant 0 : i32
    return %arg0, %c0_i32 : i32, i32
  }
  func.func @transform_4(%arg0: i32, %arg1: i32) -> (i32, i32) {
    %c0_i32 = arith.constant 0 : i32
    %c0_i32_0 = arith.constant 0 : i32
    %c0_i32_1 = arith.constant 0 : i32
    return %c0_i32, %c0_i32_0 : i32, i32
  }
  func.func @transform_5(%arg0: i32, %arg1: i32) -> (i32, i32) {
    %c0_i32 = arith.constant 0 : i32
    %c0_i32_0 = arith.constant 0 : i32
    %c0_i32_1 = arith.constant 0 : i32
    return %c0_i32, %c0_i32_0 : i32, i32
  }
  func.func @transform_6(%arg0: i32, %arg1: i32) -> (i32, i32) {
    %c0_i32 = arith.constant 0 : i32
    %c0_i32_0 = arith.constant 0 : i32
    return %arg0, %c0_i32 : i32, i32
  }
}

</mosaic_0001>

<llo_original>
// kernel: hyper_gnn_conv.3
$region0: #{hyper_gnn_conv.3}
  #allocation0 [shape = 'u32[]', space=smem, size = 0x4, offset = 0x4, fixed_abs, tag = 'smem constant byte address 0x4 - core index']
  #allocation1 [shape = 'u32[144,128]{1,0:T(1,128)}', space=vmem, size = 0x12000, scoped, tag = 'internal scratch']
  #allocation2 [shape = 'f32[512,128]{1,0:T(8,128)}', space=vmem, size = 0x40000, scoped, tag = 'scratch operand']
  %s0 = inlined_call_operand.vmem [shape: bf16[1024,512], index: 0, kind: input, shape index: {}]
  %s1 = inlined_call_operand.vmem [shape: bf16[512,128], index: 1, kind: input, shape index: {}]
  %s2 = inlined_call_operand.vmem [shape: f32[1024,1], index: 2, kind: input, shape index: {}]
  %s3 = inlined_call_operand.vmem [shape: f32[1024,128], index: 3, kind: input, shape index: {}]
  %s4 = inlined_call_operand.vmem [shape: f32[128,128], index: 4, kind: input, shape index: {}]
  %s5 = inlined_call_operand.vmem [shape: f32[1,128], index: 5, kind: input, shape index: {}]
  %s6 = inlined_call_operand.vmem [shape: f32[1024,128], index: 6, kind: output, shape index: {}]
  %s7 = sld [smem:[#allocation0]]
  $region65: #{hyper_gnn_conv.3} parent=0
    _
  %s9 = ssub.s32 1, %s7
  %s10 = scalar_select 0, %s9, %s7
  loop: start=0, step=1, limit=4
  $region2: #{hyper_gnn_conv.3} parent=0 // loop_pre_header
    _
  $region3: #{hyper_gnn_conv.3} parent=0 // loop_header
    %s12 = sphi 0, %s16
    %p13 = scmp.ge.s32.totalorder %s12, 4
    %s19 = sphi 0, %s31
    %s20 = sphi 0, %s27
    %s21 = sphi 0, %s19
    %s22 = sphi 0, %s20
    %s23 = sphi 0, %s21
    %s24 = sphi 0, %s22
    %s36 = sphi 0, %s38
    %s39 = sphi 0, %s36
    %s40 = sphi 0, %s39
    %s56 = sphi 0, %s40
    %s62 = sphi 0, %s64
    %s65 = sphi 0, %s62
    %s66 = sphi 0, %s65
    %s82 = sphi 0, %s66
    %s88 = sphi 0, %s90
    %s91 = sphi 0, %s88
    %s92 = sphi 0, %s91
    %s108 = sphi 0, %s92
    %s114 = sphi 0, %s116
    %s117 = sphi 0, %s114
    %s118 = sphi 0, %s117
    %s134 = sphi 0, %s118
    %s138 = sphi 0, %s138
    %s140 = sphi 0, %s138
    %s141 = sphi 0, %s140
    %s155 = sphi 0, %s141
    %s159 = sphi 0, %s159
    %s161 = sphi 0, %s159
    %s162 = sphi 0, %s161
    %s176 = sphi 0, %s162
    %s182 = sphi 0, %s184
    %s185 = sphi 0, %s182
    %s186 = sphi 0, %s185
    %s202 = sphi 0, %s186
  $region4: #{hyper_gnn_conv.3} parent=0 // loop_header_branch
    %15 = sbr.rel (%p13) target = $region8
  $region5: #{hyper_gnn_conv.3} parent=0 // loop_body
    %s17 = ssub.s32 %s12, 1
    %s18 = ssub.s32 %s12, 2
    %s25 = sadd.s32 1, %s20
    %p26 = scmp.ge.s32.totalorder %s25, 1
    %s27 = scalar_select %p26, 0, %s25
    %s28 = sadd.s32 1, %s19
    %s29 = scalar_select %p26, %s28, %s19
    %p30 = scmp.ge.s32.totalorder %s29, 2
    %s31 = scalar_select %p30, 0, %s29
    %s32 = ssub.s32 %s19, %s31
    %s33 = ssub.s32 %s20, %s27
    %s34 = sor.u32 %s32, %s33
    %p35 = scmp.eq.s32.totalorder %s34, 0
    %s37 = sadd.s32 %s36, 1
    %s38 = scalar_select %p35, %s36, %s37
    %p41 = pneg %p35
    %p42 = scmp.eq.s32.totalorder %s12, 1
    %p43 = por %p41, %p42
    %p44 = scmp.ne.s32.totalorder %s36, %s39
    %p45 = scmp.eq.s32.totalorder %s12, 0
    %p46 = por %p44, %p45
    %p47 = scmp.ne.s32.totalorder %s36, %s39
    %p48 = scmp.eq.s32.totalorder %s17, 1
    %p49 = por %p47, %p48
    %p50 = scmp.ne.s32.totalorder %s39, %s40
    %p51 = scmp.eq.s32.totalorder %s17, 0
    %p52 = por %p50, %p51
    %p53 = scmp.ne.s32.totalorder %s39, %s40
    %p54 = scmp.eq.s32.totalorder %s18, 1
    %p55 = por %p53, %p54
    %p57 = scmp.ne.s32.totalorder %s40, %s56
    %p58 = scmp.eq.s32.totalorder %s18, 0
    %p59 = por %p57, %p58
    %s60 = ssub.s32 %s20, %s27
    %p61 = scmp.eq.s32.totalorder %s60, 0
    %s63 = sadd.s32 %s62, 1
    %s64 = scalar_select %p61, %s62, %s63
    %p67 = pneg %p61
    %p68 = scmp.eq.s32.totalorder %s12, 1
    %p69 = por %p67, %p68
    %p70 = scmp.ne.s32.totalorder %s62, %s65
    %p71 = scmp.eq.s32.totalorder %s12, 0
    %p72 = por %p70, %p71
    %p73 = scmp.ne.s32.totalorder %s62, %s65
    %p74 = scmp.eq.s32.totalorder %s17, 1
    %p75 = por %p73, %p74
    %p76 = scmp.ne.s32.totalorder %s65, %s66
    %p77 = scmp.eq.s32.totalorder %s17, 0
    %p78 = por %p76, %p77
    %p79 = scmp.ne.s32.totalorder %s65, %s66
    %p80 = scmp.eq.s32.totalorder %s18, 1
    %p81 = por %p79, %p80
    %p83 = scmp.ne.s32.totalorder %s66, %s82
    %p84 = scmp.eq.s32.totalorder %s18, 0
    %p85 = por %p83, %p84
    %s86 = ssub.s32 %s19, %s31
    %p87 = scmp.eq.s32.totalorder %s86, 0
    %s89 = sadd.s32 %s88, 1
    %s90 = scalar_select %p87, %s88, %s89
    %p93 = pneg %p87
    %p94 = scmp.eq.s32.totalorder %s12, 1
    %p95 = por %p93, %p94
    %p96 = scmp.ne.s32.totalorder %s88, %s91
    %p97 = scmp.eq.s32.totalorder %s12, 0
    %p98 = por %p96, %p97
    %p99 = scmp.ne.s32.totalorder %s88, %s91
    %p100 = scmp.eq.s32.totalorder %s17, 1
    %p101 = por %p99, %p100
    %p102 = scmp.ne.s32.totalorder %s91, %s92
    %p103 = scmp.eq.s32.totalorder %s17, 0
    %p104 = por %p102, %p103
    %p105 = scmp.ne.s32.totalorder %s91, %s92
    %p106 = scmp.eq.s32.totalorder %s18, 1
    %p107 = por %p105, %p106
    %p109 = scmp.ne.s32.totalorder %s92, %s108
    %p110 = scmp.eq.s32.totalorder %s18, 0
    %p111 = por %p109, %p110
    %s112 = ssub.s32 %s19, %s31
    %p113 = scmp.eq.s32.totalorder %s112, 0
    %s115 = sadd.s32 %s114, 1
    %s116 = scalar_select %p113, %s114, %s115
    %p119 = pneg %p113
    %p120 = scmp.eq.s32.totalorder %s12, 1
    %p121 = por %p119, %p120
    %p122 = scmp.ne.s32.totalorder %s114, %s117
    %p123 = scmp.eq.s32.totalorder %s12, 0
    %p124 = por %p122, %p123
    %p125 = scmp.ne.s32.totalorder %s114, %s117
    %p126 = scmp.eq.s32.totalorder %s17, 1
    %p127 = por %p125, %p126
    %p128 = scmp.ne.s32.totalorder %s117, %s118
    %p129 = scmp.eq.s32.totalorder %s17, 0
    %p130 = por %p128, %p129
    %p131 = scmp.ne.s32.totalorder %s117, %s118
    %p132 = scmp.eq.s32.totalorder %s18, 1
    %p133 = por %p131, %p132
    %p135 = scmp.ne.s32.totalorder %s118, %s134
    %p136 = scmp.eq.s32.totalorder %s18, 0
    %p137 = por %p135, %p136
    %s139 = sadd.s32 %s138, 1
    %p142 = scmp.eq.s32.totalorder %s12, 1
    %p143 = scmp.ne.s32.totalorder %s138, %s140
    %p144 = scmp.eq.s32.totalorder %s12, 0
    %p145 = por %p143, %p144
    %p146 = scmp.ne.s32.totalorder %s138, %s140
    %p147 = scmp.eq.s32.totalorder %s17, 1
    %p148 = por %p146, %p147
    %p149 = scmp.ne.s32.totalorder %s140, %s141
    %p150 = scmp.eq.s32.totalorder %s17, 0
    %p151 = por %p149, %p150
    %p152 = scmp.ne.s32.totalorder %s140, %s141
    %p153 = scmp.eq.s32.totalorder %s18, 1
    %p154 = por %p152, %p153
    %p156 = scmp.ne.s32.totalorder %s141, %s155
    %p157 = scmp.eq.s32.totalorder %s18, 0
    %p158 = por %p156, %p157
    %s160 = sadd.s32 %s159, 1
    %p163 = scmp.eq.s32.totalorder %s12, 1
    %p164 = scmp.ne.s32.totalorder %s159, %s161
    %p165 = scmp.eq.s32.totalorder %s12, 0
    %p166 = por %p164, %p165
    %p167 = scmp.ne.s32.totalorder %s159, %s161
    %p168 = scmp.eq.s32.totalorder %s17, 1
    %p169 = por %p167, %p168
    %p170 = scmp.ne.s32.totalorder %s161, %s162
    %p171 = scmp.eq.s32.totalorder %s17, 0
    %p172 = por %p170, %p171
    %p173 = scmp.ne.s32.totalorder %s161, %s162
    %p174 = scmp.eq.s32.totalorder %s18, 1
    %p175 = por %p173, %p174
    %p177 = scmp.ne.s32.totalorder %s162, %s176
    %p178 = scmp.eq.s32.totalorder %s18, 0
    %p179 = por %p177, %p178
    %s180 = ssub.s32 %s19, %s31
    %p181 = scmp.eq.s32.totalorder %s180, 0
    %s183 = sadd.s32 %s182, 1
    %s184 = scalar_select %p181, %s182, %s183
    %p187 = pneg %p181
    %p188 = scmp.eq.s32.totalorder %s12, 1
    %p189 = por %p187, %p188
    %p190 = scmp.ne.s32.totalorder %s182, %s185
    %p191 = scmp.eq.s32.totalorder %s12, 0
    %p192 = por %p190, %p191
    %p193 = scmp.ne.s32.totalorder %s182, %s185
    %p194 = scmp.eq.s32.totalorder %s17, 1
    %p195 = por %p193, %p194
    %p196 = scmp.ne.s32.totalorder %s185, %s186
    %p197 = scmp.eq.s32.totalorder %s17, 0
    %p198 = por %p196, %p197
    %p199 = scmp.ne.s32.totalorder %s185, %s186
    %p200 = scmp.eq.s32.totalorder %s18, 1
    %p201 = por %p199, %p200
    %p203 = scmp.ne.s32.totalorder %s186, %s202
    %p204 = scmp.eq.s32.totalorder %s18, 0
    %p205 = por %p203, %p204
    %p206 = scmp.le.s32.totalorder 1, %s12
    %p207 = scmp.lt.s32.totalorder %s12, 3
    %p208 = pnand %p206, %p207
    %p209 = pneg %p208
    // Predicated region
    $region9: #{hyper_gnn_conv.3} parent=5 // pred_check
      _
    $region10: #{hyper_gnn_conv.3} parent=5 // pred_check_branch
      %211 = sbr.rel (%p208) target = $region12
    $region11: #{hyper_gnn_conv.3} parent=5 // pred_region
      %s212 = ssub.s32 %s12, 1
      // Predicated region
      $region13: #{hyper_gnn_conv.3} parent=11 // pred_check
        %p213 = pneg %p78
      $region14: #{hyper_gnn_conv.3} parent=11 // pred_check_branch
        %215 = sbr.rel (%p213) target = $region16
      $region15: #{hyper_gnn_conv.3} parent=11 // pred_region
        %s216 = smul.u32 64, %s22
        %p217 = scmp.lt.s32.totalorder %s216, 63
        %s218 = scalar_select %p217, %s216, 63
        %s219 = smul.addr %s218, 4
        %s220 = scalar_lea.vmem %s1, %s219
        %s221 = smul.u32 64, %s22
      $region16: #{hyper_gnn_conv.3} parent=11 // pred_fallthru
        _
      // Predicated region
      $region17: #{hyper_gnn_conv.3} parent=11 // pred_check
        %p222 = pneg %p151
      $region18: #{hyper_gnn_conv.3} parent=11 // pred_check_branch
        %224 = sbr.rel (%p222) target = $region20
      $region19: #{hyper_gnn_conv.3} parent=11 // pred_region
        _
      $region20: #{hyper_gnn_conv.3} parent=11 // pred_fallthru
        _
      // Predicated region
      $region21: #{hyper_gnn_conv.3} parent=11 // pred_check
        %p225 = pneg %p172
      $region22: #{hyper_gnn_conv.3} parent=11 // pred_check_branch
        %227 = sbr.rel (%p225) target = $region24
      $region23: #{hyper_gnn_conv.3} parent=11 // pred_region
        _
      $region24: #{hyper_gnn_conv.3} parent=11 // pred_fallthru
        _
    $region12: #{hyper_gnn_conv.3} parent=5 // pred_fallthru
      _
    %p228 = scmp.lt.s32.totalorder %s12, 2
    // Predicated region
    $region25: #{hyper_gnn_conv.3} parent=5 // pred_check
      %p229 = pneg %p228
    $region26: #{hyper_gnn_conv.3} parent=5 // pred_check_branch
      %231 = sbr.rel (%p229) target = $region28
    $region27: #{hyper_gnn_conv.3} parent=5 // pred_region
      // Predicated region
      $region29: #{hyper_gnn_conv.3} parent=27 // pred_check
        %p232 = pneg %p46
      $region30: #{hyper_gnn_conv.3} parent=27 // pred_check_branch
        %234 = sbr.rel (%p232) target = $region32
      $region31: #{hyper_gnn_conv.3} parent=27 // pred_region
        %s235 = smul.u32 64, %s19
        %s236 = smul.u32 4, %s20
        %p237 = scmp.lt.s32.totalorder %s235, 127
        %s238 = scalar_select %p237, %s235, 127
        %p239 = scmp.lt.s32.totalorder %s236, 3
        %s240 = scalar_select %p239, %s236, 3
        %s241 = smul.addr %s238, 4
        %s242 = sadd.s32 %s240, %s241
        %s243 = smul.addr %s242, 4
        %s244 = scalar_lea.vmem %s0, %s243
        %s245 = smul.u32 64, %s19
        %s246 = smul.u32 4, %s20
      $region32: #{hyper_gnn_conv.3} parent=27 // pred_fallthru
        _
      // Predicated region
      $region33: #{hyper_gnn_conv.3} parent=27 // pred_check
        %p247 = pneg %p98
      $region34: #{hyper_gnn_conv.3} parent=27 // pred_check_branch
        %249 = sbr.rel (%p247) target = $region36
      $region35: #{hyper_gnn_conv.3} parent=27 // pred_region
        %s250 = smul.u32 64, %s19
        %p251 = scmp.lt.s32.totalorder %s250, 127
        %s252 = scalar_select %p251, %s250, 127
        %s253 = smul.addr %s252, 8
        %s254 = scalar_lea.vmem %s2, %s253
        %s255 = smul.u32 64, %s19
      $region36: #{hyper_gnn_conv.3} parent=27 // pred_fallthru
        _
      // Predicated region
      $region37: #{hyper_gnn_conv.3} parent=27 // pred_check
        %p256 = pneg %p124
      $region38: #{hyper_gnn_conv.3} parent=27 // pred_check_branch
        %258 = sbr.rel (%p256) target = $region40
      $region39: #{hyper_gnn_conv.3} parent=27 // pred_region
        %s259 = smul.u32 64, %s19
        %p260 = scmp.lt.s32.totalorder %s259, 127
        %s261 = scalar_select %p260, %s259, 127
        %s262 = smul.addr %s261, 8
        %s263 = scalar_lea.vmem %s3, %s262
        %s264 = smul.u32 64, %s19
      $region40: #{hyper_gnn_conv.3} parent=27 // pred_fallthru
        _
    $region28: #{hyper_gnn_conv.3} parent=5 // pred_fallthru
      _
    %p265 = scmp.le.s32.totalorder 1, %s12
    %p266 = scmp.lt.s32.totalorder %s12, 3
    %p267 = pnand %p265, %p266
    %p268 = pneg %p267
    // Predicated region
    $region41: #{hyper_gnn_conv.3} parent=5 // pred_check
      _
    $region42: #{hyper_gnn_conv.3} parent=5 // pred_check_branch
      %270 = sbr.rel (%p267) target = $region44
    $region43: #{hyper_gnn_conv.3} parent=5 // pred_region
      %s271 = ssub.s32 %s12, 1
      %s272 = smul.u32 64, %s21
      %s273 = smul.u32 4, %s22
      %p274 = scmp.lt.s32.totalorder %s272, 127
      %s275 = scalar_select %p274, %s272, 127
      %p276 = scmp.lt.s32.totalorder %s273, 3
      %s277 = scalar_select %p276, %s273, 3
      %s278 = smul.addr %s275, 4
      %s279 = sadd.s32 %s277, %s278
      %s280 = smul.addr %s279, 4
      %s281 = scalar_lea.vmem %s0, %s280
      %p282 = pneg %p52
      %p283 = pneg %p49
      %s284 = smul.u32 64, %s22
      %p285 = scmp.lt.s32.totalorder %s284, 63
      %s286 = scalar_select %p285, %s284, 63
      %s287 = smul.addr %s286, 4
      %s288 = scalar_lea.vmem %s1, %s287
      %p289 = pneg %p78
      %p290 = pneg %p75
      %s291 = smul.u32 64, %s21
      %p292 = scmp.lt.s32.totalorder %s291, 127
      %s293 = scalar_select %p292, %s291, 127
      %s294 = smul.addr %s293, 8
      %s295 = scalar_lea.vmem %s2, %s294
      %p296 = pneg %p104
      %p297 = pneg %p101
      %s298 = smul.u32 64, %s21
      %p299 = scmp.lt.s32.totalorder %s298, 127
      %s300 = scalar_select %p299, %s298, 127
      %s301 = smul.addr %s300, 8
      %s302 = scalar_lea.vmem %s3, %s301
      %p303 = pneg %p130
      %p304 = pneg %p127
      %p305 = pneg %p151
      %p306 = pneg %p148
      %p307 = pneg %p172
      %p308 = pneg %p169
      %p309 = pneg %p198
      %p310 = pneg %p195
      %s311 = smul.u32 64, %s21
      %p312 = scmp.lt.s32.totalorder %s311, 127
      %s313 = scalar_select %p312, %s311, 127
      %s314 = smul.addr %s313, 8
      %s315 = scalar_lea.vmem %s6, %s314
      %s316 = smul.u32 64, %s21
      %s317 = smul.u32 4, %s22
      %p318 = scmp.lt.s32.totalorder %s316, 127
      %s319 = scalar_select %p318, %s316, 127
      %p320 = scmp.lt.s32.totalorder %s317, 3
      %s321 = scalar_select %p320, %s317, 3
      %s322 = smul.addr %s319, 4
      %s323 = sadd.s32 %s321, %s322
      %s324 = smul.addr %s323, 4
      %s325 = scalar_lea.vmem %s0, %s324
      %s326 = smul.u32 64, %s21
      %s327 = smul.u32 4, %s22
      %s328 = smul.u32 64, %s22
      %p329 = scmp.lt.s32.totalorder %s328, 63
      %s330 = scalar_select %p329, %s328, 63
      %s331 = smul.addr %s330, 4
      %s332 = scalar_lea.vmem %s1, %s331
      %s333 = smul.u32 64, %s22
      %s334 = smul.u32 64, %s21
      %p335 = scmp.lt.s32.totalorder %s334, 127
      %s336 = scalar_select %p335, %s334, 127
      %s337 = smul.addr %s336, 8
      %s338 = scalar_lea.vmem %s2, %s337
      %s339 = smul.u32 64, %s21
      %s340 = smul.u32 64, %s21
      %p341 = scmp.lt.s32.totalorder %s340, 127
      %s342 = scalar_select %p341, %s340, 127
      %s343 = smul.addr %s342, 8
      %s344 = scalar_lea.vmem %s3, %s343
      %s345 = smul.u32 64, %s21
      %s346 = smul.u32 64, %s21
      %p347 = scmp.lt.s32.totalorder %s346, 127
      %s348 = scalar_select %p347, %s346, 127
      %s349 = smul.addr %s348, 8
      %s350 = scalar_lea.vmem %s6, %s349
      %s351 = smul.u32 64, %s21
      %p353 = scmp.eq.s32.totalorder %s22, 0
      // Predicated region
      $region45: #{hyper_gnn_conv.3} parent=43 // pred_check
        %p354 = pneg %p353
      $region46: #{hyper_gnn_conv.3} parent=43 // pred_check_branch
        %356 = sbr.rel (%p354) target = $region48
      $region47: #{hyper_gnn_conv.3} parent=43 // pred_region
        %357 = vst [vmem:[#allocation2] sm:$0xff] 0.0
        %358 = vst [vmem:[#allocation2 + $0x8] sm:$0xff] 0.0
        %359 = vst [vmem:[#allocation2 + $0x10] sm:$0xff] 0.0
        %360 = vst [vmem:[#allocation2 + $0x18] sm:$0xff] 0.0
        %361 = vst [vmem:[#allocation2 + $0x20] sm:$0xff] 0.0
        %362 = vst [vmem:[#allocation2 + $0x28] sm:$0xff] 0.0
        %363 = vst [vmem:[#allocation2 + $0x30] sm:$0xff] 0.0
        %364 = vst [vmem:[#allocation2 + $0x38] sm:$0xff] 0.0
        %365 = vst [vmem:[#allocation2 + $0x40] sm:$0xff] 0.0
        %366 = vst [vmem:[#allocation2 + $0x48] sm:$0xff] 0.0
        %367 = vst [vmem:[#allocation2 + $0x50] sm:$0xff] 0.0
        %368 = vst [vmem:[#allocation2 + $0x58] sm:$0xff] 0.0
        %369 = vst [vmem:[#allocation2 + $0x60] sm:$0xff] 0.0
        %370 = vst [vmem:[#allocation2 + $0x68] sm:$0xff] 0.0
        %371 = vst [vmem:[#allocation2 + $0x70] sm:$0xff] 0.0
        %372 = vst [vmem:[#allocation2 + $0x78] sm:$0xff] 0.0
        %373 = vst [vmem:[#allocation2 + $0x80] sm:$0xff] 0.0
        %374 = vst [vmem:[#allocation2 + $0x88] sm:$0xff] 0.0
        %375 = vst [vmem:[#allocation2 + $0x90] sm:$0xff] 0.0
        %376 = vst [vmem:[#allocation2 + $0x98] sm:$0xff] 0.0
        %377 = vst [vmem:[#allocation2 + $0xa0] sm:$0xff] 0.0
        %378 = vst [vmem:[#allocation2 + $0xa8] sm:$0xff] 0.0
        %379 = vst [vmem:[#allocation2 + $0xb0] sm:$0xff] 0.0
        %380 = vst [vmem:[#allocation2 + $0xb8] sm:$0xff] 0.0
        %381 = vst [vmem:[#allocation2 + $0xc0] sm:$0xff] 0.0
        %382 = vst [vmem:[#allocation2 + $0xc8] sm:$0xff] 0.0
        %383 = vst [vmem:[#allocation2 + $0xd0] sm:$0xff] 0.0
        %384 = vst [vmem:[#allocation2 + $0xd8] sm:$0xff] 0.0
        %385 = vst [vmem:[#allocation2 + $0xe0] sm:$0xff] 0.0
        %386 = vst [vmem:[#allocation2 + $0xe8] sm:$0xff] 0.0
        %387 = vst [vmem:[#allocation2 + $0xf0] sm:$0xff] 0.0
        %388 = vst [vmem:[#allocation2 + $0xf8] sm:$0xff] 0.0
        %389 = vst [vmem:[#allocation2 + $0x100] sm:$0xff] 0.0
        %390 = vst [vmem:[#allocation2 + $0x108] sm:$0xff] 0.0
        %391 = vst [vmem:[#allocation2 + $0x110] sm:$0xff] 0.0
        %392 = vst [vmem:[#allocation2 + $0x118] sm:$0xff] 0.0
        %393 = vst [vmem:[#allocation2 + $0x120] sm:$0xff] 0.0
        %394 = vst [vmem:[#allocation2 + $0x128] sm:$0xff] 0.0
        %395 = vst [vmem:[#allocation2 + $0x130] sm:$0xff] 0.0
        %396 = vst [vmem:[#allocation2 + $0x138] sm:$0xff] 0.0
        %397 = vst [vmem:[#allocation2 + $0x140] sm:$0xff] 0.0
        %398 = vst [vmem:[#allocation2 + $0x148] sm:$0xff] 0.0
        %399 = vst [vmem:[#allocation2 + $0x150] sm:$0xff] 0.0
        %400 = vst [vmem:[#allocation2 + $0x158] sm:$0xff] 0.0
        %401 = vst [vmem:[#allocation2 + $0x160] sm:$0xff] 0.0
        %402 = vst [vmem:[#allocation2 + $0x168] sm:$0xff] 0.0
        %403 = vst [vmem:[#allocation2 + $0x170] sm:$0xff] 0.0
        %404 = vst [vmem:[#allocation2 + $0x178] sm:$0xff] 0.0
        %405 = vst [vmem:[#allocation2 + $0x180] sm:$0xff] 0.0
        %406 = vst [vmem:[#allocation2 + $0x188] sm:$0xff] 0.0
        %407 = vst [vmem:[#allocation2 + $0x190] sm:$0xff] 0.0
        %408 = vst [vmem:[#allocation2 + $0x198] sm:$0xff] 0.0
        %409 = vst [vmem:[#allocation2 + $0x1a0] sm:$0xff] 0.0
        %410 = vst [vmem:[#allocation2 + $0x1a8] sm:$0xff] 0.0
        %411 = vst [vmem:[#allocation2 + $0x1b0] sm:$0xff] 0.0
        %412 = vst [vmem:[#allocation2 + $0x1b8] sm:$0xff] 0.0
        %413 = vst [vmem:[#allocation2 + $0x1c0] sm:$0xff] 0.0
        %414 = vst [vmem:[#allocation2 + $0x1c8] sm:$0xff] 0.0
        %415 = vst [vmem:[#allocation2 + $0x1d0] sm:$0xff] 0.0
        %416 = vst [vmem:[#allocation2 + $0x1d8] sm:$0xff] 0.0
        %417 = vst [vmem:[#allocation2 + $0x1e0] sm:$0xff] 0.0
        %418 = vst [vmem:[#allocation2 + $0x1e8] sm:$0xff] 0.0
        %419 = vst [vmem:[#allocation2 + $0x1f0] sm:$0xff] 0.0
        %420 = vst [vmem:[#allocation2 + $0x1f8] sm:$0xff] 0.0
      $region48: #{hyper_gnn_conv.3} parent=43 // pred_fallthru
        _
      %v421 = vld [vmem:[#allocation2] sm:$0xff]
      %v422 = vld [vmem:[#allocation2 + $0x8] sm:$0xff]
      %v423 = vld [vmem:[#allocation2 + $0x10] sm:$0xff]
      %v424 = vld [vmem:[#allocation2 + $0x18] sm:$0xff]
      %v425 = vld [vmem:[#allocation2 + $0x20] sm:$0xff]
      %v426 = vld [vmem:[#allocation2 + $0x28] sm:$0xff]
      %v427 = vld [vmem:[#allocation2 + $0x30] sm:$0xff]
      %v428 = vld [vmem:[#allocation2 + $0x38] sm:$0xff]
      %v429 = vld [vmem:[#allocation2 + $0x40] sm:$0xff]
      %v430 = vld [vmem:[#allocation2 + $0x48] sm:$0xff]
      %v431 = vld [vmem:[#allocation2 + $0x50] sm:$0xff]
      %v432 = vld [vmem:[#allocation2 + $0x58] sm:$0xff]
      %v433 = vld [vmem:[#allocation2 + $0x60] sm:$0xff]
      %v434 = vld [vmem:[#allocation2 + $0x68] sm:$0xff]
      %v435 = vld [vmem:[#allocation2 + $0x70] sm:$0xff]
      %v436 = vld [vmem:[#allocation2 + $0x78] sm:$0xff]
      %v437 = vld [vmem:[#allocation2 + $0x80] sm:$0xff]
      %v438 = vld [vmem:[#allocation2 + $0x88] sm:$0xff]
      %v439 = vld [vmem:[#allocation2 + $0x90] sm:$0xff]
      %v440 = vld [vmem:[#allocation2 + $0x98] sm:$0xff]
      %v441 = vld [vmem:[#allocation2 + $0xa0] sm:$0xff]
      %v442 = vld [vmem:[#allocation2 + $0xa8] sm:$0xff]
      %v443 = vld [vmem:[#allocation2 + $0xb0] sm:$0xff]
      %v444 = vld [vmem:[#allocation2 + $0xb8] sm:$0xff]
      %v445 = vld [vmem:[#allocation2 + $0xc0] sm:$0xff]
      %v446 = vld [vmem:[#allocation2 + $0xc8] sm:$0xff]
      %v447 = vld [vmem:[#allocation2 + $0xd0] sm:$0xff]
      %v448 = vld [vmem:[#allocation2 + $0xd8] sm:$0xff]
      %v449 = vld [vmem:[#allocation2 + $0xe0] sm:$0xff]
      %v450 = vld [vmem:[#allocation2 + $0xe8] sm:$0xff]
      %v451 = vld [vmem:[#allocation2 + $0xf0] sm:$0xff]
      %v452 = vld [vmem:[#allocation2 + $0xf8] sm:$0xff]
      %v453 = vld [vmem:[#allocation2 + $0x100] sm:$0xff]
      %v454 = vld [vmem:[#allocation2 + $0x108] sm:$0xff]
      %v455 = vld [vmem:[#allocation2 + $0x110] sm:$0xff]
      %v456 = vld [vmem:[#allocation2 + $0x118] sm:$0xff]
      %v457 = vld [vmem:[#allocation2 + $0x120] sm:$0xff]
      %v458 = vld [vmem:[#allocation2 + $0x128] sm:$0xff]
      %v459 = vld [vmem:[#allocation2 + $0x130] sm:$0xff]
      %v460 = vld [vmem:[#allocation2 + $0x138] sm:$0xff]
      %v461 = vld [vmem:[#allocation2 + $0x140] sm:$0xff]
      %v462 = vld [vmem:[#allocation2 + $0x148] sm:$0xff]
      %v463 = vld [vmem:[#allocation2 + $0x150] sm:$0xff]
      %v464 = vld [vmem:[#allocation2 + $0x158] sm:$0xff]
      %v465 = vld [vmem:[#allocation2 + $0x160] sm:$0xff]
      %v466 = vld [vmem:[#allocation2 + $0x168] sm:$0xff]
      %v467 = vld [vmem:[#allocation2 + $0x170] sm:$0xff]
      %v468 = vld [vmem:[#allocation2 + $0x178] sm:$0xff]
      %v469 = vld [vmem:[#allocation2 + $0x180] sm:$0xff]
      %v470 = vld [vmem:[#allocation2 + $0x188] sm:$0xff]
      %v471 = vld [vmem:[#allocation2 + $0x190] sm:$0xff]
      %v472 = vld [vmem:[#allocation2 + $0x198] sm:$0xff]
      %v473 = vld [vmem:[#allocation2 + $0x1a0] sm:$0xff]
      %v474 = vld [vmem:[#allocation2 + $0x1a8] sm:$0xff]
      %v475 = vld [vmem:[#allocation2 + $0x1b0] sm:$0xff]
      %v476 = vld [vmem:[#allocation2 + $0x1b8] sm:$0xff]
      %v477 = vld [vmem:[#allocation2 + $0x1c0] sm:$0xff]
      %v478 = vld [vmem:[#allocation2 + $0x1c8] sm:$0xff]
      %v479 = vld [vmem:[#allocation2 + $0x1d0] sm:$0xff]
      %v480 = vld [vmem:[#allocation2 + $0x1d8] sm:$0xff]
      %v481 = vld [vmem:[#allocation2 + $0x1e0] sm:$0xff]
      %v482 = vld [vmem:[#allocation2 + $0x1e8] sm:$0xff]
      %v483 = vld [vmem:[#allocation2 + $0x1f0] sm:$0xff]
      %v484 = vld [vmem:[#allocation2 + $0x1f8] sm:$0xff]
      %v485 = vld [vmem:[%s325] sm:$0xff]
      %v486 = vld [vmem:[%s325 + $0x8] sm:$0xff]
      %v487 = vld [vmem:[%s325 + $0x10] sm:$0xff]
      %v488 = vld [vmem:[%s325 + $0x18] sm:$0xff]
      %v489 = vld [vmem:[%s325 + $0x20] sm:$0xff]
      %v490 = vld [vmem:[%s325 + $0x28] sm:$0xff]
      %v491 = vld [vmem:[%s325 + $0x30] sm:$0xff]
      %v492 = vld [vmem:[%s325 + $0x38] sm:$0xff]
      %v493 = vld [vmem:[%s325 + $0x40] sm:$0xff]
      %v494 = vld [vmem:[%s325 + $0x48] sm:$0xff]
      %v495 = vld [vmem:[%s325 + $0x50] sm:$0xff]
      %v496 = vld [vmem:[%s325 + $0x58] sm:$0xff]
      %v497 = vld [vmem:[%s325 + $0x60] sm:$0xff]
      %v498 = vld [vmem:[%s325 + $0x68] sm:$0xff]
      %v499 = vld [vmem:[%s325 + $0x70] sm:$0xff]
      %v500 = vld [vmem:[%s325 + $0x78] sm:$0xff]
      %v501 = vld [vmem:[%s325 + $0x80] sm:$0xff]
      %v502 = vld [vmem:[%s325 + $0x88] sm:$0xff]
      %v503 = vld [vmem:[%s325 + $0x90] sm:$0xff]
      %v504 = vld [vmem:[%s325 + $0x98] sm:$0xff]
      %v505 = vld [vmem:[%s325 + $0xa0] sm:$0xff]
      %v506 = vld [vmem:[%s325 + $0xa8] sm:$0xff]
      %v507 = vld [vmem:[%s325 + $0xb0] sm:$0xff]
      %v508 = vld [vmem:[%s325 + $0xb8] sm:$0xff]
      %v509 = vld [vmem:[%s325 + $0xc0] sm:$0xff]
      %v510 = vld [vmem:[%s325 + $0xc8] sm:$0xff]
      %v511 = vld [vmem:[%s325 + $0xd0] sm:$0xff]
      %v512 = vld [vmem:[%s325 + $0xd8] sm:$0xff]
      %v513 = vld [vmem:[%s325 + $0xe0] sm:$0xff]
      %v514 = vld [vmem:[%s325 + $0xe8] sm:$0xff]
      %v515 = vld [vmem:[%s325 + $0xf0] sm:$0xff]
      %v516 = vld [vmem:[%s325 + $0xf8] sm:$0xff]
      %v517 = vld [vmem:[%s325 + $0x100] sm:$0xff]
      %v518 = vld [vmem:[%s325 + $0x108] sm:$0xff]
      %v519 = vld [vmem:[%s325 + $0x110] sm:$0xff]
      %v520 = vld [vmem:[%s325 + $0x118] sm:$0xff]
      %v521 = vld [vmem:[%s325 + $0x120] sm:$0xff]
      %v522 = vld [vmem:[%s325 + $0x128] sm:$0xff]
      %v523 = vld [vmem:[%s325 + $0x130] sm:$0xff]
      %v524 = vld [vmem:[%s325 + $0x138] sm:$0xff]
      %v525 = vld [vmem:[%s325 + $0x140] sm:$0xff]
      %v526 = vld [vmem:[%s325 + $0x148] sm:$0xff]
      %v527 = vld [vmem:[%s325 + $0x150] sm:$0xff]
      %v528 = vld [vmem:[%s325 + $0x158] sm:$0xff]
      %v529 = vld [vmem:[%s325 + $0x160] sm:$0xff]
      %v530 = vld [vmem:[%s325 + $0x168] sm:$0xff]
      %v531 = vld [vmem:[%s325 + $0x170] sm:$0xff]
      %v532 = vld [vmem:[%s325 + $0x178] sm:$0xff]
      %v533 = vld [vmem:[%s325 + $0x180] sm:$0xff]
      %v534 = vld [vmem:[%s325 + $0x188] sm:$0xff]
      %v535 = vld [vmem:[%s325 + $0x190] sm:$0xff]
      %v536 = vld [vmem:[%s325 + $0x198] sm:$0xff]
      %v537 = vld [vmem:[%s325 + $0x1a0] sm:$0xff]
      %v538 = vld [vmem:[%s325 + $0x1a8] sm:$0xff]
      %v539 = vld [vmem:[%s325 + $0x1b0] sm:$0xff]
      %v540 = vld [vmem:[%s325 + $0x1b8] sm:$0xff]
      %v541 = vld [vmem:[%s325 + $0x1c0] sm:$0xff]
      %v542 = vld [vmem:[%s325 + $0x1c8] sm:$0xff]
      %v543 = vld [vmem:[%s325 + $0x1d0] sm:$0xff]
      %v544 = vld [vmem:[%s325 + $0x1d8] sm:$0xff]
      %v545 = vld [vmem:[%s325 + $0x1e0] sm:$0xff]
      %v546 = vld [vmem:[%s325 + $0x1e8] sm:$0xff]
      %v547 = vld [vmem:[%s325 + $0x1f0] sm:$0xff]
      %v548 = vld [vmem:[%s325 + $0x1f8] sm:$0xff]
      %v549 = vld [vmem:[%s325 + $0x200] sm:$0xff]
      %v550 = vld [vmem:[%s325 + $0x208] sm:$0xff]
      %v551 = vld [vmem:[%s325 + $0x210] sm:$0xff]
      %v552 = vld [vmem:[%s325 + $0x218] sm:$0xff]
      %v553 = vld [vmem:[%s325 + $0x220] sm:$0xff]
      %v554 = vld [vmem:[%s325 + $0x228] sm:$0xff]
      %v555 = vld [vmem:[%s325 + $0x230] sm:$0xff]
      %v556 = vld [vmem:[%s325 + $0x238] sm:$0xff]
      %v557 = vld [vmem:[%s325 + $0x240] sm:$0xff]
      %v558 = vld [vmem:[%s325 + $0x248] sm:$0xff]
      %v559 = vld [vmem:[%s325 + $0x250] sm:$0xff]
      %v560 = vld [vmem:[%s325 + $0x258] sm:$0xff]
      %v561 = vld [vmem:[%s325 + $0x260] sm:$0xff]
      %v562 = vld [vmem:[%s325 + $0x268] sm:$0xff]
      %v563 = vld [vmem:[%s325 + $0x270] sm:$0xff]
      %v564 = vld [vmem:[%s325 + $0x278] sm:$0xff]
      %v565 = vld [vmem:[%s325 + $0x280] sm:$0xff]
      %v566 = vld [vmem:[%s325 + $0x288] sm:$0xff]
      %v567 = vld [vmem:[%s325 + $0x290] sm:$0xff]
      %v568 = vld [vmem:[%s325 + $0x298] sm:$0xff]
      %v569 = vld [vmem:[%s325 + $0x2a0] sm:$0xff]
      %v570 = vld [vmem:[%s325 + $0x2a8] sm:$0xff]
      %v571 = vld [vmem:[%s325 + $0x2b0] sm:$0xff]
      %v572 = vld [vmem:[%s325 + $0x2b8] sm:$0xff]
      %v573 = vld [vmem:[%s325 + $0x2c0] sm:$0xff]
      %v574 = vld [vmem:[%s325 + $0x2c8] sm:$0xff]
      %v575 = vld [vmem:[%s325 + $0x2d0] sm:$0xff]
      %v576 = vld [vmem:[%s325 + $0x2d8] sm:$0xff]
      %v577 = vld [vmem:[%s325 + $0x2e0] sm:$0xff]
      %v578 = vld [vmem:[%s325 + $0x2e8] sm:$0xff]
      %v579 = vld [vmem:[%s325 + $0x2f0] sm:$0xff]
      %v580 = vld [vmem:[%s325 + $0x2f8] sm:$0xff]
      %v581 = vld [vmem:[%s325 + $0x300] sm:$0xff]
      %v582 = vld [vmem:[%s325 + $0x308] sm:$0xff]
      %v583 = vld [vmem:[%s325 + $0x310] sm:$0xff]
      %v584 = vld [vmem:[%s325 + $0x318] sm:$0xff]
      %v585 = vld [vmem:[%s325 + $0x320] sm:$0xff]
      %v586 = vld [vmem:[%s325 + $0x328] sm:$0xff]
      %v587 = vld [vmem:[%s325 + $0x330] sm:$0xff]
      %v588 = vld [vmem:[%s325 + $0x338] sm:$0xff]
      %v589 = vld [vmem:[%s325 + $0x340] sm:$0xff]
      %v590 = vld [vmem:[%s325 + $0x348] sm:$0xff]
      %v591 = vld [vmem:[%s325 + $0x350] sm:$0xff]
      %v592 = vld [vmem:[%s325 + $0x358] sm:$0xff]
      %v593 = vld [vmem:[%s325 + $0x360] sm:$0xff]
      %v594 = vld [vmem:[%s325 + $0x368] sm:$0xff]
      %v595 = vld [vmem:[%s325 + $0x370] sm:$0xff]
      %v596 = vld [vmem:[%s325 + $0x378] sm:$0xff]
      %v597 = vld [vmem:[%s325 + $0x380] sm:$0xff]
      %v598 = vld [vmem:[%s325 + $0x388] sm:$0xff]
      %v599 = vld [vmem:[%s325 + $0x390] sm:$0xff]
      %v600 = vld [vmem:[%s325 + $0x398] sm:$0xff]
      %v601 = vld [vmem:[%s325 + $0x3a0] sm:$0xff]
      %v602 = vld [vmem:[%s325 + $0x3a8] sm:$0xff]
      %v603 = vld [vmem:[%s325 + $0x3b0] sm:$0xff]
      %v604 = vld [vmem:[%s325 + $0x3b8] sm:$0xff]
      %v605 = vld [vmem:[%s325 + $0x3c0] sm:$0xff]
      %v606 = vld [vmem:[%s325 + $0x3c8] sm:$0xff]
      %v607 = vld [vmem:[%s325 + $0x3d0] sm:$0xff]
      %v608 = vld [vmem:[%s325 + $0x3d8] sm:$0xff]
      %v609 = vld [vmem:[%s325 + $0x3e0] sm:$0xff]
      %v610 = vld [vmem:[%s325 + $0x3e8] sm:$0xff]
      %v611 = vld [vmem:[%s325 + $0x3f0] sm:$0xff]
      %v612 = vld [vmem:[%s325 + $0x3f8] sm:$0xff]
      %v613 = vld [vmem:[%s332] sm:$0xf]
      %v614 = vld [vmem:[%s332 + $0x4] sm:$0xf]
      %v615 = vld [vmem:[%s332 + $0x8] sm:$0xf]
      %v616 = vld [vmem:[%s332 + $0xc] sm:$0xf]
      %v617 = vld [vmem:[%s332 + $0x10] sm:$0xf]
      %v618 = vld [vmem:[%s332 + $0x14] sm:$0xf]
      %v619 = vld [vmem:[%s332 + $0x18] sm:$0xf]
      %v620 = vld [vmem:[%s332 + $0x1c] sm:$0xf]
      %v621 = vld [vmem:[%s332 + $0x20] sm:$0xf]
      %v622 = vld [vmem:[%s332 + $0x24] sm:$0xf]
      %v623 = vld [vmem:[%s332 + $0x28] sm:$0xf]
      %v624 = vld [vmem:[%s332 + $0x2c] sm:$0xf]
      %v625 = vld [vmem:[%s332 + $0x30] sm:$0xf]
      %v626 = vld [vmem:[%s332 + $0x34] sm:$0xf]
      %v627 = vld [vmem:[%s332 + $0x38] sm:$0xf]
      %v628 = vld [vmem:[%s332 + $0x3c] sm:$0xf]
      %v629 = vld [vmem:[%s332 + $0x40] sm:$0xf]
      %v630 = vld [vmem:[%s332 + $0x44] sm:$0xf]
      %v631 = vld [vmem:[%s332 + $0x48] sm:$0xf]
      %v632 = vld [vmem:[%s332 + $0x4c] sm:$0xf]
      %v633 = vld [vmem:[%s332 + $0x50] sm:$0xf]
      %v634 = vld [vmem:[%s332 + $0x54] sm:$0xf]
      %v635 = vld [vmem:[%s332 + $0x58] sm:$0xf]
      %v636 = vld [vmem:[%s332 + $0x5c] sm:$0xf]
      %v637 = vld [vmem:[%s332 + $0x60] sm:$0xf]
      %v638 = vld [vmem:[%s332 + $0x64] sm:$0xf]
      %v639 = vld [vmem:[%s332 + $0x68] sm:$0xf]
      %v640 = vld [vmem:[%s332 + $0x6c] sm:$0xf]
      %v641 = vld [vmem:[%s332 + $0x70] sm:$0xf]
      %v642 = vld [vmem:[%s332 + $0x74] sm:$0xf]
      %v643 = vld [vmem:[%s332 + $0x78] sm:$0xf]
      %v644 = vld [vmem:[%s332 + $0x7c] sm:$0xf]
      %v645 = vld [vmem:[%s332 + $0x80] sm:$0xf]
      %v646 = vld [vmem:[%s332 + $0x84] sm:$0xf]
      %v647 = vld [vmem:[%s332 + $0x88] sm:$0xf]
      %v648 = vld [vmem:[%s332 + $0x8c] sm:$0xf]
      %v649 = vld [vmem:[%s332 + $0x90] sm:$0xf]
      %v650 = vld [vmem:[%s332 + $0x94] sm:$0xf]
      %v651 = vld [vmem:[%s332 + $0x98] sm:$0xf]
      %v652 = vld [vmem:[%s332 + $0x9c] sm:$0xf]
      %v653 = vld [vmem:[%s332 + $0xa0] sm:$0xf]
      %v654 = vld [vmem:[%s332 + $0xa4] sm:$0xf]
      %v655 = vld [vmem:[%s332 + $0xa8] sm:$0xf]
      %v656 = vld [vmem:[%s332 + $0xac] sm:$0xf]
      %v657 = vld [vmem:[%s332 + $0xb0] sm:$0xf]
      %v658 = vld [vmem:[%s332 + $0xb4] sm:$0xf]
      %v659 = vld [vmem:[%s332 + $0xb8] sm:$0xf]
      %v660 = vld [vmem:[%s332 + $0xbc] sm:$0xf]
      %v661 = vld [vmem:[%s332 + $0xc0] sm:$0xf]
      %v662 = vld [vmem:[%s332 + $0xc4] sm:$0xf]
      %v663 = vld [vmem:[%s332 + $0xc8] sm:$0xf]
      %v664 = vld [vmem:[%s332 + $0xcc] sm:$0xf]
      %v665 = vld [vmem:[%s332 + $0xd0] sm:$0xf]
      %v666 = vld [vmem:[%s332 + $0xd4] sm:$0xf]
      %v667 = vld [vmem:[%s332 + $0xd8] sm:$0xf]
      %v668 = vld [vmem:[%s332 + $0xdc] sm:$0xf]
      %v669 = vld [vmem:[%s332 + $0xe0] sm:$0xf]
      %v670 = vld [vmem:[%s332 + $0xe4] sm:$0xf]
      %v671 = vld [vmem:[%s332 + $0xe8] sm:$0xf]
      %v672 = vld [vmem:[%s332 + $0xec] sm:$0xf]
      %v673 = vld [vmem:[%s332 + $0xf0] sm:$0xf]
      %v674 = vld [vmem:[%s332 + $0xf4] sm:$0xf]
      %v675 = vld [vmem:[%s332 + $0xf8] sm:$0xf]
      %v676 = vld [vmem:[%s332 + $0xfc] sm:$0xf]
      %v805 = vunpack.c.l.b16 %v485
      %v806 = vunpack.c.h.b16 %v485
      %v807 = vunpack.c.l.b16 %v486
      %v808 = vunpack.c.h.b16 %v486
      %v809 = vunpack.c.l.b16 %v487
      %v810 = vunpack.c.h.b16 %v487
      %v811 = vunpack.c.l.b16 %v488
      %v812 = vunpack.c.h.b16 %v488
      %v813 = vunpack.c.l.b16 %v489
      %v814 = vunpack.c.h.b16 %v489
      %v815 = vunpack.c.l.b16 %v490
      %v816 = vunpack.c.h.b16 %v490
      %v817 = vunpack.c.l.b16 %v491
      %v818 = vunpack.c.h.b16 %v491
      %v819 = vunpack.c.l.b16 %v492
      %v820 = vunpack.c.h.b16 %v492
      %v821 = vunpack.c.l.b16 %v493
      %v822 = vunpack.c.h.b16 %v493
      %v823 = vunpack.c.l.b16 %v494
      %v824 = vunpack.c.h.b16 %v494
      %v825 = vunpack.c.l.b16 %v495
      %v826 = vunpack.c.h.b16 %v495
      %v827 = vunpack.c.l.b16 %v496
      %v828 = vunpack.c.h.b16 %v496
      %v829 = vunpack.c.l.b16 %v497
      %v830 = vunpack.c.h.b16 %v497
      %v831 = vunpack.c.l.b16 %v498
      %v832 = vunpack.c.h.b16 %v498
      %v833 = vunpack.c.l.b16 %v499
      %v834 = vunpack.c.h.b16 %v499
      %v835 = vunpack.c.l.b16 %v500
      %v836 = vunpack.c.h.b16 %v500
      %v837 = vunpack.c.l.b16 %v501
      %v838 = vunpack.c.h.b16 %v501
      %v839 = vunpack.c.l.b16 %v502
      %v840 = vunpack.c.h.b16 %v502
      %v841 = vunpack.c.l.b16 %v503
      %v842 = vunpack.c.h.b16 %v503
      %v843 = vunpack.c.l.b16 %v504
      %v844 = vunpack.c.h.b16 %v504
      %v845 = vunpack.c.l.b16 %v505
      %v846 = vunpack.c.h.b16 %v505
      %v847 = vunpack.c.l.b16 %v506
      %v848 = vunpack.c.h.b16 %v506
      %v849 = vunpack.c.l.b16 %v507
      %v850 = vunpack.c.h.b16 %v507
      %v851 = vunpack.c.l.b16 %v508
      %v852 = vunpack.c.h.b16 %v508
      %v853 = vunpack.c.l.b16 %v509
      %v854 = vunpack.c.h.b16 %v509
      %v855 = vunpack.c.l.b16 %v510
      %v856 = vunpack.c.h.b16 %v510
      %v857 = vunpack.c.l.b16 %v511
      %v858 = vunpack.c.h.b16 %v511
      %v859 = vunpack.c.l.b16 %v512
      %v860 = vunpack.c.h.b16 %v512
      %v861 = vunpack.c.l.b16 %v513
      %v862 = vunpack.c.h.b16 %v513
      %v863 = vunpack.c.l.b16 %v514
      %v864 = vunpack.c.h.b16 %v514
      %v865 = vunpack.c.l.b16 %v515
      %v866 = vunpack.c.h.b16 %v515
      %v867 = vunpack.c.l.b16 %v516
      %v868 = vunpack.c.h.b16 %v516
      %v869 = vunpack.c.l.b16 %v517
      %v870 = vunpack.c.h.b16 %v517
      %v871 = vunpack.c.l.b16 %v518
      %v872 = vunpack.c.h.b16 %v518
      %v873 = vunpack.c.l.b16 %v519
      %v874 = vunpack.c.h.b16 %v519
      %v875 = vunpack.c.l.b16 %v520
      %v876 = vunpack.c.h.b16 %v520
      %v877 = vunpack.c.l.b16 %v521
      %v878 = vunpack.c.h.b16 %v521
      %v879 = vunpack.c.l.b16 %v522
      %v880 = vunpack.c.h.b16 %v522
      %v881 = vunpack.c.l.b16 %v523
      %v882 = vunpack.c.h.b16 %v523
      %v883 = vunpack.c.l.b16 %v524
      %v884 = vunpack.c.h.b16 %v524
      %v885 = vunpack.c.l.b16 %v525
      %v886 = vunpack.c.h.b16 %v525
      %v887 = vunpack.c.l.b16 %v526
      %v888 = vunpack.c.h.b16 %v526
      %v889 = vunpack.c.l.b16 %v527
      %v890 = vunpack.c.h.b16 %v527
      %v891 = vunpack.c.l.b16 %v528
      %v892 = vunpack.c.h.b16 %v528
      %v893 = vunpack.c.l.b16 %v529
      %v894 = vunpack.c.h.b16 %v529
      %v895 = vunpack.c.l.b16 %v530
      %v896 = vunpack.c.h.b16 %v530
      %v897 = vunpack.c.l.b16 %v531
      %v898 = vunpack.c.h.b16 %v531
      %v899 = vunpack.c.l.b16 %v532
      %v900 = vunpack.c.h.b16 %v532
      %v901 = vunpack.c.l.b16 %v533
      %v902 = vunpack.c.h.b16 %v533
      %v903 = vunpack.c.l.b16 %v534
      %v904 = vunpack.c.h.b16 %v534
      %v905 = vunpack.c.l.b16 %v535
      %v906 = vunpack.c.h.b16 %v535
      %v907 = vunpack.c.l.b16 %v536
      %v908 = vunpack.c.h.b16 %v536
      %v909 = vunpack.c.l.b16 %v537
      %v910 = vunpack.c.h.b16 %v537
      %v911 = vunpack.c.l.b16 %v538
      %v912 = vunpack.c.h.b16 %v538
      %v913 = vunpack.c.l.b16 %v539
      %v914 = vunpack.c.h.b16 %v539
      %v915 = vunpack.c.l.b16 %v540
      %v916 = vunpack.c.h.b16 %v540
      %v917 = vunpack.c.l.b16 %v541
      %v918 = vunpack.c.h.b16 %v541
      %v919 = vunpack.c.l.b16 %v542
      %v920 = vunpack.c.h.b16 %v542
      %v921 = vunpack.c.l.b16 %v543
      %v922 = vunpack.c.h.b16 %v543
      %v923 = vunpack.c.l.b16 %v544
      %v924 = vunpack.c.h.b16 %v544
      %v925 = vunpack.c.l.b16 %v545
      %v926 = vunpack.c.h.b16 %v545
      %v927 = vunpack.c.l.b16 %v546
      %v928 = vunpack.c.h.b16 %v546
      %v929 = vunpack.c.l.b16 %v547
      %v930 = vunpack.c.h.b16 %v547
      %v931 = vunpack.c.l.b16 %v548
      %v932 = vunpack.c.h.b16 %v548
      %v933 = vunpack.c.l.b16 %v549
      %v934 = vunpack.c.h.b16 %v549
      %v935 = vunpack.c.l.b16 %v550
      %v936 = vunpack.c.h.b16 %v550
      %v937 = vunpack.c.l.b16 %v551
      %v938 = vunpack.c.h.b16 %v551
      %v939 = vunpack.c.l.b16 %v552
      %v940 = vunpack.c.h.b16 %v552
      %v941 = vunpack.c.l.b16 %v553
      %v942 = vunpack.c.h.b16 %v553
      %v943 = vunpack.c.l.b16 %v554
      %v944 = vunpack.c.h.b16 %v554
      %v945 = vunpack.c.l.b16 %v555
      %v946 = vunpack.c.h.b16 %v555
      %v947 = vunpack.c.l.b16 %v556
      %v948 = vunpack.c.h.b16 %v556
      %v949 = vunpack.c.l.b16 %v557
      %v950 = vunpack.c.h.b16 %v557
      %v951 = vunpack.c.l.b16 %v558
      %v952 = vunpack.c.h.b16 %v558
      %v953 = vunpack.c.l.b16 %v559
      %v954 = vunpack.c.h.b16 %v559
      %v955 = vunpack.c.l.b16 %v560
      %v956 = vunpack.c.h.b16 %v560
      %v957 = vunpack.c.l.b16 %v561
      %v958 = vunpack.c.h.b16 %v561
      %v959 = vunpack.c.l.b16 %v562
      %v960 = vunpack.c.h.b16 %v562
      %v961 = vunpack.c.l.b16 %v563
      %v962 = vunpack.c.h.b16 %v563
      %v963 = vunpack.c.l.b16 %v564
      %v964 = vunpack.c.h.b16 %v564
      %v965 = vunpack.c.l.b16 %v565
      %v966 = vunpack.c.h.b16 %v565
      %v967 = vunpack.c.l.b16 %v566
      %v968 = vunpack.c.h.b16 %v566
      %v969 = vunpack.c.l.b16 %v567
      %v970 = vunpack.c.h.b16 %v567
      %v971 = vunpack.c.l.b16 %v568
      %v972 = vunpack.c.h.b16 %v568
      %v973 = vunpack.c.l.b16 %v569
      %v974 = vunpack.c.h.b16 %v569
      %v975 = vunpack.c.l.b16 %v570
      %v976 = vunpack.c.h.b16 %v570
      %v977 = vunpack.c.l.b16 %v571
      %v978 = vunpack.c.h.b16 %v571
      %v979 = vunpack.c.l.b16 %v572
      %v980 = vunpack.c.h.b16 %v572
      %v981 = vunpack.c.l.b16 %v573
      %v982 = vunpack.c.h.b16 %v573
      %v983 = vunpack.c.l.b16 %v574
      %v984 = vunpack.c.h.b16 %v574
      %v985 = vunpack.c.l.b16 %v575
      %v986 = vunpack.c.h.b16 %v575
      %v987 = vunpack.c.l.b16 %v576
      %v988 = vunpack.c.h.b16 %v576
      %v989 = vunpack.c.l.b16 %v577
      %v990 = vunpack.c.h.b16 %v577
      %v991 = vunpack.c.l.b16 %v578
      %v992 = vunpack.c.h.b16 %v578
      %v993 = vunpack.c.l.b16 %v579
      %v994 = vunpack.c.h.b16 %v579
      %v995 = vunpack.c.l.b16 %v580
      %v996 = vunpack.c.h.b16 %v580
      %v997 = vunpack.c.l.b16 %v581
      %v998 = vunpack.c.h.b16 %v581
      %v999 = vunpack.c.l.b16 %v582
      %v1000 = vunpack.c.h.b16 %v582
      %v1001 = vunpack.c.l.b16 %v583
      %v1002 = vunpack.c.h.b16 %v583
      %v1003 = vunpack.c.l.b16 %v584
      %v1004 = vunpack.c.h.b16 %v584
      %v1005 = vunpack.c.l.b16 %v585
      %v1006 = vunpack.c.h.b16 %v585
      %v1007 = vunpack.c.l.b16 %v586
      %v1008 = vunpack.c.h.b16 %v586
      %v1009 = vunpack.c.l.b16 %v587
      %v1010 = vunpack.c.h.b16 %v587
      %v1011 = vunpack.c.l.b16 %v588
      %v1012 = vunpack.c.h.b16 %v588
      %v1013 = vunpack.c.l.b16 %v589
      %v1014 = vunpack.c.h.b16 %v589
      %v1015 = vunpack.c.l.b16 %v590
      %v1016 = vunpack.c.h.b16 %v590
      %v1017 = vunpack.c.l.b16 %v591
      %v1018 = vunpack.c.h.b16 %v591
      %v1019 = vunpack.c.l.b16 %v592
      %v1020 = vunpack.c.h.b16 %v592
      %v1021 = vunpack.c.l.b16 %v593
      %v1022 = vunpack.c.h.b16 %v593
      %v1023 = vunpack.c.l.b16 %v594
      %v1024 = vunpack.c.h.b16 %v594
      %v1025 = vunpack.c.l.b16 %v595
      %v1026 = vunpack.c.h.b16 %v595
      %v1027 = vunpack.c.l.b16 %v596
      %v1028 = vunpack.c.h.b16 %v596
      %v1029 = vunpack.c.l.b16 %v597
      %v1030 = vunpack.c.h.b16 %v597
      %v1031 = vunpack.c.l.b16 %v598
      %v1032 = vunpack.c.h.b16 %v598
      %v1033 = vunpack.c.l.b16 %v599
      %v1034 = vunpack.c.h.b16 %v599
      %v1035 = vunpack.c.l.b16 %v600
      %v1036 = vunpack.c.h.b16 %v600
      %v1037 = vunpack.c.l.b16 %v601
      %v1038 = vunpack.c.h.b16 %v601
      %v1039 = vunpack.c.l.b16 %v602
      %v1040 = vunpack.c.h.b16 %v602
      %v1041 = vunpack.c.l.b16 %v603
      %v1042 = vunpack.c.h.b16 %v603
      %v1043 = vunpack.c.l.b16 %v604
      %v1044 = vunpack.c.h.b16 %v604
      %v1045 = vunpack.c.l.b16 %v605
      %v1046 = vunpack.c.h.b16 %v605
      %v1047 = vunpack.c.l.b16 %v606
      %v1048 = vunpack.c.h.b16 %v606
      %v1049 = vunpack.c.l.b16 %v607
      %v1050 = vunpack.c.h.b16 %v607
      %v1051 = vunpack.c.l.b16 %v608
      %v1052 = vunpack.c.h.b16 %v608
      %v1053 = vunpack.c.l.b16 %v609
      %v1054 = vunpack.c.h.b16 %v609
      %v1055 = vunpack.c.l.b16 %v610
      %v1056 = vunpack.c.h.b16 %v610
      %v1057 = vunpack.c.l.b16 %v611
      %v1058 = vunpack.c.h.b16 %v611
      %v1059 = vunpack.c.l.b16 %v612
      %v1060 = vunpack.c.h.b16 %v612
      %v1061 = vpack.c.b16 %v809, %v805
      %v1062 = vpack.c.b16 %v810, %v806
      %v1063 = vpack.c.b16 %v811, %v807
      %v1064 = vpack.c.b16 %v812, %v808
      %v1065 = vpack.c.b16 %v817, %v813
      %v1066 = vpack.c.b16 %v818, %v814
      %v1067 = vpack.c.b16 %v819, %v815
      %v1068 = vpack.c.b16 %v820, %v816
      %v1069 = vpack.c.b16 %v825, %v821
      %v1070 = vpack.c.b16 %v826, %v822
      %v1071 = vpack.c.b16 %v827, %v823
      %v1072 = vpack.c.b16 %v828, %v824
      %v1073 = vpack.c.b16 %v833, %v829
      %v1074 = vpack.c.b16 %v834, %v830
      %v1075 = vpack.c.b16 %v835, %v831
      %v1076 = vpack.c.b16 %v836, %v832
      %v1077 = vpack.c.b16 %v841, %v837
      %v1078 = vpack.c.b16 %v842, %v838
      %v1079 = vpack.c.b16 %v843, %v839
      %v1080 = vpack.c.b16 %v844, %v840
      %v1081 = vpack.c.b16 %v849, %v845
      %v1082 = vpack.c.b16 %v850, %v846
      %v1083 = vpack.c.b16 %v851, %v847
      %v1084 = vpack.c.b16 %v852, %v848
      %v1085 = vpack.c.b16 %v857, %v853
      %v1086 = vpack.c.b16 %v858, %v854
      %v1087 = vpack.c.b16 %v859, %v855
      %v1088 = vpack.c.b16 %v860, %v856
      %v1089 = vpack.c.b16 %v865, %v861
      %v1090 = vpack.c.b16 %v866, %v862
      %v1091 = vpack.c.b16 %v867, %v863
      %v1092 = vpack.c.b16 %v868, %v864
      %v1093 = vpack.c.b16 %v873, %v869
      %v1094 = vpack.c.b16 %v874, %v870
      %v1095 = vpack.c.b16 %v875, %v871
      %v1096 = vpack.c.b16 %v876, %v872
      %v1097 = vpack.c.b16 %v881, %v877
      %v1098 = vpack.c.b16 %v882, %v878
      %v1099 = vpack.c.b16 %v883, %v879
      %v1100 = vpack.c.b16 %v884, %v880
      %v1101 = vpack.c.b16 %v889, %v885
      %v1102 = vpack.c.b16 %v890, %v886
      %v1103 = vpack.c.b16 %v891, %v887
      %v1104 = vpack.c.b16 %v892, %v888
      %v1105 = vpack.c.b16 %v897, %v893
      %v1106 = vpack.c.b16 %v898, %v894
      %v1107 = vpack.c.b16 %v899, %v895
      %v1108 = vpack.c.b16 %v900, %v896
      %v1109 = vpack.c.b16 %v905, %v901
      %v1110 = vpack.c.b16 %v906, %v902
      %v1111 = vpack.c.b16 %v907, %v903
      %v1112 = vpack.c.b16 %v908, %v904
      %v1113 = vpack.c.b16 %v913, %v909
      %v1114 = vpack.c.b16 %v914, %v910
      %v1115 = vpack.c.b16 %v915, %v911
      %v1116 = vpack.c.b16 %v916, %v912
      %v1117 = vpack.c.b16 %v921, %v917
      %v1118 = vpack.c.b16 %v922, %v918
      %v1119 = vpack.c.b16 %v923, %v919
      %v1120 = vpack.c.b16 %v924, %v920
      %v1121 = vpack.c.b16 %v929, %v925
      %v1122 = vpack.c.b16 %v930, %v926
      %v1123 = vpack.c.b16 %v931, %v927
      %v1124 = vpack.c.b16 %v932, %v928
      %v1125 = vpack.c.b16 %v937, %v933
      %v1126 = vpack.c.b16 %v938, %v934
      %v1127 = vpack.c.b16 %v939, %v935
      %v1128 = vpack.c.b16 %v940, %v936
      %v1129 = vpack.c.b16 %v945, %v941
      %v1130 = vpack.c.b16 %v946, %v942
      %v1131 = vpack.c.b16 %v947, %v943
      %v1132 = vpack.c.b16 %v948, %v944
      %v1133 = vpack.c.b16 %v953, %v949
      %v1134 = vpack.c.b16 %v954, %v950
      %v1135 = vpack.c.b16 %v955, %v951
      %v1136 = vpack.c.b16 %v956, %v952
      %v1137 = vpack.c.b16 %v961, %v957
      %v1138 = vpack.c.b16 %v962, %v958
      %v1139 = vpack.c.b16 %v963, %v959
      %v1140 = vpack.c.b16 %v964, %v960
      %v1141 = vpack.c.b16 %v969, %v965
      %v1142 = vpack.c.b16 %v970, %v966
      %v1143 = vpack.c.b16 %v971, %v967
      %v1144 = vpack.c.b16 %v972, %v968
      %v1145 = vpack.c.b16 %v977, %v973
      %v1146 = vpack.c.b16 %v978, %v974
      %v1147 = vpack.c.b16 %v979, %v975
      %v1148 = vpack.c.b16 %v980, %v976
      %v1149 = vpack.c.b16 %v985, %v981
      %v1150 = vpack.c.b16 %v986, %v982
      %v1151 = vpack.c.b16 %v987, %v983
      %v1152 = vpack.c.b16 %v988, %v984
      %v1153 = vpack.c.b16 %v993, %v989
      %v1154 = vpack.c.b16 %v994, %v990
      %v1155 = vpack.c.b16 %v995, %v991
      %v1156 = vpack.c.b16 %v996, %v992
      %v1157 = vpack.c.b16 %v1001, %v997
      %v1158 = vpack.c.b16 %v1002, %v998
      %v1159 = vpack.c.b16 %v1003, %v999
      %v1160 = vpack.c.b16 %v1004, %v1000
      %v1161 = vpack.c.b16 %v1009, %v1005
      %v1162 = vpack.c.b16 %v1010, %v1006
      %v1163 = vpack.c.b16 %v1011, %v1007
      %v1164 = vpack.c.b16 %v1012, %v1008
      %v1165 = vpack.c.b16 %v1017, %v1013
      %v1166 = vpack.c.b16 %v1018, %v1014
      %v1167 = vpack.c.b16 %v1019, %v1015
      %v1168 = vpack.c.b16 %v1020, %v1016
      %v1169 = vpack.c.b16 %v1025, %v1021
      %v1170 = vpack.c.b16 %v1026, %v1022
      %v1171 = vpack.c.b16 %v1027, %v1023
      %v1172 = vpack.c.b16 %v1028, %v1024
      %v1173 = vpack.c.b16 %v1033, %v1029
      %v1174 = vpack.c.b16 %v1034, %v1030
      %v1175 = vpack.c.b16 %v1035, %v1031
      %v1176 = vpack.c.b16 %v1036, %v1032
      %v1177 = vpack.c.b16 %v1041, %v1037
      %v1178 = vpack.c.b16 %v1042, %v1038
      %v1179 = vpack.c.b16 %v1043, %v1039
      %v1180 = vpack.c.b16 %v1044, %v1040
      %v1181 = vpack.c.b16 %v1049, %v1045
      %v1182 = vpack.c.b16 %v1050, %v1046
      %v1183 = vpack.c.b16 %v1051, %v1047
      %v1184 = vpack.c.b16 %v1052, %v1048
      %v1185 = vpack.c.b16 %v1057, %v1053
      %v1186 = vpack.c.b16 %v1058, %v1054
      %v1187 = vpack.c.b16 %v1059, %v1055
      %v1188 = vpack.c.b16 %v1060, %v1056
      %v1381 = vunpack.c.l.b16 %v613
      %v1382 = vunpack.c.l.b16 %v614
      %v1383 = vunpack.c.l.b16 %v615
      %v1384 = vunpack.c.l.b16 %v616
      %v1385 = vunpack.c.l.b16 %v617
      %v1386 = vunpack.c.l.b16 %v618
      %v1387 = vunpack.c.l.b16 %v619
      %v1388 = vunpack.c.l.b16 %v620
      %v1389 = vunpack.c.l.b16 %v621
      %v1390 = vunpack.c.l.b16 %v622
      %v1391 = vunpack.c.l.b16 %v623
      %v1392 = vunpack.c.l.b16 %v624
      %v1393 = vunpack.c.l.b16 %v625
      %v1394 = vunpack.c.l.b16 %v626
      %v1395 = vunpack.c.l.b16 %v627
      %v1396 = vunpack.c.l.b16 %v628
      %v1397 = vunpack.c.l.b16 %v629
      %v1398 = vunpack.c.l.b16 %v630
      %v1399 = vunpack.c.l.b16 %v631
      %v1400 = vunpack.c.l.b16 %v632
      %v1401 = vunpack.c.l.b16 %v633
      %v1402 = vunpack.c.l.b16 %v634
      %v1403 = vunpack.c.l.b16 %v635
      %v1404 = vunpack.c.l.b16 %v636
      %v1405 = vunpack.c.l.b16 %v637
      %v1406 = vunpack.c.l.b16 %v638
      %v1407 = vunpack.c.l.b16 %v639
      %v1408 = vunpack.c.l.b16 %v640
      %v1409 = vunpack.c.l.b16 %v641
      %v1410 = vunpack.c.l.b16 %v642
      %v1411 = vunpack.c.l.b16 %v643
      %v1412 = vunpack.c.l.b16 %v644
      %v1413 = vunpack.c.l.b16 %v645
      %v1414 = vunpack.c.l.b16 %v646
      %v1415 = vunpack.c.l.b16 %v647
      %v1416 = vunpack.c.l.b16 %v648
      %v1417 = vunpack.c.l.b16 %v649
      %v1418 = vunpack.c.l.b16 %v650
      %v1419 = vunpack.c.l.b16 %v651
      %v1420 = vunpack.c.l.b16 %v652
      %v1421 = vunpack.c.l.b16 %v653
      %v1422 = vunpack.c.l.b16 %v654
      %v1423 = vunpack.c.l.b16 %v655
      %v1424 = vunpack.c.l.b16 %v656
      %v1425 = vunpack.c.l.b16 %v657
      %v1426 = vunpack.c.l.b16 %v658
      %v1427 = vunpack.c.l.b16 %v659
      %v1428 = vunpack.c.l.b16 %v660
      %v1429 = vunpack.c.l.b16 %v661
      %v1430 = vunpack.c.l.b16 %v662
      %v1431 = vunpack.c.l.b16 %v663
      %v1432 = vunpack.c.l.b16 %v664
      %v1433 = vunpack.c.l.b16 %v665
      %v1434 = vunpack.c.l.b16 %v666
      %v1435 = vunpack.c.l.b16 %v667
      %v1436 = vunpack.c.l.b16 %v668
      %v1437 = vunpack.c.l.b16 %v669
      %v1438 = vunpack.c.l.b16 %v670
      %v1439 = vunpack.c.l.b16 %v671
      %v1440 = vunpack.c.l.b16 %v672
      %v1441 = vunpack.c.l.b16 %v673
      %v1442 = vunpack.c.l.b16 %v674
      %v1443 = vunpack.c.l.b16 %v675
      %v1444 = vunpack.c.l.b16 %v676
      %v1445 = vpack.c.b16 %v1382, %v1381
      %v1446 = vpack.c.b16 %v1384, %v1383
      %v1447 = vpack.c.b16 %v1386, %v1385
      %v1448 = vpack.c.b16 %v1388, %v1387
      %v1449 = vpack.c.b16 %v1390, %v1389
      %v1450 = vpack.c.b16 %v1392, %v1391
      %v1451 = vpack.c.b16 %v1394, %v1393
      %v1452 = vpack.c.b16 %v1396, %v1395
      %v1453 = vpack.c.b16 %v1398, %v1397
      %v1454 = vpack.c.b16 %v1400, %v1399
      %v1455 = vpack.c.b16 %v1402, %v1401
      %v1456 = vpack.c.b16 %v1404, %v1403
      %v1457 = vpack.c.b16 %v1406, %v1405
      %v1458 = vpack.c.b16 %v1408, %v1407
      %v1459 = vpack.c.b16 %v1410, %v1409
      %v1460 = vpack.c.b16 %v1412, %v1411
      %v1461 = vpack.c.b16 %v1414, %v1413
      %v1462 = vpack.c.b16 %v1416, %v1415
      %v1463 = vpack.c.b16 %v1418, %v1417
      %v1464 = vpack.c.b16 %v1420, %v1419
      %v1465 = vpack.c.b16 %v1422, %v1421
      %v1466 = vpack.c.b16 %v1424, %v1423
      %v1467 = vpack.c.b16 %v1426, %v1425
      %v1468 = vpack.c.b16 %v1428, %v1427
      %v1469 = vpack.c.b16 %v1430, %v1429
      %v1470 = vpack.c.b16 %v1432, %v1431
      %v1471 = vpack.c.b16 %v1434, %v1433
      %v1472 = vpack.c.b16 %v1436, %v1435
      %v1473 = vpack.c.b16 %v1438, %v1437
      %v1474 = vpack.c.b16 %v1440, %v1439
      %v1475 = vpack.c.b16 %v1442, %v1441
      %v1476 = vpack.c.b16 %v1444, %v1443
      %1509 = vmatprep.subr.bf16.mxu0 0
      %1510 = vmatpush1.bf16.msra.mxu0 %v1445
      %1511 = vmatprep.subr.bf16.mxu0 0
      %1512 = vmatpush1.bf16.msra.mxu0 %v1446
      %1513 = vmatprep.subr.bf16.mxu0 0
      %1514 = vmatpush1.bf16.msra.mxu0 %v1447
      %1515 = vmatprep.subr.bf16.mxu0 0
      %1516 = vmatpush1.bf16.msra.mxu0 %v1448
      %1517 = vmatprep.subr.bf16.mxu0 0
      %1518 = vmatpush1.bf16.msra.mxu0 %v1449
      %1519 = vmatprep.subr.bf16.mxu0 0
      %1520 = vmatpush1.bf16.msra.mxu0 %v1450
      %1521 = vmatprep.subr.bf16.mxu0 0
      %1522 = vmatpush1.bf16.msra.mxu0 %v1451
      %1523 = vmatprep.subr.bf16.mxu0 0
      %1524 = vmatpush1.bf16.msra.mxu0 %v1452
      %1525 = vmatprep.subr.bf16.mxu0 0
      %1526 = vmatpush1.bf16.msra.mxu0 %v1453
      %1527 = vmatprep.subr.bf16.mxu0 0
      %1528 = vmatpush1.bf16.msra.mxu0 %v1454
      %1529 = vmatprep.subr.bf16.mxu0 0
      %1530 = vmatpush1.bf16.msra.mxu0 %v1455
      %1531 = vmatprep.subr.bf16.mxu0 0
      %1532 = vmatpush1.bf16.msra.mxu0 %v1456
      %1533 = vmatprep.subr.bf16.mxu0 0
      %1534 = vmatpush1.bf16.msra.mxu0 %v1457
      %1535 = vmatprep.subr.bf16.mxu0 0
      %1536 = vmatpush1.bf16.msra.mxu0 %v1458
      %1537 = vmatprep.subr.bf16.mxu0 0
      %1538 = vmatpush1.bf16.msra.mxu0 %v1459
      %1539 = vmatprep.subr.bf16.mxu0 0
      %1540 = vmatpush1.bf16.msra.mxu0 %v1460
      %1541 = vmatprep.mubr.bf16.mxu0 %v1062
      %1542 = vmatmul.mubr.bf16.gmra.mrb[0].mxu0 %v1061
      %v1543 = vpop.f32.mrb[0].mxu0
      %v1544 = vadd.f32 0.0, %v1543
      %v1545 = vpop.f32.mrb[0].mxu0
      %v1546 = vpop.f32.mrb[0].mxu0
      %v1547 = vadd.f32 0.0, %v1546
      %v1548 = vpop.f32.mrb[0].mxu0
      %1549 = vmatprep.mubr.bf16.mxu0 %v1066
      %1550 = vmatmul.mubr.bf16.gmra.mrb[0].mxu0 %v1065
      %v1551 = vpop.f32.mrb[0].mxu0
      %v1552 = vadd.f32 0.0, %v1551
      %v1553 = vpop.f32.mrb[0].mxu0
      %v1554 = vpop.f32.mrb[0].mxu0
      %v1555 = vadd.f32 0.0, %v1554
      %v1556 = vpop.f32.mrb[0].mxu0
      %1557 = vmatprep.mubr.bf16.mxu0 %v1070
      %1558 = vmatmul.mubr.bf16.gmra.mrb[0].mxu0 %v1069
      %v1559 = vpop.f32.mrb[0].mxu0
      %v1560 = vadd.f32 0.0, %v1559
      %v1561 = vpop.f32.mrb[0].mxu0
      %v1562 = vpop.f32.mrb[0].mxu0
      %v1563 = vadd.f32 0.0, %v1562
      %v1564 = vpop.f32.mrb[0].mxu0
      %1565 = vmatprep.mubr.bf16.mxu0 %v1074
      %1566 = vmatmul.mubr.bf16.gmra.mrb[0].mxu0 %v1073
      %v1567 = vpop.f32.mrb[0].mxu0
      %v1568 = vadd.f32 0.0, %v1567
      %v1569 = vpop.f32.mrb[0].mxu0
      %v1570 = vpop.f32.mrb[0].mxu0
      %v1571 = vadd.f32 0.0, %v1570
      %v1572 = vpop.f32.mrb[0].mxu0
      %1573 = vmatprep.mubr.bf16.mxu0 %v1078
      %1574 = vmatmul.mubr.bf16.gmra.mrb[0].mxu0 %v1077
      %v1575 = vpop.f32.mrb[0].mxu0
      %v1576 = vadd.f32 0.0, %v1575
      %v1577 = vpop.f32.mrb[0].mxu0
      %v1578 = vpop.f32.mrb[0].mxu0
      %v1579 = vadd.f32 0.0, %v1578
      %v1580 = vpop.f32.mrb[0].mxu0
      %1581 = vmatprep.mubr.bf16.mxu0 %v1082
      %1582 = vmatmul.mubr.bf16.gmra.mrb[0].mxu0 %v1081
      %v1583 = vpop.f32.mrb[0].mxu0
      %v1584 = vadd.f32 0.0, %v1583
      %v1585 = vpop.f32.mrb[0].mxu0
      %v1586 = vpop.f32.mrb[0].mxu0
      %v1587 = vadd.f32 0.0, %v1586
      %v1588 = vpop.f32.mrb[0].mxu0
      %1589 = vmatprep.mubr.bf16.mxu0 %v1086
      %1590 = vmatmul.mubr.bf16.gmra.mrb[0].mxu0 %v1085
      %v1591 = vpop.f32.mrb[0].mxu0
      %v1592 = vadd.f32 0.0, %v1591
      %v1593 = vpop.f32.mrb[0].mxu0
      %v1594 = vpop.f32.mrb[0].mxu0
      %v1595 = vadd.f32 0.0, %v1594
      %v1596 = vpop.f32.mrb[0].mxu0
      %1597 = vmatprep.mubr.bf16.mxu0 %v1090
      %1598 = vmatmul.mubr.bf16.gmra.mrb[0].mxu0 %v1089
      %v1599 = vpop.f32.mrb[0].mxu0
      %v1600 = vadd.f32 0.0, %v1599
      %v1601 = vpop.f32.mrb[0].mxu0
      %v1602 = vpop.f32.mrb[0].mxu0
      %v1603 = vadd.f32 0.0, %v1602
      %v1604 = vpop.f32.mrb[0].mxu0
      %1605 = vmatprep.mubr.bf16.mxu0 %v1094
      %1606 = vmatmul.mubr.bf16.gmra.mrb[0].mxu0 %v1093
      %v1607 = vpop.f32.mrb[0].mxu0
      %v1608 = vadd.f32 0.0, %v1607
      %v1609 = vpop.f32.mrb[0].mxu0
      %v1610 = vpop.f32.mrb[0].mxu0
      %v1611 = vadd.f32 0.0, %v1610
      %v1612 = vpop.f32.mrb[0].mxu0
      %1613 = vmatprep.mubr.bf16.mxu0 %v1098
      %1614 = vmatmul.mubr.bf16.gmra.mrb[0].mxu0 %v1097
      %v1615 = vpop.f32.mrb[0].mxu0
      %v1616 = vadd.f32 0.0, %v1615
      %v1617 = vpop.f32.mrb[0].mxu0
      %v1618 = vpop.f32.mrb[0].mxu0
      %v1619 = vadd.f32 0.0, %v1618
      %v1620 = vpop.f32.mrb[0].mxu0
      %1621 = vmatprep.mubr.bf16.mxu0 %v1102
      %1622 = vmatmul.mubr.bf16.gmra.mrb[0].mxu0 %v1101
      %v1623 = vpop.f32.mrb[0].mxu0
      %v1624 = vadd.f32 0.0, %v1623
      %v1625 = vpop.f32.mrb[0].mxu0
      %v1626 = vpop.f32.mrb[0].mxu0
      %v1627 = vadd.f32 0.0, %v1626
      %v1628 = vpop.f32.mrb[0].mxu0
      %1629 = vmatprep.mubr.bf16.mxu0 %v1106
      %1630 = vmatmul.mubr.bf16.gmra.mrb[0].mxu0 %v1105
      %v1631 = vpop.f32.mrb[0].mxu0
      %v1632 = vadd.f32 0.0, %v1631
      %v1633 = vpop.f32.mrb[0].mxu0
      %v1634 = vpop.f32.mrb[0].mxu0
      %v1635 = vadd.f32 0.0, %v1634
      %v1636 = vpop.f32.mrb[0].mxu0
      %1637 = vmatprep.mubr.bf16.mxu0 %v1110
      %1638 = vmatmul.mubr.bf16.gmra.mrb[0].mxu0 %v1109
      %v1639 = vpop.f32.mrb[0].mxu0
      %v1640 = vadd.f32 0.0, %v1639
      %v1641 = vpop.f32.mrb[0].mxu0
      %v1642 = vpop.f32.mrb[0].mxu0
      %v1643 = vadd.f32 0.0, %v1642
      %v1644 = vpop.f32.mrb[0].mxu0
      %1645 = vmatprep.mubr.bf16.mxu0 %v1114
      %1646 = vmatmul.mubr.bf16.gmra.mrb[0].mxu0 %v1113
      %v1647 = vpop.f32.mrb[0].mxu0
      %v1648 = vadd.f32 0.0, %v1647
      %v1649 = vpop.f32.mrb[0].mxu0
      %v1650 = vpop.f32.mrb[0].mxu0
      %v1651 = vadd.f32 0.0, %v1650
      %v1652 = vpop.f32.mrb[0].mxu0
      %1653 = vmatprep.mubr.bf16.mxu0 %v1118
      %1654 = vmatmul.mubr.bf16.gmra.mrb[0].mxu0 %v1117
      %v1655 = vpop.f32.mrb[0].mxu0
      %v1656 = vadd.f32 0.0, %v1655
      %v1657 = vpop.f32.mrb[0].mxu0
      %v1658 = vpop.f32.mrb[0].mxu0
      %v1659 = vadd.f32 0.0, %v1658
      %v1660 = vpop.f32.mrb[0].mxu0
      %1661 = vmatprep.mubr.bf16.mxu0 %v1122
      %1662 = vmatmul.mubr.bf16.gmra.mrb[0].mxu0 %v1121
      %v1663 = vpop.f32.mrb[0].mxu0
      %v1664 = vadd.f32 0.0, %v1663
      %v1665 = vpop.f32.mrb[0].mxu0
      %v1666 = vpop.f32.mrb[0].mxu0
      %v1667 = vadd.f32 0.0, %v1666
      %v1668 = vpop.f32.mrb[0].mxu0
      %1669 = vmatprep.mubr.bf16.mxu0 %v1126
      %1670 = vmatmul.mubr.bf16.gmra.mrb[0].mxu0 %v1125
      %v1671 = vpop.f32.mrb[0].mxu0
      %v1672 = vadd.f32 0.0, %v1671
      %v1673 = vpop.f32.mrb[0].mxu0
      %v1674 = vpop.f32.mrb[0].mxu0
      %v1675 = vadd.f32 0.0, %v1674
      %v1676 = vpop.f32.mrb[0].mxu0
      %1677 = vmatprep.mubr.bf16.mxu0 %v1130
      %1678 = vmatmul.mubr.bf16.gmra.mrb[0].mxu0 %v1129
      %v1679 = vpop.f32.mrb[0].mxu0
      %v1680 = vadd.f32 0.0, %v1679
      %v1681 = vpop.f32.mrb[0].mxu0
      %v1682 = vpop.f32.mrb[0].mxu0
      %v1683 = vadd.f32 0.0, %v1682
      %v1684 = vpop.f32.mrb[0].mxu0
      %1685 = vmatprep.mubr.bf16.mxu0 %v1134
      %1686 = vmatmul.mubr.bf16.gmra.mrb[0].mxu0 %v1133
      %v1687 = vpop.f32.mrb[0].mxu0
      %v1688 = vadd.f32 0.0, %v1687
      %v1689 = vpop.f32.mrb[0].mxu0
      %v1690 = vpop.f32.mrb[0].mxu0
      %v1691 = vadd.f32 0.0, %v1690
      %v1692 = vpop.f32.mrb[0].mxu0
      %1693 = vmatprep.mubr.bf16.mxu0 %v1138
      %1694 = vmatmul.mubr.bf16.gmra.mrb[0].mxu0 %v1137
      %v1695 = vpop.f32.mrb[0].mxu0
      %v1696 = vadd.f32 0.0, %v1695
      %v1697 = vpop.f32.mrb[0].mxu0
      %v1698 = vpop.f32.mrb[0].mxu0
      %v1699 = vadd.f32 0.0, %v1698
      %v1700 = vpop.f32.mrb[0].mxu0
      %1701 = vmatprep.mubr.bf16.mxu0 %v1142
      %1702 = vmatmul.mubr.bf16.gmra.mrb[0].mxu0 %v1141
      %v1703 = vpop.f32.mrb[0].mxu0
      %v1704 = vadd.f32 0.0, %v1703
      %v1705 = vpop.f32.mrb[0].mxu0
      %v1706 = vpop.f32.mrb[0].mxu0
      %v1707 = vadd.f32 0.0, %v1706
      %v1708 = vpop.f32.mrb[0].mxu0
      %1709 = vmatprep.mubr.bf16.mxu0 %v1146
      %1710 = vmatmul.mubr.bf16.gmra.mrb[0].mxu0 %v1145
      %v1711 = vpop.f32.mrb[0].mxu0
      %v1712 = vadd.f32 0.0, %v1711
      %v1713 = vpop.f32.mrb[0].mxu0
      %v1714 = vpop.f32.mrb[0].mxu0
      %v1715 = vadd.f32 0.0, %v1714
      %v1716 = vpop.f32.mrb[0].mxu0
      %1717 = vmatprep.mubr.bf16.mxu0 %v1150
      %1718 = vmatmul.mubr.bf16.gmra.mrb[0].mxu0 %v1149
      %v1719 = vpop.f32.mrb[0].mxu0
      %v1720 = vadd.f32 0.0, %v1719
      %v1721 = vpop.f32.mrb[0].mxu0
      %v1722 = vpop.f32.mrb[0].mxu0
      %v1723 = vadd.f32 0.0, %v1722
      %v1724 = vpop.f32.mrb[0].mxu0
      %1725 = vmatprep.mubr.bf16.mxu0 %v1154
      %1726 = vmatmul.mubr.bf16.gmra.mrb[0].mxu0 %v1153
      %v1727 = vpop.f32.mrb[0].mxu0
      %v1728 = vadd.f32 0.0, %v1727
      %v1729 = vpop.f32.mrb[0].mxu0
      %v1730 = vpop.f32.mrb[0].mxu0
      %v1731 = vadd.f32 0.0, %v1730
      %v1732 = vpop.f32.mrb[0].mxu0
      %1733 = vmatprep.mubr.bf16.mxu0 %v1158
      %1734 = vmatmul.mubr.bf16.gmra.mrb[0].mxu0 %v1157
      %v1735 = vpop.f32.mrb[0].mxu0
      %v1736 = vadd.f32 0.0, %v1735
      %v1737 = vpop.f32.mrb[0].mxu0
      %v1738 = vpop.f32.mrb[0].mxu0
      %v1739 = vadd.f32 0.0, %v1738
      %v1740 = vpop.f32.mrb[0].mxu0
      %1741 = vmatprep.mubr.bf16.mxu0 %v1162
      %1742 = vmatmul.mubr.bf16.gmra.mrb[0].mxu0 %v1161
      %v1743 = vpop.f32.mrb[0].mxu0
      %v1744 = vadd.f32 0.0, %v1743
      %v1745 = vpop.f32.mrb[0].mxu0
      %v1746 = vpop.f32.mrb[0].mxu0
      %v1747 = vadd.f32 0.0, %v1746
      %v1748 = vpop.f32.mrb[0].mxu0
      %1749 = vmatprep.mubr.bf16.mxu0 %v1166
      %1750 = vmatmul.mubr.bf16.gmra.mrb[0].mxu0 %v1165
      %v1751 = vpop.f32.mrb[0].mxu0
      %v1752 = vadd.f32 0.0, %v1751
      %v1753 = vpop.f32.mrb[0].mxu0
      %v1754 = vpop.f32.mrb[0].mxu0
      %v1755 = vadd.f32 0.0, %v1754
      %v1756 = vpop.f32.mrb[0].mxu0
      %1757 = vmatprep.mubr.bf16.mxu0 %v1170
      %1758 = vmatmul.mubr.bf16.gmra.mrb[0].mxu0 %v1169
      %v1759 = vpop.f32.mrb[0].mxu0
      %v1760 = vadd.f32 0.0, %v1759
      %v1761 = vpop.f32.mrb[0].mxu0
      %v1762 = vpop.f32.mrb[0].mxu0
      %v1763 = vadd.f32 0.0, %v1762
      %v1764 = vpop.f32.mrb[0].mxu0
      %1765 = vmatprep.mubr.bf16.mxu0 %v1174
      %1766 = vmatmul.mubr.bf16.gmra.mrb[0].mxu0 %v1173
      %v1767 = vpop.f32.mrb[0].mxu0
      %v1768 = vadd.f32 0.0, %v1767
      %v1769 = vpop.f32.mrb[0].mxu0
      %v1770 = vpop.f32.mrb[0].mxu0
      %v1771 = vadd.f32 0.0, %v1770
      %v1772 = vpop.f32.mrb[0].mxu0
      %1773 = vmatprep.mubr.bf16.mxu0 %v1178
      %1774 = vmatmul.mubr.bf16.gmra.mrb[0].mxu0 %v1177
      %v1775 = vpop.f32.mrb[0].mxu0
      %v1776 = vadd.f32 0.0, %v1775
      %v1777 = vpop.f32.mrb[0].mxu0
      %v1778 = vpop.f32.mrb[0].mxu0
      %v1779 = vadd.f32 0.0, %v1778
      %v1780 = vpop.f32.mrb[0].mxu0
      %1781 = vmatprep.mubr.bf16.mxu0 %v1182
      %1782 = vmatmul.mubr.bf16.gmra.mrb[0].mxu0 %v1181
      %v1783 = vpop.f32.mrb[0].mxu0
      %v1784 = vadd.f32 0.0, %v1783
      %v1785 = vpop.f32.mrb[0].mxu0
      %v1786 = vpop.f32.mrb[0].mxu0
      %v1787 = vadd.f32 0.0, %v1786
      %v1788 = vpop.f32.mrb[0].mxu0
      %1789 = vmatprep.mubr.bf16.mxu0 %v1186
      %1790 = vmatmul.mubr.bf16.gmra.mrb[0].mxu0 %v1185
      %v1791 = vpop.f32.mrb[0].mxu0
      %v1792 = vadd.f32 0.0, %v1791
      %v1793 = vpop.f32.mrb[0].mxu0
      %v1794 = vpop.f32.mrb[0].mxu0
      %v1795 = vadd.f32 0.0, %v1794
      %v1796 = vpop.f32.mrb[0].mxu0
      %1797 = vdwg.mxu0
      %1798 = vmatprep.subr.bf16.mxu0 0
      %1799 = vmatpush1.bf16.msra.mxu0 %v1461
      %1800 = vmatprep.subr.bf16.mxu0 0
      %1801 = vmatpush1.bf16.msra.mxu0 %v1462
      %1802 = vmatprep.subr.bf16.mxu0 0
      %1803 = vmatpush1.bf16.msra.mxu0 %v1463
      %1804 = vmatprep.subr.bf16.mxu0 0
      %1805 = vmatpush1.bf16.msra.mxu0 %v1464
      %1806 = vmatprep.subr.bf16.mxu0 0
      %1807 = vmatpush1.bf16.msra.mxu0 %v1465
      %1808 = vmatprep.subr.bf16.mxu0 0
      %1809 = vmatpush1.bf16.msra.mxu0 %v1466
      %1810 = vmatprep.subr.bf16.mxu0 0
      %1811 = vmatpush1.bf16.msra.mxu0 %v1467
      %1812 = vmatprep.subr.bf16.mxu0 0
      %1813 = vmatpush1.bf16.msra.mxu0 %v1468
      %1814 = vmatprep.subr.bf16.mxu0 0
      %1815 = vmatpush1.bf16.msra.mxu0 %v1469
      %1816 = vmatprep.subr.bf16.mxu0 0
      %1817 = vmatpush1.bf16.msra.mxu0 %v1470
      %1818 = vmatprep.subr.bf16.mxu0 0
      %1819 = vmatpush1.bf16.msra.mxu0 %v1471
      %1820 = vmatprep.subr.bf16.mxu0 0
      %1821 = vmatpush1.bf16.msra.mxu0 %v1472
      %1822 = vmatprep.subr.bf16.mxu0 0
      %1823 = vmatpush1.bf16.msra.mxu0 %v1473
      %1824 = vmatprep.subr.bf16.mxu0 0
      %1825 = vmatpush1.bf16.msra.mxu0 %v1474
      %1826 = vmatprep.subr.bf16.mxu0 0
      %1827 = vmatpush1.bf16.msra.mxu0 %v1475
      %1828 = vmatprep.subr.bf16.mxu0 0
      %1829 = vmatpush1.bf16.msra.mxu0 %v1476
      %1830 = vmatprep.mubr.bf16.mxu0 %v1064
      %1831 = vmatmul.mubr.bf16.gmra.mrb[0].mxu0 %v1063
      %v1832 = vpop.f32.mrb[0].mxu0
      %v1833 = vadd.f32 %v1544, %v1832
      %v1834 = vpop.f32.mrb[0].mxu0
      %v1835 = vpop.f32.mrb[0].mxu0
      %v1836 = vadd.f32 %v1547, %v1835
      %v1837 = vpop.f32.mrb[0].mxu0
      %1838 = vmatprep.mubr.bf16.mxu0 %v1068
      %1839 = vmatmul.mubr.bf16.gmra.mrb[0].mxu0 %v1067
      %v1840 = vpop.f32.mrb[0].mxu0
      %v1841 = vadd.f32 %v1552, %v1840
      %v1842 = vpop.f32.mrb[0].mxu0
      %v1843 = vpop.f32.mrb[0].mxu0
      %v1844 = vadd.f32 %v1555, %v1843
      %v1845 = vpop.f32.mrb[0].mxu0
      %1846 = vmatprep.mubr.bf16.mxu0 %v1072
      %1847 = vmatmul.mubr.bf16.gmra.mrb[0].mxu0 %v1071
      %v1848 = vpop.f32.mrb[0].mxu0
      %v1849 = vadd.f32 %v1560, %v1848
      %v1850 = vpop.f32.mrb[0].mxu0
      %v1851 = vpop.f32.mrb[0].mxu0
      %v1852 = vadd.f32 %v1563, %v1851
      %v1853 = vpop.f32.mrb[0].mxu0
      %1854 = vmatprep.mubr.bf16.mxu0 %v1076
      %1855 = vmatmul.mubr.bf16.gmra.mrb[0].mxu0 %v1075
      %v1856 = vpop.f32.mrb[0].mxu0
      %v1857 = vadd.f32 %v1568, %v1856
      %v1858 = vpop.f32.mrb[0].mxu0
      %v1859 = vpop.f32.mrb[0].mxu0
      %v1860 = vadd.f32 %v1571, %v1859
      %v1861 = vpop.f32.mrb[0].mxu0
      %1862 = vmatprep.mubr.bf16.mxu0 %v1080
      %1863 = vmatmul.mubr.bf16.gmra.mrb[0].mxu0 %v1079
      %v1864 = vpop.f32.mrb[0].mxu0
      %v1865 = vadd.f32 %v1576, %v1864
      %v1866 = vpop.f32.mrb[0].mxu0
      %v1867 = vpop.f32.mrb[0].mxu0
      %v1868 = vadd.f32 %v1579, %v1867
      %v1869 = vpop.f32.mrb[0].mxu0
      %1870 = vmatprep.mubr.bf16.mxu0 %v1084
      %1871 = vmatmul.mubr.bf16.gmra.mrb[0].mxu0 %v1083
      %v1872 = vpop.f32.mrb[0].mxu0
      %v1873 = vadd.f32 %v1584, %v1872
      %v1874 = vpop.f32.mrb[0].mxu0
      %v1875 = vpop.f32.mrb[0].mxu0
      %v1876 = vadd.f32 %v1587, %v1875
      %v1877 = vpop.f32.mrb[0].mxu0
      %1878 = vmatprep.mubr.bf16.mxu0 %v1088
      %1879 = vmatmul.mubr.bf16.gmra.mrb[0].mxu0 %v1087
      %v1880 = vpop.f32.mrb[0].mxu0
      %v1881 = vadd.f32 %v1592, %v1880
      %v1882 = vpop.f32.mrb[0].mxu0
      %v1883 = vpop.f32.mrb[0].mxu0
      %v1884 = vadd.f32 %v1595, %v1883
      %v1885 = vpop.f32.mrb[0].mxu0
      %1886 = vmatprep.mubr.bf16.mxu0 %v1092
      %1887 = vmatmul.mubr.bf16.gmra.mrb[0].mxu0 %v1091
      %v1888 = vpop.f32.mrb[0].mxu0
      %v1889 = vadd.f32 %v1600, %v1888
      %v1890 = vpop.f32.mrb[0].mxu0
      %v1891 = vpop.f32.mrb[0].mxu0
      %v1892 = vadd.f32 %v1603, %v1891
      %v1893 = vpop.f32.mrb[0].mxu0
      %1894 = vmatprep.mubr.bf16.mxu0 %v1096
      %1895 = vmatmul.mubr.bf16.gmra.mrb[0].mxu0 %v1095
      %v1896 = vpop.f32.mrb[0].mxu0
      %v1897 = vadd.f32 %v1608, %v1896
      %v1898 = vpop.f32.mrb[0].mxu0
      %v1899 = vpop.f32.mrb[0].mxu0
      %v1900 = vadd.f32 %v1611, %v1899
      %v1901 = vpop.f32.mrb[0].mxu0
      %1902 = vmatprep.mubr.bf16.mxu0 %v1100
      %1903 = vmatmul.mubr.bf16.gmra.mrb[0].mxu0 %v1099
      %v1904 = vpop.f32.mrb[0].mxu0
      %v1905 = vadd.f32 %v1616, %v1904
      %v1906 = vpop.f32.mrb[0].mxu0
      %v1907 = vpop.f32.mrb[0].mxu0
      %v1908 = vadd.f32 %v1619, %v1907
      %v1909 = vpop.f32.mrb[0].mxu0
      %1910 = vmatprep.mubr.bf16.mxu0 %v1104
      %1911 = vmatmul.mubr.bf16.gmra.mrb[0].mxu0 %v1103
      %v1912 = vpop.f32.mrb[0].mxu0
      %v1913 = vadd.f32 %v1624, %v1912
      %v1914 = vpop.f32.mrb[0].mxu0
      %v1915 = vpop.f32.mrb[0].mxu0
      %v1916 = vadd.f32 %v1627, %v1915
      %v1917 = vpop.f32.mrb[0].mxu0
      %1918 = vmatprep.mubr.bf16.mxu0 %v1108
      %1919 = vmatmul.mubr.bf16.gmra.mrb[0].mxu0 %v1107
      %v1920 = vpop.f32.mrb[0].mxu0
      %v1921 = vadd.f32 %v1632, %v1920
      %v1922 = vpop.f32.mrb[0].mxu0
      %v1923 = vpop.f32.mrb[0].mxu0
      %v1924 = vadd.f32 %v1635, %v1923
      %v1925 = vpop.f32.mrb[0].mxu0
      %1926 = vmatprep.mubr.bf16.mxu0 %v1112
      %1927 = vmatmul.mubr.bf16.gmra.mrb[0].mxu0 %v1111
      %v1928 = vpop.f32.mrb[0].mxu0
      %v1929 = vadd.f32 %v1640, %v1928
      %v1930 = vpop.f32.mrb[0].mxu0
      %v1931 = vpop.f32.mrb[0].mxu0
      %v1932 = vadd.f32 %v1643, %v1931
      %v1933 = vpop.f32.mrb[0].mxu0
      %1934 = vmatprep.mubr.bf16.mxu0 %v1116
      %1935 = vmatmul.mubr.bf16.gmra.mrb[0].mxu0 %v1115
      %v1936 = vpop.f32.mrb[0].mxu0
      %v1937 = vadd.f32 %v1648, %v1936
      %v1938 = vpop.f32.mrb[0].mxu0
      %v1939 = vpop.f32.mrb[0].mxu0
      %v1940 = vadd.f32 %v1651, %v1939
      %v1941 = vpop.f32.mrb[0].mxu0
      %1942 = vmatprep.mubr.bf16.mxu0 %v1120
      %1943 = vmatmul.mubr.bf16.gmra.mrb[0].mxu0 %v1119
      %v1944 = vpop.f32.mrb[0].mxu0
      %v1945 = vadd.f32 %v1656, %v1944
      %v1946 = vpop.f32.mrb[0].mxu0
      %v1947 = vpop.f32.mrb[0].mxu0
      %v1948 = vadd.f32 %v1659, %v1947
      %v1949 = vpop.f32.mrb[0].mxu0
      %1950 = vmatprep.mubr.bf16.mxu0 %v1124
      %1951 = vmatmul.mubr.bf16.gmra.mrb[0].mxu0 %v1123
      %v1952 = vpop.f32.mrb[0].mxu0
      %v1953 = vadd.f32 %v1664, %v1952
      %v1954 = vpop.f32.mrb[0].mxu0
      %v1955 = vpop.f32.mrb[0].mxu0
      %v1956 = vadd.f32 %v1667, %v1955
      %v1957 = vpop.f32.mrb[0].mxu0
      %1958 = vmatprep.mubr.bf16.mxu0 %v1128
      %1959 = vmatmul.mubr.bf16.gmra.mrb[0].mxu0 %v1127
      %v1960 = vpop.f32.mrb[0].mxu0
      %v1961 = vadd.f32 %v1672, %v1960
      %v1962 = vpop.f32.mrb[0].mxu0
      %v1963 = vpop.f32.mrb[0].mxu0
      %v1964 = vadd.f32 %v1675, %v1963
      %v1965 = vpop.f32.mrb[0].mxu0
      %1966 = vmatprep.mubr.bf16.mxu0 %v1132
      %1967 = vmatmul.mubr.bf16.gmra.mrb[0].mxu0 %v1131
      %v1968 = vpop.f32.mrb[0].mxu0
      %v1969 = vadd.f32 %v1680, %v1968
      %v1970 = vpop.f32.mrb[0].mxu0
      %v1971 = vpop.f32.mrb[0].mxu0
      %v1972 = vadd.f32 %v1683, %v1971
      %v1973 = vpop.f32.mrb[0].mxu0
      %1974 = vmatprep.mubr.bf16.mxu0 %v1136
      %1975 = vmatmul.mubr.bf16.gmra.mrb[0].mxu0 %v1135
      %v1976 = vpop.f32.mrb[0].mxu0
      %v1977 = vadd.f32 %v1688, %v1976
      %v1978 = vpop.f32.mrb[0].mxu0
      %v1979 = vpop.f32.mrb[0].mxu0
      %v1980 = vadd.f32 %v1691, %v1979
      %v1981 = vpop.f32.mrb[0].mxu0
      %1982 = vmatprep.mubr.bf16.mxu0 %v1140
      %1983 = vmatmul.mubr.bf16.gmra.mrb[0].mxu0 %v1139
      %v1984 = vpop.f32.mrb[0].mxu0
      %v1985 = vadd.f32 %v1696, %v1984
      %v1986 = vpop.f32.mrb[0].mxu0
      %v1987 = vpop.f32.mrb[0].mxu0
      %v1988 = vadd.f32 %v1699, %v1987
      %v1989 = vpop.f32.mrb[0].mxu0
      %1990 = vmatprep.mubr.bf16.mxu0 %v1144
      %1991 = vmatmul.mubr.bf16.gmra.mrb[0].mxu0 %v1143
      %v1992 = vpop.f32.mrb[0].mxu0
      %v1993 = vadd.f32 %v1704, %v1992
      %v1994 = vpop.f32.mrb[0].mxu0
      %v1995 = vpop.f32.mrb[0].mxu0
      %v1996 = vadd.f32 %v1707, %v1995
      %v1997 = vpop.f32.mrb[0].mxu0
      %1998 = vmatprep.mubr.bf16.mxu0 %v1148
      %1999 = vmatmul.mubr.bf16.gmra.mrb[0].mxu0 %v1147
      %v2000 = vpop.f32.mrb[0].mxu0
      %v2001 = vadd.f32 %v1712, %v2000
      %v2002 = vpop.f32.mrb[0].mxu0
      %v2003 = vpop.f32.mrb[0].mxu0
      %v2004 = vadd.f32 %v1715, %v2003
      %v2005 = vpop.f32.mrb[0].mxu0
      %2006 = vmatprep.mubr.bf16.mxu0 %v1152
      %2007 = vmatmul.mubr.bf16.gmra.mrb[0].mxu0 %v1151
      %v2008 = vpop.f32.mrb[0].mxu0
      %v2009 = vadd.f32 %v1720, %v2008
      %v2010 = vpop.f32.mrb[0].mxu0
      %v2011 = vpop.f32.mrb[0].mxu0
      %v2012 = vadd.f32 %v1723, %v2011
      %v2013 = vpop.f32.mrb[0].mxu0
      %2014 = vmatprep.mubr.bf16.mxu0 %v1156
      %2015 = vmatmul.mubr.bf16.gmra.mrb[0].mxu0 %v1155
      %v2016 = vpop.f32.mrb[0].mxu0
      %v2017 = vadd.f32 %v1728, %v2016
      %v2018 = vpop.f32.mrb[0].mxu0
      %v2019 = vpop.f32.mrb[0].mxu0
      %v2020 = vadd.f32 %v1731, %v2019
      %v2021 = vpop.f32.mrb[0].mxu0
      %2022 = vmatprep.mubr.bf16.mxu0 %v1160
      %2023 = vmatmul.mubr.bf16.gmra.mrb[0].mxu0 %v1159
      %v2024 = vpop.f32.mrb[0].mxu0
      %v2025 = vadd.f32 %v1736, %v2024
      %v2026 = vpop.f32.mrb[0].mxu0
      %v2027 = vpop.f32.mrb[0].mxu0
      %v2028 = vadd.f32 %v1739, %v2027
      %v2029 = vpop.f32.mrb[0].mxu0
      %2030 = vmatprep.mubr.bf16.mxu0 %v1164
      %2031 = vmatmul.mubr.bf16.gmra.mrb[0].mxu0 %v1163
      %v2032 = vpop.f32.mrb[0].mxu0
      %v2033 = vadd.f32 %v1744, %v2032
      %v2034 = vpop.f32.mrb[0].mxu0
      %v2035 = vpop.f32.mrb[0].mxu0
      %v2036 = vadd.f32 %v1747, %v2035
      %v2037 = vpop.f32.mrb[0].mxu0
      %2038 = vmatprep.mubr.bf16.mxu0 %v1168
      %2039 = vmatmul.mubr.bf16.gmra.mrb[0].mxu0 %v1167
      %v2040 = vpop.f32.mrb[0].mxu0
      %v2041 = vadd.f32 %v1752, %v2040
      %v2042 = vpop.f32.mrb[0].mxu0
      %v2043 = vpop.f32.mrb[0].mxu0
      %v2044 = vadd.f32 %v1755, %v2043
      %v2045 = vpop.f32.mrb[0].mxu0
      %2046 = vmatprep.mubr.bf16.mxu0 %v1172
      %2047 = vmatmul.mubr.bf16.gmra.mrb[0].mxu0 %v1171
      %v2048 = vpop.f32.mrb[0].mxu0
      %v2049 = vadd.f32 %v1760, %v2048
      %v2050 = vpop.f32.mrb[0].mxu0
      %v2051 = vpop.f32.mrb[0].mxu0
      %v2052 = vadd.f32 %v1763, %v2051
      %v2053 = vpop.f32.mrb[0].mxu0
      %2054 = vmatprep.mubr.bf16.mxu0 %v1176
      %2055 = vmatmul.mubr.bf16.gmra.mrb[0].mxu0 %v1175
      %v2056 = vpop.f32.mrb[0].mxu0
      %v2057 = vadd.f32 %v1768, %v2056
      %v2058 = vpop.f32.mrb[0].mxu0
      %v2059 = vpop.f32.mrb[0].mxu0
      %v2060 = vadd.f32 %v1771, %v2059
      %v2061 = vpop.f32.mrb[0].mxu0
      %2062 = vmatprep.mubr.bf16.mxu0 %v1180
      %2063 = vmatmul.mubr.bf16.gmra.mrb[0].mxu0 %v1179
      %v2064 = vpop.f32.mrb[0].mxu0
      %v2065 = vadd.f32 %v1776, %v2064
      %v2066 = vpop.f32.mrb[0].mxu0
      %v2067 = vpop.f32.mrb[0].mxu0
      %v2068 = vadd.f32 %v1779, %v2067
      %v2069 = vpop.f32.mrb[0].mxu0
      %2070 = vmatprep.mubr.bf16.mxu0 %v1184
      %2071 = vmatmul.mubr.bf16.gmra.mrb[0].mxu0 %v1183
      %v2072 = vpop.f32.mrb[0].mxu0
      %v2073 = vadd.f32 %v1784, %v2072
      %v2074 = vpop.f32.mrb[0].mxu0
      %v2075 = vpop.f32.mrb[0].mxu0
      %v2076 = vadd.f32 %v1787, %v2075
      %v2077 = vpop.f32.mrb[0].mxu0
      %2078 = vmatprep.mubr.bf16.mxu0 %v1188
      %2079 = vmatmul.mubr.bf16.gmra.mrb[0].mxu0 %v1187
      %v2080 = vpop.f32.mrb[0].mxu0
      %v2081 = vadd.f32 %v1792, %v2080
      %v2082 = vpop.f32.mrb[0].mxu0
      %v2083 = vpop.f32.mrb[0].mxu0
      %v2084 = vadd.f32 %v1795, %v2083
      %v2085 = vpop.f32.mrb[0].mxu0
      %2086 = vdwg.mxu0
      %v2087 = vadd.f32 %v421, %v1833
      %v2088 = vadd.f32 %v422, %v1836
      %v2089 = vadd.f32 %v423, %v1841
      %v2090 = vadd.f32 %v424, %v1844
      %v2091 = vadd.f32 %v425, %v1849
      %v2092 = vadd.f32 %v426, %v1852
      %v2093 = vadd.f32 %v427, %v1857
      %v2094 = vadd.f32 %v428, %v1860
      %v2095 = vadd.f32 %v429, %v1865
      %v2096 = vadd.f32 %v430, %v1868
      %v2097 = vadd.f32 %v431, %v1873
      %v2098 = vadd.f32 %v432, %v1876
      %v2099 = vadd.f32 %v433, %v1881
      %v2100 = vadd.f32 %v434, %v1884
      %v2101 = vadd.f32 %v435, %v1889
      %v2102 = vadd.f32 %v436, %v1892
      %v2103 = vadd.f32 %v437, %v1897
      %v2104 = vadd.f32 %v438, %v1900
      %v2105 = vadd.f32 %v439, %v1905
      %v2106 = vadd.f32 %v440, %v1908
      %v2107 = vadd.f32 %v441, %v1913
      %v2108 = vadd.f32 %v442, %v1916
      %v2109 = vadd.f32 %v443, %v1921
      %v2110 = vadd.f32 %v444, %v1924
      %v2111 = vadd.f32 %v445, %v1929
      %v2112 = vadd.f32 %v446, %v1932
      %v2113 = vadd.f32 %v447, %v1937
      %v2114 = vadd.f32 %v448, %v1940
      %v2115 = vadd.f32 %v449, %v1945
      %v2116 = vadd.f32 %v450, %v1948
      %v2117 = vadd.f32 %v451, %v1953
      %v2118 = vadd.f32 %v452, %v1956
      %v2119 = vadd.f32 %v453, %v1961
      %v2120 = vadd.f32 %v454, %v1964
      %v2121 = vadd.f32 %v455, %v1969
      %v2122 = vadd.f32 %v456, %v1972
      %v2123 = vadd.f32 %v457, %v1977
      %v2124 = vadd.f32 %v458, %v1980
      %v2125 = vadd.f32 %v459, %v1985
      %v2126 = vadd.f32 %v460, %v1988
      %v2127 = vadd.f32 %v461, %v1993
      %v2128 = vadd.f32 %v462, %v1996
      %v2129 = vadd.f32 %v463, %v2001
      %v2130 = vadd.f32 %v464, %v2004
      %v2131 = vadd.f32 %v465, %v2009
      %v2132 = vadd.f32 %v466, %v2012
      %v2133 = vadd.f32 %v467, %v2017
      %v2134 = vadd.f32 %v468, %v2020
      %v2135 = vadd.f32 %v469, %v2025
      %v2136 = vadd.f32 %v470, %v2028
      %v2137 = vadd.f32 %v471, %v2033
      %v2138 = vadd.f32 %v472, %v2036
      %v2139 = vadd.f32 %v473, %v2041
      %v2140 = vadd.f32 %v474, %v2044
      %v2141 = vadd.f32 %v475, %v2049
      %v2142 = vadd.f32 %v476, %v2052
      %v2143 = vadd.f32 %v477, %v2057
      %v2144 = vadd.f32 %v478, %v2060
      %v2145 = vadd.f32 %v479, %v2065
      %v2146 = vadd.f32 %v480, %v2068
      %v2147 = vadd.f32 %v481, %v2073
      %v2148 = vadd.f32 %v482, %v2076
      %v2149 = vadd.f32 %v483, %v2081
      %v2150 = vadd.f32 %v484, %v2084
      %2151 = vst [vmem:[#allocation2] sm:$0xff] %v2087
      %2152 = vst [vmem:[#allocation2 + $0x8] sm:$0xff] %v2088
      %2153 = vst [vmem:[#allocation2 + $0x10] sm:$0xff] %v2089
      %2154 = vst [vmem:[#allocation2 + $0x18] sm:$0xff] %v2090
      %2155 = vst [vmem:[#allocation2 + $0x20] sm:$0xff] %v2091
      %2156 = vst [vmem:[#allocation2 + $0x28] sm:$0xff] %v2092
      %2157 = vst [vmem:[#allocation2 + $0x30] sm:$0xff] %v2093
      %2158 = vst [vmem:[#allocation2 + $0x38] sm:$0xff] %v2094
      %2159 = vst [vmem:[#allocation2 + $0x40] sm:$0xff] %v2095
      %2160 = vst [vmem:[#allocation2 + $0x48] sm:$0xff] %v2096
      %2161 = vst [vmem:[#allocation2 + $0x50] sm:$0xff] %v2097
      %2162 = vst [vmem:[#allocation2 + $0x58] sm:$0xff] %v2098
      %2163 = vst [vmem:[#allocation2 + $0x60] sm:$0xff] %v2099
      %2164 = vst [vmem:[#allocation2 + $0x68] sm:$0xff] %v2100
      %2165 = vst [vmem:[#allocation2 + $0x70] sm:$0xff] %v2101
      %2166 = vst [vmem:[#allocation2 + $0x78] sm:$0xff] %v2102
      %2167 = vst [vmem:[#allocation2 + $0x80] sm:$0xff] %v2103
      %2168 = vst [vmem:[#allocation2 + $0x88] sm:$0xff] %v2104
      %2169 = vst [vmem:[#allocation2 + $0x90] sm:$0xff] %v2105
      %2170 = vst [vmem:[#allocation2 + $0x98] sm:$0xff] %v2106
      %2171 = vst [vmem:[#allocation2 + $0xa0] sm:$0xff] %v2107
      %2172 = vst [vmem:[#allocation2 + $0xa8] sm:$0xff] %v2108
      %2173 = vst [vmem:[#allocation2 + $0xb0] sm:$0xff] %v2109
      %2174 = vst [vmem:[#allocation2 + $0xb8] sm:$0xff] %v2110
      %2175 = vst [vmem:[#allocation2 + $0xc0] sm:$0xff] %v2111
      %2176 = vst [vmem:[#allocation2 + $0xc8] sm:$0xff] %v2112
      %2177 = vst [vmem:[#allocation2 + $0xd0] sm:$0xff] %v2113
      %2178 = vst [vmem:[#allocation2 + $0xd8] sm:$0xff] %v2114
      %2179 = vst [vmem:[#allocation2 + $0xe0] sm:$0xff] %v2115
      %2180 = vst [vmem:[#allocation2 + $0xe8] sm:$0xff] %v2116
      %2181 = vst [vmem:[#allocation2 + $0xf0] sm:$0xff] %v2117
      %2182 = vst [vmem:[#allocation2 + $0xf8] sm:$0xff] %v2118
      %2183 = vst [vmem:[#allocation2 + $0x100] sm:$0xff] %v2119
      %2184 = vst [vmem:[#allocation2 + $0x108] sm:$0xff] %v2120
      %2185 = vst [vmem:[#allocation2 + $0x110] sm:$0xff] %v2121
      %2186 = vst [vmem:[#allocation2 + $0x118] sm:$0xff] %v2122
      %2187 = vst [vmem:[#allocation2 + $0x120] sm:$0xff] %v2123
      %2188 = vst [vmem:[#allocation2 + $0x128] sm:$0xff] %v2124
      %2189 = vst [vmem:[#allocation2 + $0x130] sm:$0xff] %v2125
      %2190 = vst [vmem:[#allocation2 + $0x138] sm:$0xff] %v2126
      %2191 = vst [vmem:[#allocation2 + $0x140] sm:$0xff] %v2127
      %2192 = vst [vmem:[#allocation2 + $0x148] sm:$0xff] %v2128
      %2193 = vst [vmem:[#allocation2 + $0x150] sm:$0xff] %v2129
      %2194 = vst [vmem:[#allocation2 + $0x158] sm:$0xff] %v2130
      %2195 = vst [vmem:[#allocation2 + $0x160] sm:$0xff] %v2131
      %2196 = vst [vmem:[#allocation2 + $0x168] sm:$0xff] %v2132
      %2197 = vst [vmem:[#allocation2 + $0x170] sm:$0xff] %v2133
      %2198 = vst [vmem:[#allocation2 + $0x178] sm:$0xff] %v2134
      %2199 = vst [vmem:[#allocation2 + $0x180] sm:$0xff] %v2135
      %2200 = vst [vmem:[#allocation2 + $0x188] sm:$0xff] %v2136
      %2201 = vst [vmem:[#allocation2 + $0x190] sm:$0xff] %v2137
      %2202 = vst [vmem:[#allocation2 + $0x198] sm:$0xff] %v2138
      %2203 = vst [vmem:[#allocation2 + $0x1a0] sm:$0xff] %v2139
      %2204 = vst [vmem:[#allocation2 + $0x1a8] sm:$0xff] %v2140
      %2205 = vst [vmem:[#allocation2 + $0x1b0] sm:$0xff] %v2141
      %2206 = vst [vmem:[#allocation2 + $0x1b8] sm:$0xff] %v2142
      %2207 = vst [vmem:[#allocation2 + $0x1c0] sm:$0xff] %v2143
      %2208 = vst [vmem:[#allocation2 + $0x1c8] sm:$0xff] %v2144
      %2209 = vst [vmem:[#allocation2 + $0x1d0] sm:$0xff] %v2145
      %2210 = vst [vmem:[#allocation2 + $0x1d8] sm:$0xff] %v2146
      %2211 = vst [vmem:[#allocation2 + $0x1e0] sm:$0xff] %v2147
      %2212 = vst [vmem:[#allocation2 + $0x1e8] sm:$0xff] %v2148
      %2213 = vst [vmem:[#allocation2 + $0x1f0] sm:$0xff] %v2149
      %2214 = vst [vmem:[#allocation2 + $0x1f8] sm:$0xff] %v2150
      // Predicated region
      $region49: #{hyper_gnn_conv.3} parent=43 // pred_check
        %p2215 = pneg %p353
      $region50: #{hyper_gnn_conv.3} parent=43 // pred_check_branch
        %2217 = sbr.rel (%p2215) target = $region52
      $region51: #{hyper_gnn_conv.3} parent=43 // pred_region
        %v2218 = vld [vmem:[#allocation2] sm:$0xff]
        %v2219 = vld [vmem:[#allocation2 + $0x8] sm:$0xff]
        %v2220 = vld [vmem:[#allocation2 + $0x10] sm:$0xff]
        %v2221 = vld [vmem:[#allocation2 + $0x18] sm:$0xff]
        %v2222 = vld [vmem:[#allocation2 + $0x20] sm:$0xff]
        %v2223 = vld [vmem:[#allocation2 + $0x28] sm:$0xff]
        %v2224 = vld [vmem:[#allocation2 + $0x30] sm:$0xff]
        %v2225 = vld [vmem:[#allocation2 + $0x38] sm:$0xff]
        %v2226 = vld [vmem:[#allocation2 + $0x40] sm:$0xff]
        %v2227 = vld [vmem:[#allocation2 + $0x48] sm:$0xff]
        %v2228 = vld [vmem:[#allocation2 + $0x50] sm:$0xff]
        %v2229 = vld [vmem:[#allocation2 + $0x58] sm:$0xff]
        %v2230 = vld [vmem:[#allocation2 + $0x60] sm:$0xff]
        %v2231 = vld [vmem:[#allocation2 + $0x68] sm:$0xff]
        %v2232 = vld [vmem:[#allocation2 + $0x70] sm:$0xff]
        %v2233 = vld [vmem:[#allocation2 + $0x78] sm:$0xff]
        %v2234 = vld [vmem:[#allocation2 + $0x80] sm:$0xff]
        %v2235 = vld [vmem:[#allocation2 + $0x88] sm:$0xff]
        %v2236 = vld [vmem:[#allocation2 + $0x90] sm:$0xff]
        %v2237 = vld [vmem:[#allocation2 + $0x98] sm:$0xff]
        %v2238 = vld [vmem:[#allocation2 + $0xa0] sm:$0xff]
        %v2239 = vld [vmem:[#allocation2 + $0xa8] sm:$0xff]
        %v2240 = vld [vmem:[#allocation2 + $0xb0] sm:$0xff]
        %v2241 = vld [vmem:[#allocation2 + $0xb8] sm:$0xff]
        %v2242 = vld [vmem:[#allocation2 + $0xc0] sm:$0xff]
        %v2243 = vld [vmem:[#allocation2 + $0xc8] sm:$0xff]
        %v2244 = vld [vmem:[#allocation2 + $0xd0] sm:$0xff]
        %v2245 = vld [vmem:[#allocation2 + $0xd8] sm:$0xff]
        %v2246 = vld [vmem:[#allocation2 + $0xe0] sm:$0xff]
        %v2247 = vld [vmem:[#allocation2 + $0xe8] sm:$0xff]
        %v2248 = vld [vmem:[#allocation2 + $0xf0] sm:$0xff]
        %v2249 = vld [vmem:[#allocation2 + $0xf8] sm:$0xff]
        %v2250 = vld [vmem:[#allocation2 + $0x100] sm:$0xff]
        %v2251 = vld [vmem:[#allocation2 + $0x108] sm:$0xff]
        %v2252 = vld [vmem:[#allocation2 + $0x110] sm:$0xff]
        %v2253 = vld [vmem:[#allocation2 + $0x118] sm:$0xff]
        %v2254 = vld [vmem:[#allocation2 + $0x120] sm:$0xff]
        %v2255 = vld [vmem:[#allocation2 + $0x128] sm:$0xff]
        %v2256 = vld [vmem:[#allocation2 + $0x130] sm:$0xff]
        %v2257 = vld [vmem:[#allocation2 + $0x138] sm:$0xff]
        %v2258 = vld [vmem:[#allocation2 + $0x140] sm:$0xff]
        %v2259 = vld [vmem:[#allocation2 + $0x148] sm:$0xff]
        %v2260 = vld [vmem:[#allocation2 + $0x150] sm:$0xff]
        %v2261 = vld [vmem:[#allocation2 + $0x158] sm:$0xff]
        %v2262 = vld [vmem:[#allocation2 + $0x160] sm:$0xff]
        %v2263 = vld [vmem:[#allocation2 + $0x168] sm:$0xff]
        %v2264 = vld [vmem:[#allocation2 + $0x170] sm:$0xff]
        %v2265 = vld [vmem:[#allocation2 + $0x178] sm:$0xff]
        %v2266 = vld [vmem:[#allocation2 + $0x180] sm:$0xff]
        %v2267 = vld [vmem:[#allocation2 + $0x188] sm:$0xff]
        %v2268 = vld [vmem:[#allocation2 + $0x190] sm:$0xff]
        %v2269 = vld [vmem:[#allocation2 + $0x198] sm:$0xff]
        %v2270 = vld [vmem:[#allocation2 + $0x1a0] sm:$0xff]
        %v2271 = vld [vmem:[#allocation2 + $0x1a8] sm:$0xff]
        %v2272 = vld [vmem:[#allocation2 + $0x1b0] sm:$0xff]
        %v2273 = vld [vmem:[#allocation2 + $0x1b8] sm:$0xff]
        %v2274 = vld [vmem:[#allocation2 + $0x1c0] sm:$0xff]
        %v2275 = vld [vmem:[#allocation2 + $0x1c8] sm:$0xff]
        %v2276 = vld [vmem:[#allocation2 + $0x1d0] sm:$0xff]
        %v2277 = vld [vmem:[#allocation2 + $0x1d8] sm:$0xff]
        %v2278 = vld [vmem:[#allocation2 + $0x1e0] sm:$0xff]
        %v2279 = vld [vmem:[#allocation2 + $0x1e8] sm:$0xff]
        %v2280 = vld [vmem:[#allocation2 + $0x1f0] sm:$0xff]
        %v2281 = vld [vmem:[#allocation2 + $0x1f8] sm:$0xff]
        %v2282 = vld [vmem:[%s338] sm:$0xff]
        %v2283 = vld [vmem:[%s338 + $0x8] sm:$0xff]
        %v2284 = vld [vmem:[%s338 + $0x10] sm:$0xff]
        %v2285 = vld [vmem:[%s338 + $0x18] sm:$0xff]
        %v2286 = vld [vmem:[%s338 + $0x20] sm:$0xff]
        %v2287 = vld [vmem:[%s338 + $0x28] sm:$0xff]
        %v2288 = vld [vmem:[%s338 + $0x30] sm:$0xff]
        %v2289 = vld [vmem:[%s338 + $0x38] sm:$0xff]
        %v2290 = vld [vmem:[%s338 + $0x40] sm:$0xff]
        %v2291 = vld [vmem:[%s338 + $0x48] sm:$0xff]
        %v2292 = vld [vmem:[%s338 + $0x50] sm:$0xff]
        %v2293 = vld [vmem:[%s338 + $0x58] sm:$0xff]
        %v2294 = vld [vmem:[%s338 + $0x60] sm:$0xff]
        %v2295 = vld [vmem:[%s338 + $0x68] sm:$0xff]
        %v2296 = vld [vmem:[%s338 + $0x70] sm:$0xff]
        %v2297 = vld [vmem:[%s338 + $0x78] sm:$0xff]
        %v2298 = vld [vmem:[%s338 + $0x80] sm:$0xff]
        %v2299 = vld [vmem:[%s338 + $0x88] sm:$0xff]
        %v2300 = vld [vmem:[%s338 + $0x90] sm:$0xff]
        %v2301 = vld [vmem:[%s338 + $0x98] sm:$0xff]
        %v2302 = vld [vmem:[%s338 + $0xa0] sm:$0xff]
        %v2303 = vld [vmem:[%s338 + $0xa8] sm:$0xff]
        %v2304 = vld [vmem:[%s338 + $0xb0] sm:$0xff]
        %v2305 = vld [vmem:[%s338 + $0xb8] sm:$0xff]
        %v2306 = vld [vmem:[%s338 + $0xc0] sm:$0xff]
        %v2307 = vld [vmem:[%s338 + $0xc8] sm:$0xff]
        %v2308 = vld [vmem:[%s338 + $0xd0] sm:$0xff]
        %v2309 = vld [vmem:[%s338 + $0xd8] sm:$0xff]
        %v2310 = vld [vmem:[%s338 + $0xe0] sm:$0xff]
        %v2311 = vld [vmem:[%s338 + $0xe8] sm:$0xff]
        %v2312 = vld [vmem:[%s338 + $0xf0] sm:$0xff]
        %v2313 = vld [vmem:[%s338 + $0xf8] sm:$0xff]
        %v2314 = vld [vmem:[%s338 + $0x100] sm:$0xff]
        %v2315 = vld [vmem:[%s338 + $0x108] sm:$0xff]
        %v2316 = vld [vmem:[%s338 + $0x110] sm:$0xff]
        %v2317 = vld [vmem:[%s338 + $0x118] sm:$0xff]
        %v2318 = vld [vmem:[%s338 + $0x120] sm:$0xff]
        %v2319 = vld [vmem:[%s338 + $0x128] sm:$0xff]
        %v2320 = vld [vmem:[%s338 + $0x130] sm:$0xff]
        %v2321 = vld [vmem:[%s338 + $0x138] sm:$0xff]
        %v2322 = vld [vmem:[%s338 + $0x140] sm:$0xff]
        %v2323 = vld [vmem:[%s338 + $0x148] sm:$0xff]
        %v2324 = vld [vmem:[%s338 + $0x150] sm:$0xff]
        %v2325 = vld [vmem:[%s338 + $0x158] sm:$0xff]
        %v2326 = vld [vmem:[%s338 + $0x160] sm:$0xff]
        %v2327 = vld [vmem:[%s338 + $0x168] sm:$0xff]
        %v2328 = vld [vmem:[%s338 + $0x170] sm:$0xff]
        %v2329 = vld [vmem:[%s338 + $0x178] sm:$0xff]
        %v2330 = vld [vmem:[%s338 + $0x180] sm:$0xff]
        %v2331 = vld [vmem:[%s338 + $0x188] sm:$0xff]
        %v2332 = vld [vmem:[%s338 + $0x190] sm:$0xff]
        %v2333 = vld [vmem:[%s338 + $0x198] sm:$0xff]
        %v2334 = vld [vmem:[%s338 + $0x1a0] sm:$0xff]
        %v2335 = vld [vmem:[%s338 + $0x1a8] sm:$0xff]
        %v2336 = vld [vmem:[%s338 + $0x1b0] sm:$0xff]
        %v2337 = vld [vmem:[%s338 + $0x1b8] sm:$0xff]
        %v2338 = vld [vmem:[%s338 + $0x1c0] sm:$0xff]
        %v2339 = vld [vmem:[%s338 + $0x1c8] sm:$0xff]
        %v2340 = vld [vmem:[%s338 + $0x1d0] sm:$0xff]
        %v2341 = vld [vmem:[%s338 + $0x1d8] sm:$0xff]
        %v2342 = vld [vmem:[%s338 + $0x1e0] sm:$0xff]
        %v2343 = vld [vmem:[%s338 + $0x1e8] sm:$0xff]
        %v2344 = vld [vmem:[%s338 + $0x1f0] sm:$0xff]
        %v2345 = vld [vmem:[%s338 + $0x1f8] sm:$0xff]
        %2347 = vset.pattern.permute.xlu0 0
        %2348 = vperm.xlu0 %2347, %v2282
        %v2349 = vpop.permute.xlu0 %2348
        %2352 = vset.pattern.permute.xlu0 0
        %2353 = vperm.xlu0 %2352, %v2283
        %v2354 = vpop.permute.xlu0 %2353
        %2357 = vset.pattern.permute.xlu0 0
        %2358 = vperm.xlu0 %2357, %v2284
        %v2359 = vpop.permute.xlu0 %2358
        %2362 = vset.pattern.permute.xlu0 0
        %2363 = vperm.xlu0 %2362, %v2285
        %v2364 = vpop.permute.xlu0 %2363
        %2367 = vset.pattern.permute.xlu0 0
        %2368 = vperm.xlu0 %2367, %v2286
        %v2369 = vpop.permute.xlu0 %2368
        %2372 = vset.pattern.permute.xlu0 0
        %2373 = vperm.xlu0 %2372, %v2287
        %v2374 = vpop.permute.xlu0 %2373
        %2377 = vset.pattern.permute.xlu0 0
        %2378 = vperm.xlu0 %2377, %v2288
        %v2379 = vpop.permute.xlu0 %2378
        %2382 = vset.pattern.permute.xlu0 0
        %2383 = vperm.xlu0 %2382, %v2289
        %v2384 = vpop.permute.xlu0 %2383
        %2387 = vset.pattern.permute.xlu0 0
        %2388 = vperm.xlu0 %2387, %v2290
        %v2389 = vpop.permute.xlu0 %2388
        %2392 = vset.pattern.permute.xlu0 0
        %2393 = vperm.xlu0 %2392, %v2291
        %v2394 = vpop.permute.xlu0 %2393
        %2397 = vset.pattern.permute.xlu0 0
        %2398 = vperm.xlu0 %2397, %v2292
        %v2399 = vpop.permute.xlu0 %2398
        %2402 = vset.pattern.permute.xlu0 0
        %2403 = vperm.xlu0 %2402, %v2293
        %v2404 = vpop.permute.xlu0 %2403
        %2407 = vset.pattern.permute.xlu0 0
        %2408 = vperm.xlu0 %2407, %v2294
        %v2409 = vpop.permute.xlu0 %2408
        %2412 = vset.pattern.permute.xlu0 0
        %2413 = vperm.xlu0 %2412, %v2295
        %v2414 = vpop.permute.xlu0 %2413
        %2417 = vset.pattern.permute.xlu0 0
        %2418 = vperm.xlu0 %2417, %v2296
        %v2419 = vpop.permute.xlu0 %2418
        %2422 = vset.pattern.permute.xlu0 0
        %2423 = vperm.xlu0 %2422, %v2297
        %v2424 = vpop.permute.xlu0 %2423
        %2427 = vset.pattern.permute.xlu0 0
        %2428 = vperm.xlu0 %2427, %v2298
        %v2429 = vpop.permute.xlu0 %2428
        %2432 = vset.pattern.permute.xlu0 0
        %2433 = vperm.xlu0 %2432, %v2299
        %v2434 = vpop.permute.xlu0 %2433
        %2437 = vset.pattern.permute.xlu0 0
        %2438 = vperm.xlu0 %2437, %v2300
        %v2439 = vpop.permute.xlu0 %2438
        %2442 = vset.pattern.permute.xlu0 0
        %2443 = vperm.xlu0 %2442, %v2301
        %v2444 = vpop.permute.xlu0 %2443
        %2447 = vset.pattern.permute.xlu0 0
        %2448 = vperm.xlu0 %2447, %v2302
        %v2449 = vpop.permute.xlu0 %2448
        %2452 = vset.pattern.permute.xlu0 0
        %2453 = vperm.xlu0 %2452, %v2303
        %v2454 = vpop.permute.xlu0 %2453
        %2457 = vset.pattern.permute.xlu0 0
        %2458 = vperm.xlu0 %2457, %v2304
        %v2459 = vpop.permute.xlu0 %2458
        %2462 = vset.pattern.permute.xlu0 0
        %2463 = vperm.xlu0 %2462, %v2305
        %v2464 = vpop.permute.xlu0 %2463
        %2467 = vset.pattern.permute.xlu0 0
        %2468 = vperm.xlu0 %2467, %v2306
        %v2469 = vpop.permute.xlu0 %2468
        %2472 = vset.pattern.permute.xlu0 0
        %2473 = vperm.xlu0 %2472, %v2307
        %v2474 = vpop.permute.xlu0 %2473
        %2477 = vset.pattern.permute.xlu0 0
        %2478 = vperm.xlu0 %2477, %v2308
        %v2479 = vpop.permute.xlu0 %2478
        %2482 = vset.pattern.permute.xlu0 0
        %2483 = vperm.xlu0 %2482, %v2309
        %v2484 = vpop.permute.xlu0 %2483
        %2487 = vset.pattern.permute.xlu0 0
        %2488 = vperm.xlu0 %2487, %v2310
        %v2489 = vpop.permute.xlu0 %2488
        %2492 = vset.pattern.permute.xlu0 0
        %2493 = vperm.xlu0 %2492, %v2311
        %v2494 = vpop.permute.xlu0 %2493
        %2497 = vset.pattern.permute.xlu0 0
        %2498 = vperm.xlu0 %2497, %v2312
        %v2499 = vpop.permute.xlu0 %2498
        %2502 = vset.pattern.permute.xlu0 0
        %2503 = vperm.xlu0 %2502, %v2313
        %v2504 = vpop.permute.xlu0 %2503
        %2507 = vset.pattern.permute.xlu0 0
        %2508 = vperm.xlu0 %2507, %v2314
        %v2509 = vpop.permute.xlu0 %2508
        %2512 = vset.pattern.permute.xlu0 0
        %2513 = vperm.xlu0 %2512, %v2315
        %v2514 = vpop.permute.xlu0 %2513
        %2517 = vset.pattern.permute.xlu0 0
        %2518 = vperm.xlu0 %2517, %v2316
        %v2519 = vpop.permute.xlu0 %2518
        %2522 = vset.pattern.permute.xlu0 0
        %2523 = vperm.xlu0 %2522, %v2317
        %v2524 = vpop.permute.xlu0 %2523
        %2527 = vset.pattern.permute.xlu0 0
        %2528 = vperm.xlu0 %2527, %v2318
        %v2529 = vpop.permute.xlu0 %2528
        %2532 = vset.pattern.permute.xlu0 0
        %2533 = vperm.xlu0 %2532, %v2319
        %v2534 = vpop.permute.xlu0 %2533
        %2537 = vset.pattern.permute.xlu0 0
        %2538 = vperm.xlu0 %2537, %v2320
        %v2539 = vpop.permute.xlu0 %2538
        %2542 = vset.pattern.permute.xlu0 0
        %2543 = vperm.xlu0 %2542, %v2321
        %v2544 = vpop.permute.xlu0 %2543
        %2547 = vset.pattern.permute.xlu0 0
        %2548 = vperm.xlu0 %2547, %v2322
        %v2549 = vpop.permute.xlu0 %2548
        %2552 = vset.pattern.permute.xlu0 0
        %2553 = vperm.xlu0 %2552, %v2323
        %v2554 = vpop.permute.xlu0 %2553
        %2557 = vset.pattern.permute.xlu0 0
        %2558 = vperm.xlu0 %2557, %v2324
        %v2559 = vpop.permute.xlu0 %2558
        %2562 = vset.pattern.permute.xlu0 0
        %2563 = vperm.xlu0 %2562, %v2325
        %v2564 = vpop.permute.xlu0 %2563
        %2567 = vset.pattern.permute.xlu0 0
        %2568 = vperm.xlu0 %2567, %v2326
        %v2569 = vpop.permute.xlu0 %2568
        %2572 = vset.pattern.permute.xlu0 0
        %2573 = vperm.xlu0 %2572, %v2327
        %v2574 = vpop.permute.xlu0 %2573
        %2577 = vset.pattern.permute.xlu0 0
        %2578 = vperm.xlu0 %2577, %v2328
        %v2579 = vpop.permute.xlu0 %2578
        %2582 = vset.pattern.permute.xlu0 0
        %2583 = vperm.xlu0 %2582, %v2329
        %v2584 = vpop.permute.xlu0 %2583
        %2587 = vset.pattern.permute.xlu0 0
        %2588 = vperm.xlu0 %2587, %v2330
        %v2589 = vpop.permute.xlu0 %2588
        %2592 = vset.pattern.permute.xlu0 0
        %2593 = vperm.xlu0 %2592, %v2331
        %v2594 = vpop.permute.xlu0 %2593
        %2597 = vset.pattern.permute.xlu0 0
        %2598 = vperm.xlu0 %2597, %v2332
        %v2599 = vpop.permute.xlu0 %2598
        %2602 = vset.pattern.permute.xlu0 0
        %2603 = vperm.xlu0 %2602, %v2333
        %v2604 = vpop.permute.xlu0 %2603
        %2607 = vset.pattern.permute.xlu0 0
        %2608 = vperm.xlu0 %2607, %v2334
        %v2609 = vpop.permute.xlu0 %2608
        %2612 = vset.pattern.permute.xlu0 0
        %2613 = vperm.xlu0 %2612, %v2335
        %v2614 = vpop.permute.xlu0 %2613
        %2617 = vset.pattern.permute.xlu0 0
        %2618 = vperm.xlu0 %2617, %v2336
        %v2619 = vpop.permute.xlu0 %2618
        %2622 = vset.pattern.permute.xlu0 0
        %2623 = vperm.xlu0 %2622, %v2337
        %v2624 = vpop.permute.xlu0 %2623
        %2627 = vset.pattern.permute.xlu0 0
        %2628 = vperm.xlu0 %2627, %v2338
        %v2629 = vpop.permute.xlu0 %2628
        %2632 = vset.pattern.permute.xlu0 0
        %2633 = vperm.xlu0 %2632, %v2339
        %v2634 = vpop.permute.xlu0 %2633
        %2637 = vset.pattern.permute.xlu0 0
        %2638 = vperm.xlu0 %2637, %v2340
        %v2639 = vpop.permute.xlu0 %2638
        %2642 = vset.pattern.permute.xlu0 0
        %2643 = vperm.xlu0 %2642, %v2341
        %v2644 = vpop.permute.xlu0 %2643
        %2647 = vset.pattern.permute.xlu0 0
        %2648 = vperm.xlu0 %2647, %v2342
        %v2649 = vpop.permute.xlu0 %2648
        %2652 = vset.pattern.permute.xlu0 0
        %2653 = vperm.xlu0 %2652, %v2343
        %v2654 = vpop.permute.xlu0 %2653
        %2657 = vset.pattern.permute.xlu0 0
        %2658 = vperm.xlu0 %2657, %v2344
        %v2659 = vpop.permute.xlu0 %2658
        %2662 = vset.pattern.permute.xlu0 0
        %2663 = vperm.xlu0 %2662, %v2345
        %v2664 = vpop.permute.xlu0 %2663
        %v2666 = vmul.f32 %v2218, %v2349
        %v2667 = vmul.f32 %v2219, %v2354
        %v2668 = vmul.f32 %v2220, %v2359
        %v2669 = vmul.f32 %v2221, %v2364
        %v2670 = vmul.f32 %v2222, %v2369
        %v2671 = vmul.f32 %v2223, %v2374
        %v2672 = vmul.f32 %v2224, %v2379
        %v2673 = vmul.f32 %v2225, %v2384
        %v2674 = vmul.f32 %v2226, %v2389
        %v2675 = vmul.f32 %v2227, %v2394
        %v2676 = vmul.f32 %v2228, %v2399
        %v2677 = vmul.f32 %v2229, %v2404
        %v2678 = vmul.f32 %v2230, %v2409
        %v2679 = vmul.f32 %v2231, %v2414
        %v2680 = vmul.f32 %v2232, %v2419
        %v2681 = vmul.f32 %v2233, %v2424
        %v2682 = vmul.f32 %v2234, %v2429
        %v2683 = vmul.f32 %v2235, %v2434
        %v2684 = vmul.f32 %v2236, %v2439
        %v2685 = vmul.f32 %v2237, %v2444
        %v2686 = vmul.f32 %v2238, %v2449
        %v2687 = vmul.f32 %v2239, %v2454
        %v2688 = vmul.f32 %v2240, %v2459
        %v2689 = vmul.f32 %v2241, %v2464
        %v2690 = vmul.f32 %v2242, %v2469
        %v2691 = vmul.f32 %v2243, %v2474
        %v2692 = vmul.f32 %v2244, %v2479
        %v2693 = vmul.f32 %v2245, %v2484
        %v2694 = vmul.f32 %v2246, %v2489
        %v2695 = vmul.f32 %v2247, %v2494
        %v2696 = vmul.f32 %v2248, %v2499
        %v2697 = vmul.f32 %v2249, %v2504
        %v2698 = vmul.f32 %v2250, %v2509
        %v2699 = vmul.f32 %v2251, %v2514
        %v2700 = vmul.f32 %v2252, %v2519
        %v2701 = vmul.f32 %v2253, %v2524
        %v2702 = vmul.f32 %v2254, %v2529
        %v2703 = vmul.f32 %v2255, %v2534
        %v2704 = vmul.f32 %v2256, %v2539
        %v2705 = vmul.f32 %v2257, %v2544
        %v2706 = vmul.f32 %v2258, %v2549
        %v2707 = vmul.f32 %v2259, %v2554
        %v2708 = vmul.f32 %v2260, %v2559
        %v2709 = vmul.f32 %v2261, %v2564
        %v2710 = vmul.f32 %v2262, %v2569
        %v2711 = vmul.f32 %v2263, %v2574
        %v2712 = vmul.f32 %v2264, %v2579
        %v2713 = vmul.f32 %v2265, %v2584
        %v2714 = vmul.f32 %v2266, %v2589
        %v2715 = vmul.f32 %v2267, %v2594
        %v2716 = vmul.f32 %v2268, %v2599
        %v2717 = vmul.f32 %v2269, %v2604
        %v2718 = vmul.f32 %v2270, %v2609
        %v2719 = vmul.f32 %v2271, %v2614
        %v2720 = vmul.f32 %v2272, %v2619
        %v2721 = vmul.f32 %v2273, %v2624
        %v2722 = vmul.f32 %v2274, %v2629
        %v2723 = vmul.f32 %v2275, %v2634
        %v2724 = vmul.f32 %v2276, %v2639
        %v2725 = vmul.f32 %v2277, %v2644
        %v2726 = vmul.f32 %v2278, %v2649
        %v2727 = vmul.f32 %v2279, %v2654
        %v2728 = vmul.f32 %v2280, %v2659
        %v2729 = vmul.f32 %v2281, %v2664
        %v2730 = vld [vmem:[%s344] sm:$0xff]
        %v2731 = vld [vmem:[%s344 + $0x8] sm:$0xff]
        %v2732 = vld [vmem:[%s344 + $0x10] sm:$0xff]
        %v2733 = vld [vmem:[%s344 + $0x18] sm:$0xff]
        %v2734 = vld [vmem:[%s344 + $0x20] sm:$0xff]
        %v2735 = vld [vmem:[%s344 + $0x28] sm:$0xff]
        %v2736 = vld [vmem:[%s344 + $0x30] sm:$0xff]
        %v2737 = vld [vmem:[%s344 + $0x38] sm:$0xff]
        %v2738 = vld [vmem:[%s344 + $0x40] sm:$0xff]
        %v2739 = vld [vmem:[%s344 + $0x48] sm:$0xff]
        %v2740 = vld [vmem:[%s344 + $0x50] sm:$0xff]
        %v2741 = vld [vmem:[%s344 + $0x58] sm:$0xff]
        %v2742 = vld [vmem:[%s344 + $0x60] sm:$0xff]
        %v2743 = vld [vmem:[%s344 + $0x68] sm:$0xff]
        %v2744 = vld [vmem:[%s344 + $0x70] sm:$0xff]
        %v2745 = vld [vmem:[%s344 + $0x78] sm:$0xff]
        %v2746 = vld [vmem:[%s344 + $0x80] sm:$0xff]
        %v2747 = vld [vmem:[%s344 + $0x88] sm:$0xff]
        %v2748 = vld [vmem:[%s344 + $0x90] sm:$0xff]
        %v2749 = vld [vmem:[%s344 + $0x98] sm:$0xff]
        %v2750 = vld [vmem:[%s344 + $0xa0] sm:$0xff]
        %v2751 = vld [vmem:[%s344 + $0xa8] sm:$0xff]
        %v2752 = vld [vmem:[%s344 + $0xb0] sm:$0xff]
        %v2753 = vld [vmem:[%s344 + $0xb8] sm:$0xff]
        %v2754 = vld [vmem:[%s344 + $0xc0] sm:$0xff]
        %v2755 = vld [vmem:[%s344 + $0xc8] sm:$0xff]
        %v2756 = vld [vmem:[%s344 + $0xd0] sm:$0xff]
        %v2757 = vld [vmem:[%s344 + $0xd8] sm:$0xff]
        %v2758 = vld [vmem:[%s344 + $0xe0] sm:$0xff]
        %v2759 = vld [vmem:[%s344 + $0xe8] sm:$0xff]
        %v2760 = vld [vmem:[%s344 + $0xf0] sm:$0xff]
        %v2761 = vld [vmem:[%s344 + $0xf8] sm:$0xff]
        %v2762 = vld [vmem:[%s344 + $0x100] sm:$0xff]
        %v2763 = vld [vmem:[%s344 + $0x108] sm:$0xff]
        %v2764 = vld [vmem:[%s344 + $0x110] sm:$0xff]
        %v2765 = vld [vmem:[%s344 + $0x118] sm:$0xff]
        %v2766 = vld [vmem:[%s344 + $0x120] sm:$0xff]
        %v2767 = vld [vmem:[%s344 + $0x128] sm:$0xff]
        %v2768 = vld [vmem:[%s344 + $0x130] sm:$0xff]
        %v2769 = vld [vmem:[%s344 + $0x138] sm:$0xff]
        %v2770 = vld [vmem:[%s344 + $0x140] sm:$0xff]
        %v2771 = vld [vmem:[%s344 + $0x148] sm:$0xff]
        %v2772 = vld [vmem:[%s344 + $0x150] sm:$0xff]
        %v2773 = vld [vmem:[%s344 + $0x158] sm:$0xff]
        %v2774 = vld [vmem:[%s344 + $0x160] sm:$0xff]
        %v2775 = vld [vmem:[%s344 + $0x168] sm:$0xff]
        %v2776 = vld [vmem:[%s344 + $0x170] sm:$0xff]
        %v2777 = vld [vmem:[%s344 + $0x178] sm:$0xff]
        %v2778 = vld [vmem:[%s344 + $0x180] sm:$0xff]
        %v2779 = vld [vmem:[%s344 + $0x188] sm:$0xff]
        %v2780 = vld [vmem:[%s344 + $0x190] sm:$0xff]
        %v2781 = vld [vmem:[%s344 + $0x198] sm:$0xff]
        %v2782 = vld [vmem:[%s344 + $0x1a0] sm:$0xff]
        %v2783 = vld [vmem:[%s344 + $0x1a8] sm:$0xff]
        %v2784 = vld [vmem:[%s344 + $0x1b0] sm:$0xff]
        %v2785 = vld [vmem:[%s344 + $0x1b8] sm:$0xff]
        %v2786 = vld [vmem:[%s344 + $0x1c0] sm:$0xff]
        %v2787 = vld [vmem:[%s344 + $0x1c8] sm:$0xff]
        %v2788 = vld [vmem:[%s344 + $0x1d0] sm:$0xff]
        %v2789 = vld [vmem:[%s344 + $0x1d8] sm:$0xff]
        %v2790 = vld [vmem:[%s344 + $0x1e0] sm:$0xff]
        %v2791 = vld [vmem:[%s344 + $0x1e8] sm:$0xff]
        %v2792 = vld [vmem:[%s344 + $0x1f0] sm:$0xff]
        %v2793 = vld [vmem:[%s344 + $0x1f8] sm:$0xff]
        %v2794 = vadd.f32 %v2666, %v2730
        %v2795 = vadd.f32 %v2667, %v2731
        %v2796 = vadd.f32 %v2668, %v2732
        %v2797 = vadd.f32 %v2669, %v2733
        %v2798 = vadd.f32 %v2670, %v2734
        %v2799 = vadd.f32 %v2671, %v2735
        %v2800 = vadd.f32 %v2672, %v2736
        %v2801 = vadd.f32 %v2673, %v2737
        %v2802 = vadd.f32 %v2674, %v2738
        %v2803 = vadd.f32 %v2675, %v2739
        %v2804 = vadd.f32 %v2676, %v2740
        %v2805 = vadd.f32 %v2677, %v2741
        %v2806 = vadd.f32 %v2678, %v2742
        %v2807 = vadd.f32 %v2679, %v2743
        %v2808 = vadd.f32 %v2680, %v2744
        %v2809 = vadd.f32 %v2681, %v2745
        %v2810 = vadd.f32 %v2682, %v2746
        %v2811 = vadd.f32 %v2683, %v2747
        %v2812 = vadd.f32 %v2684, %v2748
        %v2813 = vadd.f32 %v2685, %v2749
        %v2814 = vadd.f32 %v2686, %v2750
        %v2815 = vadd.f32 %v2687, %v2751
        %v2816 = vadd.f32 %v2688, %v2752
        %v2817 = vadd.f32 %v2689, %v2753
        %v2818 = vadd.f32 %v2690, %v2754
        %v2819 = vadd.f32 %v2691, %v2755
        %v2820 = vadd.f32 %v2692, %v2756
        %v2821 = vadd.f32 %v2693, %v2757
        %v2822 = vadd.f32 %v2694, %v2758
        %v2823 = vadd.f32 %v2695, %v2759
        %v2824 = vadd.f32 %v2696, %v2760
        %v2825 = vadd.f32 %v2697, %v2761
        %v2826 = vadd.f32 %v2698, %v2762
        %v2827 = vadd.f32 %v2699, %v2763
        %v2828 = vadd.f32 %v2700, %v2764
        %v2829 = vadd.f32 %v2701, %v2765
        %v2830 = vadd.f32 %v2702, %v2766
        %v2831 = vadd.f32 %v2703, %v2767
        %v2832 = vadd.f32 %v2704, %v2768
        %v2833 = vadd.f32 %v2705, %v2769
        %v2834 = vadd.f32 %v2706, %v2770
        %v2835 = vadd.f32 %v2707, %v2771
        %v2836 = vadd.f32 %v2708, %v2772
        %v2837 = vadd.f32 %v2709, %v2773
        %v2838 = vadd.f32 %v2710, %v2774
        %v2839 = vadd.f32 %v2711, %v2775
        %v2840 = vadd.f32 %v2712, %v2776
        %v2841 = vadd.f32 %v2713, %v2777
        %v2842 = vadd.f32 %v2714, %v2778
        %v2843 = vadd.f32 %v2715, %v2779
        %v2844 = vadd.f32 %v2716, %v2780
        %v2845 = vadd.f32 %v2717, %v2781
        %v2846 = vadd.f32 %v2718, %v2782
        %v2847 = vadd.f32 %v2719, %v2783
        %v2848 = vadd.f32 %v2720, %v2784
        %v2849 = vadd.f32 %v2721, %v2785
        %v2850 = vadd.f32 %v2722, %v2786
        %v2851 = vadd.f32 %v2723, %v2787
        %v2852 = vadd.f32 %v2724, %v2788
        %v2853 = vadd.f32 %v2725, %v2789
        %v2854 = vadd.f32 %v2726, %v2790
        %v2855 = vadd.f32 %v2727, %v2791
        %v2856 = vadd.f32 %v2728, %v2792
        %v2857 = vadd.f32 %v2729, %v2793
        %v2858 = vld [vmem:[%s4] sm:$0xff]
        %v2859 = vld [vmem:[%s4 + $0x8] sm:$0xff]
        %v2860 = vld [vmem:[%s4 + $0x10] sm:$0xff]
        %v2861 = vld [vmem:[%s4 + $0x18] sm:$0xff]
        %v2862 = vld [vmem:[%s4 + $0x20] sm:$0xff]
        %v2863 = vld [vmem:[%s4 + $0x28] sm:$0xff]
        %v2864 = vld [vmem:[%s4 + $0x30] sm:$0xff]
        %v2865 = vld [vmem:[%s4 + $0x38] sm:$0xff]
        %v2866 = vld [vmem:[%s4 + $0x40] sm:$0xff]
        %v2867 = vld [vmem:[%s4 + $0x48] sm:$0xff]
        %v2868 = vld [vmem:[%s4 + $0x50] sm:$0xff]
        %v2869 = vld [vmem:[%s4 + $0x58] sm:$0xff]
        %v2870 = vld [vmem:[%s4 + $0x60] sm:$0xff]
        %v2871 = vld [vmem:[%s4 + $0x68] sm:$0xff]
        %v2872 = vld [vmem:[%s4 + $0x70] sm:$0xff]
        %v2873 = vld [vmem:[%s4 + $0x78] sm:$0xff]
        %v2874 = vld [vmem:[%s5] sm:$0x1]
        %v2876 = vlaneseq
        %v2877 = vshrl.u32 %v2876, 7
        %v2878 = vsub.s32 0, %v2877
        %v2879 = vrot.slane %v2874, %v2878
        %2881 = vmatprep.subr.mxu0 0.0
        %2882 = vmatpush1.msra.mxu0 %v2858
        %2883 = vmatprep.subr.mxu0 0.0
        %2884 = vmatpush1.msra.mxu0 %v2859
        %2885 = vmatprep.subr.mxu0 0.0
        %2886 = vmatpush1.msra.mxu0 %v2860
        %2887 = vmatprep.subr.mxu0 0.0
        %2888 = vmatpush1.msra.mxu0 %v2861
        %2889 = vmatprep.subr.mxu0 0.0
        %2890 = vmatpush1.msra.mxu0 %v2862
        %2891 = vmatprep.subr.mxu0 0.0
        %2892 = vmatpush1.msra.mxu0 %v2863
        %2893 = vmatprep.subr.mxu0 0.0
        %2894 = vmatpush1.msra.mxu0 %v2864
        %2895 = vmatprep.subr.mxu0 0.0
        %2896 = vmatpush1.msra.mxu0 %v2865
        %2897 = vmatprep.subr.mxu0 0.0
        %2898 = vmatpush1.msra.mxu0 %v2866
        %2899 = vmatprep.subr.mxu0 0.0
        %2900 = vmatpush1.msra.mxu0 %v2867
        %2901 = vmatprep.subr.mxu0 0.0
        %2902 = vmatpush1.msra.mxu0 %v2868
        %2903 = vmatprep.subr.mxu0 0.0
        %2904 = vmatpush1.msra.mxu0 %v2869
        %2905 = vmatprep.subr.mxu0 0.0
        %2906 = vmatpush1.msra.mxu0 %v2870
        %2907 = vmatprep.subr.mxu0 0.0
        %2908 = vmatpush1.msra.mxu0 %v2871
        %2909 = vmatprep.subr.mxu0 0.0
        %2910 = vmatpush1.msra.mxu0 %v2872
        %2911 = vmatprep.subr.mxu0 0.0
        %2912 = vmatpush1.msra.mxu0 %v2873
        %2913 = vmatprep.subr.mxu0 0.0
        %2914 = vmatpush1.msra.mxu0 0.0
        %2915 = vmatprep.subr.mxu0 0.0
        %2916 = vmatpush1.msra.mxu0 0.0
        %2917 = vmatprep.subr.mxu0 0.0
        %2918 = vmatpush1.msra.mxu0 0.0
        %2919 = vmatprep.subr.mxu0 0.0
        %2920 = vmatpush1.msra.mxu0 0.0
        %2921 = vmatprep.subr.mxu0 0.0
        %2922 = vmatpush1.msra.mxu0 0.0
        %2923 = vmatprep.subr.mxu0 0.0
        %2924 = vmatpush1.msra.mxu0 0.0
        %2925 = vmatprep.subr.mxu0 0.0
        %2926 = vmatpush1.msra.mxu0 0.0
        %2927 = vmatprep.subr.mxu0 0.0
        %2928 = vmatpush1.msra.mxu0 0.0
        %2929 = vmatprep.subr.mxu0 0.0
        %2930 = vmatpush1.msra.mxu0 0.0
        %2931 = vmatprep.subr.mxu0 0.0
        %2932 = vmatpush1.msra.mxu0 0.0
        %2933 = vmatprep.subr.mxu0 0.0
        %2934 = vmatpush1.msra.mxu0 0.0
        %2935 = vmatprep.subr.mxu0 0.0
        %2936 = vmatpush1.msra.mxu0 0.0
        %2937 = vmatprep.subr.mxu0 0.0
        %2938 = vmatpush1.msra.mxu0 0.0
        %2939 = vmatprep.subr.mxu0 0.0
        %2940 = vmatpush1.msra.mxu0 0.0
        %2941 = vmatprep.subr.mxu0 0.0
        %2942 = vmatpush1.msra.mxu0 0.0
        %2943 = vmatprep.subr.mxu0 0.0
        %2944 = vmatpush1.msra.mxu0 0.0
        %2945 = vmatprep.mubr.f32.mxu0 0.0
        %2946 = vmatmul.mubr.f32.gmra.mrb[0].mxu0 %v2794
        %v2947 = vpop.f32.mrb[0].mxu0
        %v2948 = vadd.f32 %v2879, %v2947
        %v2949 = vpop.f32.mrb[0].mxu0
        %2950 = vmatprep.mubr.f32.mxu0 0.0
        %2951 = vmatmul.mubr.f32.gmra.mrb[0].mxu0 %v2795
        %v2952 = vpop.f32.mrb[0].mxu0
        %v2953 = vadd.f32 %v2879, %v2952
        %v2954 = vpop.f32.mrb[0].mxu0
        %2955 = vmatprep.mubr.f32.mxu0 0.0
        %2956 = vmatmul.mubr.f32.gmra.mrb[0].mxu0 %v2796
        %v2957 = vpop.f32.mrb[0].mxu0
        %v2958 = vadd.f32 %v2879, %v2957
        %v2959 = vpop.f32.mrb[0].mxu0
        %2960 = vmatprep.mubr.f32.mxu0 0.0
        %2961 = vmatmul.mubr.f32.gmra.mrb[0].mxu0 %v2797
        %v2962 = vpop.f32.mrb[0].mxu0
        %v2963 = vadd.f32 %v2879, %v2962
        %v2964 = vpop.f32.mrb[0].mxu0
        %2965 = vmatprep.mubr.f32.mxu0 0.0
        %2966 = vmatmul.mubr.f32.gmra.mrb[0].mxu0 %v2798
        %v2967 = vpop.f32.mrb[0].mxu0
        %v2968 = vadd.f32 %v2879, %v2967
        %v2969 = vpop.f32.mrb[0].mxu0
        %2970 = vmatprep.mubr.f32.mxu0 0.0
        %2971 = vmatmul.mubr.f32.gmra.mrb[0].mxu0 %v2799
        %v2972 = vpop.f32.mrb[0].mxu0
        %v2973 = vadd.f32 %v2879, %v2972
        %v2974 = vpop.f32.mrb[0].mxu0
        %2975 = vmatprep.mubr.f32.mxu0 0.0
        %2976 = vmatmul.mubr.f32.gmra.mrb[0].mxu0 %v2800
        %v2977 = vpop.f32.mrb[0].mxu0
        %v2978 = vadd.f32 %v2879, %v2977
        %v2979 = vpop.f32.mrb[0].mxu0
        %2980 = vmatprep.mubr.f32.mxu0 0.0
        %2981 = vmatmul.mubr.f32.gmra.mrb[0].mxu0 %v2801
        %v2982 = vpop.f32.mrb[0].mxu0
        %v2983 = vadd.f32 %v2879, %v2982
        %v2984 = vpop.f32.mrb[0].mxu0
        %2985 = vmatprep.mubr.f32.mxu0 0.0
        %2986 = vmatmul.mubr.f32.gmra.mrb[0].mxu0 %v2802
        %v2987 = vpop.f32.mrb[0].mxu0
        %v2988 = vadd.f32 %v2879, %v2987
        %v2989 = vpop.f32.mrb[0].mxu0
        %2990 = vmatprep.mubr.f32.mxu0 0.0
        %2991 = vmatmul.mubr.f32.gmra.mrb[0].mxu0 %v2803
        %v2992 = vpop.f32.mrb[0].mxu0
        %v2993 = vadd.f32 %v2879, %v2992
        %v2994 = vpop.f32.mrb[0].mxu0
        %2995 = vmatprep.mubr.f32.mxu0 0.0
        %2996 = vmatmul.mubr.f32.gmra.mrb[0].mxu0 %v2804
        %v2997 = vpop.f32.mrb[0].mxu0
        %v2998 = vadd.f32 %v2879, %v2997
        %v2999 = vpop.f32.mrb[0].mxu0
        %3000 = vmatprep.mubr.f32.mxu0 0.0
        %3001 = vmatmul.mubr.f32.gmra.mrb[0].mxu0 %v2805
        %v3002 = vpop.f32.mrb[0].mxu0
        %v3003 = vadd.f32 %v2879, %v3002
        %v3004 = vpop.f32.mrb[0].mxu0
        %3005 = vmatprep.mubr.f32.mxu0 0.0
        %3006 = vmatmul.mubr.f32.gmra.mrb[0].mxu0 %v2806
        %v3007 = vpop.f32.mrb[0].mxu0
        %v3008 = vadd.f32 %v2879, %v3007
        %v3009 = vpop.f32.mrb[0].mxu0
        %3010 = vmatprep.mubr.f32.mxu0 0.0
        %3011 = vmatmul.mubr.f32.gmra.mrb[0].mxu0 %v2807
        %v3012 = vpop.f32.mrb[0].mxu0
        %v3013 = vadd.f32 %v2879, %v3012
        %v3014 = vpop.f32.mrb[0].mxu0
        %3015 = vmatprep.mubr.f32.mxu0 0.0
        %3016 = vmatmul.mubr.f32.gmra.mrb[0].mxu0 %v2808
        %v3017 = vpop.f32.mrb[0].mxu0
        %v3018 = vadd.f32 %v2879, %v3017
        %v3019 = vpop.f32.mrb[0].mxu0
        %3020 = vmatprep.mubr.f32.mxu0 0.0
        %3021 = vmatmul.mubr.f32.gmra.mrb[0].mxu0 %v2809
        %v3022 = vpop.f32.mrb[0].mxu0
        %v3023 = vadd.f32 %v2879, %v3022
        %v3024 = vpop.f32.mrb[0].mxu0
        %3025 = vmatprep.mubr.f32.mxu0 0.0
        %3026 = vmatmul.mubr.f32.gmra.mrb[0].mxu0 %v2810
        %v3027 = vpop.f32.mrb[0].mxu0
        %v3028 = vadd.f32 %v2879, %v3027
        %v3029 = vpop.f32.mrb[0].mxu0
        %3030 = vmatprep.mubr.f32.mxu0 0.0
        %3031 = vmatmul.mubr.f32.gmra.mrb[0].mxu0 %v2811
        %v3032 = vpop.f32.mrb[0].mxu0
        %v3033 = vadd.f32 %v2879, %v3032
        %v3034 = vpop.f32.mrb[0].mxu0
        %3035 = vmatprep.mubr.f32.mxu0 0.0
        %3036 = vmatmul.mubr.f32.gmra.mrb[0].mxu0 %v2812
        %v3037 = vpop.f32.mrb[0].mxu0
        %v3038 = vadd.f32 %v2879, %v3037
        %v3039 = vpop.f32.mrb[0].mxu0
        %3040 = vmatprep.mubr.f32.mxu0 0.0
        %3041 = vmatmul.mubr.f32.gmra.mrb[0].mxu0 %v2813
        %v3042 = vpop.f32.mrb[0].mxu0
        %v3043 = vadd.f32 %v2879, %v3042
        %v3044 = vpop.f32.mrb[0].mxu0
        %3045 = vmatprep.mubr.f32.mxu0 0.0
        %3046 = vmatmul.mubr.f32.gmra.mrb[0].mxu0 %v2814
        %v3047 = vpop.f32.mrb[0].mxu0
        %v3048 = vadd.f32 %v2879, %v3047
        %v3049 = vpop.f32.mrb[0].mxu0
        %3050 = vmatprep.mubr.f32.mxu0 0.0
        %3051 = vmatmul.mubr.f32.gmra.mrb[0].mxu0 %v2815
        %v3052 = vpop.f32.mrb[0].mxu0
        %v3053 = vadd.f32 %v2879, %v3052
        %v3054 = vpop.f32.mrb[0].mxu0
        %3055 = vmatprep.mubr.f32.mxu0 0.0
        %3056 = vmatmul.mubr.f32.gmra.mrb[0].mxu0 %v2816
        %v3057 = vpop.f32.mrb[0].mxu0
        %v3058 = vadd.f32 %v2879, %v3057
        %v3059 = vpop.f32.mrb[0].mxu0
        %3060 = vmatprep.mubr.f32.mxu0 0.0
        %3061 = vmatmul.mubr.f32.gmra.mrb[0].mxu0 %v2817
        %v3062 = vpop.f32.mrb[0].mxu0
        %v3063 = vadd.f32 %v2879, %v3062
        %v3064 = vpop.f32.mrb[0].mxu0
        %3065 = vmatprep.mubr.f32.mxu0 0.0
        %3066 = vmatmul.mubr.f32.gmra.mrb[0].mxu0 %v2818
        %v3067 = vpop.f32.mrb[0].mxu0
        %v3068 = vadd.f32 %v2879, %v3067
        %v3069 = vpop.f32.mrb[0].mxu0
        %3070 = vmatprep.mubr.f32.mxu0 0.0
        %3071 = vmatmul.mubr.f32.gmra.mrb[0].mxu0 %v2819
        %v3072 = vpop.f32.mrb[0].mxu0
        %v3073 = vadd.f32 %v2879, %v3072
        %v3074 = vpop.f32.mrb[0].mxu0
        %3075 = vmatprep.mubr.f32.mxu0 0.0
        %3076 = vmatmul.mubr.f32.gmra.mrb[0].mxu0 %v2820
        %v3077 = vpop.f32.mrb[0].mxu0
        %v3078 = vadd.f32 %v2879, %v3077
        %v3079 = vpop.f32.mrb[0].mxu0
        %3080 = vmatprep.mubr.f32.mxu0 0.0
        %3081 = vmatmul.mubr.f32.gmra.mrb[0].mxu0 %v2821
        %v3082 = vpop.f32.mrb[0].mxu0
        %v3083 = vadd.f32 %v2879, %v3082
        %v3084 = vpop.f32.mrb[0].mxu0
        %3085 = vmatprep.mubr.f32.mxu0 0.0
        %3086 = vmatmul.mubr.f32.gmra.mrb[0].mxu0 %v2822
        %v3087 = vpop.f32.mrb[0].mxu0
        %v3088 = vadd.f32 %v2879, %v3087
        %v3089 = vpop.f32.mrb[0].mxu0
        %3090 = vmatprep.mubr.f32.mxu0 0.0
        %3091 = vmatmul.mubr.f32.gmra.mrb[0].mxu0 %v2823
        %v3092 = vpop.f32.mrb[0].mxu0
        %v3093 = vadd.f32 %v2879, %v3092
        %v3094 = vpop.f32.mrb[0].mxu0
        %3095 = vmatprep.mubr.f32.mxu0 0.0
        %3096 = vmatmul.mubr.f32.gmra.mrb[0].mxu0 %v2824
        %v3097 = vpop.f32.mrb[0].mxu0
        %v3098 = vadd.f32 %v2879, %v3097
        %v3099 = vpop.f32.mrb[0].mxu0
        %3100 = vmatprep.mubr.f32.mxu0 0.0
        %3101 = vmatmul.mubr.f32.gmra.mrb[0].mxu0 %v2825
        %v3102 = vpop.f32.mrb[0].mxu0
        %v3103 = vadd.f32 %v2879, %v3102
        %v3104 = vpop.f32.mrb[0].mxu0
        %3105 = vmatprep.mubr.f32.mxu0 0.0
        %3106 = vmatmul.mubr.f32.gmra.mrb[0].mxu0 %v2826
        %v3107 = vpop.f32.mrb[0].mxu0
        %v3108 = vadd.f32 %v2879, %v3107
        %v3109 = vpop.f32.mrb[0].mxu0
        %3110 = vmatprep.mubr.f32.mxu0 0.0
        %3111 = vmatmul.mubr.f32.gmra.mrb[0].mxu0 %v2827
        %v3112 = vpop.f32.mrb[0].mxu0
        %v3113 = vadd.f32 %v2879, %v3112
        %v3114 = vpop.f32.mrb[0].mxu0
        %3115 = vmatprep.mubr.f32.mxu0 0.0
        %3116 = vmatmul.mubr.f32.gmra.mrb[0].mxu0 %v2828
        %v3117 = vpop.f32.mrb[0].mxu0
        %v3118 = vadd.f32 %v2879, %v3117
        %v3119 = vpop.f32.mrb[0].mxu0
        %3120 = vmatprep.mubr.f32.mxu0 0.0
        %3121 = vmatmul.mubr.f32.gmra.mrb[0].mxu0 %v2829
        %v3122 = vpop.f32.mrb[0].mxu0
        %v3123 = vadd.f32 %v2879, %v3122
        %v3124 = vpop.f32.mrb[0].mxu0
        %3125 = vmatprep.mubr.f32.mxu0 0.0
        %3126 = vmatmul.mubr.f32.gmra.mrb[0].mxu0 %v2830
        %v3127 = vpop.f32.mrb[0].mxu0
        %v3128 = vadd.f32 %v2879, %v3127
        %v3129 = vpop.f32.mrb[0].mxu0
        %3130 = vmatprep.mubr.f32.mxu0 0.0
        %3131 = vmatmul.mubr.f32.gmra.mrb[0].mxu0 %v2831
        %v3132 = vpop.f32.mrb[0].mxu0
        %v3133 = vadd.f32 %v2879, %v3132
        %v3134 = vpop.f32.mrb[0].mxu0
        %3135 = vmatprep.mubr.f32.mxu0 0.0
        %3136 = vmatmul.mubr.f32.gmra.mrb[0].mxu0 %v2832
        %v3137 = vpop.f32.mrb[0].mxu0
        %v3138 = vadd.f32 %v2879, %v3137
        %v3139 = vpop.f32.mrb[0].mxu0
        %3140 = vmatprep.mubr.f32.mxu0 0.0
        %3141 = vmatmul.mubr.f32.gmra.mrb[0].mxu0 %v2833
        %v3142 = vpop.f32.mrb[0].mxu0
        %v3143 = vadd.f32 %v2879, %v3142
        %v3144 = vpop.f32.mrb[0].mxu0
        %3145 = vmatprep.mubr.f32.mxu0 0.0
        %3146 = vmatmul.mubr.f32.gmra.mrb[0].mxu0 %v2834
        %v3147 = vpop.f32.mrb[0].mxu0
        %v3148 = vadd.f32 %v2879, %v3147
        %v3149 = vpop.f32.mrb[0].mxu0
        %3150 = vmatprep.mubr.f32.mxu0 0.0
        %3151 = vmatmul.mubr.f32.gmra.mrb[0].mxu0 %v2835
        %v3152 = vpop.f32.mrb[0].mxu0
        %v3153 = vadd.f32 %v2879, %v3152
        %v3154 = vpop.f32.mrb[0].mxu0
        %3155 = vmatprep.mubr.f32.mxu0 0.0
        %3156 = vmatmul.mubr.f32.gmra.mrb[0].mxu0 %v2836
        %v3157 = vpop.f32.mrb[0].mxu0
        %v3158 = vadd.f32 %v2879, %v3157
        %v3159 = vpop.f32.mrb[0].mxu0
        %3160 = vmatprep.mubr.f32.mxu0 0.0
        %3161 = vmatmul.mubr.f32.gmra.mrb[0].mxu0 %v2837
        %v3162 = vpop.f32.mrb[0].mxu0
        %v3163 = vadd.f32 %v2879, %v3162
        %v3164 = vpop.f32.mrb[0].mxu0
        %3165 = vmatprep.mubr.f32.mxu0 0.0
        %3166 = vmatmul.mubr.f32.gmra.mrb[0].mxu0 %v2838
        %v3167 = vpop.f32.mrb[0].mxu0
        %v3168 = vadd.f32 %v2879, %v3167
        %v3169 = vpop.f32.mrb[0].mxu0
        %3170 = vmatprep.mubr.f32.mxu0 0.0
        %3171 = vmatmul.mubr.f32.gmra.mrb[0].mxu0 %v2839
        %v3172 = vpop.f32.mrb[0].mxu0
        %v3173 = vadd.f32 %v2879, %v3172
        %v3174 = vpop.f32.mrb[0].mxu0
        %3175 = vmatprep.mubr.f32.mxu0 0.0
        %3176 = vmatmul.mubr.f32.gmra.mrb[0].mxu0 %v2840
        %v3177 = vpop.f32.mrb[0].mxu0
        %v3178 = vadd.f32 %v2879, %v3177
        %v3179 = vpop.f32.mrb[0].mxu0
        %3180 = vmatprep.mubr.f32.mxu0 0.0
        %3181 = vmatmul.mubr.f32.gmra.mrb[0].mxu0 %v2841
        %v3182 = vpop.f32.mrb[0].mxu0
        %v3183 = vadd.f32 %v2879, %v3182
        %v3184 = vpop.f32.mrb[0].mxu0
        %3185 = vmatprep.mubr.f32.mxu0 0.0
        %3186 = vmatmul.mubr.f32.gmra.mrb[0].mxu0 %v2842
        %v3187 = vpop.f32.mrb[0].mxu0
        %v3188 = vadd.f32 %v2879, %v3187
        %v3189 = vpop.f32.mrb[0].mxu0
        %3190 = vmatprep.mubr.f32.mxu0 0.0
        %3191 = vmatmul.mubr.f32.gmra.mrb[0].mxu0 %v2843
        %v3192 = vpop.f32.mrb[0].mxu0
        %v3193 = vadd.f32 %v2879, %v3192
        %v3194 = vpop.f32.mrb[0].mxu0
        %3195 = vmatprep.mubr.f32.mxu0 0.0
        %3196 = vmatmul.mubr.f32.gmra.mrb[0].mxu0 %v2844
        %v3197 = vpop.f32.mrb[0].mxu0
        %v3198 = vadd.f32 %v2879, %v3197
        %v3199 = vpop.f32.mrb[0].mxu0
        %3200 = vmatprep.mubr.f32.mxu0 0.0
        %3201 = vmatmul.mubr.f32.gmra.mrb[0].mxu0 %v2845
        %v3202 = vpop.f32.mrb[0].mxu0
        %v3203 = vadd.f32 %v2879, %v3202
        %v3204 = vpop.f32.mrb[0].mxu0
        %3205 = vmatprep.mubr.f32.mxu0 0.0
        %3206 = vmatmul.mubr.f32.gmra.mrb[0].mxu0 %v2846
        %v3207 = vpop.f32.mrb[0].mxu0
        %v3208 = vadd.f32 %v2879, %v3207
        %v3209 = vpop.f32.mrb[0].mxu0
        %3210 = vmatprep.mubr.f32.mxu0 0.0
        %3211 = vmatmul.mubr.f32.gmra.mrb[0].mxu0 %v2847
        %v3212 = vpop.f32.mrb[0].mxu0
        %v3213 = vadd.f32 %v2879, %v3212
        %v3214 = vpop.f32.mrb[0].mxu0
        %3215 = vmatprep.mubr.f32.mxu0 0.0
        %3216 = vmatmul.mubr.f32.gmra.mrb[0].mxu0 %v2848
        %v3217 = vpop.f32.mrb[0].mxu0
        %v3218 = vadd.f32 %v2879, %v3217
        %v3219 = vpop.f32.mrb[0].mxu0
        %3220 = vmatprep.mubr.f32.mxu0 0.0
        %3221 = vmatmul.mubr.f32.gmra.mrb[0].mxu0 %v2849
        %v3222 = vpop.f32.mrb[0].mxu0
        %v3223 = vadd.f32 %v2879, %v3222
        %v3224 = vpop.f32.mrb[0].mxu0
        %3225 = vmatprep.mubr.f32.mxu0 0.0
        %3226 = vmatmul.mubr.f32.gmra.mrb[0].mxu0 %v2850
        %v3227 = vpop.f32.mrb[0].mxu0
        %v3228 = vadd.f32 %v2879, %v3227
        %v3229 = vpop.f32.mrb[0].mxu0
        %3230 = vmatprep.mubr.f32.mxu0 0.0
        %3231 = vmatmul.mubr.f32.gmra.mrb[0].mxu0 %v2851
        %v3232 = vpop.f32.mrb[0].mxu0
        %v3233 = vadd.f32 %v2879, %v3232
        %v3234 = vpop.f32.mrb[0].mxu0
        %3235 = vmatprep.mubr.f32.mxu0 0.0
        %3236 = vmatmul.mubr.f32.gmra.mrb[0].mxu0 %v2852
        %v3237 = vpop.f32.mrb[0].mxu0
        %v3238 = vadd.f32 %v2879, %v3237
        %v3239 = vpop.f32.mrb[0].mxu0
        %3240 = vmatprep.mubr.f32.mxu0 0.0
        %3241 = vmatmul.mubr.f32.gmra.mrb[0].mxu0 %v2853
        %v3242 = vpop.f32.mrb[0].mxu0
        %v3243 = vadd.f32 %v2879, %v3242
        %v3244 = vpop.f32.mrb[0].mxu0
        %3245 = vmatprep.mubr.f32.mxu0 0.0
        %3246 = vmatmul.mubr.f32.gmra.mrb[0].mxu0 %v2854
        %v3247 = vpop.f32.mrb[0].mxu0
        %v3248 = vadd.f32 %v2879, %v3247
        %v3249 = vpop.f32.mrb[0].mxu0
        %3250 = vmatprep.mubr.f32.mxu0 0.0
        %3251 = vmatmul.mubr.f32.gmra.mrb[0].mxu0 %v2855
        %v3252 = vpop.f32.mrb[0].mxu0
        %v3253 = vadd.f32 %v2879, %v3252
        %v3254 = vpop.f32.mrb[0].mxu0
        %3255 = vmatprep.mubr.f32.mxu0 0.0
        %3256 = vmatmul.mubr.f32.gmra.mrb[0].mxu0 %v2856
        %v3257 = vpop.f32.mrb[0].mxu0
        %v3258 = vadd.f32 %v2879, %v3257
        %v3259 = vpop.f32.mrb[0].mxu0
        %3260 = vmatprep.mubr.f32.mxu0 0.0
        %3261 = vmatmul.mubr.f32.gmra.mrb[0].mxu0 %v2857
        %v3262 = vpop.f32.mrb[0].mxu0
        %v3263 = vadd.f32 %v2879, %v3262
        %v3264 = vpop.f32.mrb[0].mxu0
        %3265 = vdwg.mxu0
        %v3266 = vmul.f32 %v2948, %v2948
        %v3267 = vmul.f32 %v2953, %v2953
        %v3268 = vmul.f32 %v2958, %v2958
        %v3269 = vmul.f32 %v2963, %v2963
        %v3270 = vmul.f32 %v2968, %v2968
        %v3271 = vmul.f32 %v2973, %v2973
        %v3272 = vmul.f32 %v2978, %v2978
        %v3273 = vmul.f32 %v2983, %v2983
        %v3274 = vmul.f32 %v2988, %v2988
        %v3275 = vmul.f32 %v2993, %v2993
        %v3276 = vmul.f32 %v2998, %v2998
        %v3277 = vmul.f32 %v3003, %v3003
        %v3278 = vmul.f32 %v3008, %v3008
        %v3279 = vmul.f32 %v3013, %v3013
        %v3280 = vmul.f32 %v3018, %v3018
        %v3281 = vmul.f32 %v3023, %v3023
        %v3282 = vmul.f32 %v3028, %v3028
        %v3283 = vmul.f32 %v3033, %v3033
        %v3284 = vmul.f32 %v3038, %v3038
        %v3285 = vmul.f32 %v3043, %v3043
        %v3286 = vmul.f32 %v3048, %v3048
        %v3287 = vmul.f32 %v3053, %v3053
        %v3288 = vmul.f32 %v3058, %v3058
        %v3289 = vmul.f32 %v3063, %v3063
        %v3290 = vmul.f32 %v3068, %v3068
        %v3291 = vmul.f32 %v3073, %v3073
        %v3292 = vmul.f32 %v3078, %v3078
        %v3293 = vmul.f32 %v3083, %v3083
        %v3294 = vmul.f32 %v3088, %v3088
        %v3295 = vmul.f32 %v3093, %v3093
        %v3296 = vmul.f32 %v3098, %v3098
        %v3297 = vmul.f32 %v3103, %v3103
        %v3298 = vmul.f32 %v3108, %v3108
        %v3299 = vmul.f32 %v3113, %v3113
        %v3300 = vmul.f32 %v3118, %v3118
        %v3301 = vmul.f32 %v3123, %v3123
        %v3302 = vmul.f32 %v3128, %v3128
        %v3303 = vmul.f32 %v3133, %v3133
        %v3304 = vmul.f32 %v3138, %v3138
        %v3305 = vmul.f32 %v3143, %v3143
        %v3306 = vmul.f32 %v3148, %v3148
        %v3307 = vmul.f32 %v3153, %v3153
        %v3308 = vmul.f32 %v3158, %v3158
        %v3309 = vmul.f32 %v3163, %v3163
        %v3310 = vmul.f32 %v3168, %v3168
        %v3311 = vmul.f32 %v3173, %v3173
        %v3312 = vmul.f32 %v3178, %v3178
        %v3313 = vmul.f32 %v3183, %v3183
        %v3314 = vmul.f32 %v3188, %v3188
        %v3315 = vmul.f32 %v3193, %v3193
        %v3316 = vmul.f32 %v3198, %v3198
        %v3317 = vmul.f32 %v3203, %v3203
        %v3318 = vmul.f32 %v3208, %v3208
        %v3319 = vmul.f32 %v3213, %v3213
        %v3320 = vmul.f32 %v3218, %v3218
        %v3321 = vmul.f32 %v3223, %v3223
        %v3322 = vmul.f32 %v3228, %v3228
        %v3323 = vmul.f32 %v3233, %v3233
        %v3324 = vmul.f32 %v3238, %v3238
        %v3325 = vmul.f32 %v3243, %v3243
        %v3326 = vmul.f32 %v3248, %v3248
        %v3327 = vmul.f32 %v3253, %v3253
        %v3328 = vmul.f32 %v3258, %v3258
        %v3329 = vmul.f32 %v3263, %v3263
        %3330 = vadd.xlane.f32.xlu0 %v3266
        %v3331 = vpop.xlane.xlu0 %3330
        %3332 = vadd.xlane.f32.xlu0 %v3267
        %v3333 = vpop.xlane.xlu0 %3332
        %3334 = vadd.xlane.f32.xlu0 %v3268
        %v3335 = vpop.xlane.xlu0 %3334
        %3336 = vadd.xlane.f32.xlu0 %v3269
        %v3337 = vpop.xlane.xlu0 %3336
        %3338 = vadd.xlane.f32.xlu0 %v3270
        %v3339 = vpop.xlane.xlu0 %3338
        %3340 = vadd.xlane.f32.xlu0 %v3271
        %v3341 = vpop.xlane.xlu0 %3340
        %3342 = vadd.xlane.f32.xlu0 %v3272
        %v3343 = vpop.xlane.xlu0 %3342
        %3344 = vadd.xlane.f32.xlu0 %v3273
        %v3345 = vpop.xlane.xlu0 %3344
        %3346 = vadd.xlane.f32.xlu0 %v3274
        %v3347 = vpop.xlane.xlu0 %3346
        %3348 = vadd.xlane.f32.xlu0 %v3275
        %v3349 = vpop.xlane.xlu0 %3348
        %3350 = vadd.xlane.f32.xlu0 %v3276
        %v3351 = vpop.xlane.xlu0 %3350
        %3352 = vadd.xlane.f32.xlu0 %v3277
        %v3353 = vpop.xlane.xlu0 %3352
        %3354 = vadd.xlane.f32.xlu0 %v3278
        %v3355 = vpop.xlane.xlu0 %3354
        %3356 = vadd.xlane.f32.xlu0 %v3279
        %v3357 = vpop.xlane.xlu0 %3356
        %3358 = vadd.xlane.f32.xlu0 %v3280
        %v3359 = vpop.xlane.xlu0 %3358
        %3360 = vadd.xlane.f32.xlu0 %v3281
        %v3361 = vpop.xlane.xlu0 %3360
        %3362 = vadd.xlane.f32.xlu0 %v3282
        %v3363 = vpop.xlane.xlu0 %3362
        %3364 = vadd.xlane.f32.xlu0 %v3283
        %v3365 = vpop.xlane.xlu0 %3364
        %3366 = vadd.xlane.f32.xlu0 %v3284
        %v3367 = vpop.xlane.xlu0 %3366
        %3368 = vadd.xlane.f32.xlu0 %v3285
        %v3369 = vpop.xlane.xlu0 %3368
        %3370 = vadd.xlane.f32.xlu0 %v3286
        %v3371 = vpop.xlane.xlu0 %3370
        %3372 = vadd.xlane.f32.xlu0 %v3287
        %v3373 = vpop.xlane.xlu0 %3372
        %3374 = vadd.xlane.f32.xlu0 %v3288
        %v3375 = vpop.xlane.xlu0 %3374
        %3376 = vadd.xlane.f32.xlu0 %v3289
        %v3377 = vpop.xlane.xlu0 %3376
        %3378 = vadd.xlane.f32.xlu0 %v3290
        %v3379 = vpop.xlane.xlu0 %3378
        %3380 = vadd.xlane.f32.xlu0 %v3291
        %v3381 = vpop.xlane.xlu0 %3380
        %3382 = vadd.xlane.f32.xlu0 %v3292
        %v3383 = vpop.xlane.xlu0 %3382
        %3384 = vadd.xlane.f32.xlu0 %v3293
        %v3385 = vpop.xlane.xlu0 %3384
        %3386 = vadd.xlane.f32.xlu0 %v3294
        %v3387 = vpop.xlane.xlu0 %3386
        %3388 = vadd.xlane.f32.xlu0 %v3295
        %v3389 = vpop.xlane.xlu0 %3388
        %3390 = vadd.xlane.f32.xlu0 %v3296
        %v3391 = vpop.xlane.xlu0 %3390
        %3392 = vadd.xlane.f32.xlu0 %v3297
        %v3393 = vpop.xlane.xlu0 %3392
        %3394 = vadd.xlane.f32.xlu0 %v3298
        %v3395 = vpop.xlane.xlu0 %3394
        %3396 = vadd.xlane.f32.xlu0 %v3299
        %v3397 = vpop.xlane.xlu0 %3396
        %3398 = vadd.xlane.f32.xlu0 %v3300
        %v3399 = vpop.xlane.xlu0 %3398
        %3400 = vadd.xlane.f32.xlu0 %v3301
        %v3401 = vpop.xlane.xlu0 %3400
        %3402 = vadd.xlane.f32.xlu0 %v3302
        %v3403 = vpop.xlane.xlu0 %3402
        %3404 = vadd.xlane.f32.xlu0 %v3303
        %v3405 = vpop.xlane.xlu0 %3404
        %3406 = vadd.xlane.f32.xlu0 %v3304
        %v3407 = vpop.xlane.xlu0 %3406
        %3408 = vadd.xlane.f32.xlu0 %v3305
        %v3409 = vpop.xlane.xlu0 %3408
        %3410 = vadd.xlane.f32.xlu0 %v3306
        %v3411 = vpop.xlane.xlu0 %3410
        %3412 = vadd.xlane.f32.xlu0 %v3307
        %v3413 = vpop.xlane.xlu0 %3412
        %3414 = vadd.xlane.f32.xlu0 %v3308
        %v3415 = vpop.xlane.xlu0 %3414
        %3416 = vadd.xlane.f32.xlu0 %v3309
        %v3417 = vpop.xlane.xlu0 %3416
        %3418 = vadd.xlane.f32.xlu0 %v3310
        %v3419 = vpop.xlane.xlu0 %3418
        %3420 = vadd.xlane.f32.xlu0 %v3311
        %v3421 = vpop.xlane.xlu0 %3420
        %3422 = vadd.xlane.f32.xlu0 %v3312
        %v3423 = vpop.xlane.xlu0 %3422
        %3424 = vadd.xlane.f32.xlu0 %v3313
        %v3425 = vpop.xlane.xlu0 %3424
        %3426 = vadd.xlane.f32.xlu0 %v3314
        %v3427 = vpop.xlane.xlu0 %3426
        %3428 = vadd.xlane.f32.xlu0 %v3315
        %v3429 = vpop.xlane.xlu0 %3428
        %3430 = vadd.xlane.f32.xlu0 %v3316
        %v3431 = vpop.xlane.xlu0 %3430
        %3432 = vadd.xlane.f32.xlu0 %v3317
        %v3433 = vpop.xlane.xlu0 %3432
        %3434 = vadd.xlane.f32.xlu0 %v3318
        %v3435 = vpop.xlane.xlu0 %3434
        %3436 = vadd.xlane.f32.xlu0 %v3319
        %v3437 = vpop.xlane.xlu0 %3436
        %3438 = vadd.xlane.f32.xlu0 %v3320
        %v3439 = vpop.xlane.xlu0 %3438
        %3440 = vadd.xlane.f32.xlu0 %v3321
        %v3441 = vpop.xlane.xlu0 %3440
        %3442 = vadd.xlane.f32.xlu0 %v3322
        %v3443 = vpop.xlane.xlu0 %3442
        %3444 = vadd.xlane.f32.xlu0 %v3323
        %v3445 = vpop.xlane.xlu0 %3444
        %3446 = vadd.xlane.f32.xlu0 %v3324
        %v3447 = vpop.xlane.xlu0 %3446
        %3448 = vadd.xlane.f32.xlu0 %v3325
        %v3449 = vpop.xlane.xlu0 %3448
        %3450 = vadd.xlane.f32.xlu0 %v3326
        %v3451 = vpop.xlane.xlu0 %3450
        %3452 = vadd.xlane.f32.xlu0 %v3327
        %v3453 = vpop.xlane.xlu0 %3452
        %3454 = vadd.xlane.f32.xlu0 %v3328
        %v3455 = vpop.xlane.xlu0 %3454
        %3456 = vadd.xlane.f32.xlu0 %v3329
        %v3457 = vpop.xlane.xlu0 %3456
        %v3458 = vmax.f32 %v3331, 1e-24
        %v3459 = vmax.f32 %v3333, 1e-24
        %v3460 = vmax.f32 %v3335, 1e-24
        %v3461 = vmax.f32 %v3337, 1e-24
        %v3462 = vmax.f32 %v3339, 1e-24
        %v3463 = vmax.f32 %v3341, 1e-24
        %v3464 = vmax.f32 %v3343, 1e-24
        %v3465 = vmax.f32 %v3345, 1e-24
        %v3466 = vmax.f32 %v3347, 1e-24
        %v3467 = vmax.f32 %v3349, 1e-24
        %v3468 = vmax.f32 %v3351, 1e-24
        %v3469 = vmax.f32 %v3353, 1e-24
        %v3470 = vmax.f32 %v3355, 1e-24
        %v3471 = vmax.f32 %v3357, 1e-24
        %v3472 = vmax.f32 %v3359, 1e-24
        %v3473 = vmax.f32 %v3361, 1e-24
        %v3474 = vmax.f32 %v3363, 1e-24
        %v3475 = vmax.f32 %v3365, 1e-24
        %v3476 = vmax.f32 %v3367, 1e-24
        %v3477 = vmax.f32 %v3369, 1e-24
        %v3478 = vmax.f32 %v3371, 1e-24
        %v3479 = vmax.f32 %v3373, 1e-24
        %v3480 = vmax.f32 %v3375, 1e-24
        %v3481 = vmax.f32 %v3377, 1e-24
        %v3482 = vmax.f32 %v3379, 1e-24
        %v3483 = vmax.f32 %v3381, 1e-24
        %v3484 = vmax.f32 %v3383, 1e-24
        %v3485 = vmax.f32 %v3385, 1e-24
        %v3486 = vmax.f32 %v3387, 1e-24
        %v3487 = vmax.f32 %v3389, 1e-24
        %v3488 = vmax.f32 %v3391, 1e-24
        %v3489 = vmax.f32 %v3393, 1e-24
        %v3490 = vmax.f32 %v3395, 1e-24
        %v3491 = vmax.f32 %v3397, 1e-24
        %v3492 = vmax.f32 %v3399, 1e-24
        %v3493 = vmax.f32 %v3401, 1e-24
        %v3494 = vmax.f32 %v3403, 1e-24
        %v3495 = vmax.f32 %v3405, 1e-24
        %v3496 = vmax.f32 %v3407, 1e-24
        %v3497 = vmax.f32 %v3409, 1e-24
        %v3498 = vmax.f32 %v3411, 1e-24
        %v3499 = vmax.f32 %v3413, 1e-24
        %v3500 = vmax.f32 %v3415, 1e-24
        %v3501 = vmax.f32 %v3417, 1e-24
        %v3502 = vmax.f32 %v3419, 1e-24
        %v3503 = vmax.f32 %v3421, 1e-24
        %v3504 = vmax.f32 %v3423, 1e-24
        %v3505 = vmax.f32 %v3425, 1e-24
        %v3506 = vmax.f32 %v3427, 1e-24
        %v3507 = vmax.f32 %v3429, 1e-24
        %v3508 = vmax.f32 %v3431, 1e-24
        %v3509 = vmax.f32 %v3433, 1e-24
        %v3510 = vmax.f32 %v3435, 1e-24
        %v3511 = vmax.f32 %v3437, 1e-24
        %v3512 = vmax.f32 %v3439, 1e-24
        %v3513 = vmax.f32 %v3441, 1e-24
        %v3514 = vmax.f32 %v3443, 1e-24
        %v3515 = vmax.f32 %v3445, 1e-24
        %v3516 = vmax.f32 %v3447, 1e-24
        %v3517 = vmax.f32 %v3449, 1e-24
        %v3518 = vmax.f32 %v3451, 1e-24
        %v3519 = vmax.f32 %v3453, 1e-24
        %v3520 = vmax.f32 %v3455, 1e-24
        %v3521 = vmax.f32 %v3457, 1e-24
        %v3522 = vrsqrt.pop %v3458
        %v3523 = vrsqrt.pop %v3459
        %v3524 = vrsqrt.pop %v3460
        %v3525 = vrsqrt.pop %v3461
        %v3526 = vrsqrt.pop %v3462
        %v3527 = vrsqrt.pop %v3463
        %v3528 = vrsqrt.pop %v3464
        %v3529 = vrsqrt.pop %v3465
        %v3530 = vrsqrt.pop %v3466
        %v3531 = vrsqrt.pop %v3467
        %v3532 = vrsqrt.pop %v3468
        %v3533 = vrsqrt.pop %v3469
        %v3534 = vrsqrt.pop %v3470
        %v3535 = vrsqrt.pop %v3471
        %v3536 = vrsqrt.pop %v3472
        %v3537 = vrsqrt.pop %v3473
        %v3538 = vrsqrt.pop %v3474
        %v3539 = vrsqrt.pop %v3475
        %v3540 = vrsqrt.pop %v3476
        %v3541 = vrsqrt.pop %v3477
        %v3542 = vrsqrt.pop %v3478
        %v3543 = vrsqrt.pop %v3479
        %v3544 = vrsqrt.pop %v3480
        %v3545 = vrsqrt.pop %v3481
        %v3546 = vrsqrt.pop %v3482
        %v3547 = vrsqrt.pop %v3483
        %v3548 = vrsqrt.pop %v3484
        %v3549 = vrsqrt.pop %v3485
        %v3550 = vrsqrt.pop %v3486
        %v3551 = vrsqrt.pop %v3487
        %v3552 = vrsqrt.pop %v3488
        %v3553 = vrsqrt.pop %v3489
        %v3554 = vrsqrt.pop %v3490
        %v3555 = vrsqrt.pop %v3491
        %v3556 = vrsqrt.pop %v3492
        %v3557 = vrsqrt.pop %v3493
        %v3558 = vrsqrt.pop %v3494
        %v3559 = vrsqrt.pop %v3495
        %v3560 = vrsqrt.pop %v3496
        %v3561 = vrsqrt.pop %v3497
        %v3562 = vrsqrt.pop %v3498
        %v3563 = vrsqrt.pop %v3499
        %v3564 = vrsqrt.pop %v3500
        %v3565 = vrsqrt.pop %v3501
        %v3566 = vrsqrt.pop %v3502
        %v3567 = vrsqrt.pop %v3503
        %v3568 = vrsqrt.pop %v3504
        %v3569 = vrsqrt.pop %v3505
        %v3570 = vrsqrt.pop %v3506
        %v3571 = vrsqrt.pop %v3507
        %v3572 = vrsqrt.pop %v3508
        %v3573 = vrsqrt.pop %v3509
        %v3574 = vrsqrt.pop %v3510
        %v3575 = vrsqrt.pop %v3511
        %v3576 = vrsqrt.pop %v3512
        %v3577 = vrsqrt.pop %v3513
        %v3578 = vrsqrt.pop %v3514
        %v3579 = vrsqrt.pop %v3515
        %v3580 = vrsqrt.pop %v3516
        %v3581 = vrsqrt.pop %v3517
        %v3582 = vrsqrt.pop %v3518
        %v3583 = vrsqrt.pop %v3519
        %v3584 = vrsqrt.pop %v3520
        %v3585 = vrsqrt.pop %v3521
        %v3586 = vmul.f32 %v2948, %v3522
        %v3587 = vmul.f32 %v2953, %v3523
        %v3588 = vmul.f32 %v2958, %v3524
        %v3589 = vmul.f32 %v2963, %v3525
        %v3590 = vmul.f32 %v2968, %v3526
        %v3591 = vmul.f32 %v2973, %v3527
        %v3592 = vmul.f32 %v2978, %v3528
        %v3593 = vmul.f32 %v2983, %v3529
        %v3594 = vmul.f32 %v2988, %v3530
        %v3595 = vmul.f32 %v2993, %v3531
        %v3596 = vmul.f32 %v2998, %v3532
        %v3597 = vmul.f32 %v3003, %v3533
        %v3598 = vmul.f32 %v3008, %v3534
        %v3599 = vmul.f32 %v3013, %v3535
        %v3600 = vmul.f32 %v3018, %v3536
        %v3601 = vmul.f32 %v3023, %v3537
        %v3602 = vmul.f32 %v3028, %v3538
        %v3603 = vmul.f32 %v3033, %v3539
        %v3604 = vmul.f32 %v3038, %v3540
        %v3605 = vmul.f32 %v3043, %v3541
        %v3606 = vmul.f32 %v3048, %v3542
        %v3607 = vmul.f32 %v3053, %v3543
        %v3608 = vmul.f32 %v3058, %v3544
        %v3609 = vmul.f32 %v3063, %v3545
        %v3610 = vmul.f32 %v3068, %v3546
        %v3611 = vmul.f32 %v3073, %v3547
        %v3612 = vmul.f32 %v3078, %v3548
        %v3613 = vmul.f32 %v3083, %v3549
        %v3614 = vmul.f32 %v3088, %v3550
        %v3615 = vmul.f32 %v3093, %v3551
        %v3616 = vmul.f32 %v3098, %v3552
        %v3617 = vmul.f32 %v3103, %v3553
        %v3618 = vmul.f32 %v3108, %v3554
        %v3619 = vmul.f32 %v3113, %v3555
        %v3620 = vmul.f32 %v3118, %v3556
        %v3621 = vmul.f32 %v3123, %v3557
        %v3622 = vmul.f32 %v3128, %v3558
        %v3623 = vmul.f32 %v3133, %v3559
        %v3624 = vmul.f32 %v3138, %v3560
        %v3625 = vmul.f32 %v3143, %v3561
        %v3626 = vmul.f32 %v3148, %v3562
        %v3627 = vmul.f32 %v3153, %v3563
        %v3628 = vmul.f32 %v3158, %v3564
        %v3629 = vmul.f32 %v3163, %v3565
        %v3630 = vmul.f32 %v3168, %v3566
        %v3631 = vmul.f32 %v3173, %v3567
        %v3632 = vmul.f32 %v3178, %v3568
        %v3633 = vmul.f32 %v3183, %v3569
        %v3634 = vmul.f32 %v3188, %v3570
        %v3635 = vmul.f32 %v3193, %v3571
        %v3636 = vmul.f32 %v3198, %v3572
        %v3637 = vmul.f32 %v3203, %v3573
        %v3638 = vmul.f32 %v3208, %v3574
        %v3639 = vmul.f32 %v3213, %v3575
        %v3640 = vmul.f32 %v3218, %v3576
        %v3641 = vmul.f32 %v3223, %v3577
        %v3642 = vmul.f32 %v3228, %v3578
        %v3643 = vmul.f32 %v3233, %v3579
        %v3644 = vmul.f32 %v3238, %v3580
        %v3645 = vmul.f32 %v3243, %v3581
        %v3646 = vmul.f32 %v3248, %v3582
        %v3647 = vmul.f32 %v3253, %v3583
        %v3648 = vmul.f32 %v3258, %v3584
        %v3649 = vmul.f32 %v3263, %v3585
        %3650 = vst [vmem:[%s350] sm:$0xff] %v3586
        %3651 = vst [vmem:[%s350 + $0x8] sm:$0xff] %v3587
        %3652 = vst [vmem:[%s350 + $0x10] sm:$0xff] %v3588
        %3653 = vst [vmem:[%s350 + $0x18] sm:$0xff] %v3589
        %3654 = vst [vmem:[%s350 + $0x20] sm:$0xff] %v3590
        %3655 = vst [vmem:[%s350 + $0x28] sm:$0xff] %v3591
        %3656 = vst [vmem:[%s350 + $0x30] sm:$0xff] %v3592
        %3657 = vst [vmem:[%s350 + $0x38] sm:$0xff] %v3593
        %3658 = vst [vmem:[%s350 + $0x40] sm:$0xff] %v3594
        %3659 = vst [vmem:[%s350 + $0x48] sm:$0xff] %v3595
        %3660 = vst [vmem:[%s350 + $0x50] sm:$0xff] %v3596
        %3661 = vst [vmem:[%s350 + $0x58] sm:$0xff] %v3597
        %3662 = vst [vmem:[%s350 + $0x60] sm:$0xff] %v3598
        %3663 = vst [vmem:[%s350 + $0x68] sm:$0xff] %v3599
        %3664 = vst [vmem:[%s350 + $0x70] sm:$0xff] %v3600
        %3665 = vst [vmem:[%s350 + $0x78] sm:$0xff] %v3601
        %3666 = vst [vmem:[%s350 + $0x80] sm:$0xff] %v3602
        %3667 = vst [vmem:[%s350 + $0x88] sm:$0xff] %v3603
        %3668 = vst [vmem:[%s350 + $0x90] sm:$0xff] %v3604
        %3669 = vst [vmem:[%s350 + $0x98] sm:$0xff] %v3605
        %3670 = vst [vmem:[%s350 + $0xa0] sm:$0xff] %v3606
        %3671 = vst [vmem:[%s350 + $0xa8] sm:$0xff] %v3607
        %3672 = vst [vmem:[%s350 + $0xb0] sm:$0xff] %v3608
        %3673 = vst [vmem:[%s350 + $0xb8] sm:$0xff] %v3609
        %3674 = vst [vmem:[%s350 + $0xc0] sm:$0xff] %v3610
        %3675 = vst [vmem:[%s350 + $0xc8] sm:$0xff] %v3611
        %3676 = vst [vmem:[%s350 + $0xd0] sm:$0xff] %v3612
        %3677 = vst [vmem:[%s350 + $0xd8] sm:$0xff] %v3613
        %3678 = vst [vmem:[%s350 + $0xe0] sm:$0xff] %v3614
        %3679 = vst [vmem:[%s350 + $0xe8] sm:$0xff] %v3615
        %3680 = vst [vmem:[%s350 + $0xf0] sm:$0xff] %v3616
        %3681 = vst [vmem:[%s350 + $0xf8] sm:$0xff] %v3617
        %3682 = vst [vmem:[%s350 + $0x100] sm:$0xff] %v3618
        %3683 = vst [vmem:[%s350 + $0x108] sm:$0xff] %v3619
        %3684 = vst [vmem:[%s350 + $0x110] sm:$0xff] %v3620
        %3685 = vst [vmem:[%s350 + $0x118] sm:$0xff] %v3621
        %3686 = vst [vmem:[%s350 + $0x120] sm:$0xff] %v3622
        %3687 = vst [vmem:[%s350 + $0x128] sm:$0xff] %v3623
        %3688 = vst [vmem:[%s350 + $0x130] sm:$0xff] %v3624
        %3689 = vst [vmem:[%s350 + $0x138] sm:$0xff] %v3625
        %3690 = vst [vmem:[%s350 + $0x140] sm:$0xff] %v3626
        %3691 = vst [vmem:[%s350 + $0x148] sm:$0xff] %v3627
        %3692 = vst [vmem:[%s350 + $0x150] sm:$0xff] %v3628
        %3693 = vst [vmem:[%s350 + $0x158] sm:$0xff] %v3629
        %3694 = vst [vmem:[%s350 + $0x160] sm:$0xff] %v3630
        %3695 = vst [vmem:[%s350 + $0x168] sm:$0xff] %v3631
        %3696 = vst [vmem:[%s350 + $0x170] sm:$0xff] %v3632
        %3697 = vst [vmem:[%s350 + $0x178] sm:$0xff] %v3633
        %3698 = vst [vmem:[%s350 + $0x180] sm:$0xff] %v3634
        %3699 = vst [vmem:[%s350 + $0x188] sm:$0xff] %v3635
        %3700 = vst [vmem:[%s350 + $0x190] sm:$0xff] %v3636
        %3701 = vst [vmem:[%s350 + $0x198] sm:$0xff] %v3637
        %3702 = vst [vmem:[%s350 + $0x1a0] sm:$0xff] %v3638
        %3703 = vst [vmem:[%s350 + $0x1a8] sm:$0xff] %v3639
        %3704 = vst [vmem:[%s350 + $0x1b0] sm:$0xff] %v3640
        %3705 = vst [vmem:[%s350 + $0x1b8] sm:$0xff] %v3641
        %3706 = vst [vmem:[%s350 + $0x1c0] sm:$0xff] %v3642
        %3707 = vst [vmem:[%s350 + $0x1c8] sm:$0xff] %v3643
        %3708 = vst [vmem:[%s350 + $0x1d0] sm:$0xff] %v3644
        %3709 = vst [vmem:[%s350 + $0x1d8] sm:$0xff] %v3645
        %3710 = vst [vmem:[%s350 + $0x1e0] sm:$0xff] %v3646
        %3711 = vst [vmem:[%s350 + $0x1e8] sm:$0xff] %v3647
        %3712 = vst [vmem:[%s350 + $0x1f0] sm:$0xff] %v3648
        %3713 = vst [vmem:[%s350 + $0x1f8] sm:$0xff] %v3649
      $region52: #{hyper_gnn_conv.3} parent=43 // pred_fallthru
        _
      %s3714 = smul.u32 64, %s21
      %p3715 = scmp.lt.s32.totalorder %s3714, 127
      %s3716 = scalar_select %p3715, %s3714, 127
      %s3717 = smul.addr %s3716, 8
      %s3718 = scalar_lea.vmem %s6, %s3717
      // Predicated region
      $region53: #{hyper_gnn_conv.3} parent=43 // pred_check
        %p3719 = pneg %p195
      $region54: #{hyper_gnn_conv.3} parent=43 // pred_check_branch
        %3721 = sbr.rel (%p3719) target = $region56
      $region55: #{hyper_gnn_conv.3} parent=43 // pred_region
        %s3722 = smul.u32 64, %s21
      $region56: #{hyper_gnn_conv.3} parent=43 // pred_fallthru
        _
    $region44: #{hyper_gnn_conv.3} parent=5 // pred_fallthru
      _
    %p3723 = scmp.le.s32.totalorder 2, %s12
    // Predicated region
    $region57: #{hyper_gnn_conv.3} parent=5 // pred_check
      %p3724 = pneg %p3723
    $region58: #{hyper_gnn_conv.3} parent=5 // pred_check_branch
      %3726 = sbr.rel (%p3724) target = $region60
    $region59: #{hyper_gnn_conv.3} parent=5 // pred_region
      %s3727 = ssub.s32 %s12, 2
      // Predicated region
      $region61: #{hyper_gnn_conv.3} parent=59 // pred_check
        %p3728 = pneg %p201
      $region62: #{hyper_gnn_conv.3} parent=59 // pred_check_branch
        %3730 = sbr.rel (%p3728) target = $region64
      $region63: #{hyper_gnn_conv.3} parent=59 // pred_region
        %s3731 = smul.u32 64, %s23
        %p3732 = scmp.lt.s32.totalorder %s3731, 127
        %s3733 = scalar_select %p3732, %s3731, 127
        %s3734 = smul.addr %s3733, 8
        %s3735 = scalar_lea.vmem %s6, %s3734
      $region64: #{hyper_gnn_conv.3} parent=59 // pred_fallthru
        _
    $region60: #{hyper_gnn_conv.3} parent=5 // pred_fallthru
      _
  $region6: #{hyper_gnn_conv.3} parent=0 // loop_footer
    %s16 = sadd.s32 1, %s12
  $region7: #{hyper_gnn_conv.3} parent=0 // loop_footer_branch
    %11 = sbr.rel target = $region3
  $region8: #{hyper_gnn_conv.3} parent=0 // loop_exit
    _

// kernel: hyper_gnn_conv.2
$region0: #{hyper_gnn_conv.2}
  #allocation0 [shape = 'u32[]', space=smem, size = 0x4, offset = 0x4, fixed_abs, tag = 'smem constant byte address 0x4 - core index']
  #allocation1 [shape = 'u32[144,128]{1,0:T(1,128)}', space=vmem, size = 0x12000, scoped, tag = 'internal scratch']
  #allocation2 [shape = 'f32[512,128]{1,0:T(8,128)}', space=vmem, size = 0x40000, scoped, tag = 'scratch operand']
  %s0 = inlined_call_operand.vmem [shape: bf16[512,1024], index: 0, kind: input, shape index: {}]
  %s1 = inlined_call_operand.vmem [shape: bf16[1024,128], index: 1, kind: input, shape index: {}]
  %s2 = inlined_call_operand.vmem [shape: f32[512,1], index: 2, kind: input, shape index: {}]
  %s3 = inlined_call_operand.vmem [shape: f32[512,128], index: 3, kind: input, shape index: {}]
  %s4 = inlined_call_operand.vmem [shape: f32[128,128], index: 4, kind: input, shape index: {}]
  %s5 = inlined_call_operand.vmem [shape: f32[1,128], index: 5, kind: input, shape index: {}]
  %s6 = inlined_call_operand.vmem [shape: bf16[512,128], index: 6, kind: output, shape index: {}]
  %s7 = sld [smem:[#allocation0]]
  $region88: #{hyper_gnn_conv.2} parent=0
    _
  %s9 = ssub.s32 1, %s7
  %s10 = scalar_select 0, %s9, %s7
  $region1: #{hyper_gnn_conv.2} parent=0
    #allocation3 [shape = 'u8[1048576]{0}', space=vmem, size = 0x100000, scoped, tag = 'input window, operand 0']
    loop: start=0, step=1, limit=4
    $region2: #{hyper_gnn_conv.2} parent=1 // loop_pre_header
      _
    $region3: #{hyper_gnn_conv.2} parent=1 // loop_header
      %s12 = sphi 0, %s16
      %p13 = scmp.ge.s32.totalorder %s12, 4
      %s19 = sphi 0, %s31
      %s20 = sphi 0, %s27
      %s21 = sphi 0, %s19
      %s22 = sphi 0, %s20
      %s23 = sphi 0, %s21
      %s24 = sphi 0, %s22
      %s36 = sphi 0, %s38
      %s39 = sphi 0, %s36
      %s40 = sphi 0, %s39
      %s56 = sphi 0, %s40
      %s62 = sphi 0, %s64
      %s65 = sphi 0, %s62
      %s66 = sphi 0, %s65
      %s82 = sphi 0, %s66
      %s88 = sphi 0, %s90
      %s91 = sphi 0, %s88
      %s92 = sphi 0, %s91
      %s108 = sphi 0, %s92
      %s114 = sphi 0, %s116
      %s117 = sphi 0, %s114
      %s118 = sphi 0, %s117
      %s134 = sphi 0, %s118
      %s138 = sphi 0, %s138
      %s140 = sphi 0, %s138
      %s141 = sphi 0, %s140
      %s155 = sphi 0, %s141
      %s159 = sphi 0, %s159
      %s161 = sphi 0, %s159
      %s162 = sphi 0, %s161
      %s176 = sphi 0, %s162
      %s182 = sphi 0, %s184
      %s185 = sphi 0, %s182
      %s186 = sphi 0, %s185
      %s202 = sphi 0, %s186
    $region4: #{hyper_gnn_conv.2} parent=1 // loop_header_branch
      %15 = sbr.rel (%p13) target = $region8
    $region5: #{hyper_gnn_conv.2} parent=1 // loop_body
      %s17 = ssub.s32 %s12, 1
      %s18 = ssub.s32 %s12, 2
      %s25 = sadd.s32 1, %s20
      %p26 = scmp.ge.s32.totalorder %s25, 2
      %s27 = scalar_select %p26, 0, %s25
      %s28 = sadd.s32 1, %s19
      %s29 = scalar_select %p26, %s28, %s19
      %p30 = scmp.ge.s32.totalorder %s29, 1
      %s31 = scalar_select %p30, 0, %s29
      %s32 = ssub.s32 %s19, %s31
      %s33 = ssub.s32 %s20, %s27
      %s34 = sor.u32 %s32, %s33
      %p35 = scmp.eq.s32.totalorder %s34, 0
      %s37 = sadd.s32 %s36, 1
      %s38 = scalar_select %p35, %s36, %s37
      %p41 = pneg %p35
      %p42 = scmp.eq.s32.totalorder %s12, 1
      %p43 = por %p41, %p42
      %p44 = scmp.ne.s32.totalorder %s36, %s39
      %p45 = scmp.eq.s32.totalorder %s12, 0
      %p46 = por %p44, %p45
      %p47 = scmp.ne.s32.totalorder %s36, %s39
      %p48 = scmp.eq.s32.totalorder %s17, 1
      %p49 = por %p47, %p48
      %p50 = scmp.ne.s32.totalorder %s39, %s40
      %p51 = scmp.eq.s32.totalorder %s17, 0
      %p52 = por %p50, %p51
      %p53 = scmp.ne.s32.totalorder %s39, %s40
      %p54 = scmp.eq.s32.totalorder %s18, 1
      %p55 = por %p53, %p54
      %p57 = scmp.ne.s32.totalorder %s40, %s56
      %p58 = scmp.eq.s32.totalorder %s18, 0
      %p59 = por %p57, %p58
      %s60 = ssub.s32 %s20, %s27
      %p61 = scmp.eq.s32.totalorder %s60, 0
      %s63 = sadd.s32 %s62, 1
      %s64 = scalar_select %p61, %s62, %s63
      %p67 = pneg %p61
      %p68 = scmp.eq.s32.totalorder %s12, 1
      %p69 = por %p67, %p68
      %p70 = scmp.ne.s32.totalorder %s62, %s65
      %p71 = scmp.eq.s32.totalorder %s12, 0
      %p72 = por %p70, %p71
      %p73 = scmp.ne.s32.totalorder %s62, %s65
      %p74 = scmp.eq.s32.totalorder %s17, 1
      %p75 = por %p73, %p74
      %p76 = scmp.ne.s32.totalorder %s65, %s66
      %p77 = scmp.eq.s32.totalorder %s17, 0
      %p78 = por %p76, %p77
      %p79 = scmp.ne.s32.totalorder %s65, %s66
      %p80 = scmp.eq.s32.totalorder %s18, 1
      %p81 = por %p79, %p80
      %p83 = scmp.ne.s32.totalorder %s66, %s82
      %p84 = scmp.eq.s32.totalorder %s18, 0
      %p85 = por %p83, %p84
      %s86 = ssub.s32 %s19, %s31
      %p87 = scmp.eq.s32.totalorder %s86, 0
      %s89 = sadd.s32 %s88, 1
      %s90 = scalar_select %p87, %s88, %s89
      %p93 = pneg %p87
      %p94 = scmp.eq.s32.totalorder %s12, 1
      %p95 = por %p93, %p94
      %p96 = scmp.ne.s32.totalorder %s88, %s91
      %p97 = scmp.eq.s32.totalorder %s12, 0
      %p98 = por %p96, %p97
      %p99 = scmp.ne.s32.totalorder %s88, %s91
      %p100 = scmp.eq.s32.totalorder %s17, 1
      %p101 = por %p99, %p100
      %p102 = scmp.ne.s32.totalorder %s91, %s92
      %p103 = scmp.eq.s32.totalorder %s17, 0
      %p104 = por %p102, %p103
      %p105 = scmp.ne.s32.totalorder %s91, %s92
      %p106 = scmp.eq.s32.totalorder %s18, 1
      %p107 = por %p105, %p106
      %p109 = scmp.ne.s32.totalorder %s92, %s108
      %p110 = scmp.eq.s32.totalorder %s18, 0
      %p111 = por %p109, %p110
      %s112 = ssub.s32 %s19, %s31
      %p113 = scmp.eq.s32.totalorder %s112, 0
      %s115 = sadd.s32 %s114, 1
      %s116 = scalar_select %p113, %s114, %s115
      %p119 = pneg %p113
      %p120 = scmp.eq.s32.totalorder %s12, 1
      %p121 = por %p119, %p120
      %p122 = scmp.ne.s32.totalorder %s114, %s117
      %p123 = scmp.eq.s32.totalorder %s12, 0
      %p124 = por %p122, %p123
      %p125 = scmp.ne.s32.totalorder %s114, %s117
      %p126 = scmp.eq.s32.totalorder %s17, 1
      %p127 = por %p125, %p126
      %p128 = scmp.ne.s32.totalorder %s117, %s118
      %p129 = scmp.eq.s32.totalorder %s17, 0
      %p130 = por %p128, %p129
      %p131 = scmp.ne.s32.totalorder %s117, %s118
      %p132 = scmp.eq.s32.totalorder %s18, 1
      %p133 = por %p131, %p132
      %p135 = scmp.ne.s32.totalorder %s118, %s134
      %p136 = scmp.eq.s32.totalorder %s18, 0
      %p137 = por %p135, %p136
      %s139 = sadd.s32 %s138, 1
      %p142 = scmp.eq.s32.totalorder %s12, 1
      %p143 = scmp.ne.s32.totalorder %s138, %s140
      %p144 = scmp.eq.s32.totalorder %s12, 0
      %p145 = por %p143, %p144
      %p146 = scmp.ne.s32.totalorder %s138, %s140
      %p147 = scmp.eq.s32.totalorder %s17, 1
      %p148 = por %p146, %p147
      %p149 = scmp.ne.s32.totalorder %s140, %s141
      %p150 = scmp.eq.s32.totalorder %s17, 0
      %p151 = por %p149, %p150
      %p152 = scmp.ne.s32.totalorder %s140, %s141
      %p153 = scmp.eq.s32.totalorder %s18, 1
      %p154 = por %p152, %p153
      %p156 = scmp.ne.s32.totalorder %s141, %s155
      %p157 = scmp.eq.s32.totalorder %s18, 0
      %p158 = por %p156, %p157
      %s160 = sadd.s32 %s159, 1
      %p163 = scmp.eq.s32.totalorder %s12, 1
      %p164 = scmp.ne.s32.totalorder %s159, %s161
      %p165 = scmp.eq.s32.totalorder %s12, 0
      %p166 = por %p164, %p165
      %p167 = scmp.ne.s32.totalorder %s159, %s161
      %p168 = scmp.eq.s32.totalorder %s17, 1
      %p169 = por %p167, %p168
      %p170 = scmp.ne.s32.totalorder %s161, %s162
      %p171 = scmp.eq.s32.totalorder %s17, 0
      %p172 = por %p170, %p171
      %p173 = scmp.ne.s32.totalorder %s161, %s162
      %p174 = scmp.eq.s32.totalorder %s18, 1
      %p175 = por %p173, %p174
      %p177 = scmp.ne.s32.totalorder %s162, %s176
      %p178 = scmp.eq.s32.totalorder %s18, 0
      %p179 = por %p177, %p178
      %s180 = ssub.s32 %s19, %s31
      %p181 = scmp.eq.s32.totalorder %s180, 0
      %s183 = sadd.s32 %s182, 1
      %s184 = scalar_select %p181, %s182, %s183
      %p187 = pneg %p181
      %p188 = scmp.eq.s32.totalorder %s12, 1
      %p189 = por %p187, %p188
      %p190 = scmp.ne.s32.totalorder %s182, %s185
      %p191 = scmp.eq.s32.totalorder %s12, 0
      %p192 = por %p190, %p191
      %p193 = scmp.ne.s32.totalorder %s182, %s185
      %p194 = scmp.eq.s32.totalorder %s17, 1
      %p195 = por %p193, %p194
      %p196 = scmp.ne.s32.totalorder %s185, %s186
      %p197 = scmp.eq.s32.totalorder %s17, 0
      %p198 = por %p196, %p197
      %p199 = scmp.ne.s32.totalorder %s185, %s186
      %p200 = scmp.eq.s32.totalorder %s18, 1
      %p201 = por %p199, %p200
      %p203 = scmp.ne.s32.totalorder %s186, %s202
      %p204 = scmp.eq.s32.totalorder %s18, 0
      %p205 = por %p203, %p204
      %p206 = scmp.le.s32.totalorder 1, %s12
      %p207 = scmp.lt.s32.totalorder %s12, 3
      %p208 = pnand %p206, %p207
      %p209 = pneg %p208
      // Predicated region
      $region9: #{hyper_gnn_conv.2} parent=5 // pred_check
        _
      $region10: #{hyper_gnn_conv.2} parent=5 // pred_check_branch
        %211 = sbr.rel (%p208) target = $region12
      $region11: #{hyper_gnn_conv.2} parent=5 // pred_region
        %s212 = ssub.s32 %s12, 1
        // Predicated region
        $region13: #{hyper_gnn_conv.2} parent=11 // pred_check
          %p213 = pneg %p104
        $region14: #{hyper_gnn_conv.2} parent=11 // pred_check_branch
          %215 = sbr.rel (%p213) target = $region16
        $region15: #{hyper_gnn_conv.2} parent=11 // pred_region
          %s216 = smul.u32 64, %s21
          %p217 = scmp.lt.s32.totalorder %s216, 63
          %s218 = scalar_select %p217, %s216, 63
          %s219 = smul.addr %s218, 8
          %s220 = scalar_lea.vmem %s2, %s219
          %s221 = smul.u32 64, %s21
        $region16: #{hyper_gnn_conv.2} parent=11 // pred_fallthru
          _
        // Predicated region
        $region17: #{hyper_gnn_conv.2} parent=11 // pred_check
          %p222 = pneg %p130
        $region18: #{hyper_gnn_conv.2} parent=11 // pred_check_branch
          %224 = sbr.rel (%p222) target = $region20
        $region19: #{hyper_gnn_conv.2} parent=11 // pred_region
          %s225 = smul.u32 64, %s21
          %p226 = scmp.lt.s32.totalorder %s225, 63
          %s227 = scalar_select %p226, %s225, 63
          %s228 = smul.addr %s227, 8
          %s229 = scalar_lea.vmem %s3, %s228
          %s230 = smul.u32 64, %s21
        $region20: #{hyper_gnn_conv.2} parent=11 // pred_fallthru
          _
        // Predicated region
        $region21: #{hyper_gnn_conv.2} parent=11 // pred_check
          %p231 = pneg %p151
        $region22: #{hyper_gnn_conv.2} parent=11 // pred_check_branch
          %233 = sbr.rel (%p231) target = $region24
        $region23: #{hyper_gnn_conv.2} parent=11 // pred_region
          _
        $region24: #{hyper_gnn_conv.2} parent=11 // pred_fallthru
          _
        // Predicated region
        $region25: #{hyper_gnn_conv.2} parent=11 // pred_check
          %p234 = pneg %p172
        $region26: #{hyper_gnn_conv.2} parent=11 // pred_check_branch
          %236 = sbr.rel (%p234) target = $region28
        $region27: #{hyper_gnn_conv.2} parent=11 // pred_region
          _
        $region28: #{hyper_gnn_conv.2} parent=11 // pred_fallthru
          _
      $region12: #{hyper_gnn_conv.2} parent=5 // pred_fallthru
        _
      %p237 = scmp.lt.s32.totalorder %s12, 2
      // Predicated region
      $region29: #{hyper_gnn_conv.2} parent=5 // pred_check
        %p238 = pneg %p237
      $region30: #{hyper_gnn_conv.2} parent=5 // pred_check_branch
        %240 = sbr.rel (%p238) target = $region32
      $region31: #{hyper_gnn_conv.2} parent=5 // pred_region
        // Predicated region
        $region33: #{hyper_gnn_conv.2} parent=31 // pred_check
          %p241 = pneg %p46
        $region34: #{hyper_gnn_conv.2} parent=31 // pred_check_branch
          %243 = sbr.rel (%p241) target = $region36
        $region35: #{hyper_gnn_conv.2} parent=31 // pred_region
          %s244 = sand.u32 %s36, 1
          %s245 = sand.u32 %s36, 1
          %s246 = smul.addr %s245, 1024
          %s247 = scalar_lea.vmem [#allocation3], %s246
          %s248 = smul.u32 64, %s19
          %s249 = smul.u32 4, %s20
          %s250 = smul.addr %s248, 8
          %s251 = sadd.s32 %s249, %s250
          %s252 = smul.addr %s251, 4
          %s253 = scalar_lea.vmem %s0, %s252
          // Predicated region
          $region37: #{hyper_gnn_conv.2} parent=35 // pred_check
            _
          $region38: #{hyper_gnn_conv.2} parent=35 // pred_check_branch
            %255 = sbr.rel (0) target = $region40
          $region39: #{hyper_gnn_conv.2} parent=35 // pred_region
            // Predicated region
            $region41: #{hyper_gnn_conv.2} parent=39 // pred_check
              _
            $region42: #{hyper_gnn_conv.2} parent=39 // pred_check_branch
              %257 = sbr.rel (0) target = $region44
            $region43: #{hyper_gnn_conv.2} parent=39 // pred_region
              loop: start=0, step=1, limit=1
              $region45: #{hyper_gnn_conv.2} parent=43 // loop_pre_header
                _
              $region46: #{hyper_gnn_conv.2} parent=43 // loop_header
                %s259 = sphi 0, %s263
                %p260 = scmp.ge.s32.totalorder %s259, 1
                %s264 = sphi %s253, %s253
                %s265 = sphi %s247, %s247
              $region47: #{hyper_gnn_conv.2} parent=43 // loop_header_branch
                %262 = sbr.rel (%p260) target = $region51
              $region48: #{hyper_gnn_conv.2} parent=43 // loop_body
                %v266 = vld [vmem:[%s264] sm:$0xff]
                %267 = vst [vmem:[%s265] sm:$0xff] %v266
                %v268 = vld [vmem:[%s264 + $0x8] sm:$0xff]
                %269 = vst [vmem:[%s265 + $0x8] sm:$0xff] %v268
                %v270 = vld [vmem:[%s264 + $0x20] sm:$0xff]
                %271 = vst [vmem:[%s265 + $0x10] sm:$0xff] %v270
                %v272 = vld [vmem:[%s264 + $0x28] sm:$0xff]
                %273 = vst [vmem:[%s265 + $0x18] sm:$0xff] %v272
                %v274 = vld [vmem:[%s264 + $0x40] sm:$0xff]
                %275 = vst [vmem:[%s265 + $0x20] sm:$0xff] %v274
                %v276 = vld [vmem:[%s264 + $0x48] sm:$0xff]
                %277 = vst [vmem:[%s265 + $0x28] sm:$0xff] %v276
                %v278 = vld [vmem:[%s264 + $0x60] sm:$0xff]
                %279 = vst [vmem:[%s265 + $0x30] sm:$0xff] %v278
                %v280 = vld [vmem:[%s264 + $0x68] sm:$0xff]
                %281 = vst [vmem:[%s265 + $0x38] sm:$0xff] %v280
                %v282 = vld [vmem:[%s264 + $0x80] sm:$0xff]
                %283 = vst [vmem:[%s265 + $0x40] sm:$0xff] %v282
                %v284 = vld [vmem:[%s264 + $0x88] sm:$0xff]
                %285 = vst [vmem:[%s265 + $0x48] sm:$0xff] %v284
                %v286 = vld [vmem:[%s264 + $0xa0] sm:$0xff]
                %287 = vst [vmem:[%s265 + $0x50] sm:$0xff] %v286
                %v288 = vld [vmem:[%s264 + $0xa8] sm:$0xff]
                %289 = vst [vmem:[%s265 + $0x58] sm:$0xff] %v288
                %v290 = vld [vmem:[%s264 + $0xc0] sm:$0xff]
                %291 = vst [vmem:[%s265 + $0x60] sm:$0xff] %v290
                %v292 = vld [vmem:[%s264 + $0xc8] sm:$0xff]
                %293 = vst [vmem:[%s265 + $0x68] sm:$0xff] %v292
                %v294 = vld [vmem:[%s264 + $0xe0] sm:$0xff]
                %295 = vst [vmem:[%s265 + $0x70] sm:$0xff] %v294
                %v296 = vld [vmem:[%s264 + $0xe8] sm:$0xff]
                %297 = vst [vmem:[%s265 + $0x78] sm:$0xff] %v296
                %v298 = vld [vmem:[%s264 + $0x100] sm:$0xff]
                %299 = vst [vmem:[%s265 + $0x80] sm:$0xff] %v298
                %v300 = vld [vmem:[%s264 + $0x108] sm:$0xff]
                %301 = vst [vmem:[%s265 + $0x88] sm:$0xff] %v300
                %v302 = vld [vmem:[%s264 + $0x120] sm:$0xff]
                %303 = vst [vmem:[%s265 + $0x90] sm:$0xff] %v302
                %v304 = vld [vmem:[%s264 + $0x128] sm:$0xff]
                %305 = vst [vmem:[%s265 + $0x98] sm:$0xff] %v304
                %v306 = vld [vmem:[%s264 + $0x140] sm:$0xff]
                %307 = vst [vmem:[%s265 + $0xa0] sm:$0xff] %v306
                %v308 = vld [vmem:[%s264 + $0x148] sm:$0xff]
                %309 = vst [vmem:[%s265 + $0xa8] sm:$0xff] %v308
                %v310 = vld [vmem:[%s264 + $0x160] sm:$0xff]
                %311 = vst [vmem:[%s265 + $0xb0] sm:$0xff] %v310
                %v312 = vld [vmem:[%s264 + $0x168] sm:$0xff]
                %313 = vst [vmem:[%s265 + $0xb8] sm:$0xff] %v312
                %v314 = vld [vmem:[%s264 + $0x180] sm:$0xff]
                %315 = vst [vmem:[%s265 + $0xc0] sm:$0xff] %v314
                %v316 = vld [vmem:[%s264 + $0x188] sm:$0xff]
                %317 = vst [vmem:[%s265 + $0xc8] sm:$0xff] %v316
                %v318 = vld [vmem:[%s264 + $0x1a0] sm:$0xff]
                %319 = vst [vmem:[%s265 + $0xd0] sm:$0xff] %v318
                %v320 = vld [vmem:[%s264 + $0x1a8] sm:$0xff]
                %321 = vst [vmem:[%s265 + $0xd8] sm:$0xff] %v320
                %v322 = vld [vmem:[%s264 + $0x1c0] sm:$0xff]
                %323 = vst [vmem:[%s265 + $0xe0] sm:$0xff] %v322
                %v324 = vld [vmem:[%s264 + $0x1c8] sm:$0xff]
                %325 = vst [vmem:[%s265 + $0xe8] sm:$0xff] %v324
                %v326 = vld [vmem:[%s264 + $0x1e0] sm:$0xff]
                %327 = vst [vmem:[%s265 + $0xf0] sm:$0xff] %v326
                %v328 = vld [vmem:[%s264 + $0x1e8] sm:$0xff]
                %329 = vst [vmem:[%s265 + $0xf8] sm:$0xff] %v328
                %v330 = vld [vmem:[%s264 + $0x200] sm:$0xff]
                %331 = vst [vmem:[%s265 + $0x100] sm:$0xff] %v330
                %v332 = vld [vmem:[%s264 + $0x208] sm:$0xff]
                %333 = vst [vmem:[%s265 + $0x108] sm:$0xff] %v332
                %v334 = vld [vmem:[%s264 + $0x220] sm:$0xff]
                %335 = vst [vmem:[%s265 + $0x110] sm:$0xff] %v334
                %v336 = vld [vmem:[%s264 + $0x228] sm:$0xff]
                %337 = vst [vmem:[%s265 + $0x118] sm:$0xff] %v336
                %v338 = vld [vmem:[%s264 + $0x240] sm:$0xff]
                %339 = vst [vmem:[%s265 + $0x120] sm:$0xff] %v338
                %v340 = vld [vmem:[%s264 + $0x248] sm:$0xff]
                %341 = vst [vmem:[%s265 + $0x128] sm:$0xff] %v340
                %v342 = vld [vmem:[%s264 + $0x260] sm:$0xff]
                %343 = vst [vmem:[%s265 + $0x130] sm:$0xff] %v342
                %v344 = vld [vmem:[%s264 + $0x268] sm:$0xff]
                %345 = vst [vmem:[%s265 + $0x138] sm:$0xff] %v344
                %v346 = vld [vmem:[%s264 + $0x280] sm:$0xff]
                %347 = vst [vmem:[%s265 + $0x140] sm:$0xff] %v346
                %v348 = vld [vmem:[%s264 + $0x288] sm:$0xff]
                %349 = vst [vmem:[%s265 + $0x148] sm:$0xff] %v348
                %v350 = vld [vmem:[%s264 + $0x2a0] sm:$0xff]
                %351 = vst [vmem:[%s265 + $0x150] sm:$0xff] %v350
                %v352 = vld [vmem:[%s264 + $0x2a8] sm:$0xff]
                %353 = vst [vmem:[%s265 + $0x158] sm:$0xff] %v352
                %v354 = vld [vmem:[%s264 + $0x2c0] sm:$0xff]
                %355 = vst [vmem:[%s265 + $0x160] sm:$0xff] %v354
                %v356 = vld [vmem:[%s264 + $0x2c8] sm:$0xff]
                %357 = vst [vmem:[%s265 + $0x168] sm:$0xff] %v356
                %v358 = vld [vmem:[%s264 + $0x2e0] sm:$0xff]
                %359 = vst [vmem:[%s265 + $0x170] sm:$0xff] %v358
                %v360 = vld [vmem:[%s264 + $0x2e8] sm:$0xff]
                %361 = vst [vmem:[%s265 + $0x178] sm:$0xff] %v360
                %v362 = vld [vmem:[%s264 + $0x300] sm:$0xff]
                %363 = vst [vmem:[%s265 + $0x180] sm:$0xff] %v362
                %v364 = vld [vmem:[%s264 + $0x308] sm:$0xff]
                %365 = vst [vmem:[%s265 + $0x188] sm:$0xff] %v364
                %v366 = vld [vmem:[%s264 + $0x320] sm:$0xff]
                %367 = vst [vmem:[%s265 + $0x190] sm:$0xff] %v366
                %v368 = vld [vmem:[%s264 + $0x328] sm:$0xff]
                %369 = vst [vmem:[%s265 + $0x198] sm:$0xff] %v368
                %v370 = vld [vmem:[%s264 + $0x340] sm:$0xff]
                %371 = vst [vmem:[%s265 + $0x1a0] sm:$0xff] %v370
                %v372 = vld [vmem:[%s264 + $0x348] sm:$0xff]
                %373 = vst [vmem:[%s265 + $0x1a8] sm:$0xff] %v372
                %v374 = vld [vmem:[%s264 + $0x360] sm:$0xff]
                %375 = vst [vmem:[%s265 + $0x1b0] sm:$0xff] %v374
                %v376 = vld [vmem:[%s264 + $0x368] sm:$0xff]
                %377 = vst [vmem:[%s265 + $0x1b8] sm:$0xff] %v376
                %v378 = vld [vmem:[%s264 + $0x380] sm:$0xff]
                %379 = vst [vmem:[%s265 + $0x1c0] sm:$0xff] %v378
                %v380 = vld [vmem:[%s264 + $0x388] sm:$0xff]
                %381 = vst [vmem:[%s265 + $0x1c8] sm:$0xff] %v380
                %v382 = vld [vmem:[%s264 + $0x3a0] sm:$0xff]
                %383 = vst [vmem:[%s265 + $0x1d0] sm:$0xff] %v382
                %v384 = vld [vmem:[%s264 + $0x3a8] sm:$0xff]
                %385 = vst [vmem:[%s265 + $0x1d8] sm:$0xff] %v384
                %v386 = vld [vmem:[%s264 + $0x3c0] sm:$0xff]
                %387 = vst [vmem:[%s265 + $0x1e0] sm:$0xff] %v386
                %v388 = vld [vmem:[%s264 + $0x3c8] sm:$0xff]
                %389 = vst [vmem:[%s265 + $0x1e8] sm:$0xff] %v388
                %v390 = vld [vmem:[%s264 + $0x3e0] sm:$0xff]
                %391 = vst [vmem:[%s265 + $0x1f0] sm:$0xff] %v390
                %v392 = vld [vmem:[%s264 + $0x3e8] sm:$0xff]
                %393 = vst [vmem:[%s265 + $0x1f8] sm:$0xff] %v392
                %v394 = vld [vmem:[%s264 + $0x400] sm:$0xff]
                %395 = vst [vmem:[%s265 + $0x200] sm:$0xff] %v394
                %v396 = vld [vmem:[%s264 + $0x408] sm:$0xff]
                %397 = vst [vmem:[%s265 + $0x208] sm:$0xff] %v396
                %v398 = vld [vmem:[%s264 + $0x420] sm:$0xff]
                %399 = vst [vmem:[%s265 + $0x210] sm:$0xff] %v398
                %v400 = vld [vmem:[%s264 + $0x428] sm:$0xff]
                %401 = vst [vmem:[%s265 + $0x218] sm:$0xff] %v400
                %v402 = vld [vmem:[%s264 + $0x440] sm:$0xff]
                %403 = vst [vmem:[%s265 + $0x220] sm:$0xff] %v402
                %v404 = vld [vmem:[%s264 + $0x448] sm:$0xff]
                %405 = vst [vmem:[%s265 + $0x228] sm:$0xff] %v404
                %v406 = vld [vmem:[%s264 + $0x460] sm:$0xff]
                %407 = vst [vmem:[%s265 + $0x230] sm:$0xff] %v406
                %v408 = vld [vmem:[%s264 + $0x468] sm:$0xff]
                %409 = vst [vmem:[%s265 + $0x238] sm:$0xff] %v408
                %v410 = vld [vmem:[%s264 + $0x480] sm:$0xff]
                %411 = vst [vmem:[%s265 + $0x240] sm:$0xff] %v410
                %v412 = vld [vmem:[%s264 + $0x488] sm:$0xff]
                %413 = vst [vmem:[%s265 + $0x248] sm:$0xff] %v412
                %v414 = vld [vmem:[%s264 + $0x4a0] sm:$0xff]
                %415 = vst [vmem:[%s265 + $0x250] sm:$0xff] %v414
                %v416 = vld [vmem:[%s264 + $0x4a8] sm:$0xff]
                %417 = vst [vmem:[%s265 + $0x258] sm:$0xff] %v416
                %v418 = vld [vmem:[%s264 + $0x4c0] sm:$0xff]
                %419 = vst [vmem:[%s265 + $0x260] sm:$0xff] %v418
                %v420 = vld [vmem:[%s264 + $0x4c8] sm:$0xff]
                %421 = vst [vmem:[%s265 + $0x268] sm:$0xff] %v420
                %v422 = vld [vmem:[%s264 + $0x4e0] sm:$0xff]
                %423 = vst [vmem:[%s265 + $0x270] sm:$0xff] %v422
                %v424 = vld [vmem:[%s264 + $0x4e8] sm:$0xff]
                %425 = vst [vmem:[%s265 + $0x278] sm:$0xff] %v424
                %v426 = vld [vmem:[%s264 + $0x500] sm:$0xff]
                %427 = vst [vmem:[%s265 + $0x280] sm:$0xff] %v426
                %v428 = vld [vmem:[%s264 + $0x508] sm:$0xff]
                %429 = vst [vmem:[%s265 + $0x288] sm:$0xff] %v428
                %v430 = vld [vmem:[%s264 + $0x520] sm:$0xff]
                %431 = vst [vmem:[%s265 + $0x290] sm:$0xff] %v430
                %v432 = vld [vmem:[%s264 + $0x528] sm:$0xff]
                %433 = vst [vmem:[%s265 + $0x298] sm:$0xff] %v432
                %v434 = vld [vmem:[%s264 + $0x540] sm:$0xff]
                %435 = vst [vmem:[%s265 + $0x2a0] sm:$0xff] %v434
                %v436 = vld [vmem:[%s264 + $0x548] sm:$0xff]
                %437 = vst [vmem:[%s265 + $0x2a8] sm:$0xff] %v436
                %v438 = vld [vmem:[%s264 + $0x560] sm:$0xff]
                %439 = vst [vmem:[%s265 + $0x2b0] sm:$0xff] %v438
                %v440 = vld [vmem:[%s264 + $0x568] sm:$0xff]
                %441 = vst [vmem:[%s265 + $0x2b8] sm:$0xff] %v440
                %v442 = vld [vmem:[%s264 + $0x580] sm:$0xff]
                %443 = vst [vmem:[%s265 + $0x2c0] sm:$0xff] %v442
                %v444 = vld [vmem:[%s264 + $0x588] sm:$0xff]
                %445 = vst [vmem:[%s265 + $0x2c8] sm:$0xff] %v444
                %v446 = vld [vmem:[%s264 + $0x5a0] sm:$0xff]
                %447 = vst [vmem:[%s265 + $0x2d0] sm:$0xff] %v446
                %v448 = vld [vmem:[%s264 + $0x5a8] sm:$0xff]
                %449 = vst [vmem:[%s265 + $0x2d8] sm:$0xff] %v448
                %v450 = vld [vmem:[%s264 + $0x5c0] sm:$0xff]
                %451 = vst [vmem:[%s265 + $0x2e0] sm:$0xff] %v450
                %v452 = vld [vmem:[%s264 + $0x5c8] sm:$0xff]
                %453 = vst [vmem:[%s265 + $0x2e8] sm:$0xff] %v452
                %v454 = vld [vmem:[%s264 + $0x5e0] sm:$0xff]
                %455 = vst [vmem:[%s265 + $0x2f0] sm:$0xff] %v454
                %v456 = vld [vmem:[%s264 + $0x5e8] sm:$0xff]
                %457 = vst [vmem:[%s265 + $0x2f8] sm:$0xff] %v456
                %v458 = vld [vmem:[%s264 + $0x600] sm:$0xff]
                %459 = vst [vmem:[%s265 + $0x300] sm:$0xff] %v458
                %v460 = vld [vmem:[%s264 + $0x608] sm:$0xff]
                %461 = vst [vmem:[%s265 + $0x308] sm:$0xff] %v460
                %v462 = vld [vmem:[%s264 + $0x620] sm:$0xff]
                %463 = vst [vmem:[%s265 + $0x310] sm:$0xff] %v462
                %v464 = vld [vmem:[%s264 + $0x628] sm:$0xff]
                %465 = vst [vmem:[%s265 + $0x318] sm:$0xff] %v464
                %v466 = vld [vmem:[%s264 + $0x640] sm:$0xff]
                %467 = vst [vmem:[%s265 + $0x320] sm:$0xff] %v466
                %v468 = vld [vmem:[%s264 + $0x648] sm:$0xff]
                %469 = vst [vmem:[%s265 + $0x328] sm:$0xff] %v468
                %v470 = vld [vmem:[%s264 + $0x660] sm:$0xff]
                %471 = vst [vmem:[%s265 + $0x330] sm:$0xff] %v470
                %v472 = vld [vmem:[%s264 + $0x668] sm:$0xff]
                %473 = vst [vmem:[%s265 + $0x338] sm:$0xff] %v472
                %v474 = vld [vmem:[%s264 + $0x680] sm:$0xff]
                %475 = vst [vmem:[%s265 + $0x340] sm:$0xff] %v474
                %v476 = vld [vmem:[%s264 + $0x688] sm:$0xff]
                %477 = vst [vmem:[%s265 + $0x348] sm:$0xff] %v476
                %v478 = vld [vmem:[%s264 + $0x6a0] sm:$0xff]
                %479 = vst [vmem:[%s265 + $0x350] sm:$0xff] %v478
                %v480 = vld [vmem:[%s264 + $0x6a8] sm:$0xff]
                %481 = vst [vmem:[%s265 + $0x358] sm:$0xff] %v480
                %v482 = vld [vmem:[%s264 + $0x6c0] sm:$0xff]
                %483 = vst [vmem:[%s265 + $0x360] sm:$0xff] %v482
                %v484 = vld [vmem:[%s264 + $0x6c8] sm:$0xff]
                %485 = vst [vmem:[%s265 + $0x368] sm:$0xff] %v484
                %v486 = vld [vmem:[%s264 + $0x6e0] sm:$0xff]
                %487 = vst [vmem:[%s265 + $0x370] sm:$0xff] %v486
                %v488 = vld [vmem:[%s264 + $0x6e8] sm:$0xff]
                %489 = vst [vmem:[%s265 + $0x378] sm:$0xff] %v488
                %v490 = vld [vmem:[%s264 + $0x700] sm:$0xff]
                %491 = vst [vmem:[%s265 + $0x380] sm:$0xff] %v490
                %v492 = vld [vmem:[%s264 + $0x708] sm:$0xff]
                %493 = vst [vmem:[%s265 + $0x388] sm:$0xff] %v492
                %v494 = vld [vmem:[%s264 + $0x720] sm:$0xff]
                %495 = vst [vmem:[%s265 + $0x390] sm:$0xff] %v494
                %v496 = vld [vmem:[%s264 + $0x728] sm:$0xff]
                %497 = vst [vmem:[%s265 + $0x398] sm:$0xff] %v496
                %v498 = vld [vmem:[%s264 + $0x740] sm:$0xff]
                %499 = vst [vmem:[%s265 + $0x3a0] sm:$0xff] %v498
                %v500 = vld [vmem:[%s264 + $0x748] sm:$0xff]
                %501 = vst [vmem:[%s265 + $0x3a8] sm:$0xff] %v500
                %v502 = vld [vmem:[%s264 + $0x760] sm:$0xff]
                %503 = vst [vmem:[%s265 + $0x3b0] sm:$0xff] %v502
                %v504 = vld [vmem:[%s264 + $0x768] sm:$0xff]
                %505 = vst [vmem:[%s265 + $0x3b8] sm:$0xff] %v504
                %v506 = vld [vmem:[%s264 + $0x780] sm:$0xff]
                %507 = vst [vmem:[%s265 + $0x3c0] sm:$0xff] %v506
                %v508 = vld [vmem:[%s264 + $0x788] sm:$0xff]
                %509 = vst [vmem:[%s265 + $0x3c8] sm:$0xff] %v508
                %v510 = vld [vmem:[%s264 + $0x7a0] sm:$0xff]
                %511 = vst [vmem:[%s265 + $0x3d0] sm:$0xff] %v510
                %v512 = vld [vmem:[%s264 + $0x7a8] sm:$0xff]
                %513 = vst [vmem:[%s265 + $0x3d8] sm:$0xff] %v512
                %v514 = vld [vmem:[%s264 + $0x7c0] sm:$0xff]
                %515 = vst [vmem:[%s265 + $0x3e0] sm:$0xff] %v514
                %v516 = vld [vmem:[%s264 + $0x7c8] sm:$0xff]
                %517 = vst [vmem:[%s265 + $0x3e8] sm:$0xff] %v516
                %v518 = vld [vmem:[%s264 + $0x7e0] sm:$0xff]
                %519 = vst [vmem:[%s265 + $0x3f0] sm:$0xff] %v518
                %v520 = vld [vmem:[%s264 + $0x7e8] sm:$0xff]
                %521 = vst [vmem:[%s265 + $0x3f8] sm:$0xff] %v520
              $region49: #{hyper_gnn_conv.2} parent=43 // loop_footer
                %s263 = sadd.s32 1, %s259
              $region50: #{hyper_gnn_conv.2} parent=43 // loop_footer_branch
                %258 = sbr.rel target = $region46
              $region51: #{hyper_gnn_conv.2} parent=43 // loop_exit
                _
            $region44: #{hyper_gnn_conv.2} parent=39 // pred_fallthru
              _
            // Predicated region
            $region52: #{hyper_gnn_conv.2} parent=39 // pred_check
              _
            $region53: #{hyper_gnn_conv.2} parent=39 // pred_check_branch
              %523 = sbr.rel target = $region55
            $region54: #{hyper_gnn_conv.2} parent=39 // pred_region
              _
            $region55: #{hyper_gnn_conv.2} parent=39 // pred_fallthru
              _
          $region40: #{hyper_gnn_conv.2} parent=35 // pred_fallthru
            _
          %524 = vnop
        $region36: #{hyper_gnn_conv.2} parent=31 // pred_fallthru
          _
        // Predicated region
        $region56: #{hyper_gnn_conv.2} parent=31 // pred_check
          %p525 = pneg %p72
        $region57: #{hyper_gnn_conv.2} parent=31 // pred_check_branch
          %527 = sbr.rel (%p525) target = $region59
        $region58: #{hyper_gnn_conv.2} parent=31 // pred_region
          %s528 = smul.u32 64, %s20
          %p529 = scmp.lt.s32.totalorder %s528, 127
          %s530 = scalar_select %p529, %s528, 127
          %s531 = smul.addr %s530, 4
          %s532 = scalar_lea.vmem %s1, %s531
          %s533 = smul.u32 64, %s20
        $region59: #{hyper_gnn_conv.2} parent=31 // pred_fallthru
          _
      $region32: #{hyper_gnn_conv.2} parent=5 // pred_fallthru
        _
      %p534 = scmp.le.s32.totalorder 1, %s12
      %p535 = scmp.lt.s32.totalorder %s12, 3
      %p536 = pnand %p534, %p535
      %p537 = pneg %p536
      // Predicated region
      $region60: #{hyper_gnn_conv.2} parent=5 // pred_check
        _
      $region61: #{hyper_gnn_conv.2} parent=5 // pred_check_branch
        %539 = sbr.rel (%p536) target = $region63
      $region62: #{hyper_gnn_conv.2} parent=5 // pred_region
        %s540 = ssub.s32 %s12, 1
        %s541 = sand.u32 %s39, 1
        %s542 = sand.u32 %s39, 1
        %s543 = smul.addr %s542, 1024
        %s544 = scalar_lea.vmem [#allocation3], %s543
        // Predicated region
        $region64: #{hyper_gnn_conv.2} parent=62 // pred_check
          %p545 = pneg %p52
        $region65: #{hyper_gnn_conv.2} parent=62 // pred_check_branch
          %547 = sbr.rel (%p545) target = $region67
        $region66: #{hyper_gnn_conv.2} parent=62 // pred_region
          _
        $region67: #{hyper_gnn_conv.2} parent=62 // pred_fallthru
          _
        %s548 = sand.u32 %s39, 1
        %s549 = sand.u32 %s39, 1
        %s550 = smul.addr %s549, 1024
        %s551 = scalar_lea.vmem [#allocation3], %s550
        %p552 = pneg %p52
        %p553 = pneg %p49
        %s554 = smul.u32 64, %s22
        %p555 = scmp.lt.s32.totalorder %s554, 127
        %s556 = scalar_select %p555, %s554, 127
        %s557 = smul.addr %s556, 4
        %s558 = scalar_lea.vmem %s1, %s557
        %p559 = pneg %p78
        %p560 = pneg %p75
        %s561 = smul.u32 64, %s21
        %p562 = scmp.lt.s32.totalorder %s561, 63
        %s563 = scalar_select %p562, %s561, 63
        %s564 = smul.addr %s563, 8
        %s565 = scalar_lea.vmem %s2, %s564
        %p566 = pneg %p104
        %p567 = pneg %p101
        %s568 = smul.u32 64, %s21
        %p569 = scmp.lt.s32.totalorder %s568, 63
        %s570 = scalar_select %p569, %s568, 63
        %s571 = smul.addr %s570, 8
        %s572 = scalar_lea.vmem %s3, %s571
        %p573 = pneg %p130
        %p574 = pneg %p127
        %p575 = pneg %p151
        %p576 = pneg %p148
        %p577 = pneg %p172
        %p578 = pneg %p169
        %p579 = pneg %p198
        %p580 = pneg %p195
        %s581 = smul.u32 64, %s21
        %p582 = scmp.lt.s32.totalorder %s581, 63
        %s583 = scalar_select %p582, %s581, 63
        %s584 = smul.addr %s583, 4
        %s585 = scalar_lea.vmem %s6, %s584
        %s586 = smul.u32 64, %s21
        %s587 = smul.u32 4, %s22
        %s588 = smul.u32 64, %s22
        %p589 = scmp.lt.s32.totalorder %s588, 127
        %s590 = scalar_select %p589, %s588, 127
        %s591 = smul.addr %s590, 4
        %s592 = scalar_lea.vmem %s1, %s591
        %s593 = smul.u32 64, %s22
        %s594 = smul.u32 64, %s21
        %p595 = scmp.lt.s32.totalorder %s594, 63
        %s596 = scalar_select %p595, %s594, 63
        %s597 = smul.addr %s596, 8
        %s598 = scalar_lea.vmem %s2, %s597
        %s599 = smul.u32 64, %s21
        %s600 = smul.u32 64, %s21
        %p601 = scmp.lt.s32.totalorder %s600, 63
        %s602 = scalar_select %p601, %s600, 63
        %s603 = smul.addr %s602, 8
        %s604 = scalar_lea.vmem %s3, %s603
        %s605 = smul.u32 64, %s21
        %s606 = smul.u32 64, %s21
        %p607 = scmp.lt.s32.totalorder %s606, 63
        %s608 = scalar_select %p607, %s606, 63
        %s609 = smul.addr %s608, 4
        %s610 = scalar_lea.vmem %s6, %s609
        %s611 = smul.u32 64, %s21
        %p613 = scmp.eq.s32.totalorder %s22, 0
        // Predicated region
        $region68: #{hyper_gnn_conv.2} parent=62 // pred_check
          %p614 = pneg %p613
        $region69: #{hyper_gnn_conv.2} parent=62 // pred_check_branch
          %616 = sbr.rel (%p614) target = $region71
        $region70: #{hyper_gnn_conv.2} parent=62 // pred_region
          %617 = vst [vmem:[#allocation2] sm:$0xff] 0.0
          %618 = vst [vmem:[#allocation2 + $0x8] sm:$0xff] 0.0
          %619 = vst [vmem:[#allocation2 + $0x10] sm:$0xff] 0.0
          %620 = vst [vmem:[#allocation2 + $0x18] sm:$0xff] 0.0
          %621 = vst [vmem:[#allocation2 + $0x20] sm:$0xff] 0.0
          %622 = vst [vmem:[#allocation2 + $0x28] sm:$0xff] 0.0
          %623 = vst [vmem:[#allocation2 + $0x30] sm:$0xff] 0.0
          %624 = vst [vmem:[#allocation2 + $0x38] sm:$0xff] 0.0
          %625 = vst [vmem:[#allocation2 + $0x40] sm:$0xff] 0.0
          %626 = vst [vmem:[#allocation2 + $0x48] sm:$0xff] 0.0
          %627 = vst [vmem:[#allocation2 + $0x50] sm:$0xff] 0.0
          %628 = vst [vmem:[#allocation2 + $0x58] sm:$0xff] 0.0
          %629 = vst [vmem:[#allocation2 + $0x60] sm:$0xff] 0.0
          %630 = vst [vmem:[#allocation2 + $0x68] sm:$0xff] 0.0
          %631 = vst [vmem:[#allocation2 + $0x70] sm:$0xff] 0.0
          %632 = vst [vmem:[#allocation2 + $0x78] sm:$0xff] 0.0
          %633 = vst [vmem:[#allocation2 + $0x80] sm:$0xff] 0.0
          %634 = vst [vmem:[#allocation2 + $0x88] sm:$0xff] 0.0
          %635 = vst [vmem:[#allocation2 + $0x90] sm:$0xff] 0.0
          %636 = vst [vmem:[#allocation2 + $0x98] sm:$0xff] 0.0
          %637 = vst [vmem:[#allocation2 + $0xa0] sm:$0xff] 0.0
          %638 = vst [vmem:[#allocation2 + $0xa8] sm:$0xff] 0.0
          %639 = vst [vmem:[#allocation2 + $0xb0] sm:$0xff] 0.0
          %640 = vst [vmem:[#allocation2 + $0xb8] sm:$0xff] 0.0
          %641 = vst [vmem:[#allocation2 + $0xc0] sm:$0xff] 0.0
          %642 = vst [vmem:[#allocation2 + $0xc8] sm:$0xff] 0.0
          %643 = vst [vmem:[#allocation2 + $0xd0] sm:$0xff] 0.0
          %644 = vst [vmem:[#allocation2 + $0xd8] sm:$0xff] 0.0
          %645 = vst [vmem:[#allocation2 + $0xe0] sm:$0xff] 0.0
          %646 = vst [vmem:[#allocation2 + $0xe8] sm:$0xff] 0.0
          %647 = vst [vmem:[#allocation2 + $0xf0] sm:$0xff] 0.0
          %648 = vst [vmem:[#allocation2 + $0xf8] sm:$0xff] 0.0
          %649 = vst [vmem:[#allocation2 + $0x100] sm:$0xff] 0.0
          %650 = vst [vmem:[#allocation2 + $0x108] sm:$0xff] 0.0
          %651 = vst [vmem:[#allocation2 + $0x110] sm:$0xff] 0.0
          %652 = vst [vmem:[#allocation2 + $0x118] sm:$0xff] 0.0
          %653 = vst [vmem:[#allocation2 + $0x120] sm:$0xff] 0.0
          %654 = vst [vmem:[#allocation2 + $0x128] sm:$0xff] 0.0
          %655 = vst [vmem:[#allocation2 + $0x130] sm:$0xff] 0.0
          %656 = vst [vmem:[#allocation2 + $0x138] sm:$0xff] 0.0
          %657 = vst [vmem:[#allocation2 + $0x140] sm:$0xff] 0.0
          %658 = vst [vmem:[#allocation2 + $0x148] sm:$0xff] 0.0
          %659 = vst [vmem:[#allocation2 + $0x150] sm:$0xff] 0.0
          %660 = vst [vmem:[#allocation2 + $0x158] sm:$0xff] 0.0
          %661 = vst [vmem:[#allocation2 + $0x160] sm:$0xff] 0.0
          %662 = vst [vmem:[#allocation2 + $0x168] sm:$0xff] 0.0
          %663 = vst [vmem:[#allocation2 + $0x170] sm:$0xff] 0.0
          %664 = vst [vmem:[#allocation2 + $0x178] sm:$0xff] 0.0
          %665 = vst [vmem:[#allocation2 + $0x180] sm:$0xff] 0.0
          %666 = vst [vmem:[#allocation2 + $0x188] sm:$0xff] 0.0
          %667 = vst [vmem:[#allocation2 + $0x190] sm:$0xff] 0.0
          %668 = vst [vmem:[#allocation2 + $0x198] sm:$0xff] 0.0
          %669 = vst [vmem:[#allocation2 + $0x1a0] sm:$0xff] 0.0
          %670 = vst [vmem:[#allocation2 + $0x1a8] sm:$0xff] 0.0
          %671 = vst [vmem:[#allocation2 + $0x1b0] sm:$0xff] 0.0
          %672 = vst [vmem:[#allocation2 + $0x1b8] sm:$0xff] 0.0
          %673 = vst [vmem:[#allocation2 + $0x1c0] sm:$0xff] 0.0
          %674 = vst [vmem:[#allocation2 + $0x1c8] sm:$0xff] 0.0
          %675 = vst [vmem:[#allocation2 + $0x1d0] sm:$0xff] 0.0
          %676 = vst [vmem:[#allocation2 + $0x1d8] sm:$0xff] 0.0
          %677 = vst [vmem:[#allocation2 + $0x1e0] sm:$0xff] 0.0
          %678 = vst [vmem:[#allocation2 + $0x1e8] sm:$0xff] 0.0
          %679 = vst [vmem:[#allocation2 + $0x1f0] sm:$0xff] 0.0
          %680 = vst [vmem:[#allocation2 + $0x1f8] sm:$0xff] 0.0
        $region71: #{hyper_gnn_conv.2} parent=62 // pred_fallthru
          _
        %v681 = vld [vmem:[#allocation2] sm:$0xff]
        %v682 = vld [vmem:[#allocation2 + $0x8] sm:$0xff]
        %v683 = vld [vmem:[#allocation2 + $0x10] sm:$0xff]
        %v684 = vld [vmem:[#allocation2 + $0x18] sm:$0xff]
        %v685 = vld [vmem:[#allocation2 + $0x20] sm:$0xff]
        %v686 = vld [vmem:[#allocation2 + $0x28] sm:$0xff]
        %v687 = vld [vmem:[#allocation2 + $0x30] sm:$0xff]
        %v688 = vld [vmem:[#allocation2 + $0x38] sm:$0xff]
        %v689 = vld [vmem:[#allocation2 + $0x40] sm:$0xff]
        %v690 = vld [vmem:[#allocation2 + $0x48] sm:$0xff]
        %v691 = vld [vmem:[#allocation2 + $0x50] sm:$0xff]
        %v692 = vld [vmem:[#allocation2 + $0x58] sm:$0xff]
        %v693 = vld [vmem:[#allocation2 + $0x60] sm:$0xff]
        %v694 = vld [vmem:[#allocation2 + $0x68] sm:$0xff]
        %v695 = vld [vmem:[#allocation2 + $0x70] sm:$0xff]
        %v696 = vld [vmem:[#allocation2 + $0x78] sm:$0xff]
        %v697 = vld [vmem:[#allocation2 + $0x80] sm:$0xff]
        %v698 = vld [vmem:[#allocation2 + $0x88] sm:$0xff]
        %v699 = vld [vmem:[#allocation2 + $0x90] sm:$0xff]
        %v700 = vld [vmem:[#allocation2 + $0x98] sm:$0xff]
        %v701 = vld [vmem:[#allocation2 + $0xa0] sm:$0xff]
        %v702 = vld [vmem:[#allocation2 + $0xa8] sm:$0xff]
        %v703 = vld [vmem:[#allocation2 + $0xb0] sm:$0xff]
        %v704 = vld [vmem:[#allocation2 + $0xb8] sm:$0xff]
        %v705 = vld [vmem:[#allocation2 + $0xc0] sm:$0xff]
        %v706 = vld [vmem:[#allocation2 + $0xc8] sm:$0xff]
        %v707 = vld [vmem:[#allocation2 + $0xd0] sm:$0xff]
        %v708 = vld [vmem:[#allocation2 + $0xd8] sm:$0xff]
        %v709 = vld [vmem:[#allocation2 + $0xe0] sm:$0xff]
        %v710 = vld [vmem:[#allocation2 + $0xe8] sm:$0xff]
        %v711 = vld [vmem:[#allocation2 + $0xf0] sm:$0xff]
        %v712 = vld [vmem:[#allocation2 + $0xf8] sm:$0xff]
        %v713 = vld [vmem:[#allocation2 + $0x100] sm:$0xff]
        %v714 = vld [vmem:[#allocation2 + $0x108] sm:$0xff]
        %v715 = vld [vmem:[#allocation2 + $0x110] sm:$0xff]
        %v716 = vld [vmem:[#allocation2 + $0x118] sm:$0xff]
        %v717 = vld [vmem:[#allocation2 + $0x120] sm:$0xff]
        %v718 = vld [vmem:[#allocation2 + $0x128] sm:$0xff]
        %v719 = vld [vmem:[#allocation2 + $0x130] sm:$0xff]
        %v720 = vld [vmem:[#allocation2 + $0x138] sm:$0xff]
        %v721 = vld [vmem:[#allocation2 + $0x140] sm:$0xff]
        %v722 = vld [vmem:[#allocation2 + $0x148] sm:$0xff]
        %v723 = vld [vmem:[#allocation2 + $0x150] sm:$0xff]
        %v724 = vld [vmem:[#allocation2 + $0x158] sm:$0xff]
        %v725 = vld [vmem:[#allocation2 + $0x160] sm:$0xff]
        %v726 = vld [vmem:[#allocation2 + $0x168] sm:$0xff]
        %v727 = vld [vmem:[#allocation2 + $0x170] sm:$0xff]
        %v728 = vld [vmem:[#allocation2 + $0x178] sm:$0xff]
        %v729 = vld [vmem:[#allocation2 + $0x180] sm:$0xff]
        %v730 = vld [vmem:[#allocation2 + $0x188] sm:$0xff]
        %v731 = vld [vmem:[#allocation2 + $0x190] sm:$0xff]
        %v732 = vld [vmem:[#allocation2 + $0x198] sm:$0xff]
        %v733 = vld [vmem:[#allocation2 + $0x1a0] sm:$0xff]
        %v734 = vld [vmem:[#allocation2 + $0x1a8] sm:$0xff]
        %v735 = vld [vmem:[#allocation2 + $0x1b0] sm:$0xff]
        %v736 = vld [vmem:[#allocation2 + $0x1b8] sm:$0xff]
        %v737 = vld [vmem:[#allocation2 + $0x1c0] sm:$0xff]
        %v738 = vld [vmem:[#allocation2 + $0x1c8] sm:$0xff]
        %v739 = vld [vmem:[#allocation2 + $0x1d0] sm:$0xff]
        %v740 = vld [vmem:[#allocation2 + $0x1d8] sm:$0xff]
        %v741 = vld [vmem:[#allocation2 + $0x1e0] sm:$0xff]
        %v742 = vld [vmem:[#allocation2 + $0x1e8] sm:$0xff]
        %v743 = vld [vmem:[#allocation2 + $0x1f0] sm:$0xff]
        %v744 = vld [vmem:[#allocation2 + $0x1f8] sm:$0xff]
        %v745 = vld [vmem:[%s544] sm:$0xff]
        %v746 = vld [vmem:[%s544 + $0x8] sm:$0xff]
        %v747 = vld [vmem:[%s544 + $0x10] sm:$0xff]
        %v748 = vld [vmem:[%s544 + $0x18] sm:$0xff]
        %v749 = vld [vmem:[%s544 + $0x20] sm:$0xff]
        %v750 = vld [vmem:[%s544 + $0x28] sm:$0xff]
        %v751 = vld [vmem:[%s544 + $0x30] sm:$0xff]
        %v752 = vld [vmem:[%s544 + $0x38] sm:$0xff]
        %v753 = vld [vmem:[%s544 + $0x40] sm:$0xff]
        %v754 = vld [vmem:[%s544 + $0x48] sm:$0xff]
        %v755 = vld [vmem:[%s544 + $0x50] sm:$0xff]
        %v756 = vld [vmem:[%s544 + $0x58] sm:$0xff]
        %v757 = vld [vmem:[%s544 + $0x60] sm:$0xff]
        %v758 = vld [vmem:[%s544 + $0x68] sm:$0xff]
        %v759 = vld [vmem:[%s544 + $0x70] sm:$0xff]
        %v760 = vld [vmem:[%s544 + $0x78] sm:$0xff]
        %v761 = vld [vmem:[%s544 + $0x80] sm:$0xff]
        %v762 = vld [vmem:[%s544 + $0x88] sm:$0xff]
        %v763 = vld [vmem:[%s544 + $0x90] sm:$0xff]
        %v764 = vld [vmem:[%s544 + $0x98] sm:$0xff]
        %v765 = vld [vmem:[%s544 + $0xa0] sm:$0xff]
        %v766 = vld [vmem:[%s544 + $0xa8] sm:$0xff]
        %v767 = vld [vmem:[%s544 + $0xb0] sm:$0xff]
        %v768 = vld [vmem:[%s544 + $0xb8] sm:$0xff]
        %v769 = vld [vmem:[%s544 + $0xc0] sm:$0xff]
        %v770 = vld [vmem:[%s544 + $0xc8] sm:$0xff]
        %v771 = vld [vmem:[%s544 + $0xd0] sm:$0xff]
        %v772 = vld [vmem:[%s544 + $0xd8] sm:$0xff]
        %v773 = vld [vmem:[%s544 + $0xe0] sm:$0xff]
        %v774 = vld [vmem:[%s544 + $0xe8] sm:$0xff]
        %v775 = vld [vmem:[%s544 + $0xf0] sm:$0xff]
        %v776 = vld [vmem:[%s544 + $0xf8] sm:$0xff]
        %v777 = vld [vmem:[%s544 + $0x100] sm:$0xff]
        %v778 = vld [vmem:[%s544 + $0x108] sm:$0xff]
        %v779 = vld [vmem:[%s544 + $0x110] sm:$0xff]
        %v780 = vld [vmem:[%s544 + $0x118] sm:$0xff]
        %v781 = vld [vmem:[%s544 + $0x120] sm:$0xff]
        %v782 = vld [vmem:[%s544 + $0x128] sm:$0xff]
        %v783 = vld [vmem:[%s544 + $0x130] sm:$0xff]
        %v784 = vld [vmem:[%s544 + $0x138] sm:$0xff]
        %v785 = vld [vmem:[%s544 + $0x140] sm:$0xff]
        %v786 = vld [vmem:[%s544 + $0x148] sm:$0xff]
        %v787 = vld [vmem:[%s544 + $0x150] sm:$0xff]
        %v788 = vld [vmem:[%s544 + $0x158] sm:$0xff]
        %v789 = vld [vmem:[%s544 + $0x160] sm:$0xff]
        %v790 = vld [vmem:[%s544 + $0x168] sm:$0xff]
        %v791 = vld [vmem:[%s544 + $0x170] sm:$0xff]
        %v792 = vld [vmem:[%s544 + $0x178] sm:$0xff]
        %v793 = vld [vmem:[%s544 + $0x180] sm:$0xff]
        %v794 = vld [vmem:[%s544 + $0x188] sm:$0xff]
        %v795 = vld [vmem:[%s544 + $0x190] sm:$0xff]
        %v796 = vld [vmem:[%s544 + $0x198] sm:$0xff]
        %v797 = vld [vmem:[%s544 + $0x1a0] sm:$0xff]
        %v798 = vld [vmem:[%s544 + $0x1a8] sm:$0xff]
        %v799 = vld [vmem:[%s544 + $0x1b0] sm:$0xff]
        %v800 = vld [vmem:[%s544 + $0x1b8] sm:$0xff]
        %v801 = vld [vmem:[%s544 + $0x1c0] sm:$0xff]
        %v802 = vld [vmem:[%s544 + $0x1c8] sm:$0xff]
        %v803 = vld [vmem:[%s544 + $0x1d0] sm:$0xff]
        %v804 = vld [vmem:[%s544 + $0x1d8] sm:$0xff]
        %v805 = vld [vmem:[%s544 + $0x1e0] sm:$0xff]
        %v806 = vld [vmem:[%s544 + $0x1e8] sm:$0xff]
        %v807 = vld [vmem:[%s544 + $0x1f0] sm:$0xff]
        %v808 = vld [vmem:[%s544 + $0x1f8] sm:$0xff]
        %v809 = vld [vmem:[%s544 + $0x200] sm:$0xff]
        %v810 = vld [vmem:[%s544 + $0x208] sm:$0xff]
        %v811 = vld [vmem:[%s544 + $0x210] sm:$0xff]
        %v812 = vld [vmem:[%s544 + $0x218] sm:$0xff]
        %v813 = vld [vmem:[%s544 + $0x220] sm:$0xff]
        %v814 = vld [vmem:[%s544 + $0x228] sm:$0xff]
        %v815 = vld [vmem:[%s544 + $0x230] sm:$0xff]
        %v816 = vld [vmem:[%s544 + $0x238] sm:$0xff]
        %v817 = vld [vmem:[%s544 + $0x240] sm:$0xff]
        %v818 = vld [vmem:[%s544 + $0x248] sm:$0xff]
        %v819 = vld [vmem:[%s544 + $0x250] sm:$0xff]
        %v820 = vld [vmem:[%s544 + $0x258] sm:$0xff]
        %v821 = vld [vmem:[%s544 + $0x260] sm:$0xff]
        %v822 = vld [vmem:[%s544 + $0x268] sm:$0xff]
        %v823 = vld [vmem:[%s544 + $0x270] sm:$0xff]
        %v824 = vld [vmem:[%s544 + $0x278] sm:$0xff]
        %v825 = vld [vmem:[%s544 + $0x280] sm:$0xff]
        %v826 = vld [vmem:[%s544 + $0x288] sm:$0xff]
        %v827 = vld [vmem:[%s544 + $0x290] sm:$0xff]
        %v828 = vld [vmem:[%s544 + $0x298] sm:$0xff]
        %v829 = vld [vmem:[%s544 + $0x2a0] sm:$0xff]
        %v830 = vld [vmem:[%s544 + $0x2a8] sm:$0xff]
        %v831 = vld [vmem:[%s544 + $0x2b0] sm:$0xff]
        %v832 = vld [vmem:[%s544 + $0x2b8] sm:$0xff]
        %v833 = vld [vmem:[%s544 + $0x2c0] sm:$0xff]
        %v834 = vld [vmem:[%s544 + $0x2c8] sm:$0xff]
        %v835 = vld [vmem:[%s544 + $0x2d0] sm:$0xff]
        %v836 = vld [vmem:[%s544 + $0x2d8] sm:$0xff]
        %v837 = vld [vmem:[%s544 + $0x2e0] sm:$0xff]
        %v838 = vld [vmem:[%s544 + $0x2e8] sm:$0xff]
        %v839 = vld [vmem:[%s544 + $0x2f0] sm:$0xff]
        %v840 = vld [vmem:[%s544 + $0x2f8] sm:$0xff]
        %v841 = vld [vmem:[%s544 + $0x300] sm:$0xff]
        %v842 = vld [vmem:[%s544 + $0x308] sm:$0xff]
        %v843 = vld [vmem:[%s544 + $0x310] sm:$0xff]
        %v844 = vld [vmem:[%s544 + $0x318] sm:$0xff]
        %v845 = vld [vmem:[%s544 + $0x320] sm:$0xff]
        %v846 = vld [vmem:[%s544 + $0x328] sm:$0xff]
        %v847 = vld [vmem:[%s544 + $0x330] sm:$0xff]
        %v848 = vld [vmem:[%s544 + $0x338] sm:$0xff]
        %v849 = vld [vmem:[%s544 + $0x340] sm:$0xff]
        %v850 = vld [vmem:[%s544 + $0x348] sm:$0xff]
        %v851 = vld [vmem:[%s544 + $0x350] sm:$0xff]
        %v852 = vld [vmem:[%s544 + $0x358] sm:$0xff]
        %v853 = vld [vmem:[%s544 + $0x360] sm:$0xff]
        %v854 = vld [vmem:[%s544 + $0x368] sm:$0xff]
        %v855 = vld [vmem:[%s544 + $0x370] sm:$0xff]
        %v856 = vld [vmem:[%s544 + $0x378] sm:$0xff]
        %v857 = vld [vmem:[%s544 + $0x380] sm:$0xff]
        %v858 = vld [vmem:[%s544 + $0x388] sm:$0xff]
        %v859 = vld [vmem:[%s544 + $0x390] sm:$0xff]
        %v860 = vld [vmem:[%s544 + $0x398] sm:$0xff]
        %v861 = vld [vmem:[%s544 + $0x3a0] sm:$0xff]
        %v862 = vld [vmem:[%s544 + $0x3a8] sm:$0xff]
        %v863 = vld [vmem:[%s544 + $0x3b0] sm:$0xff]
        %v864 = vld [vmem:[%s544 + $0x3b8] sm:$0xff]
        %v865 = vld [vmem:[%s544 + $0x3c0] sm:$0xff]
        %v866 = vld [vmem:[%s544 + $0x3c8] sm:$0xff]
        %v867 = vld [vmem:[%s544 + $0x3d0] sm:$0xff]
        %v868 = vld [vmem:[%s544 + $0x3d8] sm:$0xff]
        %v869 = vld [vmem:[%s544 + $0x3e0] sm:$0xff]
        %v870 = vld [vmem:[%s544 + $0x3e8] sm:$0xff]
        %v871 = vld [vmem:[%s544 + $0x3f0] sm:$0xff]
        %v872 = vld [vmem:[%s544 + $0x3f8] sm:$0xff]
        %v873 = vld [vmem:[%s592] sm:$0xf]
        %v874 = vld [vmem:[%s592 + $0x4] sm:$0xf]
        %v875 = vld [vmem:[%s592 + $0x8] sm:$0xf]
        %v876 = vld [vmem:[%s592 + $0xc] sm:$0xf]
        %v877 = vld [vmem:[%s592 + $0x10] sm:$0xf]
        %v878 = vld [vmem:[%s592 + $0x14] sm:$0xf]
        %v879 = vld [vmem:[%s592 + $0x18] sm:$0xf]
        %v880 = vld [vmem:[%s592 + $0x1c] sm:$0xf]
        %v881 = vld [vmem:[%s592 + $0x20] sm:$0xf]
        %v882 = vld [vmem:[%s592 + $0x24] sm:$0xf]
        %v883 = vld [vmem:[%s592 + $0x28] sm:$0xf]
        %v884 = vld [vmem:[%s592 + $0x2c] sm:$0xf]
        %v885 = vld [vmem:[%s592 + $0x30] sm:$0xf]
        %v886 = vld [vmem:[%s592 + $0x34] sm:$0xf]
        %v887 = vld [vmem:[%s592 + $0x38] sm:$0xf]
        %v888 = vld [vmem:[%s592 + $0x3c] sm:$0xf]
        %v889 = vld [vmem:[%s592 + $0x40] sm:$0xf]
        %v890 = vld [vmem:[%s592 + $0x44] sm:$0xf]
        %v891 = vld [vmem:[%s592 + $0x48] sm:$0xf]
        %v892 = vld [vmem:[%s592 + $0x4c] sm:$0xf]
        %v893 = vld [vmem:[%s592 + $0x50] sm:$0xf]
        %v894 = vld [vmem:[%s592 + $0x54] sm:$0xf]
        %v895 = vld [vmem:[%s592 + $0x58] sm:$0xf]
        %v896 = vld [vmem:[%s592 + $0x5c] sm:$0xf]
        %v897 = vld [vmem:[%s592 + $0x60] sm:$0xf]
        %v898 = vld [vmem:[%s592 + $0x64] sm:$0xf]
        %v899 = vld [vmem:[%s592 + $0x68] sm:$0xf]
        %v900 = vld [vmem:[%s592 + $0x6c] sm:$0xf]
        %v901 = vld [vmem:[%s592 + $0x70] sm:$0xf]
        %v902 = vld [vmem:[%s592 + $0x74] sm:$0xf]
        %v903 = vld [vmem:[%s592 + $0x78] sm:$0xf]
        %v904 = vld [vmem:[%s592 + $0x7c] sm:$0xf]
        %v905 = vld [vmem:[%s592 + $0x80] sm:$0xf]
        %v906 = vld [vmem:[%s592 + $0x84] sm:$0xf]
        %v907 = vld [vmem:[%s592 + $0x88] sm:$0xf]
        %v908 = vld [vmem:[%s592 + $0x8c] sm:$0xf]
        %v909 = vld [vmem:[%s592 + $0x90] sm:$0xf]
        %v910 = vld [vmem:[%s592 + $0x94] sm:$0xf]
        %v911 = vld [vmem:[%s592 + $0x98] sm:$0xf]
        %v912 = vld [vmem:[%s592 + $0x9c] sm:$0xf]
        %v913 = vld [vmem:[%s592 + $0xa0] sm:$0xf]
        %v914 = vld [vmem:[%s592 + $0xa4] sm:$0xf]
        %v915 = vld [vmem:[%s592 + $0xa8] sm:$0xf]
        %v916 = vld [vmem:[%s592 + $0xac] sm:$0xf]
        %v917 = vld [vmem:[%s592 + $0xb0] sm:$0xf]
        %v918 = vld [vmem:[%s592 + $0xb4] sm:$0xf]
        %v919 = vld [vmem:[%s592 + $0xb8] sm:$0xf]
        %v920 = vld [vmem:[%s592 + $0xbc] sm:$0xf]
        %v921 = vld [vmem:[%s592 + $0xc0] sm:$0xf]
        %v922 = vld [vmem:[%s592 + $0xc4] sm:$0xf]
        %v923 = vld [vmem:[%s592 + $0xc8] sm:$0xf]
        %v924 = vld [vmem:[%s592 + $0xcc] sm:$0xf]
        %v925 = vld [vmem:[%s592 + $0xd0] sm:$0xf]
        %v926 = vld [vmem:[%s592 + $0xd4] sm:$0xf]
        %v927 = vld [vmem:[%s592 + $0xd8] sm:$0xf]
        %v928 = vld [vmem:[%s592 + $0xdc] sm:$0xf]
        %v929 = vld [vmem:[%s592 + $0xe0] sm:$0xf]
        %v930 = vld [vmem:[%s592 + $0xe4] sm:$0xf]
        %v931 = vld [vmem:[%s592 + $0xe8] sm:$0xf]
        %v932 = vld [vmem:[%s592 + $0xec] sm:$0xf]
        %v933 = vld [vmem:[%s592 + $0xf0] sm:$0xf]
        %v934 = vld [vmem:[%s592 + $0xf4] sm:$0xf]
        %v935 = vld [vmem:[%s592 + $0xf8] sm:$0xf]
        %v936 = vld [vmem:[%s592 + $0xfc] sm:$0xf]
        %v1065 = vunpack.c.l.b16 %v745
        %v1066 = vunpack.c.h.b16 %v745
        %v1067 = vunpack.c.l.b16 %v746
        %v1068 = vunpack.c.h.b16 %v746
        %v1069 = vunpack.c.l.b16 %v747
        %v1070 = vunpack.c.h.b16 %v747
        %v1071 = vunpack.c.l.b16 %v748
        %v1072 = vunpack.c.h.b16 %v748
        %v1073 = vunpack.c.l.b16 %v749
        %v1074 = vunpack.c.h.b16 %v749
        %v1075 = vunpack.c.l.b16 %v750
        %v1076 = vunpack.c.h.b16 %v750
        %v1077 = vunpack.c.l.b16 %v751
        %v1078 = vunpack.c.h.b16 %v751
        %v1079 = vunpack.c.l.b16 %v752
        %v1080 = vunpack.c.h.b16 %v752
        %v1081 = vunpack.c.l.b16 %v753
        %v1082 = vunpack.c.h.b16 %v753
        %v1083 = vunpack.c.l.b16 %v754
        %v1084 = vunpack.c.h.b16 %v754
        %v1085 = vunpack.c.l.b16 %v755
        %v1086 = vunpack.c.h.b16 %v755
        %v1087 = vunpack.c.l.b16 %v756
        %v1088 = vunpack.c.h.b16 %v756
        %v1089 = vunpack.c.l.b16 %v757
        %v1090 = vunpack.c.h.b16 %v757
        %v1091 = vunpack.c.l.b16 %v758
        %v1092 = vunpack.c.h.b16 %v758
        %v1093 = vunpack.c.l.b16 %v759
        %v1094 = vunpack.c.h.b16 %v759
        %v1095 = vunpack.c.l.b16 %v760
        %v1096 = vunpack.c.h.b16 %v760
        %v1097 = vunpack.c.l.b16 %v761
        %v1098 = vunpack.c.h.b16 %v761
        %v1099 = vunpack.c.l.b16 %v762
        %v1100 = vunpack.c.h.b16 %v762
        %v1101 = vunpack.c.l.b16 %v763
        %v1102 = vunpack.c.h.b16 %v763
        %v1103 = vunpack.c.l.b16 %v764
        %v1104 = vunpack.c.h.b16 %v764
        %v1105 = vunpack.c.l.b16 %v765
        %v1106 = vunpack.c.h.b16 %v765
        %v1107 = vunpack.c.l.b16 %v766
        %v1108 = vunpack.c.h.b16 %v766
        %v1109 = vunpack.c.l.b16 %v767
        %v1110 = vunpack.c.h.b16 %v767
        %v1111 = vunpack.c.l.b16 %v768
        %v1112 = vunpack.c.h.b16 %v768
        %v1113 = vunpack.c.l.b16 %v769
        %v1114 = vunpack.c.h.b16 %v769
        %v1115 = vunpack.c.l.b16 %v770
        %v1116 = vunpack.c.h.b16 %v770
        %v1117 = vunpack.c.l.b16 %v771
        %v1118 = vunpack.c.h.b16 %v771
        %v1119 = vunpack.c.l.b16 %v772
        %v1120 = vunpack.c.h.b16 %v772
        %v1121 = vunpack.c.l.b16 %v773
        %v1122 = vunpack.c.h.b16 %v773
        %v1123 = vunpack.c.l.b16 %v774
        %v1124 = vunpack.c.h.b16 %v774
        %v1125 = vunpack.c.l.b16 %v775
        %v1126 = vunpack.c.h.b16 %v775
        %v1127 = vunpack.c.l.b16 %v776
        %v1128 = vunpack.c.h.b16 %v776
        %v1129 = vunpack.c.l.b16 %v777
        %v1130 = vunpack.c.h.b16 %v777
        %v1131 = vunpack.c.l.b16 %v778
        %v1132 = vunpack.c.h.b16 %v778
        %v1133 = vunpack.c.l.b16 %v779
        %v1134 = vunpack.c.h.b16 %v779
        %v1135 = vunpack.c.l.b16 %v780
        %v1136 = vunpack.c.h.b16 %v780
        %v1137 = vunpack.c.l.b16 %v781
        %v1138 = vunpack.c.h.b16 %v781
        %v1139 = vunpack.c.l.b16 %v782
        %v1140 = vunpack.c.h.b16 %v782
        %v1141 = vunpack.c.l.b16 %v783
        %v1142 = vunpack.c.h.b16 %v783
        %v1143 = vunpack.c.l.b16 %v784
        %v1144 = vunpack.c.h.b16 %v784
        %v1145 = vunpack.c.l.b16 %v785
        %v1146 = vunpack.c.h.b16 %v785
        %v1147 = vunpack.c.l.b16 %v786
        %v1148 = vunpack.c.h.b16 %v786
        %v1149 = vunpack.c.l.b16 %v787
        %v1150 = vunpack.c.h.b16 %v787
        %v1151 = vunpack.c.l.b16 %v788
        %v1152 = vunpack.c.h.b16 %v788
        %v1153 = vunpack.c.l.b16 %v789
        %v1154 = vunpack.c.h.b16 %v789
        %v1155 = vunpack.c.l.b16 %v790
        %v1156 = vunpack.c.h.b16 %v790
        %v1157 = vunpack.c.l.b16 %v791
        %v1158 = vunpack.c.h.b16 %v791
        %v1159 = vunpack.c.l.b16 %v792
        %v1160 = vunpack.c.h.b16 %v792
        %v1161 = vunpack.c.l.b16 %v793
        %v1162 = vunpack.c.h.b16 %v793
        %v1163 = vunpack.c.l.b16 %v794
        %v1164 = vunpack.c.h.b16 %v794
        %v1165 = vunpack.c.l.b16 %v795
        %v1166 = vunpack.c.h.b16 %v795
        %v1167 = vunpack.c.l.b16 %v796
        %v1168 = vunpack.c.h.b16 %v796
        %v1169 = vunpack.c.l.b16 %v797
        %v1170 = vunpack.c.h.b16 %v797
        %v1171 = vunpack.c.l.b16 %v798
        %v1172 = vunpack.c.h.b16 %v798
        %v1173 = vunpack.c.l.b16 %v799
        %v1174 = vunpack.c.h.b16 %v799
        %v1175 = vunpack.c.l.b16 %v800
        %v1176 = vunpack.c.h.b16 %v800
        %v1177 = vunpack.c.l.b16 %v801
        %v1178 = vunpack.c.h.b16 %v801
        %v1179 = vunpack.c.l.b16 %v802
        %v1180 = vunpack.c.h.b16 %v802
        %v1181 = vunpack.c.l.b16 %v803
        %v1182 = vunpack.c.h.b16 %v803
        %v1183 = vunpack.c.l.b16 %v804
        %v1184 = vunpack.c.h.b16 %v804
        %v1185 = vunpack.c.l.b16 %v805
        %v1186 = vunpack.c.h.b16 %v805
        %v1187 = vunpack.c.l.b16 %v806
        %v1188 = vunpack.c.h.b16 %v806
        %v1189 = vunpack.c.l.b16 %v807
        %v1190 = vunpack.c.h.b16 %v807
        %v1191 = vunpack.c.l.b16 %v808
        %v1192 = vunpack.c.h.b16 %v808
        %v1193 = vunpack.c.l.b16 %v809
        %v1194 = vunpack.c.h.b16 %v809
        %v1195 = vunpack.c.l.b16 %v810
        %v1196 = vunpack.c.h.b16 %v810
        %v1197 = vunpack.c.l.b16 %v811
        %v1198 = vunpack.c.h.b16 %v811
        %v1199 = vunpack.c.l.b16 %v812
        %v1200 = vunpack.c.h.b16 %v812
        %v1201 = vunpack.c.l.b16 %v813
        %v1202 = vunpack.c.h.b16 %v813
        %v1203 = vunpack.c.l.b16 %v814
        %v1204 = vunpack.c.h.b16 %v814
        %v1205 = vunpack.c.l.b16 %v815
        %v1206 = vunpack.c.h.b16 %v815
        %v1207 = vunpack.c.l.b16 %v816
        %v1208 = vunpack.c.h.b16 %v816
        %v1209 = vunpack.c.l.b16 %v817
        %v1210 = vunpack.c.h.b16 %v817
        %v1211 = vunpack.c.l.b16 %v818
        %v1212 = vunpack.c.h.b16 %v818
        %v1213 = vunpack.c.l.b16 %v819
        %v1214 = vunpack.c.h.b16 %v819
        %v1215 = vunpack.c.l.b16 %v820
        %v1216 = vunpack.c.h.b16 %v820
        %v1217 = vunpack.c.l.b16 %v821
        %v1218 = vunpack.c.h.b16 %v821
        %v1219 = vunpack.c.l.b16 %v822
        %v1220 = vunpack.c.h.b16 %v822
        %v1221 = vunpack.c.l.b16 %v823
        %v1222 = vunpack.c.h.b16 %v823
        %v1223 = vunpack.c.l.b16 %v824
        %v1224 = vunpack.c.h.b16 %v824
        %v1225 = vunpack.c.l.b16 %v825
        %v1226 = vunpack.c.h.b16 %v825
        %v1227 = vunpack.c.l.b16 %v826
        %v1228 = vunpack.c.h.b16 %v826
        %v1229 = vunpack.c.l.b16 %v827
        %v1230 = vunpack.c.h.b16 %v827
        %v1231 = vunpack.c.l.b16 %v828
        %v1232 = vunpack.c.h.b16 %v828
        %v1233 = vunpack.c.l.b16 %v829
        %v1234 = vunpack.c.h.b16 %v829
        %v1235 = vunpack.c.l.b16 %v830
        %v1236 = vunpack.c.h.b16 %v830
        %v1237 = vunpack.c.l.b16 %v831
        %v1238 = vunpack.c.h.b16 %v831
        %v1239 = vunpack.c.l.b16 %v832
        %v1240 = vunpack.c.h.b16 %v832
        %v1241 = vunpack.c.l.b16 %v833
        %v1242 = vunpack.c.h.b16 %v833
        %v1243 = vunpack.c.l.b16 %v834
        %v1244 = vunpack.c.h.b16 %v834
        %v1245 = vunpack.c.l.b16 %v835
        %v1246 = vunpack.c.h.b16 %v835
        %v1247 = vunpack.c.l.b16 %v836
        %v1248 = vunpack.c.h.b16 %v836
        %v1249 = vunpack.c.l.b16 %v837
        %v1250 = vunpack.c.h.b16 %v837
        %v1251 = vunpack.c.l.b16 %v838
        %v1252 = vunpack.c.h.b16 %v838
        %v1253 = vunpack.c.l.b16 %v839
        %v1254 = vunpack.c.h.b16 %v839
        %v1255 = vunpack.c.l.b16 %v840
        %v1256 = vunpack.c.h.b16 %v840
        %v1257 = vunpack.c.l.b16 %v841
        %v1258 = vunpack.c.h.b16 %v841
        %v1259 = vunpack.c.l.b16 %v842
        %v1260 = vunpack.c.h.b16 %v842
        %v1261 = vunpack.c.l.b16 %v843
        %v1262 = vunpack.c.h.b16 %v843
        %v1263 = vunpack.c.l.b16 %v844
        %v1264 = vunpack.c.h.b16 %v844
        %v1265 = vunpack.c.l.b16 %v845
        %v1266 = vunpack.c.h.b16 %v845
        %v1267 = vunpack.c.l.b16 %v846
        %v1268 = vunpack.c.h.b16 %v846
        %v1269 = vunpack.c.l.b16 %v847
        %v1270 = vunpack.c.h.b16 %v847
        %v1271 = vunpack.c.l.b16 %v848
        %v1272 = vunpack.c.h.b16 %v848
        %v1273 = vunpack.c.l.b16 %v849
        %v1274 = vunpack.c.h.b16 %v849
        %v1275 = vunpack.c.l.b16 %v850
        %v1276 = vunpack.c.h.b16 %v850
        %v1277 = vunpack.c.l.b16 %v851
        %v1278 = vunpack.c.h.b16 %v851
        %v1279 = vunpack.c.l.b16 %v852
        %v1280 = vunpack.c.h.b16 %v852
        %v1281 = vunpack.c.l.b16 %v853
        %v1282 = vunpack.c.h.b16 %v853
        %v1283 = vunpack.c.l.b16 %v854
        %v1284 = vunpack.c.h.b16 %v854
        %v1285 = vunpack.c.l.b16 %v855
        %v1286 = vunpack.c.h.b16 %v855
        %v1287 = vunpack.c.l.b16 %v856
        %v1288 = vunpack.c.h.b16 %v856
        %v1289 = vunpack.c.l.b16 %v857
        %v1290 = vunpack.c.h.b16 %v857
        %v1291 = vunpack.c.l.b16 %v858
        %v1292 = vunpack.c.h.b16 %v858
        %v1293 = vunpack.c.l.b16 %v859
        %v1294 = vunpack.c.h.b16 %v859
        %v1295 = vunpack.c.l.b16 %v860
        %v1296 = vunpack.c.h.b16 %v860
        %v1297 = vunpack.c.l.b16 %v861
        %v1298 = vunpack.c.h.b16 %v861
        %v1299 = vunpack.c.l.b16 %v862
        %v1300 = vunpack.c.h.b16 %v862
        %v1301 = vunpack.c.l.b16 %v863
        %v1302 = vunpack.c.h.b16 %v863
        %v1303 = vunpack.c.l.b16 %v864
        %v1304 = vunpack.c.h.b16 %v864
        %v1305 = vunpack.c.l.b16 %v865
        %v1306 = vunpack.c.h.b16 %v865
        %v1307 = vunpack.c.l.b16 %v866
        %v1308 = vunpack.c.h.b16 %v866
        %v1309 = vunpack.c.l.b16 %v867
        %v1310 = vunpack.c.h.b16 %v867
        %v1311 = vunpack.c.l.b16 %v868
        %v1312 = vunpack.c.h.b16 %v868
        %v1313 = vunpack.c.l.b16 %v869
        %v1314 = vunpack.c.h.b16 %v869
        %v1315 = vunpack.c.l.b16 %v870
        %v1316 = vunpack.c.h.b16 %v870
        %v1317 = vunpack.c.l.b16 %v871
        %v1318 = vunpack.c.h.b16 %v871
        %v1319 = vunpack.c.l.b16 %v872
        %v1320 = vunpack.c.h.b16 %v872
        %v1321 = vpack.c.b16 %v1069, %v1065
        %v1322 = vpack.c.b16 %v1070, %v1066
        %v1323 = vpack.c.b16 %v1071, %v1067
        %v1324 = vpack.c.b16 %v1072, %v1068
        %v1325 = vpack.c.b16 %v1077, %v1073
        %v1326 = vpack.c.b16 %v1078, %v1074
        %v1327 = vpack.c.b16 %v1079, %v1075
        %v1328 = vpack.c.b16 %v1080, %v1076
        %v1329 = vpack.c.b16 %v1085, %v1081
        %v1330 = vpack.c.b16 %v1086, %v1082
        %v1331 = vpack.c.b16 %v1087, %v1083
        %v1332 = vpack.c.b16 %v1088, %v1084
        %v1333 = vpack.c.b16 %v1093, %v1089
        %v1334 = vpack.c.b16 %v1094, %v1090
        %v1335 = vpack.c.b16 %v1095, %v1091
        %v1336 = vpack.c.b16 %v1096, %v1092
        %v1337 = vpack.c.b16 %v1101, %v1097
        %v1338 = vpack.c.b16 %v1102, %v1098
        %v1339 = vpack.c.b16 %v1103, %v1099
        %v1340 = vpack.c.b16 %v1104, %v1100
        %v1341 = vpack.c.b16 %v1109, %v1105
        %v1342 = vpack.c.b16 %v1110, %v1106
        %v1343 = vpack.c.b16 %v1111, %v1107
        %v1344 = vpack.c.b16 %v1112, %v1108
        %v1345 = vpack.c.b16 %v1117, %v1113
        %v1346 = vpack.c.b16 %v1118, %v1114
        %v1347 = vpack.c.b16 %v1119, %v1115
        %v1348 = vpack.c.b16 %v1120, %v1116
        %v1349 = vpack.c.b16 %v1125, %v1121
        %v1350 = vpack.c.b16 %v1126, %v1122
        %v1351 = vpack.c.b16 %v1127, %v1123
        %v1352 = vpack.c.b16 %v1128, %v1124
        %v1353 = vpack.c.b16 %v1133, %v1129
        %v1354 = vpack.c.b16 %v1134, %v1130
        %v1355 = vpack.c.b16 %v1135, %v1131
        %v1356 = vpack.c.b16 %v1136, %v1132
        %v1357 = vpack.c.b16 %v1141, %v1137
        %v1358 = vpack.c.b16 %v1142, %v1138
        %v1359 = vpack.c.b16 %v1143, %v1139
        %v1360 = vpack.c.b16 %v1144, %v1140
        %v1361 = vpack.c.b16 %v1149, %v1145
        %v1362 = vpack.c.b16 %v1150, %v1146
        %v1363 = vpack.c.b16 %v1151, %v1147
        %v1364 = vpack.c.b16 %v1152, %v1148
        %v1365 = vpack.c.b16 %v1157, %v1153
        %v1366 = vpack.c.b16 %v1158, %v1154
        %v1367 = vpack.c.b16 %v1159, %v1155
        %v1368 = vpack.c.b16 %v1160, %v1156
        %v1369 = vpack.c.b16 %v1165, %v1161
        %v1370 = vpack.c.b16 %v1166, %v1162
        %v1371 = vpack.c.b16 %v1167, %v1163
        %v1372 = vpack.c.b16 %v1168, %v1164
        %v1373 = vpack.c.b16 %v1173, %v1169
        %v1374 = vpack.c.b16 %v1174, %v1170
        %v1375 = vpack.c.b16 %v1175, %v1171
        %v1376 = vpack.c.b16 %v1176, %v1172
        %v1377 = vpack.c.b16 %v1181, %v1177
        %v1378 = vpack.c.b16 %v1182, %v1178
        %v1379 = vpack.c.b16 %v1183, %v1179
        %v1380 = vpack.c.b16 %v1184, %v1180
        %v1381 = vpack.c.b16 %v1189, %v1185
        %v1382 = vpack.c.b16 %v1190, %v1186
        %v1383 = vpack.c.b16 %v1191, %v1187
        %v1384 = vpack.c.b16 %v1192, %v1188
        %v1385 = vpack.c.b16 %v1197, %v1193
        %v1386 = vpack.c.b16 %v1198, %v1194
        %v1387 = vpack.c.b16 %v1199, %v1195
        %v1388 = vpack.c.b16 %v1200, %v1196
        %v1389 = vpack.c.b16 %v1205, %v1201
        %v1390 = vpack.c.b16 %v1206, %v1202
        %v1391 = vpack.c.b16 %v1207, %v1203
        %v1392 = vpack.c.b16 %v1208, %v1204
        %v1393 = vpack.c.b16 %v1213, %v1209
        %v1394 = vpack.c.b16 %v1214, %v1210
        %v1395 = vpack.c.b16 %v1215, %v1211
        %v1396 = vpack.c.b16 %v1216, %v1212
        %v1397 = vpack.c.b16 %v1221, %v1217
        %v1398 = vpack.c.b16 %v1222, %v1218
        %v1399 = vpack.c.b16 %v1223, %v1219
        %v1400 = vpack.c.b16 %v1224, %v1220
        %v1401 = vpack.c.b16 %v1229, %v1225
        %v1402 = vpack.c.b16 %v1230, %v1226
        %v1403 = vpack.c.b16 %v1231, %v1227
        %v1404 = vpack.c.b16 %v1232, %v1228
        %v1405 = vpack.c.b16 %v1237, %v1233
        %v1406 = vpack.c.b16 %v1238, %v1234
        %v1407 = vpack.c.b16 %v1239, %v1235
        %v1408 = vpack.c.b16 %v1240, %v1236
        %v1409 = vpack.c.b16 %v1245, %v1241
        %v1410 = vpack.c.b16 %v1246, %v1242
        %v1411 = vpack.c.b16 %v1247, %v1243
        %v1412 = vpack.c.b16 %v1248, %v1244
        %v1413 = vpack.c.b16 %v1253, %v1249
        %v1414 = vpack.c.b16 %v1254, %v1250
        %v1415 = vpack.c.b16 %v1255, %v1251
        %v1416 = vpack.c.b16 %v1256, %v1252
        %v1417 = vpack.c.b16 %v1261, %v1257
        %v1418 = vpack.c.b16 %v1262, %v1258
        %v1419 = vpack.c.b16 %v1263, %v1259
        %v1420 = vpack.c.b16 %v1264, %v1260
        %v1421 = vpack.c.b16 %v1269, %v1265
        %v1422 = vpack.c.b16 %v1270, %v1266
        %v1423 = vpack.c.b16 %v1271, %v1267
        %v1424 = vpack.c.b16 %v1272, %v1268
        %v1425 = vpack.c.b16 %v1277, %v1273
        %v1426 = vpack.c.b16 %v1278, %v1274
        %v1427 = vpack.c.b16 %v1279, %v1275
        %v1428 = vpack.c.b16 %v1280, %v1276
        %v1429 = vpack.c.b16 %v1285, %v1281
        %v1430 = vpack.c.b16 %v1286, %v1282
        %v1431 = vpack.c.b16 %v1287, %v1283
        %v1432 = vpack.c.b16 %v1288, %v1284
        %v1433 = vpack.c.b16 %v1293, %v1289
        %v1434 = vpack.c.b16 %v1294, %v1290
        %v1435 = vpack.c.b16 %v1295, %v1291
        %v1436 = vpack.c.b16 %v1296, %v1292
        %v1437 = vpack.c.b16 %v1301, %v1297
        %v1438 = vpack.c.b16 %v1302, %v1298
        %v1439 = vpack.c.b16 %v1303, %v1299
        %v1440 = vpack.c.b16 %v1304, %v1300
        %v1441 = vpack.c.b16 %v1309, %v1305
        %v1442 = vpack.c.b16 %v1310, %v1306
        %v1443 = vpack.c.b16 %v1311, %v1307
        %v1444 = vpack.c.b16 %v1312, %v1308
        %v1445 = vpack.c.b16 %v1317, %v1313
        %v1446 = vpack.c.b16 %v1318, %v1314
        %v1447 = vpack.c.b16 %v1319, %v1315
        %v1448 = vpack.c.b16 %v1320, %v1316
        %v1641 = vunpack.c.l.b16 %v873
        %v1642 = vunpack.c.l.b16 %v874
        %v1643 = vunpack.c.l.b16 %v875
        %v1644 = vunpack.c.l.b16 %v876
        %v1645 = vunpack.c.l.b16 %v877
        %v1646 = vunpack.c.l.b16 %v878
        %v1647 = vunpack.c.l.b16 %v879
        %v1648 = vunpack.c.l.b16 %v880
        %v1649 = vunpack.c.l.b16 %v881
        %v1650 = vunpack.c.l.b16 %v882
        %v1651 = vunpack.c.l.b16 %v883
        %v1652 = vunpack.c.l.b16 %v884
        %v1653 = vunpack.c.l.b16 %v885
        %v1654 = vunpack.c.l.b16 %v886
        %v1655 = vunpack.c.l.b16 %v887
        %v1656 = vunpack.c.l.b16 %v888
        %v1657 = vunpack.c.l.b16 %v889
        %v1658 = vunpack.c.l.b16 %v890
        %v1659 = vunpack.c.l.b16 %v891
        %v1660 = vunpack.c.l.b16 %v892
        %v1661 = vunpack.c.l.b16 %v893
        %v1662 = vunpack.c.l.b16 %v894
        %v1663 = vunpack.c.l.b16 %v895
        %v1664 = vunpack.c.l.b16 %v896
        %v1665 = vunpack.c.l.b16 %v897
        %v1666 = vunpack.c.l.b16 %v898
        %v1667 = vunpack.c.l.b16 %v899
        %v1668 = vunpack.c.l.b16 %v900
        %v1669 = vunpack.c.l.b16 %v901
        %v1670 = vunpack.c.l.b16 %v902
        %v1671 = vunpack.c.l.b16 %v903
        %v1672 = vunpack.c.l.b16 %v904
        %v1673 = vunpack.c.l.b16 %v905
        %v1674 = vunpack.c.l.b16 %v906
        %v1675 = vunpack.c.l.b16 %v907
        %v1676 = vunpack.c.l.b16 %v908
        %v1677 = vunpack.c.l.b16 %v909
        %v1678 = vunpack.c.l.b16 %v910
        %v1679 = vunpack.c.l.b16 %v911
        %v1680 = vunpack.c.l.b16 %v912
        %v1681 = vunpack.c.l.b16 %v913
        %v1682 = vunpack.c.l.b16 %v914
        %v1683 = vunpack.c.l.b16 %v915
        %v1684 = vunpack.c.l.b16 %v916
        %v1685 = vunpack.c.l.b16 %v917
        %v1686 = vunpack.c.l.b16 %v918
        %v1687 = vunpack.c.l.b16 %v919
        %v1688 = vunpack.c.l.b16 %v920
        %v1689 = vunpack.c.l.b16 %v921
        %v1690 = vunpack.c.l.b16 %v922
        %v1691 = vunpack.c.l.b16 %v923
        %v1692 = vunpack.c.l.b16 %v924
        %v1693 = vunpack.c.l.b16 %v925
        %v1694 = vunpack.c.l.b16 %v926
        %v1695 = vunpack.c.l.b16 %v927
        %v1696 = vunpack.c.l.b16 %v928
        %v1697 = vunpack.c.l.b16 %v929
        %v1698 = vunpack.c.l.b16 %v930
        %v1699 = vunpack.c.l.b16 %v931
        %v1700 = vunpack.c.l.b16 %v932
        %v1701 = vunpack.c.l.b16 %v933
        %v1702 = vunpack.c.l.b16 %v934
        %v1703 = vunpack.c.l.b16 %v935
        %v1704 = vunpack.c.l.b16 %v936
        %v1705 = vpack.c.b16 %v1642, %v1641
        %v1706 = vpack.c.b16 %v1644, %v1643
        %v1707 = vpack.c.b16 %v1646, %v1645
        %v1708 = vpack.c.b16 %v1648, %v1647
        %v1709 = vpack.c.b16 %v1650, %v1649
        %v1710 = vpack.c.b16 %v1652, %v1651
        %v1711 = vpack.c.b16 %v1654, %v1653
        %v1712 = vpack.c.b16 %v1656, %v1655
        %v1713 = vpack.c.b16 %v1658, %v1657
        %v1714 = vpack.c.b16 %v1660, %v1659
        %v1715 = vpack.c.b16 %v1662, %v1661
        %v1716 = vpack.c.b16 %v1664, %v1663
        %v1717 = vpack.c.b16 %v1666, %v1665
        %v1718 = vpack.c.b16 %v1668, %v1667
        %v1719 = vpack.c.b16 %v1670, %v1669
        %v1720 = vpack.c.b16 %v1672, %v1671
        %v1721 = vpack.c.b16 %v1674, %v1673
        %v1722 = vpack.c.b16 %v1676, %v1675
        %v1723 = vpack.c.b16 %v1678, %v1677
        %v1724 = vpack.c.b16 %v1680, %v1679
        %v1725 = vpack.c.b16 %v1682, %v1681
        %v1726 = vpack.c.b16 %v1684, %v1683
        %v1727 = vpack.c.b16 %v1686, %v1685
        %v1728 = vpack.c.b16 %v1688, %v1687
        %v1729 = vpack.c.b16 %v1690, %v1689
        %v1730 = vpack.c.b16 %v1692, %v1691
        %v1731 = vpack.c.b16 %v1694, %v1693
        %v1732 = vpack.c.b16 %v1696, %v1695
        %v1733 = vpack.c.b16 %v1698, %v1697
        %v1734 = vpack.c.b16 %v1700, %v1699
        %v1735 = vpack.c.b16 %v1702, %v1701
        %v1736 = vpack.c.b16 %v1704, %v1703
        %1769 = vmatprep.subr.bf16.mxu0 0
        %1770 = vmatpush1.bf16.msra.mxu0 %v1705
        %1771 = vmatprep.subr.bf16.mxu0 0
        %1772 = vmatpush1.bf16.msra.mxu0 %v1706
        %1773 = vmatprep.subr.bf16.mxu0 0
        %1774 = vmatpush1.bf16.msra.mxu0 %v1707
        %1775 = vmatprep.subr.bf16.mxu0 0
        %1776 = vmatpush1.bf16.msra.mxu0 %v1708
        %1777 = vmatprep.subr.bf16.mxu0 0
        %1778 = vmatpush1.bf16.msra.mxu0 %v1709
        %1779 = vmatprep.subr.bf16.mxu0 0
        %1780 = vmatpush1.bf16.msra.mxu0 %v1710
        %1781 = vmatprep.subr.bf16.mxu0 0
        %1782 = vmatpush1.bf16.msra.mxu0 %v1711
        %1783 = vmatprep.subr.bf16.mxu0 0
        %1784 = vmatpush1.bf16.msra.mxu0 %v1712
        %1785 = vmatprep.subr.bf16.mxu0 0
        %1786 = vmatpush1.bf16.msra.mxu0 %v1713
        %1787 = vmatprep.subr.bf16.mxu0 0
        %1788 = vmatpush1.bf16.msra.mxu0 %v1714
        %1789 = vmatprep.subr.bf16.mxu0 0
        %1790 = vmatpush1.bf16.msra.mxu0 %v1715
        %1791 = vmatprep.subr.bf16.mxu0 0
        %1792 = vmatpush1.bf16.msra.mxu0 %v1716
        %1793 = vmatprep.subr.bf16.mxu0 0
        %1794 = vmatpush1.bf16.msra.mxu0 %v1717
        %1795 = vmatprep.subr.bf16.mxu0 0
        %1796 = vmatpush1.bf16.msra.mxu0 %v1718
        %1797 = vmatprep.subr.bf16.mxu0 0
        %1798 = vmatpush1.bf16.msra.mxu0 %v1719
        %1799 = vmatprep.subr.bf16.mxu0 0
        %1800 = vmatpush1.bf16.msra.mxu0 %v1720
        %1801 = vmatprep.mubr.bf16.mxu0 %v1322
        %1802 = vmatmul.mubr.bf16.gmra.mrb[0].mxu0 %v1321
        %v1803 = vpop.f32.mrb[0].mxu0
        %v1804 = vadd.f32 0.0, %v1803
        %v1805 = vpop.f32.mrb[0].mxu0
        %v1806 = vpop.f32.mrb[0].mxu0
        %v1807 = vadd.f32 0.0, %v1806
        %v1808 = vpop.f32.mrb[0].mxu0
        %1809 = vmatprep.mubr.bf16.mxu0 %v1326
        %1810 = vmatmul.mubr.bf16.gmra.mrb[0].mxu0 %v1325
        %v1811 = vpop.f32.mrb[0].mxu0
        %v1812 = vadd.f32 0.0, %v1811
        %v1813 = vpop.f32.mrb[0].mxu0
        %v1814 = vpop.f32.mrb[0].mxu0
        %v1815 = vadd.f32 0.0, %v1814
        %v1816 = vpop.f32.mrb[0].mxu0
        %1817 = vmatprep.mubr.bf16.mxu0 %v1330
        %1818 = vmatmul.mubr.bf16.gmra.mrb[0].mxu0 %v1329
        %v1819 = vpop.f32.mrb[0].mxu0
        %v1820 = vadd.f32 0.0, %v1819
        %v1821 = vpop.f32.mrb[0].mxu0
        %v1822 = vpop.f32.mrb[0].mxu0
        %v1823 = vadd.f32 0.0, %v1822
        %v1824 = vpop.f32.mrb[0].mxu0
        %1825 = vmatprep.mubr.bf16.mxu0 %v1334
        %1826 = vmatmul.mubr.bf16.gmra.mrb[0].mxu0 %v1333
        %v1827 = vpop.f32.mrb[0].mxu0
        %v1828 = vadd.f32 0.0, %v1827
        %v1829 = vpop.f32.mrb[0].mxu0
        %v1830 = vpop.f32.mrb[0].mxu0
        %v1831 = vadd.f32 0.0, %v1830
        %v1832 = vpop.f32.mrb[0].mxu0
        %1833 = vmatprep.mubr.bf16.mxu0 %v1338
        %1834 = vmatmul.mubr.bf16.gmra.mrb[0].mxu0 %v1337
        %v1835 = vpop.f32.mrb[0].mxu0
        %v1836 = vadd.f32 0.0, %v1835
        %v1837 = vpop.f32.mrb[0].mxu0
        %v1838 = vpop.f32.mrb[0].mxu0
        %v1839 = vadd.f32 0.0, %v1838
        %v1840 = vpop.f32.mrb[0].mxu0
        %1841 = vmatprep.mubr.bf16.mxu0 %v1342
        %1842 = vmatmul.mubr.bf16.gmra.mrb[0].mxu0 %v1341
        %v1843 = vpop.f32.mrb[0].mxu0
        %v1844 = vadd.f32 0.0, %v1843
        %v1845 = vpop.f32.mrb[0].mxu0
        %v1846 = vpop.f32.mrb[0].mxu0
        %v1847 = vadd.f32 0.0, %v1846
        %v1848 = vpop.f32.mrb[0].mxu0
        %1849 = vmatprep.mubr.bf16.mxu0 %v1346
        %1850 = vmatmul.mubr.bf16.gmra.mrb[0].mxu0 %v1345
        %v1851 = vpop.f32.mrb[0].mxu0
        %v1852 = vadd.f32 0.0, %v1851
        %v1853 = vpop.f32.mrb[0].mxu0
        %v1854 = vpop.f32.mrb[0].mxu0
        %v1855 = vadd.f32 0.0, %v1854
        %v1856 = vpop.f32.mrb[0].mxu0
        %1857 = vmatprep.mubr.bf16.mxu0 %v1350
        %1858 = vmatmul.mubr.bf16.gmra.mrb[0].mxu0 %v1349
        %v1859 = vpop.f32.mrb[0].mxu0
        %v1860 = vadd.f32 0.0, %v1859
        %v1861 = vpop.f32.mrb[0].mxu0
        %v1862 = vpop.f32.mrb[0].mxu0
        %v1863 = vadd.f32 0.0, %v1862
        %v1864 = vpop.f32.mrb[0].mxu0
        %1865 = vmatprep.mubr.bf16.mxu0 %v1354
        %1866 = vmatmul.mubr.bf16.gmra.mrb[0].mxu0 %v1353
        %v1867 = vpop.f32.mrb[0].mxu0
        %v1868 = vadd.f32 0.0, %v1867
        %v1869 = vpop.f32.mrb[0].mxu0
        %v1870 = vpop.f32.mrb[0].mxu0
        %v1871 = vadd.f32 0.0, %v1870
        %v1872 = vpop.f32.mrb[0].mxu0
        %1873 = vmatprep.mubr.bf16.mxu0 %v1358
        %1874 = vmatmul.mubr.bf16.gmra.mrb[0].mxu0 %v1357
        %v1875 = vpop.f32.mrb[0].mxu0
        %v1876 = vadd.f32 0.0, %v1875
        %v1877 = vpop.f32.mrb[0].mxu0
        %v1878 = vpop.f32.mrb[0].mxu0
        %v1879 = vadd.f32 0.0, %v1878
        %v1880 = vpop.f32.mrb[0].mxu0
        %1881 = vmatprep.mubr.bf16.mxu0 %v1362
        %1882 = vmatmul.mubr.bf16.gmra.mrb[0].mxu0 %v1361
        %v1883 = vpop.f32.mrb[0].mxu0
        %v1884 = vadd.f32 0.0, %v1883
        %v1885 = vpop.f32.mrb[0].mxu0
        %v1886 = vpop.f32.mrb[0].mxu0
        %v1887 = vadd.f32 0.0, %v1886
        %v1888 = vpop.f32.mrb[0].mxu0
        %1889 = vmatprep.mubr.bf16.mxu0 %v1366
        %1890 = vmatmul.mubr.bf16.gmra.mrb[0].mxu0 %v1365
        %v1891 = vpop.f32.mrb[0].mxu0
        %v1892 = vadd.f32 0.0, %v1891
        %v1893 = vpop.f32.mrb[0].mxu0
        %v1894 = vpop.f32.mrb[0].mxu0
        %v1895 = vadd.f32 0.0, %v1894
        %v1896 = vpop.f32.mrb[0].mxu0
        %1897 = vmatprep.mubr.bf16.mxu0 %v1370
        %1898 = vmatmul.mubr.bf16.gmra.mrb[0].mxu0 %v1369
        %v1899 = vpop.f32.mrb[0].mxu0
        %v1900 = vadd.f32 0.0, %v1899
        %v1901 = vpop.f32.mrb[0].mxu0
        %v1902 = vpop.f32.mrb[0].mxu0
        %v1903 = vadd.f32 0.0, %v1902
        %v1904 = vpop.f32.mrb[0].mxu0
        %1905 = vmatprep.mubr.bf16.mxu0 %v1374
        %1906 = vmatmul.mubr.bf16.gmra.mrb[0].mxu0 %v1373
        %v1907 = vpop.f32.mrb[0].mxu0
        %v1908 = vadd.f32 0.0, %v1907
        %v1909 = vpop.f32.mrb[0].mxu0
        %v1910 = vpop.f32.mrb[0].mxu0
        %v1911 = vadd.f32 0.0, %v1910
        %v1912 = vpop.f32.mrb[0].mxu0
        %1913 = vmatprep.mubr.bf16.mxu0 %v1378
        %1914 = vmatmul.mubr.bf16.gmra.mrb[0].mxu0 %v1377
        %v1915 = vpop.f32.mrb[0].mxu0
        %v1916 = vadd.f32 0.0, %v1915
        %v1917 = vpop.f32.mrb[0].mxu0
        %v1918 = vpop.f32.mrb[0].mxu0
        %v1919 = vadd.f32 0.0, %v1918
        %v1920 = vpop.f32.mrb[0].mxu0
        %1921 = vmatprep.mubr.bf16.mxu0 %v1382
        %1922 = vmatmul.mubr.bf16.gmra.mrb[0].mxu0 %v1381
        %v1923 = vpop.f32.mrb[0].mxu0
        %v1924 = vadd.f32 0.0, %v1923
        %v1925 = vpop.f32.mrb[0].mxu0
        %v1926 = vpop.f32.mrb[0].mxu0
        %v1927 = vadd.f32 0.0, %v1926
        %v1928 = vpop.f32.mrb[0].mxu0
        %1929 = vmatprep.mubr.bf16.mxu0 %v1386
        %1930 = vmatmul.mubr.bf16.gmra.mrb[0].mxu0 %v1385
        %v1931 = vpop.f32.mrb[0].mxu0
        %v1932 = vadd.f32 0.0, %v1931
        %v1933 = vpop.f32.mrb[0].mxu0
        %v1934 = vpop.f32.mrb[0].mxu0
        %v1935 = vadd.f32 0.0, %v1934
        %v1936 = vpop.f32.mrb[0].mxu0
        %1937 = vmatprep.mubr.bf16.mxu0 %v1390
        %1938 = vmatmul.mubr.bf16.gmra.mrb[0].mxu0 %v1389
        %v1939 = vpop.f32.mrb[0].mxu0
        %v1940 = vadd.f32 0.0, %v1939
        %v1941 = vpop.f32.mrb[0].mxu0
        %v1942 = vpop.f32.mrb[0].mxu0
        %v1943 = vadd.f32 0.0, %v1942
        %v1944 = vpop.f32.mrb[0].mxu0
        %1945 = vmatprep.mubr.bf16.mxu0 %v1394
        %1946 = vmatmul.mubr.bf16.gmra.mrb[0].mxu0 %v1393
        %v1947 = vpop.f32.mrb[0].mxu0
        %v1948 = vadd.f32 0.0, %v1947
        %v1949 = vpop.f32.mrb[0].mxu0
        %v1950 = vpop.f32.mrb[0].mxu0
        %v1951 = vadd.f32 0.0, %v1950
        %v1952 = vpop.f32.mrb[0].mxu0
        %1953 = vmatprep.mubr.bf16.mxu0 %v1398
        %1954 = vmatmul.mubr.bf16.gmra.mrb[0].mxu0 %v1397
        %v1955 = vpop.f32.mrb[0].mxu0
        %v1956 = vadd.f32 0.0, %v1955
        %v1957 = vpop.f32.mrb[0].mxu0
        %v1958 = vpop.f32.mrb[0].mxu0
        %v1959 = vadd.f32 0.0, %v1958
        %v1960 = vpop.f32.mrb[0].mxu0
        %1961 = vmatprep.mubr.bf16.mxu0 %v1402
        %1962 = vmatmul.mubr.bf16.gmra.mrb[0].mxu0 %v1401
        %v1963 = vpop.f32.mrb[0].mxu0
        %v1964 = vadd.f32 0.0, %v1963
        %v1965 = vpop.f32.mrb[0].mxu0
        %v1966 = vpop.f32.mrb[0].mxu0
        %v1967 = vadd.f32 0.0, %v1966
        %v1968 = vpop.f32.mrb[0].mxu0
        %1969 = vmatprep.mubr.bf16.mxu0 %v1406
        %1970 = vmatmul.mubr.bf16.gmra.mrb[0].mxu0 %v1405
        %v1971 = vpop.f32.mrb[0].mxu0
        %v1972 = vadd.f32 0.0, %v1971
        %v1973 = vpop.f32.mrb[0].mxu0
        %v1974 = vpop.f32.mrb[0].mxu0
        %v1975 = vadd.f32 0.0, %v1974
        %v1976 = vpop.f32.mrb[0].mxu0
        %1977 = vmatprep.mubr.bf16.mxu0 %v1410
        %1978 = vmatmul.mubr.bf16.gmra.mrb[0].mxu0 %v1409
        %v1979 = vpop.f32.mrb[0].mxu0
        %v1980 = vadd.f32 0.0, %v1979
        %v1981 = vpop.f32.mrb[0].mxu0
        %v1982 = vpop.f32.mrb[0].mxu0
        %v1983 = vadd.f32 0.0, %v1982
        %v1984 = vpop.f32.mrb[0].mxu0
        %1985 = vmatprep.mubr.bf16.mxu0 %v1414
        %1986 = vmatmul.mubr.bf16.gmra.mrb[0].mxu0 %v1413
        %v1987 = vpop.f32.mrb[0].mxu0
        %v1988 = vadd.f32 0.0, %v1987
        %v1989 = vpop.f32.mrb[0].mxu0
        %v1990 = vpop.f32.mrb[0].mxu0
        %v1991 = vadd.f32 0.0, %v1990
        %v1992 = vpop.f32.mrb[0].mxu0
        %1993 = vmatprep.mubr.bf16.mxu0 %v1418
        %1994 = vmatmul.mubr.bf16.gmra.mrb[0].mxu0 %v1417
        %v1995 = vpop.f32.mrb[0].mxu0
        %v1996 = vadd.f32 0.0, %v1995
        %v1997 = vpop.f32.mrb[0].mxu0
        %v1998 = vpop.f32.mrb[0].mxu0
        %v1999 = vadd.f32 0.0, %v1998
        %v2000 = vpop.f32.mrb[0].mxu0
        %2001 = vmatprep.mubr.bf16.mxu0 %v1422
        %2002 = vmatmul.mubr.bf16.gmra.mrb[0].mxu0 %v1421
        %v2003 = vpop.f32.mrb[0].mxu0
        %v2004 = vadd.f32 0.0, %v2003
        %v2005 = vpop.f32.mrb[0].mxu0
        %v2006 = vpop.f32.mrb[0].mxu0
        %v2007 = vadd.f32 0.0, %v2006
        %v2008 = vpop.f32.mrb[0].mxu0
        %2009 = vmatprep.mubr.bf16.mxu0 %v1426
        %2010 = vmatmul.mubr.bf16.gmra.mrb[0].mxu0 %v1425
        %v2011 = vpop.f32.mrb[0].mxu0
        %v2012 = vadd.f32 0.0, %v2011
        %v2013 = vpop.f32.mrb[0].mxu0
        %v2014 = vpop.f32.mrb[0].mxu0
        %v2015 = vadd.f32 0.0, %v2014
        %v2016 = vpop.f32.mrb[0].mxu0
        %2017 = vmatprep.mubr.bf16.mxu0 %v1430
        %2018 = vmatmul.mubr.bf16.gmra.mrb[0].mxu0 %v1429
        %v2019 = vpop.f32.mrb[0].mxu0
        %v2020 = vadd.f32 0.0, %v2019
        %v2021 = vpop.f32.mrb[0].mxu0
        %v2022 = vpop.f32.mrb[0].mxu0
        %v2023 = vadd.f32 0.0, %v2022
        %v2024 = vpop.f32.mrb[0].mxu0
        %2025 = vmatprep.mubr.bf16.mxu0 %v1434
        %2026 = vmatmul.mubr.bf16.gmra.mrb[0].mxu0 %v1433
        %v2027 = vpop.f32.mrb[0].mxu0
        %v2028 = vadd.f32 0.0, %v2027
        %v2029 = vpop.f32.mrb[0].mxu0
        %v2030 = vpop.f32.mrb[0].mxu0
        %v2031 = vadd.f32 0.0, %v2030
        %v2032 = vpop.f32.mrb[0].mxu0
        %2033 = vmatprep.mubr.bf16.mxu0 %v1438
        %2034 = vmatmul.mubr.bf16.gmra.mrb[0].mxu0 %v1437
        %v2035 = vpop.f32.mrb[0].mxu0
        %v2036 = vadd.f32 0.0, %v2035
        %v2037 = vpop.f32.mrb[0].mxu0
        %v2038 = vpop.f32.mrb[0].mxu0
        %v2039 = vadd.f32 0.0, %v2038
        %v2040 = vpop.f32.mrb[0].mxu0
        %2041 = vmatprep.mubr.bf16.mxu0 %v1442
        %2042 = vmatmul.mubr.bf16.gmra.mrb[0].mxu0 %v1441
        %v2043 = vpop.f32.mrb[0].mxu0
        %v2044 = vadd.f32 0.0, %v2043
        %v2045 = vpop.f32.mrb[0].mxu0
        %v2046 = vpop.f32.mrb[0].mxu0
        %v2047 = vadd.f32 0.0, %v2046
        %v2048 = vpop.f32.mrb[0].mxu0
        %2049 = vmatprep.mubr.bf16.mxu0 %v1446
        %2050 = vmatmul.mubr.bf16.gmra.mrb[0].mxu0 %v1445
        %v2051 = vpop.f32.mrb[0].mxu0
        %v2052 = vadd.f32 0.0, %v2051
        %v2053 = vpop.f32.mrb[0].mxu0
        %v2054 = vpop.f32.mrb[0].mxu0
        %v2055 = vadd.f32 0.0, %v2054
        %v2056 = vpop.f32.mrb[0].mxu0
        %2057 = vdwg.mxu0
        %2058 = vmatprep.subr.bf16.mxu0 0
        %2059 = vmatpush1.bf16.msra.mxu0 %v1721
        %2060 = vmatprep.subr.bf16.mxu0 0
        %2061 = vmatpush1.bf16.msra.mxu0 %v1722
        %2062 = vmatprep.subr.bf16.mxu0 0
        %2063 = vmatpush1.bf16.msra.mxu0 %v1723
        %2064 = vmatprep.subr.bf16.mxu0 0
        %2065 = vmatpush1.bf16.msra.mxu0 %v1724
        %2066 = vmatprep.subr.bf16.mxu0 0
        %2067 = vmatpush1.bf16.msra.mxu0 %v1725
        %2068 = vmatprep.subr.bf16.mxu0 0
        %2069 = vmatpush1.bf16.msra.mxu0 %v1726
        %2070 = vmatprep.subr.bf16.mxu0 0
        %2071 = vmatpush1.bf16.msra.mxu0 %v1727
        %2072 = vmatprep.subr.bf16.mxu0 0
        %2073 = vmatpush1.bf16.msra.mxu0 %v1728
        %2074 = vmatprep.subr.bf16.mxu0 0
        %2075 = vmatpush1.bf16.msra.mxu0 %v1729
        %2076 = vmatprep.subr.bf16.mxu0 0
        %2077 = vmatpush1.bf16.msra.mxu0 %v1730
        %2078 = vmatprep.subr.bf16.mxu0 0
        %2079 = vmatpush1.bf16.msra.mxu0 %v1731
        %2080 = vmatprep.subr.bf16.mxu0 0
        %2081 = vmatpush1.bf16.msra.mxu0 %v1732
        %2082 = vmatprep.subr.bf16.mxu0 0
        %2083 = vmatpush1.bf16.msra.mxu0 %v1733
        %2084 = vmatprep.subr.bf16.mxu0 0
        %2085 = vmatpush1.bf16.msra.mxu0 %v1734
        %2086 = vmatprep.subr.bf16.mxu0 0
        %2087 = vmatpush1.bf16.msra.mxu0 %v1735
        %2088 = vmatprep.subr.bf16.mxu0 0
        %2089 = vmatpush1.bf16.msra.mxu0 %v1736
        %2090 = vmatprep.mubr.bf16.mxu0 %v1324
        %2091 = vmatmul.mubr.bf16.gmra.mrb[0].mxu0 %v1323
        %v2092 = vpop.f32.mrb[0].mxu0
        %v2093 = vadd.f32 %v1804, %v2092
        %v2094 = vpop.f32.mrb[0].mxu0
        %v2095 = vpop.f32.mrb[0].mxu0
        %v2096 = vadd.f32 %v1807, %v2095
        %v2097 = vpop.f32.mrb[0].mxu0
        %2098 = vmatprep.mubr.bf16.mxu0 %v1328
        %2099 = vmatmul.mubr.bf16.gmra.mrb[0].mxu0 %v1327
        %v2100 = vpop.f32.mrb[0].mxu0
        %v2101 = vadd.f32 %v1812, %v2100
        %v2102 = vpop.f32.mrb[0].mxu0
        %v2103 = vpop.f32.mrb[0].mxu0
        %v2104 = vadd.f32 %v1815, %v2103
        %v2105 = vpop.f32.mrb[0].mxu0
        %2106 = vmatprep.mubr.bf16.mxu0 %v1332
        %2107 = vmatmul.mubr.bf16.gmra.mrb[0].mxu0 %v1331
        %v2108 = vpop.f32.mrb[0].mxu0
        %v2109 = vadd.f32 %v1820, %v2108
        %v2110 = vpop.f32.mrb[0].mxu0
        %v2111 = vpop.f32.mrb[0].mxu0
        %v2112 = vadd.f32 %v1823, %v2111
        %v2113 = vpop.f32.mrb[0].mxu0
        %2114 = vmatprep.mubr.bf16.mxu0 %v1336
        %2115 = vmatmul.mubr.bf16.gmra.mrb[0].mxu0 %v1335
        %v2116 = vpop.f32.mrb[0].mxu0
        %v2117 = vadd.f32 %v1828, %v2116
        %v2118 = vpop.f32.mrb[0].mxu0
        %v2119 = vpop.f32.mrb[0].mxu0
        %v2120 = vadd.f32 %v1831, %v2119
        %v2121 = vpop.f32.mrb[0].mxu0
        %2122 = vmatprep.mubr.bf16.mxu0 %v1340
        %2123 = vmatmul.mubr.bf16.gmra.mrb[0].mxu0 %v1339
        %v2124 = vpop.f32.mrb[0].mxu0
        %v2125 = vadd.f32 %v1836, %v2124
        %v2126 = vpop.f32.mrb[0].mxu0
        %v2127 = vpop.f32.mrb[0].mxu0
        %v2128 = vadd.f32 %v1839, %v2127
        %v2129 = vpop.f32.mrb[0].mxu0
        %2130 = vmatprep.mubr.bf16.mxu0 %v1344
        %2131 = vmatmul.mubr.bf16.gmra.mrb[0].mxu0 %v1343
        %v2132 = vpop.f32.mrb[0].mxu0
        %v2133 = vadd.f32 %v1844, %v2132
        %v2134 = vpop.f32.mrb[0].mxu0
        %v2135 = vpop.f32.mrb[0].mxu0
        %v2136 = vadd.f32 %v1847, %v2135
        %v2137 = vpop.f32.mrb[0].mxu0
        %2138 = vmatprep.mubr.bf16.mxu0 %v1348
        %2139 = vmatmul.mubr.bf16.gmra.mrb[0].mxu0 %v1347
        %v2140 = vpop.f32.mrb[0].mxu0
        %v2141 = vadd.f32 %v1852, %v2140
        %v2142 = vpop.f32.mrb[0].mxu0
        %v2143 = vpop.f32.mrb[0].mxu0
        %v2144 = vadd.f32 %v1855, %v2143
        %v2145 = vpop.f32.mrb[0].mxu0
        %2146 = vmatprep.mubr.bf16.mxu0 %v1352
        %2147 = vmatmul.mubr.bf16.gmra.mrb[0].mxu0 %v1351
        %v2148 = vpop.f32.mrb[0].mxu0
        %v2149 = vadd.f32 %v1860, %v2148
        %v2150 = vpop.f32.mrb[0].mxu0
        %v2151 = vpop.f32.mrb[0].mxu0
        %v2152 = vadd.f32 %v1863, %v2151
        %v2153 = vpop.f32.mrb[0].mxu0
        %2154 = vmatprep.mubr.bf16.mxu0 %v1356
        %2155 = vmatmul.mubr.bf16.gmra.mrb[0].mxu0 %v1355
        %v2156 = vpop.f32.mrb[0].mxu0
        %v2157 = vadd.f32 %v1868, %v2156
        %v2158 = vpop.f32.mrb[0].mxu0
        %v2159 = vpop.f32.mrb[0].mxu0
        %v2160 = vadd.f32 %v1871, %v2159
        %v2161 = vpop.f32.mrb[0].mxu0
        %2162 = vmatprep.mubr.bf16.mxu0 %v1360
        %2163 = vmatmul.mubr.bf16.gmra.mrb[0].mxu0 %v1359
        %v2164 = vpop.f32.mrb[0].mxu0
        %v2165 = vadd.f32 %v1876, %v2164
        %v2166 = vpop.f32.mrb[0].mxu0
        %v2167 = vpop.f32.mrb[0].mxu0
        %v2168 = vadd.f32 %v1879, %v2167
        %v2169 = vpop.f32.mrb[0].mxu0
        %2170 = vmatprep.mubr.bf16.mxu0 %v1364
        %2171 = vmatmul.mubr.bf16.gmra.mrb[0].mxu0 %v1363
        %v2172 = vpop.f32.mrb[0].mxu0
        %v2173 = vadd.f32 %v1884, %v2172
        %v2174 = vpop.f32.mrb[0].mxu0
        %v2175 = vpop.f32.mrb[0].mxu0
        %v2176 = vadd.f32 %v1887, %v2175
        %v2177 = vpop.f32.mrb[0].mxu0
        %2178 = vmatprep.mubr.bf16.mxu0 %v1368
        %2179 = vmatmul.mubr.bf16.gmra.mrb[0].mxu0 %v1367
        %v2180 = vpop.f32.mrb[0].mxu0
        %v2181 = vadd.f32 %v1892, %v2180
        %v2182 = vpop.f32.mrb[0].mxu0
        %v2183 = vpop.f32.mrb[0].mxu0
        %v2184 = vadd.f32 %v1895, %v2183
        %v2185 = vpop.f32.mrb[0].mxu0
        %2186 = vmatprep.mubr.bf16.mxu0 %v1372
        %2187 = vmatmul.mubr.bf16.gmra.mrb[0].mxu0 %v1371
        %v2188 = vpop.f32.mrb[0].mxu0
        %v2189 = vadd.f32 %v1900, %v2188
        %v2190 = vpop.f32.mrb[0].mxu0
        %v2191 = vpop.f32.mrb[0].mxu0
        %v2192 = vadd.f32 %v1903, %v2191
        %v2193 = vpop.f32.mrb[0].mxu0
        %2194 = vmatprep.mubr.bf16.mxu0 %v1376
        %2195 = vmatmul.mubr.bf16.gmra.mrb[0].mxu0 %v1375
        %v2196 = vpop.f32.mrb[0].mxu0
        %v2197 = vadd.f32 %v1908, %v2196
        %v2198 = vpop.f32.mrb[0].mxu0
        %v2199 = vpop.f32.mrb[0].mxu0
        %v2200 = vadd.f32 %v1911, %v2199
        %v2201 = vpop.f32.mrb[0].mxu0
        %2202 = vmatprep.mubr.bf16.mxu0 %v1380
        %2203 = vmatmul.mubr.bf16.gmra.mrb[0].mxu0 %v1379
        %v2204 = vpop.f32.mrb[0].mxu0
        %v2205 = vadd.f32 %v1916, %v2204
        %v2206 = vpop.f32.mrb[0].mxu0
        %v2207 = vpop.f32.mrb[0].mxu0
        %v2208 = vadd.f32 %v1919, %v2207
        %v2209 = vpop.f32.mrb[0].mxu0
        %2210 = vmatprep.mubr.bf16.mxu0 %v1384
        %2211 = vmatmul.mubr.bf16.gmra.mrb[0].mxu0 %v1383
        %v2212 = vpop.f32.mrb[0].mxu0
        %v2213 = vadd.f32 %v1924, %v2212
        %v2214 = vpop.f32.mrb[0].mxu0
        %v2215 = vpop.f32.mrb[0].mxu0
        %v2216 = vadd.f32 %v1927, %v2215
        %v2217 = vpop.f32.mrb[0].mxu0
        %2218 = vmatprep.mubr.bf16.mxu0 %v1388
        %2219 = vmatmul.mubr.bf16.gmra.mrb[0].mxu0 %v1387
        %v2220 = vpop.f32.mrb[0].mxu0
        %v2221 = vadd.f32 %v1932, %v2220
        %v2222 = vpop.f32.mrb[0].mxu0
        %v2223 = vpop.f32.mrb[0].mxu0
        %v2224 = vadd.f32 %v1935, %v2223
        %v2225 = vpop.f32.mrb[0].mxu0
        %2226 = vmatprep.mubr.bf16.mxu0 %v1392
        %2227 = vmatmul.mubr.bf16.gmra.mrb[0].mxu0 %v1391
        %v2228 = vpop.f32.mrb[0].mxu0
        %v2229 = vadd.f32 %v1940, %v2228
        %v2230 = vpop.f32.mrb[0].mxu0
        %v2231 = vpop.f32.mrb[0].mxu0
        %v2232 = vadd.f32 %v1943, %v2231
        %v2233 = vpop.f32.mrb[0].mxu0
        %2234 = vmatprep.mubr.bf16.mxu0 %v1396
        %2235 = vmatmul.mubr.bf16.gmra.mrb[0].mxu0 %v1395
        %v2236 = vpop.f32.mrb[0].mxu0
        %v2237 = vadd.f32 %v1948, %v2236
        %v2238 = vpop.f32.mrb[0].mxu0
        %v2239 = vpop.f32.mrb[0].mxu0
        %v2240 = vadd.f32 %v1951, %v2239
        %v2241 = vpop.f32.mrb[0].mxu0
        %2242 = vmatprep.mubr.bf16.mxu0 %v1400
        %2243 = vmatmul.mubr.bf16.gmra.mrb[0].mxu0 %v1399
        %v2244 = vpop.f32.mrb[0].mxu0
        %v2245 = vadd.f32 %v1956, %v2244
        %v2246 = vpop.f32.mrb[0].mxu0
        %v2247 = vpop.f32.mrb[0].mxu0
        %v2248 = vadd.f32 %v1959, %v2247
        %v2249 = vpop.f32.mrb[0].mxu0
        %2250 = vmatprep.mubr.bf16.mxu0 %v1404
        %2251 = vmatmul.mubr.bf16.gmra.mrb[0].mxu0 %v1403
        %v2252 = vpop.f32.mrb[0].mxu0
        %v2253 = vadd.f32 %v1964, %v2252
        %v2254 = vpop.f32.mrb[0].mxu0
        %v2255 = vpop.f32.mrb[0].mxu0
        %v2256 = vadd.f32 %v1967, %v2255
        %v2257 = vpop.f32.mrb[0].mxu0
        %2258 = vmatprep.mubr.bf16.mxu0 %v1408
        %2259 = vmatmul.mubr.bf16.gmra.mrb[0].mxu0 %v1407
        %v2260 = vpop.f32.mrb[0].mxu0
        %v2261 = vadd.f32 %v1972, %v2260
        %v2262 = vpop.f32.mrb[0].mxu0
        %v2263 = vpop.f32.mrb[0].mxu0
        %v2264 = vadd.f32 %v1975, %v2263
        %v2265 = vpop.f32.mrb[0].mxu0
        %2266 = vmatprep.mubr.bf16.mxu0 %v1412
        %2267 = vmatmul.mubr.bf16.gmra.mrb[0].mxu0 %v1411
        %v2268 = vpop.f32.mrb[0].mxu0
        %v2269 = vadd.f32 %v1980, %v2268
        %v2270 = vpop.f32.mrb[0].mxu0
        %v2271 = vpop.f32.mrb[0].mxu0
        %v2272 = vadd.f32 %v1983, %v2271
        %v2273 = vpop.f32.mrb[0].mxu0
        %2274 = vmatprep.mubr.bf16.mxu0 %v1416
        %2275 = vmatmul.mubr.bf16.gmra.mrb[0].mxu0 %v1415
        %v2276 = vpop.f32.mrb[0].mxu0
        %v2277 = vadd.f32 %v1988, %v2276
        %v2278 = vpop.f32.mrb[0].mxu0
        %v2279 = vpop.f32.mrb[0].mxu0
        %v2280 = vadd.f32 %v1991, %v2279
        %v2281 = vpop.f32.mrb[0].mxu0
        %2282 = vmatprep.mubr.bf16.mxu0 %v1420
        %2283 = vmatmul.mubr.bf16.gmra.mrb[0].mxu0 %v1419
        %v2284 = vpop.f32.mrb[0].mxu0
        %v2285 = vadd.f32 %v1996, %v2284
        %v2286 = vpop.f32.mrb[0].mxu0
        %v2287 = vpop.f32.mrb[0].mxu0
        %v2288 = vadd.f32 %v1999, %v2287
        %v2289 = vpop.f32.mrb[0].mxu0
        %2290 = vmatprep.mubr.bf16.mxu0 %v1424
        %2291 = vmatmul.mubr.bf16.gmra.mrb[0].mxu0 %v1423
        %v2292 = vpop.f32.mrb[0].mxu0
        %v2293 = vadd.f32 %v2004, %v2292
        %v2294 = vpop.f32.mrb[0].mxu0
        %v2295 = vpop.f32.mrb[0].mxu0
        %v2296 = vadd.f32 %v2007, %v2295
        %v2297 = vpop.f32.mrb[0].mxu0
        %2298 = vmatprep.mubr.bf16.mxu0 %v1428
        %2299 = vmatmul.mubr.bf16.gmra.mrb[0].mxu0 %v1427
        %v2300 = vpop.f32.mrb[0].mxu0
        %v2301 = vadd.f32 %v2012, %v2300
        %v2302 = vpop.f32.mrb[0].mxu0
        %v2303 = vpop.f32.mrb[0].mxu0
        %v2304 = vadd.f32 %v2015, %v2303
        %v2305 = vpop.f32.mrb[0].mxu0
        %2306 = vmatprep.mubr.bf16.mxu0 %v1432
        %2307 = vmatmul.mubr.bf16.gmra.mrb[0].mxu0 %v1431
        %v2308 = vpop.f32.mrb[0].mxu0
        %v2309 = vadd.f32 %v2020, %v2308
        %v2310 = vpop.f32.mrb[0].mxu0
        %v2311 = vpop.f32.mrb[0].mxu0
        %v2312 = vadd.f32 %v2023, %v2311
        %v2313 = vpop.f32.mrb[0].mxu0
        %2314 = vmatprep.mubr.bf16.mxu0 %v1436
        %2315 = vmatmul.mubr.bf16.gmra.mrb[0].mxu0 %v1435
        %v2316 = vpop.f32.mrb[0].mxu0
        %v2317 = vadd.f32 %v2028, %v2316
        %v2318 = vpop.f32.mrb[0].mxu0
        %v2319 = vpop.f32.mrb[0].mxu0
        %v2320 = vadd.f32 %v2031, %v2319
        %v2321 = vpop.f32.mrb[0].mxu0
        %2322 = vmatprep.mubr.bf16.mxu0 %v1440
        %2323 = vmatmul.mubr.bf16.gmra.mrb[0].mxu0 %v1439
        %v2324 = vpop.f32.mrb[0].mxu0
        %v2325 = vadd.f32 %v2036, %v2324
        %v2326 = vpop.f32.mrb[0].mxu0
        %v2327 = vpop.f32.mrb[0].mxu0
        %v2328 = vadd.f32 %v2039, %v2327
        %v2329 = vpop.f32.mrb[0].mxu0
        %2330 = vmatprep.mubr.bf16.mxu0 %v1444
        %2331 = vmatmul.mubr.bf16.gmra.mrb[0].mxu0 %v1443
        %v2332 = vpop.f32.mrb[0].mxu0
        %v2333 = vadd.f32 %v2044, %v2332
        %v2334 = vpop.f32.mrb[0].mxu0
        %v2335 = vpop.f32.mrb[0].mxu0
        %v2336 = vadd.f32 %v2047, %v2335
        %v2337 = vpop.f32.mrb[0].mxu0
        %2338 = vmatprep.mubr.bf16.mxu0 %v1448
        %2339 = vmatmul.mubr.bf16.gmra.mrb[0].mxu0 %v1447
        %v2340 = vpop.f32.mrb[0].mxu0
        %v2341 = vadd.f32 %v2052, %v2340
        %v2342 = vpop.f32.mrb[0].mxu0
        %v2343 = vpop.f32.mrb[0].mxu0
        %v2344 = vadd.f32 %v2055, %v2343
        %v2345 = vpop.f32.mrb[0].mxu0
        %2346 = vdwg.mxu0
        %v2347 = vadd.f32 %v681, %v2093
        %v2348 = vadd.f32 %v682, %v2096
        %v2349 = vadd.f32 %v683, %v2101
        %v2350 = vadd.f32 %v684, %v2104
        %v2351 = vadd.f32 %v685, %v2109
        %v2352 = vadd.f32 %v686, %v2112
        %v2353 = vadd.f32 %v687, %v2117
        %v2354 = vadd.f32 %v688, %v2120
        %v2355 = vadd.f32 %v689, %v2125
        %v2356 = vadd.f32 %v690, %v2128
        %v2357 = vadd.f32 %v691, %v2133
        %v2358 = vadd.f32 %v692, %v2136
        %v2359 = vadd.f32 %v693, %v2141
        %v2360 = vadd.f32 %v694, %v2144
        %v2361 = vadd.f32 %v695, %v2149
        %v2362 = vadd.f32 %v696, %v2152
        %v2363 = vadd.f32 %v697, %v2157
        %v2364 = vadd.f32 %v698, %v2160
        %v2365 = vadd.f32 %v699, %v2165
        %v2366 = vadd.f32 %v700, %v2168
        %v2367 = vadd.f32 %v701, %v2173
        %v2368 = vadd.f32 %v702, %v2176
        %v2369 = vadd.f32 %v703, %v2181
        %v2370 = vadd.f32 %v704, %v2184
        %v2371 = vadd.f32 %v705, %v2189
        %v2372 = vadd.f32 %v706, %v2192
        %v2373 = vadd.f32 %v707, %v2197
        %v2374 = vadd.f32 %v708, %v2200
        %v2375 = vadd.f32 %v709, %v2205
        %v2376 = vadd.f32 %v710, %v2208
        %v2377 = vadd.f32 %v711, %v2213
        %v2378 = vadd.f32 %v712, %v2216
        %v2379 = vadd.f32 %v713, %v2221
        %v2380 = vadd.f32 %v714, %v2224
        %v2381 = vadd.f32 %v715, %v2229
        %v2382 = vadd.f32 %v716, %v2232
        %v2383 = vadd.f32 %v717, %v2237
        %v2384 = vadd.f32 %v718, %v2240
        %v2385 = vadd.f32 %v719, %v2245
        %v2386 = vadd.f32 %v720, %v2248
        %v2387 = vadd.f32 %v721, %v2253
        %v2388 = vadd.f32 %v722, %v2256
        %v2389 = vadd.f32 %v723, %v2261
        %v2390 = vadd.f32 %v724, %v2264
        %v2391 = vadd.f32 %v725, %v2269
        %v2392 = vadd.f32 %v726, %v2272
        %v2393 = vadd.f32 %v727, %v2277
        %v2394 = vadd.f32 %v728, %v2280
        %v2395 = vadd.f32 %v729, %v2285
        %v2396 = vadd.f32 %v730, %v2288
        %v2397 = vadd.f32 %v731, %v2293
        %v2398 = vadd.f32 %v732, %v2296
        %v2399 = vadd.f32 %v733, %v2301
        %v2400 = vadd.f32 %v734, %v2304
        %v2401 = vadd.f32 %v735, %v2309
        %v2402 = vadd.f32 %v736, %v2312
        %v2403 = vadd.f32 %v737, %v2317
        %v2404 = vadd.f32 %v738, %v2320
        %v2405 = vadd.f32 %v739, %v2325
        %v2406 = vadd.f32 %v740, %v2328
        %v2407 = vadd.f32 %v741, %v2333
        %v2408 = vadd.f32 %v742, %v2336
        %v2409 = vadd.f32 %v743, %v2341
        %v2410 = vadd.f32 %v744, %v2344
        %2411 = vst [vmem:[#allocation2] sm:$0xff] %v2347
        %2412 = vst [vmem:[#allocation2 + $0x8] sm:$0xff] %v2348
        %2413 = vst [vmem:[#allocation2 + $0x10] sm:$0xff] %v2349
        %2414 = vst [vmem:[#allocation2 + $0x18] sm:$0xff] %v2350
        %2415 = vst [vmem:[#allocation2 + $0x20] sm:$0xff] %v2351
        %2416 = vst [vmem:[#allocation2 + $0x28] sm:$0xff] %v2352
        %2417 = vst [vmem:[#allocation2 + $0x30] sm:$0xff] %v2353
        %2418 = vst [vmem:[#allocation2 + $0x38] sm:$0xff] %v2354
        %2419 = vst [vmem:[#allocation2 + $0x40] sm:$0xff] %v2355
        %2420 = vst [vmem:[#allocation2 + $0x48] sm:$0xff] %v2356
        %2421 = vst [vmem:[#allocation2 + $0x50] sm:$0xff] %v2357
        %2422 = vst [vmem:[#allocation2 + $0x58] sm:$0xff] %v2358
        %2423 = vst [vmem:[#allocation2 + $0x60] sm:$0xff] %v2359
        %2424 = vst [vmem:[#allocation2 + $0x68] sm:$0xff] %v2360
        %2425 = vst [vmem:[#allocation2 + $0x70] sm:$0xff] %v2361
        %2426 = vst [vmem:[#allocation2 + $0x78] sm:$0xff] %v2362
        %2427 = vst [vmem:[#allocation2 + $0x80] sm:$0xff] %v2363
        %2428 = vst [vmem:[#allocation2 + $0x88] sm:$0xff] %v2364
        %2429 = vst [vmem:[#allocation2 + $0x90] sm:$0xff] %v2365
        %2430 = vst [vmem:[#allocation2 + $0x98] sm:$0xff] %v2366
        %2431 = vst [vmem:[#allocation2 + $0xa0] sm:$0xff] %v2367
        %2432 = vst [vmem:[#allocation2 + $0xa8] sm:$0xff] %v2368
        %2433 = vst [vmem:[#allocation2 + $0xb0] sm:$0xff] %v2369
        %2434 = vst [vmem:[#allocation2 + $0xb8] sm:$0xff] %v2370
        %2435 = vst [vmem:[#allocation2 + $0xc0] sm:$0xff] %v2371
        %2436 = vst [vmem:[#allocation2 + $0xc8] sm:$0xff] %v2372
        %2437 = vst [vmem:[#allocation2 + $0xd0] sm:$0xff] %v2373
        %2438 = vst [vmem:[#allocation2 + $0xd8] sm:$0xff] %v2374
        %2439 = vst [vmem:[#allocation2 + $0xe0] sm:$0xff] %v2375
        %2440 = vst [vmem:[#allocation2 + $0xe8] sm:$0xff] %v2376
        %2441 = vst [vmem:[#allocation2 + $0xf0] sm:$0xff] %v2377
        %2442 = vst [vmem:[#allocation2 + $0xf8] sm:$0xff] %v2378
        %2443 = vst [vmem:[#allocation2 + $0x100] sm:$0xff] %v2379
        %2444 = vst [vmem:[#allocation2 + $0x108] sm:$0xff] %v2380
        %2445 = vst [vmem:[#allocation2 + $0x110] sm:$0xff] %v2381
        %2446 = vst [vmem:[#allocation2 + $0x118] sm:$0xff] %v2382
        %2447 = vst [vmem:[#allocation2 + $0x120] sm:$0xff] %v2383
        %2448 = vst [vmem:[#allocation2 + $0x128] sm:$0xff] %v2384
        %2449 = vst [vmem:[#allocation2 + $0x130] sm:$0xff] %v2385
        %2450 = vst [vmem:[#allocation2 + $0x138] sm:$0xff] %v2386
        %2451 = vst [vmem:[#allocation2 + $0x140] sm:$0xff] %v2387
        %2452 = vst [vmem:[#allocation2 + $0x148] sm:$0xff] %v2388
        %2453 = vst [vmem:[#allocation2 + $0x150] sm:$0xff] %v2389
        %2454 = vst [vmem:[#allocation2 + $0x158] sm:$0xff] %v2390
        %2455 = vst [vmem:[#allocation2 + $0x160] sm:$0xff] %v2391
        %2456 = vst [vmem:[#allocation2 + $0x168] sm:$0xff] %v2392
        %2457 = vst [vmem:[#allocation2 + $0x170] sm:$0xff] %v2393
        %2458 = vst [vmem:[#allocation2 + $0x178] sm:$0xff] %v2394
        %2459 = vst [vmem:[#allocation2 + $0x180] sm:$0xff] %v2395
        %2460 = vst [vmem:[#allocation2 + $0x188] sm:$0xff] %v2396
        %2461 = vst [vmem:[#allocation2 + $0x190] sm:$0xff] %v2397
        %2462 = vst [vmem:[#allocation2 + $0x198] sm:$0xff] %v2398
        %2463 = vst [vmem:[#allocation2 + $0x1a0] sm:$0xff] %v2399
        %2464 = vst [vmem:[#allocation2 + $0x1a8] sm:$0xff] %v2400
        %2465 = vst [vmem:[#allocation2 + $0x1b0] sm:$0xff] %v2401
        %2466 = vst [vmem:[#allocation2 + $0x1b8] sm:$0xff] %v2402
        %2467 = vst [vmem:[#allocation2 + $0x1c0] sm:$0xff] %v2403
        %2468 = vst [vmem:[#allocation2 + $0x1c8] sm:$0xff] %v2404
        %2469 = vst [vmem:[#allocation2 + $0x1d0] sm:$0xff] %v2405
        %2470 = vst [vmem:[#allocation2 + $0x1d8] sm:$0xff] %v2406
        %2471 = vst [vmem:[#allocation2 + $0x1e0] sm:$0xff] %v2407
        %2472 = vst [vmem:[#allocation2 + $0x1e8] sm:$0xff] %v2408
        %2473 = vst [vmem:[#allocation2 + $0x1f0] sm:$0xff] %v2409
        %2474 = vst [vmem:[#allocation2 + $0x1f8] sm:$0xff] %v2410
        %p2475 = scmp.eq.s32.totalorder %s22, 1
        // Predicated region
        $region72: #{hyper_gnn_conv.2} parent=62 // pred_check
          %p2476 = pneg %p2475
        $region73: #{hyper_gnn_conv.2} parent=62 // pred_check_branch
          %2478 = sbr.rel (%p2476) target = $region75
        $region74: #{hyper_gnn_conv.2} parent=62 // pred_region
          %v2479 = vld [vmem:[#allocation2] sm:$0xff]
          %v2480 = vld [vmem:[#allocation2 + $0x8] sm:$0xff]
          %v2481 = vld [vmem:[#allocation2 + $0x10] sm:$0xff]
          %v2482 = vld [vmem:[#allocation2 + $0x18] sm:$0xff]
          %v2483 = vld [vmem:[#allocation2 + $0x20] sm:$0xff]
          %v2484 = vld [vmem:[#allocation2 + $0x28] sm:$0xff]
          %v2485 = vld [vmem:[#allocation2 + $0x30] sm:$0xff]
          %v2486 = vld [vmem:[#allocation2 + $0x38] sm:$0xff]
          %v2487 = vld [vmem:[#allocation2 + $0x40] sm:$0xff]
          %v2488 = vld [vmem:[#allocation2 + $0x48] sm:$0xff]
          %v2489 = vld [vmem:[#allocation2 + $0x50] sm:$0xff]
          %v2490 = vld [vmem:[#allocation2 + $0x58] sm:$0xff]
          %v2491 = vld [vmem:[#allocation2 + $0x60] sm:$0xff]
          %v2492 = vld [vmem:[#allocation2 + $0x68] sm:$0xff]
          %v2493 = vld [vmem:[#allocation2 + $0x70] sm:$0xff]
          %v2494 = vld [vmem:[#allocation2 + $0x78] sm:$0xff]
          %v2495 = vld [vmem:[#allocation2 + $0x80] sm:$0xff]
          %v2496 = vld [vmem:[#allocation2 + $0x88] sm:$0xff]
          %v2497 = vld [vmem:[#allocation2 + $0x90] sm:$0xff]
          %v2498 = vld [vmem:[#allocation2 + $0x98] sm:$0xff]
          %v2499 = vld [vmem:[#allocation2 + $0xa0] sm:$0xff]
          %v2500 = vld [vmem:[#allocation2 + $0xa8] sm:$0xff]
          %v2501 = vld [vmem:[#allocation2 + $0xb0] sm:$0xff]
          %v2502 = vld [vmem:[#allocation2 + $0xb8] sm:$0xff]
          %v2503 = vld [vmem:[#allocation2 + $0xc0] sm:$0xff]
          %v2504 = vld [vmem:[#allocation2 + $0xc8] sm:$0xff]
          %v2505 = vld [vmem:[#allocation2 + $0xd0] sm:$0xff]
          %v2506 = vld [vmem:[#allocation2 + $0xd8] sm:$0xff]
          %v2507 = vld [vmem:[#allocation2 + $0xe0] sm:$0xff]
          %v2508 = vld [vmem:[#allocation2 + $0xe8] sm:$0xff]
          %v2509 = vld [vmem:[#allocation2 + $0xf0] sm:$0xff]
          %v2510 = vld [vmem:[#allocation2 + $0xf8] sm:$0xff]
          %v2511 = vld [vmem:[#allocation2 + $0x100] sm:$0xff]
          %v2512 = vld [vmem:[#allocation2 + $0x108] sm:$0xff]
          %v2513 = vld [vmem:[#allocation2 + $0x110] sm:$0xff]
          %v2514 = vld [vmem:[#allocation2 + $0x118] sm:$0xff]
          %v2515 = vld [vmem:[#allocation2 + $0x120] sm:$0xff]
          %v2516 = vld [vmem:[#allocation2 + $0x128] sm:$0xff]
          %v2517 = vld [vmem:[#allocation2 + $0x130] sm:$0xff]
          %v2518 = vld [vmem:[#allocation2 + $0x138] sm:$0xff]
          %v2519 = vld [vmem:[#allocation2 + $0x140] sm:$0xff]
          %v2520 = vld [vmem:[#allocation2 + $0x148] sm:$0xff]
          %v2521 = vld [vmem:[#allocation2 + $0x150] sm:$0xff]
          %v2522 = vld [vmem:[#allocation2 + $0x158] sm:$0xff]
          %v2523 = vld [vmem:[#allocation2 + $0x160] sm:$0xff]
          %v2524 = vld [vmem:[#allocation2 + $0x168] sm:$0xff]
          %v2525 = vld [vmem:[#allocation2 + $0x170] sm:$0xff]
          %v2526 = vld [vmem:[#allocation2 + $0x178] sm:$0xff]
          %v2527 = vld [vmem:[#allocation2 + $0x180] sm:$0xff]
          %v2528 = vld [vmem:[#allocation2 + $0x188] sm:$0xff]
          %v2529 = vld [vmem:[#allocation2 + $0x190] sm:$0xff]
          %v2530 = vld [vmem:[#allocation2 + $0x198] sm:$0xff]
          %v2531 = vld [vmem:[#allocation2 + $0x1a0] sm:$0xff]
          %v2532 = vld [vmem:[#allocation2 + $0x1a8] sm:$0xff]
          %v2533 = vld [vmem:[#allocation2 + $0x1b0] sm:$0xff]
          %v2534 = vld [vmem:[#allocation2 + $0x1b8] sm:$0xff]
          %v2535 = vld [vmem:[#allocation2 + $0x1c0] sm:$0xff]
          %v2536 = vld [vmem:[#allocation2 + $0x1c8] sm:$0xff]
          %v2537 = vld [vmem:[#allocation2 + $0x1d0] sm:$0xff]
          %v2538 = vld [vmem:[#allocation2 + $0x1d8] sm:$0xff]
          %v2539 = vld [vmem:[#allocation2 + $0x1e0] sm:$0xff]
          %v2540 = vld [vmem:[#allocation2 + $0x1e8] sm:$0xff]
          %v2541 = vld [vmem:[#allocation2 + $0x1f0] sm:$0xff]
          %v2542 = vld [vmem:[#allocation2 + $0x1f8] sm:$0xff]
          %v2543 = vld [vmem:[%s598] sm:$0xff]
          %v2544 = vld [vmem:[%s598 + $0x8] sm:$0xff]
          %v2545 = vld [vmem:[%s598 + $0x10] sm:$0xff]
          %v2546 = vld [vmem:[%s598 + $0x18] sm:$0xff]
          %v2547 = vld [vmem:[%s598 + $0x20] sm:$0xff]
          %v2548 = vld [vmem:[%s598 + $0x28] sm:$0xff]
          %v2549 = vld [vmem:[%s598 + $0x30] sm:$0xff]
          %v2550 = vld [vmem:[%s598 + $0x38] sm:$0xff]
          %v2551 = vld [vmem:[%s598 + $0x40] sm:$0xff]
          %v2552 = vld [vmem:[%s598 + $0x48] sm:$0xff]
          %v2553 = vld [vmem:[%s598 + $0x50] sm:$0xff]
          %v2554 = vld [vmem:[%s598 + $0x58] sm:$0xff]
          %v2555 = vld [vmem:[%s598 + $0x60] sm:$0xff]
          %v2556 = vld [vmem:[%s598 + $0x68] sm:$0xff]
          %v2557 = vld [vmem:[%s598 + $0x70] sm:$0xff]
          %v2558 = vld [vmem:[%s598 + $0x78] sm:$0xff]
          %v2559 = vld [vmem:[%s598 + $0x80] sm:$0xff]
          %v2560 = vld [vmem:[%s598 + $0x88] sm:$0xff]
          %v2561 = vld [vmem:[%s598 + $0x90] sm:$0xff]
          %v2562 = vld [vmem:[%s598 + $0x98] sm:$0xff]
          %v2563 = vld [vmem:[%s598 + $0xa0] sm:$0xff]
          %v2564 = vld [vmem:[%s598 + $0xa8] sm:$0xff]
          %v2565 = vld [vmem:[%s598 + $0xb0] sm:$0xff]
          %v2566 = vld [vmem:[%s598 + $0xb8] sm:$0xff]
          %v2567 = vld [vmem:[%s598 + $0xc0] sm:$0xff]
          %v2568 = vld [vmem:[%s598 + $0xc8] sm:$0xff]
          %v2569 = vld [vmem:[%s598 + $0xd0] sm:$0xff]
          %v2570 = vld [vmem:[%s598 + $0xd8] sm:$0xff]
          %v2571 = vld [vmem:[%s598 + $0xe0] sm:$0xff]
          %v2572 = vld [vmem:[%s598 + $0xe8] sm:$0xff]
          %v2573 = vld [vmem:[%s598 + $0xf0] sm:$0xff]
          %v2574 = vld [vmem:[%s598 + $0xf8] sm:$0xff]
          %v2575 = vld [vmem:[%s598 + $0x100] sm:$0xff]
          %v2576 = vld [vmem:[%s598 + $0x108] sm:$0xff]
          %v2577 = vld [vmem:[%s598 + $0x110] sm:$0xff]
          %v2578 = vld [vmem:[%s598 + $0x118] sm:$0xff]
          %v2579 = vld [vmem:[%s598 + $0x120] sm:$0xff]
          %v2580 = vld [vmem:[%s598 + $0x128] sm:$0xff]
          %v2581 = vld [vmem:[%s598 + $0x130] sm:$0xff]
          %v2582 = vld [vmem:[%s598 + $0x138] sm:$0xff]
          %v2583 = vld [vmem:[%s598 + $0x140] sm:$0xff]
          %v2584 = vld [vmem:[%s598 + $0x148] sm:$0xff]
          %v2585 = vld [vmem:[%s598 + $0x150] sm:$0xff]
          %v2586 = vld [vmem:[%s598 + $0x158] sm:$0xff]
          %v2587 = vld [vmem:[%s598 + $0x160] sm:$0xff]
          %v2588 = vld [vmem:[%s598 + $0x168] sm:$0xff]
          %v2589 = vld [vmem:[%s598 + $0x170] sm:$0xff]
          %v2590 = vld [vmem:[%s598 + $0x178] sm:$0xff]
          %v2591 = vld [vmem:[%s598 + $0x180] sm:$0xff]
          %v2592 = vld [vmem:[%s598 + $0x188] sm:$0xff]
          %v2593 = vld [vmem:[%s598 + $0x190] sm:$0xff]
          %v2594 = vld [vmem:[%s598 + $0x198] sm:$0xff]
          %v2595 = vld [vmem:[%s598 + $0x1a0] sm:$0xff]
          %v2596 = vld [vmem:[%s598 + $0x1a8] sm:$0xff]
          %v2597 = vld [vmem:[%s598 + $0x1b0] sm:$0xff]
          %v2598 = vld [vmem:[%s598 + $0x1b8] sm:$0xff]
          %v2599 = vld [vmem:[%s598 + $0x1c0] sm:$0xff]
          %v2600 = vld [vmem:[%s598 + $0x1c8] sm:$0xff]
          %v2601 = vld [vmem:[%s598 + $0x1d0] sm:$0xff]
          %v2602 = vld [vmem:[%s598 + $0x1d8] sm:$0xff]
          %v2603 = vld [vmem:[%s598 + $0x1e0] sm:$0xff]
          %v2604 = vld [vmem:[%s598 + $0x1e8] sm:$0xff]
          %v2605 = vld [vmem:[%s598 + $0x1f0] sm:$0xff]
          %v2606 = vld [vmem:[%s598 + $0x1f8] sm:$0xff]
          %2608 = vset.pattern.permute.xlu0 0
          %2609 = vperm.xlu0 %2608, %v2543
          %v2610 = vpop.permute.xlu0 %2609
          %2613 = vset.pattern.permute.xlu0 0
          %2614 = vperm.xlu0 %2613, %v2544
          %v2615 = vpop.permute.xlu0 %2614
          %2618 = vset.pattern.permute.xlu0 0
          %2619 = vperm.xlu0 %2618, %v2545
          %v2620 = vpop.permute.xlu0 %2619
          %2623 = vset.pattern.permute.xlu0 0
          %2624 = vperm.xlu0 %2623, %v2546
          %v2625 = vpop.permute.xlu0 %2624
          %2628 = vset.pattern.permute.xlu0 0
          %2629 = vperm.xlu0 %2628, %v2547
          %v2630 = vpop.permute.xlu0 %2629
          %2633 = vset.pattern.permute.xlu0 0
          %2634 = vperm.xlu0 %2633, %v2548
          %v2635 = vpop.permute.xlu0 %2634
          %2638 = vset.pattern.permute.xlu0 0
          %2639 = vperm.xlu0 %2638, %v2549
          %v2640 = vpop.permute.xlu0 %2639
          %2643 = vset.pattern.permute.xlu0 0
          %2644 = vperm.xlu0 %2643, %v2550
          %v2645 = vpop.permute.xlu0 %2644
          %2648 = vset.pattern.permute.xlu0 0
          %2649 = vperm.xlu0 %2648, %v2551
          %v2650 = vpop.permute.xlu0 %2649
          %2653 = vset.pattern.permute.xlu0 0
          %2654 = vperm.xlu0 %2653, %v2552
          %v2655 = vpop.permute.xlu0 %2654
          %2658 = vset.pattern.permute.xlu0 0
          %2659 = vperm.xlu0 %2658, %v2553
          %v2660 = vpop.permute.xlu0 %2659
          %2663 = vset.pattern.permute.xlu0 0
          %2664 = vperm.xlu0 %2663, %v2554
          %v2665 = vpop.permute.xlu0 %2664
          %2668 = vset.pattern.permute.xlu0 0
          %2669 = vperm.xlu0 %2668, %v2555
          %v2670 = vpop.permute.xlu0 %2669
          %2673 = vset.pattern.permute.xlu0 0
          %2674 = vperm.xlu0 %2673, %v2556
          %v2675 = vpop.permute.xlu0 %2674
          %2678 = vset.pattern.permute.xlu0 0
          %2679 = vperm.xlu0 %2678, %v2557
          %v2680 = vpop.permute.xlu0 %2679
          %2683 = vset.pattern.permute.xlu0 0
          %2684 = vperm.xlu0 %2683, %v2558
          %v2685 = vpop.permute.xlu0 %2684
          %2688 = vset.pattern.permute.xlu0 0
          %2689 = vperm.xlu0 %2688, %v2559
          %v2690 = vpop.permute.xlu0 %2689
          %2693 = vset.pattern.permute.xlu0 0
          %2694 = vperm.xlu0 %2693, %v2560
          %v2695 = vpop.permute.xlu0 %2694
          %2698 = vset.pattern.permute.xlu0 0
          %2699 = vperm.xlu0 %2698, %v2561
          %v2700 = vpop.permute.xlu0 %2699
          %2703 = vset.pattern.permute.xlu0 0
          %2704 = vperm.xlu0 %2703, %v2562
          %v2705 = vpop.permute.xlu0 %2704
          %2708 = vset.pattern.permute.xlu0 0
          %2709 = vperm.xlu0 %2708, %v2563
          %v2710 = vpop.permute.xlu0 %2709
          %2713 = vset.pattern.permute.xlu0 0
          %2714 = vperm.xlu0 %2713, %v2564
          %v2715 = vpop.permute.xlu0 %2714
          %2718 = vset.pattern.permute.xlu0 0
          %2719 = vperm.xlu0 %2718, %v2565
          %v2720 = vpop.permute.xlu0 %2719
          %2723 = vset.pattern.permute.xlu0 0
          %2724 = vperm.xlu0 %2723, %v2566
          %v2725 = vpop.permute.xlu0 %2724
          %2728 = vset.pattern.permute.xlu0 0
          %2729 = vperm.xlu0 %2728, %v2567
          %v2730 = vpop.permute.xlu0 %2729
          %2733 = vset.pattern.permute.xlu0 0
          %2734 = vperm.xlu0 %2733, %v2568
          %v2735 = vpop.permute.xlu0 %2734
          %2738 = vset.pattern.permute.xlu0 0
          %2739 = vperm.xlu0 %2738, %v2569
          %v2740 = vpop.permute.xlu0 %2739
          %2743 = vset.pattern.permute.xlu0 0
          %2744 = vperm.xlu0 %2743, %v2570
          %v2745 = vpop.permute.xlu0 %2744
          %2748 = vset.pattern.permute.xlu0 0
          %2749 = vperm.xlu0 %2748, %v2571
          %v2750 = vpop.permute.xlu0 %2749
          %2753 = vset.pattern.permute.xlu0 0
          %2754 = vperm.xlu0 %2753, %v2572
          %v2755 = vpop.permute.xlu0 %2754
          %2758 = vset.pattern.permute.xlu0 0
          %2759 = vperm.xlu0 %2758, %v2573
          %v2760 = vpop.permute.xlu0 %2759
          %2763 = vset.pattern.permute.xlu0 0
          %2764 = vperm.xlu0 %2763, %v2574
          %v2765 = vpop.permute.xlu0 %2764
          %2768 = vset.pattern.permute.xlu0 0
          %2769 = vperm.xlu0 %2768, %v2575
          %v2770 = vpop.permute.xlu0 %2769
          %2773 = vset.pattern.permute.xlu0 0
          %2774 = vperm.xlu0 %2773, %v2576
          %v2775 = vpop.permute.xlu0 %2774
          %2778 = vset.pattern.permute.xlu0 0
          %2779 = vperm.xlu0 %2778, %v2577
          %v2780 = vpop.permute.xlu0 %2779
          %2783 = vset.pattern.permute.xlu0 0
          %2784 = vperm.xlu0 %2783, %v2578
          %v2785 = vpop.permute.xlu0 %2784
          %2788 = vset.pattern.permute.xlu0 0
          %2789 = vperm.xlu0 %2788, %v2579
          %v2790 = vpop.permute.xlu0 %2789
          %2793 = vset.pattern.permute.xlu0 0
          %2794 = vperm.xlu0 %2793, %v2580
          %v2795 = vpop.permute.xlu0 %2794
          %2798 = vset.pattern.permute.xlu0 0
          %2799 = vperm.xlu0 %2798, %v2581
          %v2800 = vpop.permute.xlu0 %2799
          %2803 = vset.pattern.permute.xlu0 0
          %2804 = vperm.xlu0 %2803, %v2582
          %v2805 = vpop.permute.xlu0 %2804
          %2808 = vset.pattern.permute.xlu0 0
          %2809 = vperm.xlu0 %2808, %v2583
          %v2810 = vpop.permute.xlu0 %2809
          %2813 = vset.pattern.permute.xlu0 0
          %2814 = vperm.xlu0 %2813, %v2584
          %v2815 = vpop.permute.xlu0 %2814
          %2818 = vset.pattern.permute.xlu0 0
          %2819 = vperm.xlu0 %2818, %v2585
          %v2820 = vpop.permute.xlu0 %2819
          %2823 = vset.pattern.permute.xlu0 0
          %2824 = vperm.xlu0 %2823, %v2586
          %v2825 = vpop.permute.xlu0 %2824
          %2828 = vset.pattern.permute.xlu0 0
          %2829 = vperm.xlu0 %2828, %v2587
          %v2830 = vpop.permute.xlu0 %2829
          %2833 = vset.pattern.permute.xlu0 0
          %2834 = vperm.xlu0 %2833, %v2588
          %v2835 = vpop.permute.xlu0 %2834
          %2838 = vset.pattern.permute.xlu0 0
          %2839 = vperm.xlu0 %2838, %v2589
          %v2840 = vpop.permute.xlu0 %2839
          %2843 = vset.pattern.permute.xlu0 0
          %2844 = vperm.xlu0 %2843, %v2590
          %v2845 = vpop.permute.xlu0 %2844
          %2848 = vset.pattern.permute.xlu0 0
          %2849 = vperm.xlu0 %2848, %v2591
          %v2850 = vpop.permute.xlu0 %2849
          %2853 = vset.pattern.permute.xlu0 0
          %2854 = vperm.xlu0 %2853, %v2592
          %v2855 = vpop.permute.xlu0 %2854
          %2858 = vset.pattern.permute.xlu0 0
          %2859 = vperm.xlu0 %2858, %v2593
          %v2860 = vpop.permute.xlu0 %2859
          %2863 = vset.pattern.permute.xlu0 0
          %2864 = vperm.xlu0 %2863, %v2594
          %v2865 = vpop.permute.xlu0 %2864
          %2868 = vset.pattern.permute.xlu0 0
          %2869 = vperm.xlu0 %2868, %v2595
          %v2870 = vpop.permute.xlu0 %2869
          %2873 = vset.pattern.permute.xlu0 0
          %2874 = vperm.xlu0 %2873, %v2596
          %v2875 = vpop.permute.xlu0 %2874
          %2878 = vset.pattern.permute.xlu0 0
          %2879 = vperm.xlu0 %2878, %v2597
          %v2880 = vpop.permute.xlu0 %2879
          %2883 = vset.pattern.permute.xlu0 0
          %2884 = vperm.xlu0 %2883, %v2598
          %v2885 = vpop.permute.xlu0 %2884
          %2888 = vset.pattern.permute.xlu0 0
          %2889 = vperm.xlu0 %2888, %v2599
          %v2890 = vpop.permute.xlu0 %2889
          %2893 = vset.pattern.permute.xlu0 0
          %2894 = vperm.xlu0 %2893, %v2600
          %v2895 = vpop.permute.xlu0 %2894
          %2898 = vset.pattern.permute.xlu0 0
          %2899 = vperm.xlu0 %2898, %v2601
          %v2900 = vpop.permute.xlu0 %2899
          %2903 = vset.pattern.permute.xlu0 0
          %2904 = vperm.xlu0 %2903, %v2602
          %v2905 = vpop.permute.xlu0 %2904
          %2908 = vset.pattern.permute.xlu0 0
          %2909 = vperm.xlu0 %2908, %v2603
          %v2910 = vpop.permute.xlu0 %2909
          %2913 = vset.pattern.permute.xlu0 0
          %2914 = vperm.xlu0 %2913, %v2604
          %v2915 = vpop.permute.xlu0 %2914
          %2918 = vset.pattern.permute.xlu0 0
          %2919 = vperm.xlu0 %2918, %v2605
          %v2920 = vpop.permute.xlu0 %2919
          %2923 = vset.pattern.permute.xlu0 0
          %2924 = vperm.xlu0 %2923, %v2606
          %v2925 = vpop.permute.xlu0 %2924
          %v2927 = vmul.f32 %v2479, %v2610
          %v2928 = vmul.f32 %v2480, %v2615
          %v2929 = vmul.f32 %v2481, %v2620
          %v2930 = vmul.f32 %v2482, %v2625
          %v2931 = vmul.f32 %v2483, %v2630
          %v2932 = vmul.f32 %v2484, %v2635
          %v2933 = vmul.f32 %v2485, %v2640
          %v2934 = vmul.f32 %v2486, %v2645
          %v2935 = vmul.f32 %v2487, %v2650
          %v2936 = vmul.f32 %v2488, %v2655
          %v2937 = vmul.f32 %v2489, %v2660
          %v2938 = vmul.f32 %v2490, %v2665
          %v2939 = vmul.f32 %v2491, %v2670
          %v2940 = vmul.f32 %v2492, %v2675
          %v2941 = vmul.f32 %v2493, %v2680
          %v2942 = vmul.f32 %v2494, %v2685
          %v2943 = vmul.f32 %v2495, %v2690
          %v2944 = vmul.f32 %v2496, %v2695
          %v2945 = vmul.f32 %v2497, %v2700
          %v2946 = vmul.f32 %v2498, %v2705
          %v2947 = vmul.f32 %v2499, %v2710
          %v2948 = vmul.f32 %v2500, %v2715
          %v2949 = vmul.f32 %v2501, %v2720
          %v2950 = vmul.f32 %v2502, %v2725
          %v2951 = vmul.f32 %v2503, %v2730
          %v2952 = vmul.f32 %v2504, %v2735
          %v2953 = vmul.f32 %v2505, %v2740
          %v2954 = vmul.f32 %v2506, %v2745
          %v2955 = vmul.f32 %v2507, %v2750
          %v2956 = vmul.f32 %v2508, %v2755
          %v2957 = vmul.f32 %v2509, %v2760
          %v2958 = vmul.f32 %v2510, %v2765
          %v2959 = vmul.f32 %v2511, %v2770
          %v2960 = vmul.f32 %v2512, %v2775
          %v2961 = vmul.f32 %v2513, %v2780
          %v2962 = vmul.f32 %v2514, %v2785
          %v2963 = vmul.f32 %v2515, %v2790
          %v2964 = vmul.f32 %v2516, %v2795
          %v2965 = vmul.f32 %v2517, %v2800
          %v2966 = vmul.f32 %v2518, %v2805
          %v2967 = vmul.f32 %v2519, %v2810
          %v2968 = vmul.f32 %v2520, %v2815
          %v2969 = vmul.f32 %v2521, %v2820
          %v2970 = vmul.f32 %v2522, %v2825
          %v2971 = vmul.f32 %v2523, %v2830
          %v2972 = vmul.f32 %v2524, %v2835
          %v2973 = vmul.f32 %v2525, %v2840
          %v2974 = vmul.f32 %v2526, %v2845
          %v2975 = vmul.f32 %v2527, %v2850
          %v2976 = vmul.f32 %v2528, %v2855
          %v2977 = vmul.f32 %v2529, %v2860
          %v2978 = vmul.f32 %v2530, %v2865
          %v2979 = vmul.f32 %v2531, %v2870
          %v2980 = vmul.f32 %v2532, %v2875
          %v2981 = vmul.f32 %v2533, %v2880
          %v2982 = vmul.f32 %v2534, %v2885
          %v2983 = vmul.f32 %v2535, %v2890
          %v2984 = vmul.f32 %v2536, %v2895
          %v2985 = vmul.f32 %v2537, %v2900
          %v2986 = vmul.f32 %v2538, %v2905
          %v2987 = vmul.f32 %v2539, %v2910
          %v2988 = vmul.f32 %v2540, %v2915
          %v2989 = vmul.f32 %v2541, %v2920
          %v2990 = vmul.f32 %v2542, %v2925
          %v2991 = vld [vmem:[%s604] sm:$0xff]
          %v2992 = vld [vmem:[%s604 + $0x8] sm:$0xff]
          %v2993 = vld [vmem:[%s604 + $0x10] sm:$0xff]
          %v2994 = vld [vmem:[%s604 + $0x18] sm:$0xff]
          %v2995 = vld [vmem:[%s604 + $0x20] sm:$0xff]
          %v2996 = vld [vmem:[%s604 + $0x28] sm:$0xff]
          %v2997 = vld [vmem:[%s604 + $0x30] sm:$0xff]
          %v2998 = vld [vmem:[%s604 + $0x38] sm:$0xff]
          %v2999 = vld [vmem:[%s604 + $0x40] sm:$0xff]
          %v3000 = vld [vmem:[%s604 + $0x48] sm:$0xff]
          %v3001 = vld [vmem:[%s604 + $0x50] sm:$0xff]
          %v3002 = vld [vmem:[%s604 + $0x58] sm:$0xff]
          %v3003 = vld [vmem:[%s604 + $0x60] sm:$0xff]
          %v3004 = vld [vmem:[%s604 + $0x68] sm:$0xff]
          %v3005 = vld [vmem:[%s604 + $0x70] sm:$0xff]
          %v3006 = vld [vmem:[%s604 + $0x78] sm:$0xff]
          %v3007 = vld [vmem:[%s604 + $0x80] sm:$0xff]
          %v3008 = vld [vmem:[%s604 + $0x88] sm:$0xff]
          %v3009 = vld [vmem:[%s604 + $0x90] sm:$0xff]
          %v3010 = vld [vmem:[%s604 + $0x98] sm:$0xff]
          %v3011 = vld [vmem:[%s604 + $0xa0] sm:$0xff]
          %v3012 = vld [vmem:[%s604 + $0xa8] sm:$0xff]
          %v3013 = vld [vmem:[%s604 + $0xb0] sm:$0xff]
          %v3014 = vld [vmem:[%s604 + $0xb8] sm:$0xff]
          %v3015 = vld [vmem:[%s604 + $0xc0] sm:$0xff]
          %v3016 = vld [vmem:[%s604 + $0xc8] sm:$0xff]
          %v3017 = vld [vmem:[%s604 + $0xd0] sm:$0xff]
          %v3018 = vld [vmem:[%s604 + $0xd8] sm:$0xff]
          %v3019 = vld [vmem:[%s604 + $0xe0] sm:$0xff]
          %v3020 = vld [vmem:[%s604 + $0xe8] sm:$0xff]
          %v3021 = vld [vmem:[%s604 + $0xf0] sm:$0xff]
          %v3022 = vld [vmem:[%s604 + $0xf8] sm:$0xff]
          %v3023 = vld [vmem:[%s604 + $0x100] sm:$0xff]
          %v3024 = vld [vmem:[%s604 + $0x108] sm:$0xff]
          %v3025 = vld [vmem:[%s604 + $0x110] sm:$0xff]
          %v3026 = vld [vmem:[%s604 + $0x118] sm:$0xff]
          %v3027 = vld [vmem:[%s604 + $0x120] sm:$0xff]
          %v3028 = vld [vmem:[%s604 + $0x128] sm:$0xff]
          %v3029 = vld [vmem:[%s604 + $0x130] sm:$0xff]
          %v3030 = vld [vmem:[%s604 + $0x138] sm:$0xff]
          %v3031 = vld [vmem:[%s604 + $0x140] sm:$0xff]
          %v3032 = vld [vmem:[%s604 + $0x148] sm:$0xff]
          %v3033 = vld [vmem:[%s604 + $0x150] sm:$0xff]
          %v3034 = vld [vmem:[%s604 + $0x158] sm:$0xff]
          %v3035 = vld [vmem:[%s604 + $0x160] sm:$0xff]
          %v3036 = vld [vmem:[%s604 + $0x168] sm:$0xff]
          %v3037 = vld [vmem:[%s604 + $0x170] sm:$0xff]
          %v3038 = vld [vmem:[%s604 + $0x178] sm:$0xff]
          %v3039 = vld [vmem:[%s604 + $0x180] sm:$0xff]
          %v3040 = vld [vmem:[%s604 + $0x188] sm:$0xff]
          %v3041 = vld [vmem:[%s604 + $0x190] sm:$0xff]
          %v3042 = vld [vmem:[%s604 + $0x198] sm:$0xff]
          %v3043 = vld [vmem:[%s604 + $0x1a0] sm:$0xff]
          %v3044 = vld [vmem:[%s604 + $0x1a8] sm:$0xff]
          %v3045 = vld [vmem:[%s604 + $0x1b0] sm:$0xff]
          %v3046 = vld [vmem:[%s604 + $0x1b8] sm:$0xff]
          %v3047 = vld [vmem:[%s604 + $0x1c0] sm:$0xff]
          %v3048 = vld [vmem:[%s604 + $0x1c8] sm:$0xff]
          %v3049 = vld [vmem:[%s604 + $0x1d0] sm:$0xff]
          %v3050 = vld [vmem:[%s604 + $0x1d8] sm:$0xff]
          %v3051 = vld [vmem:[%s604 + $0x1e0] sm:$0xff]
          %v3052 = vld [vmem:[%s604 + $0x1e8] sm:$0xff]
          %v3053 = vld [vmem:[%s604 + $0x1f0] sm:$0xff]
          %v3054 = vld [vmem:[%s604 + $0x1f8] sm:$0xff]
          %v3055 = vadd.f32 %v2927, %v2991
          %v3056 = vadd.f32 %v2928, %v2992
          %v3057 = vadd.f32 %v2929, %v2993
          %v3058 = vadd.f32 %v2930, %v2994
          %v3059 = vadd.f32 %v2931, %v2995
          %v3060 = vadd.f32 %v2932, %v2996
          %v3061 = vadd.f32 %v2933, %v2997
          %v3062 = vadd.f32 %v2934, %v2998
          %v3063 = vadd.f32 %v2935, %v2999
          %v3064 = vadd.f32 %v2936, %v3000
          %v3065 = vadd.f32 %v2937, %v3001
          %v3066 = vadd.f32 %v2938, %v3002
          %v3067 = vadd.f32 %v2939, %v3003
          %v3068 = vadd.f32 %v2940, %v3004
          %v3069 = vadd.f32 %v2941, %v3005
          %v3070 = vadd.f32 %v2942, %v3006
          %v3071 = vadd.f32 %v2943, %v3007
          %v3072 = vadd.f32 %v2944, %v3008
          %v3073 = vadd.f32 %v2945, %v3009
          %v3074 = vadd.f32 %v2946, %v3010
          %v3075 = vadd.f32 %v2947, %v3011
          %v3076 = vadd.f32 %v2948, %v3012
          %v3077 = vadd.f32 %v2949, %v3013
          %v3078 = vadd.f32 %v2950, %v3014
          %v3079 = vadd.f32 %v2951, %v3015
          %v3080 = vadd.f32 %v2952, %v3016
          %v3081 = vadd.f32 %v2953, %v3017
          %v3082 = vadd.f32 %v2954, %v3018
          %v3083 = vadd.f32 %v2955, %v3019
          %v3084 = vadd.f32 %v2956, %v3020
          %v3085 = vadd.f32 %v2957, %v3021
          %v3086 = vadd.f32 %v2958, %v3022
          %v3087 = vadd.f32 %v2959, %v3023
          %v3088 = vadd.f32 %v2960, %v3024
          %v3089 = vadd.f32 %v2961, %v3025
          %v3090 = vadd.f32 %v2962, %v3026
          %v3091 = vadd.f32 %v2963, %v3027
          %v3092 = vadd.f32 %v2964, %v3028
          %v3093 = vadd.f32 %v2965, %v3029
          %v3094 = vadd.f32 %v2966, %v3030
          %v3095 = vadd.f32 %v2967, %v3031
          %v3096 = vadd.f32 %v2968, %v3032
          %v3097 = vadd.f32 %v2969, %v3033
          %v3098 = vadd.f32 %v2970, %v3034
          %v3099 = vadd.f32 %v2971, %v3035
          %v3100 = vadd.f32 %v2972, %v3036
          %v3101 = vadd.f32 %v2973, %v3037
          %v3102 = vadd.f32 %v2974, %v3038
          %v3103 = vadd.f32 %v2975, %v3039
          %v3104 = vadd.f32 %v2976, %v3040
          %v3105 = vadd.f32 %v2977, %v3041
          %v3106 = vadd.f32 %v2978, %v3042
          %v3107 = vadd.f32 %v2979, %v3043
          %v3108 = vadd.f32 %v2980, %v3044
          %v3109 = vadd.f32 %v2981, %v3045
          %v3110 = vadd.f32 %v2982, %v3046
          %v3111 = vadd.f32 %v2983, %v3047
          %v3112 = vadd.f32 %v2984, %v3048
          %v3113 = vadd.f32 %v2985, %v3049
          %v3114 = vadd.f32 %v2986, %v3050
          %v3115 = vadd.f32 %v2987, %v3051
          %v3116 = vadd.f32 %v2988, %v3052
          %v3117 = vadd.f32 %v2989, %v3053
          %v3118 = vadd.f32 %v2990, %v3054
          %v3119 = vld [vmem:[%s4] sm:$0xff]
          %v3120 = vld [vmem:[%s4 + $0x8] sm:$0xff]
          %v3121 = vld [vmem:[%s4 + $0x10] sm:$0xff]
          %v3122 = vld [vmem:[%s4 + $0x18] sm:$0xff]
          %v3123 = vld [vmem:[%s4 + $0x20] sm:$0xff]
          %v3124 = vld [vmem:[%s4 + $0x28] sm:$0xff]
          %v3125 = vld [vmem:[%s4 + $0x30] sm:$0xff]
          %v3126 = vld [vmem:[%s4 + $0x38] sm:$0xff]
          %v3127 = vld [vmem:[%s4 + $0x40] sm:$0xff]
          %v3128 = vld [vmem:[%s4 + $0x48] sm:$0xff]
          %v3129 = vld [vmem:[%s4 + $0x50] sm:$0xff]
          %v3130 = vld [vmem:[%s4 + $0x58] sm:$0xff]
          %v3131 = vld [vmem:[%s4 + $0x60] sm:$0xff]
          %v3132 = vld [vmem:[%s4 + $0x68] sm:$0xff]
          %v3133 = vld [vmem:[%s4 + $0x70] sm:$0xff]
          %v3134 = vld [vmem:[%s4 + $0x78] sm:$0xff]
          %v3135 = vld [vmem:[%s5] sm:$0x1]
          %v3137 = vlaneseq
          %v3138 = vshrl.u32 %v3137, 7
          %v3139 = vsub.s32 0, %v3138
          %v3140 = vrot.slane %v3135, %v3139
          %3142 = vmatprep.subr.mxu0 0.0
          %3143 = vmatpush1.msra.mxu0 %v3119
          %3144 = vmatprep.subr.mxu0 0.0
          %3145 = vmatpush1.msra.mxu0 %v3120
          %3146 = vmatprep.subr.mxu0 0.0
          %3147 = vmatpush1.msra.mxu0 %v3121
          %3148 = vmatprep.subr.mxu0 0.0
          %3149 = vmatpush1.msra.mxu0 %v3122
          %3150 = vmatprep.subr.mxu0 0.0
          %3151 = vmatpush1.msra.mxu0 %v3123
          %3152 = vmatprep.subr.mxu0 0.0
          %3153 = vmatpush1.msra.mxu0 %v3124
          %3154 = vmatprep.subr.mxu0 0.0
          %3155 = vmatpush1.msra.mxu0 %v3125
          %3156 = vmatprep.subr.mxu0 0.0
          %3157 = vmatpush1.msra.mxu0 %v3126
          %3158 = vmatprep.subr.mxu0 0.0
          %3159 = vmatpush1.msra.mxu0 %v3127
          %3160 = vmatprep.subr.mxu0 0.0
          %3161 = vmatpush1.msra.mxu0 %v3128
          %3162 = vmatprep.subr.mxu0 0.0
          %3163 = vmatpush1.msra.mxu0 %v3129
          %3164 = vmatprep.subr.mxu0 0.0
          %3165 = vmatpush1.msra.mxu0 %v3130
          %3166 = vmatprep.subr.mxu0 0.0
          %3167 = vmatpush1.msra.mxu0 %v3131
          %3168 = vmatprep.subr.mxu0 0.0
          %3169 = vmatpush1.msra.mxu0 %v3132
          %3170 = vmatprep.subr.mxu0 0.0
          %3171 = vmatpush1.msra.mxu0 %v3133
          %3172 = vmatprep.subr.mxu0 0.0
          %3173 = vmatpush1.msra.mxu0 %v3134
          %3174 = vmatprep.subr.mxu0 0.0
          %3175 = vmatpush1.msra.mxu0 0.0
          %3176 = vmatprep.subr.mxu0 0.0
          %3177 = vmatpush1.msra.mxu0 0.0
          %3178 = vmatprep.subr.mxu0 0.0
          %3179 = vmatpush1.msra.mxu0 0.0
          %3180 = vmatprep.subr.mxu0 0.0
          %3181 = vmatpush1.msra.mxu0 0.0
          %3182 = vmatprep.subr.mxu0 0.0
          %3183 = vmatpush1.msra.mxu0 0.0
          %3184 = vmatprep.subr.mxu0 0.0
          %3185 = vmatpush1.msra.mxu0 0.0
          %3186 = vmatprep.subr.mxu0 0.0
          %3187 = vmatpush1.msra.mxu0 0.0
          %3188 = vmatprep.subr.mxu0 0.0
          %3189 = vmatpush1.msra.mxu0 0.0
          %3190 = vmatprep.subr.mxu0 0.0
          %3191 = vmatpush1.msra.mxu0 0.0
          %3192 = vmatprep.subr.mxu0 0.0
          %3193 = vmatpush1.msra.mxu0 0.0
          %3194 = vmatprep.subr.mxu0 0.0
          %3195 = vmatpush1.msra.mxu0 0.0
          %3196 = vmatprep.subr.mxu0 0.0
          %3197 = vmatpush1.msra.mxu0 0.0
          %3198 = vmatprep.subr.mxu0 0.0
          %3199 = vmatpush1.msra.mxu0 0.0
          %3200 = vmatprep.subr.mxu0 0.0
          %3201 = vmatpush1.msra.mxu0 0.0
          %3202 = vmatprep.subr.mxu0 0.0
          %3203 = vmatpush1.msra.mxu0 0.0
          %3204 = vmatprep.subr.mxu0 0.0
          %3205 = vmatpush1.msra.mxu0 0.0
          %3206 = vmatprep.mubr.f32.mxu0 0.0
          %3207 = vmatmul.mubr.f32.gmra.mrb[0].mxu0 %v3055
          %v3208 = vpop.f32.mrb[0].mxu0
          %v3209 = vadd.f32 %v3140, %v3208
          %v3210 = vpop.f32.mrb[0].mxu0
          %3211 = vmatprep.mubr.f32.mxu0 0.0
          %3212 = vmatmul.mubr.f32.gmra.mrb[0].mxu0 %v3056
          %v3213 = vpop.f32.mrb[0].mxu0
          %v3214 = vadd.f32 %v3140, %v3213
          %v3215 = vpop.f32.mrb[0].mxu0
          %3216 = vmatprep.mubr.f32.mxu0 0.0
          %3217 = vmatmul.mubr.f32.gmra.mrb[0].mxu0 %v3057
          %v3218 = vpop.f32.mrb[0].mxu0
          %v3219 = vadd.f32 %v3140, %v3218
          %v3220 = vpop.f32.mrb[0].mxu0
          %3221 = vmatprep.mubr.f32.mxu0 0.0
          %3222 = vmatmul.mubr.f32.gmra.mrb[0].mxu0 %v3058
          %v3223 = vpop.f32.mrb[0].mxu0
          %v3224 = vadd.f32 %v3140, %v3223
          %v3225 = vpop.f32.mrb[0].mxu0
          %3226 = vmatprep.mubr.f32.mxu0 0.0
          %3227 = vmatmul.mubr.f32.gmra.mrb[0].mxu0 %v3059
          %v3228 = vpop.f32.mrb[0].mxu0
          %v3229 = vadd.f32 %v3140, %v3228
          %v3230 = vpop.f32.mrb[0].mxu0
          %3231 = vmatprep.mubr.f32.mxu0 0.0
          %3232 = vmatmul.mubr.f32.gmra.mrb[0].mxu0 %v3060
          %v3233 = vpop.f32.mrb[0].mxu0
          %v3234 = vadd.f32 %v3140, %v3233
          %v3235 = vpop.f32.mrb[0].mxu0
          %3236 = vmatprep.mubr.f32.mxu0 0.0
          %3237 = vmatmul.mubr.f32.gmra.mrb[0].mxu0 %v3061
          %v3238 = vpop.f32.mrb[0].mxu0
          %v3239 = vadd.f32 %v3140, %v3238
          %v3240 = vpop.f32.mrb[0].mxu0
          %3241 = vmatprep.mubr.f32.mxu0 0.0
          %3242 = vmatmul.mubr.f32.gmra.mrb[0].mxu0 %v3062
          %v3243 = vpop.f32.mrb[0].mxu0
          %v3244 = vadd.f32 %v3140, %v3243
          %v3245 = vpop.f32.mrb[0].mxu0
          %3246 = vmatprep.mubr.f32.mxu0 0.0
          %3247 = vmatmul.mubr.f32.gmra.mrb[0].mxu0 %v3063
          %v3248 = vpop.f32.mrb[0].mxu0
          %v3249 = vadd.f32 %v3140, %v3248
          %v3250 = vpop.f32.mrb[0].mxu0
          %3251 = vmatprep.mubr.f32.mxu0 0.0
          %3252 = vmatmul.mubr.f32.gmra.mrb[0].mxu0 %v3064
          %v3253 = vpop.f32.mrb[0].mxu0
          %v3254 = vadd.f32 %v3140, %v3253
          %v3255 = vpop.f32.mrb[0].mxu0
          %3256 = vmatprep.mubr.f32.mxu0 0.0
          %3257 = vmatmul.mubr.f32.gmra.mrb[0].mxu0 %v3065
          %v3258 = vpop.f32.mrb[0].mxu0
          %v3259 = vadd.f32 %v3140, %v3258
          %v3260 = vpop.f32.mrb[0].mxu0
          %3261 = vmatprep.mubr.f32.mxu0 0.0
          %3262 = vmatmul.mubr.f32.gmra.mrb[0].mxu0 %v3066
          %v3263 = vpop.f32.mrb[0].mxu0
          %v3264 = vadd.f32 %v3140, %v3263
          %v3265 = vpop.f32.mrb[0].mxu0
          %3266 = vmatprep.mubr.f32.mxu0 0.0
          %3267 = vmatmul.mubr.f32.gmra.mrb[0].mxu0 %v3067
          %v3268 = vpop.f32.mrb[0].mxu0
          %v3269 = vadd.f32 %v3140, %v3268
          %v3270 = vpop.f32.mrb[0].mxu0
          %3271 = vmatprep.mubr.f32.mxu0 0.0
          %3272 = vmatmul.mubr.f32.gmra.mrb[0].mxu0 %v3068
          %v3273 = vpop.f32.mrb[0].mxu0
          %v3274 = vadd.f32 %v3140, %v3273
          %v3275 = vpop.f32.mrb[0].mxu0
          %3276 = vmatprep.mubr.f32.mxu0 0.0
          %3277 = vmatmul.mubr.f32.gmra.mrb[0].mxu0 %v3069
          %v3278 = vpop.f32.mrb[0].mxu0
          %v3279 = vadd.f32 %v3140, %v3278
          %v3280 = vpop.f32.mrb[0].mxu0
          %3281 = vmatprep.mubr.f32.mxu0 0.0
          %3282 = vmatmul.mubr.f32.gmra.mrb[0].mxu0 %v3070
          %v3283 = vpop.f32.mrb[0].mxu0
          %v3284 = vadd.f32 %v3140, %v3283
          %v3285 = vpop.f32.mrb[0].mxu0
          %3286 = vmatprep.mubr.f32.mxu0 0.0
          %3287 = vmatmul.mubr.f32.gmra.mrb[0].mxu0 %v3071
          %v3288 = vpop.f32.mrb[0].mxu0
          %v3289 = vadd.f32 %v3140, %v3288
          %v3290 = vpop.f32.mrb[0].mxu0
          %3291 = vmatprep.mubr.f32.mxu0 0.0
          %3292 = vmatmul.mubr.f32.gmra.mrb[0].mxu0 %v3072
          %v3293 = vpop.f32.mrb[0].mxu0
          %v3294 = vadd.f32 %v3140, %v3293
          %v3295 = vpop.f32.mrb[0].mxu0
          %3296 = vmatprep.mubr.f32.mxu0 0.0
          %3297 = vmatmul.mubr.f32.gmra.mrb[0].mxu0 %v3073
          %v3298 = vpop.f32.mrb[0].mxu0
          %v3299 = vadd.f32 %v3140, %v3298
          %v3300 = vpop.f32.mrb[0].mxu0
          %3301 = vmatprep.mubr.f32.mxu0 0.0
          %3302 = vmatmul.mubr.f32.gmra.mrb[0].mxu0 %v3074
          %v3303 = vpop.f32.mrb[0].mxu0
          %v3304 = vadd.f32 %v3140, %v3303
          %v3305 = vpop.f32.mrb[0].mxu0
          %3306 = vmatprep.mubr.f32.mxu0 0.0
          %3307 = vmatmul.mubr.f32.gmra.mrb[0].mxu0 %v3075
          %v3308 = vpop.f32.mrb[0].mxu0
          %v3309 = vadd.f32 %v3140, %v3308
          %v3310 = vpop.f32.mrb[0].mxu0
          %3311 = vmatprep.mubr.f32.mxu0 0.0
          %3312 = vmatmul.mubr.f32.gmra.mrb[0].mxu0 %v3076
          %v3313 = vpop.f32.mrb[0].mxu0
          %v3314 = vadd.f32 %v3140, %v3313
          %v3315 = vpop.f32.mrb[0].mxu0
          %3316 = vmatprep.mubr.f32.mxu0 0.0
          %3317 = vmatmul.mubr.f32.gmra.mrb[0].mxu0 %v3077
          %v3318 = vpop.f32.mrb[0].mxu0
          %v3319 = vadd.f32 %v3140, %v3318
          %v3320 = vpop.f32.mrb[0].mxu0
          %3321 = vmatprep.mubr.f32.mxu0 0.0
          %3322 = vmatmul.mubr.f32.gmra.mrb[0].mxu0 %v3078
          %v3323 = vpop.f32.mrb[0].mxu0
          %v3324 = vadd.f32 %v3140, %v3323
          %v3325 = vpop.f32.mrb[0].mxu0
          %3326 = vmatprep.mubr.f32.mxu0 0.0
          %3327 = vmatmul.mubr.f32.gmra.mrb[0].mxu0 %v3079
          %v3328 = vpop.f32.mrb[0].mxu0
          %v3329 = vadd.f32 %v3140, %v3328
          %v3330 = vpop.f32.mrb[0].mxu0
          %3331 = vmatprep.mubr.f32.mxu0 0.0
          %3332 = vmatmul.mubr.f32.gmra.mrb[0].mxu0 %v3080
          %v3333 = vpop.f32.mrb[0].mxu0
          %v3334 = vadd.f32 %v3140, %v3333
          %v3335 = vpop.f32.mrb[0].mxu0
          %3336 = vmatprep.mubr.f32.mxu0 0.0
          %3337 = vmatmul.mubr.f32.gmra.mrb[0].mxu0 %v3081
          %v3338 = vpop.f32.mrb[0].mxu0
          %v3339 = vadd.f32 %v3140, %v3338
          %v3340 = vpop.f32.mrb[0].mxu0
          %3341 = vmatprep.mubr.f32.mxu0 0.0
          %3342 = vmatmul.mubr.f32.gmra.mrb[0].mxu0 %v3082
          %v3343 = vpop.f32.mrb[0].mxu0
          %v3344 = vadd.f32 %v3140, %v3343
          %v3345 = vpop.f32.mrb[0].mxu0
          %3346 = vmatprep.mubr.f32.mxu0 0.0
          %3347 = vmatmul.mubr.f32.gmra.mrb[0].mxu0 %v3083
          %v3348 = vpop.f32.mrb[0].mxu0
          %v3349 = vadd.f32 %v3140, %v3348
          %v3350 = vpop.f32.mrb[0].mxu0
          %3351 = vmatprep.mubr.f32.mxu0 0.0
          %3352 = vmatmul.mubr.f32.gmra.mrb[0].mxu0 %v3084
          %v3353 = vpop.f32.mrb[0].mxu0
          %v3354 = vadd.f32 %v3140, %v3353
          %v3355 = vpop.f32.mrb[0].mxu0
          %3356 = vmatprep.mubr.f32.mxu0 0.0
          %3357 = vmatmul.mubr.f32.gmra.mrb[0].mxu0 %v3085
          %v3358 = vpop.f32.mrb[0].mxu0
          %v3359 = vadd.f32 %v3140, %v3358
          %v3360 = vpop.f32.mrb[0].mxu0
          %3361 = vmatprep.mubr.f32.mxu0 0.0
          %3362 = vmatmul.mubr.f32.gmra.mrb[0].mxu0 %v3086
          %v3363 = vpop.f32.mrb[0].mxu0
          %v3364 = vadd.f32 %v3140, %v3363
          %v3365 = vpop.f32.mrb[0].mxu0
          %3366 = vmatprep.mubr.f32.mxu0 0.0
          %3367 = vmatmul.mubr.f32.gmra.mrb[0].mxu0 %v3087
          %v3368 = vpop.f32.mrb[0].mxu0
          %v3369 = vadd.f32 %v3140, %v3368
          %v3370 = vpop.f32.mrb[0].mxu0
          %3371 = vmatprep.mubr.f32.mxu0 0.0
          %3372 = vmatmul.mubr.f32.gmra.mrb[0].mxu0 %v3088
          %v3373 = vpop.f32.mrb[0].mxu0
          %v3374 = vadd.f32 %v3140, %v3373
          %v3375 = vpop.f32.mrb[0].mxu0
          %3376 = vmatprep.mubr.f32.mxu0 0.0
          %3377 = vmatmul.mubr.f32.gmra.mrb[0].mxu0 %v3089
          %v3378 = vpop.f32.mrb[0].mxu0
          %v3379 = vadd.f32 %v3140, %v3378
          %v3380 = vpop.f32.mrb[0].mxu0
          %3381 = vmatprep.mubr.f32.mxu0 0.0
          %3382 = vmatmul.mubr.f32.gmra.mrb[0].mxu0 %v3090
          %v3383 = vpop.f32.mrb[0].mxu0
          %v3384 = vadd.f32 %v3140, %v3383
          %v3385 = vpop.f32.mrb[0].mxu0
          %3386 = vmatprep.mubr.f32.mxu0 0.0
          %3387 = vmatmul.mubr.f32.gmra.mrb[0].mxu0 %v3091
          %v3388 = vpop.f32.mrb[0].mxu0
          %v3389 = vadd.f32 %v3140, %v3388
          %v3390 = vpop.f32.mrb[0].mxu0
          %3391 = vmatprep.mubr.f32.mxu0 0.0
          %3392 = vmatmul.mubr.f32.gmra.mrb[0].mxu0 %v3092
          %v3393 = vpop.f32.mrb[0].mxu0
          %v3394 = vadd.f32 %v3140, %v3393
          %v3395 = vpop.f32.mrb[0].mxu0
          %3396 = vmatprep.mubr.f32.mxu0 0.0
          %3397 = vmatmul.mubr.f32.gmra.mrb[0].mxu0 %v3093
          %v3398 = vpop.f32.mrb[0].mxu0
          %v3399 = vadd.f32 %v3140, %v3398
          %v3400 = vpop.f32.mrb[0].mxu0
          %3401 = vmatprep.mubr.f32.mxu0 0.0
          %3402 = vmatmul.mubr.f32.gmra.mrb[0].mxu0 %v3094
          %v3403 = vpop.f32.mrb[0].mxu0
          %v3404 = vadd.f32 %v3140, %v3403
          %v3405 = vpop.f32.mrb[0].mxu0
          %3406 = vmatprep.mubr.f32.mxu0 0.0
          %3407 = vmatmul.mubr.f32.gmra.mrb[0].mxu0 %v3095
          %v3408 = vpop.f32.mrb[0].mxu0
          %v3409 = vadd.f32 %v3140, %v3408
          %v3410 = vpop.f32.mrb[0].mxu0
          %3411 = vmatprep.mubr.f32.mxu0 0.0
          %3412 = vmatmul.mubr.f32.gmra.mrb[0].mxu0 %v3096
          %v3413 = vpop.f32.mrb[0].mxu0
          %v3414 = vadd.f32 %v3140, %v3413
          %v3415 = vpop.f32.mrb[0].mxu0
          %3416 = vmatprep.mubr.f32.mxu0 0.0
          %3417 = vmatmul.mubr.f32.gmra.mrb[0].mxu0 %v3097
          %v3418 = vpop.f32.mrb[0].mxu0
          %v3419 = vadd.f32 %v3140, %v3418
          %v3420 = vpop.f32.mrb[0].mxu0
          %3421 = vmatprep.mubr.f32.mxu0 0.0
          %3422 = vmatmul.mubr.f32.gmra.mrb[0].mxu0 %v3098
          %v3423 = vpop.f32.mrb[0].mxu0
          %v3424 = vadd.f32 %v3140, %v3423
          %v3425 = vpop.f32.mrb[0].mxu0
          %3426 = vmatprep.mubr.f32.mxu0 0.0
          %3427 = vmatmul.mubr.f32.gmra.mrb[0].mxu0 %v3099
          %v3428 = vpop.f32.mrb[0].mxu0
          %v3429 = vadd.f32 %v3140, %v3428
          %v3430 = vpop.f32.mrb[0].mxu0
          %3431 = vmatprep.mubr.f32.mxu0 0.0
          %3432 = vmatmul.mubr.f32.gmra.mrb[0].mxu0 %v3100
          %v3433 = vpop.f32.mrb[0].mxu0
          %v3434 = vadd.f32 %v3140, %v3433
          %v3435 = vpop.f32.mrb[0].mxu0
          %3436 = vmatprep.mubr.f32.mxu0 0.0
          %3437 = vmatmul.mubr.f32.gmra.mrb[0].mxu0 %v3101
          %v3438 = vpop.f32.mrb[0].mxu0
          %v3439 = vadd.f32 %v3140, %v3438
          %v3440 = vpop.f32.mrb[0].mxu0
          %3441 = vmatprep.mubr.f32.mxu0 0.0
          %3442 = vmatmul.mubr.f32.gmra.mrb[0].mxu0 %v3102
          %v3443 = vpop.f32.mrb[0].mxu0
          %v3444 = vadd.f32 %v3140, %v3443
          %v3445 = vpop.f32.mrb[0].mxu0
          %3446 = vmatprep.mubr.f32.mxu0 0.0
          %3447 = vmatmul.mubr.f32.gmra.mrb[0].mxu0 %v3103
          %v3448 = vpop.f32.mrb[0].mxu0
          %v3449 = vadd.f32 %v3140, %v3448
          %v3450 = vpop.f32.mrb[0].mxu0
          %3451 = vmatprep.mubr.f32.mxu0 0.0
          %3452 = vmatmul.mubr.f32.gmra.mrb[0].mxu0 %v3104
          %v3453 = vpop.f32.mrb[0].mxu0
          %v3454 = vadd.f32 %v3140, %v3453
          %v3455 = vpop.f32.mrb[0].mxu0
          %3456 = vmatprep.mubr.f32.mxu0 0.0
          %3457 = vmatmul.mubr.f32.gmra.mrb[0].mxu0 %v3105
          %v3458 = vpop.f32.mrb[0].mxu0
          %v3459 = vadd.f32 %v3140, %v3458
          %v3460 = vpop.f32.mrb[0].mxu0
          %3461 = vmatprep.mubr.f32.mxu0 0.0
          %3462 = vmatmul.mubr.f32.gmra.mrb[0].mxu0 %v3106
          %v3463 = vpop.f32.mrb[0].mxu0
          %v3464 = vadd.f32 %v3140, %v3463
          %v3465 = vpop.f32.mrb[0].mxu0
          %3466 = vmatprep.mubr.f32.mxu0 0.0
          %3467 = vmatmul.mubr.f32.gmra.mrb[0].mxu0 %v3107
          %v3468 = vpop.f32.mrb[0].mxu0
          %v3469 = vadd.f32 %v3140, %v3468
          %v3470 = vpop.f32.mrb[0].mxu0
          %3471 = vmatprep.mubr.f32.mxu0 0.0
          %3472 = vmatmul.mubr.f32.gmra.mrb[0].mxu0 %v3108
          %v3473 = vpop.f32.mrb[0].mxu0
          %v3474 = vadd.f32 %v3140, %v3473
          %v3475 = vpop.f32.mrb[0].mxu0
          %3476 = vmatprep.mubr.f32.mxu0 0.0
          %3477 = vmatmul.mubr.f32.gmra.mrb[0].mxu0 %v3109
          %v3478 = vpop.f32.mrb[0].mxu0
          %v3479 = vadd.f32 %v3140, %v3478
          %v3480 = vpop.f32.mrb[0].mxu0
          %3481 = vmatprep.mubr.f32.mxu0 0.0
          %3482 = vmatmul.mubr.f32.gmra.mrb[0].mxu0 %v3110
          %v3483 = vpop.f32.mrb[0].mxu0
          %v3484 = vadd.f32 %v3140, %v3483
          %v3485 = vpop.f32.mrb[0].mxu0
          %3486 = vmatprep.mubr.f32.mxu0 0.0
          %3487 = vmatmul.mubr.f32.gmra.mrb[0].mxu0 %v3111
          %v3488 = vpop.f32.mrb[0].mxu0
          %v3489 = vadd.f32 %v3140, %v3488
          %v3490 = vpop.f32.mrb[0].mxu0
          %3491 = vmatprep.mubr.f32.mxu0 0.0
          %3492 = vmatmul.mubr.f32.gmra.mrb[0].mxu0 %v3112
          %v3493 = vpop.f32.mrb[0].mxu0
          %v3494 = vadd.f32 %v3140, %v3493
          %v3495 = vpop.f32.mrb[0].mxu0
          %3496 = vmatprep.mubr.f32.mxu0 0.0
          %3497 = vmatmul.mubr.f32.gmra.mrb[0].mxu0 %v3113
          %v3498 = vpop.f32.mrb[0].mxu0
          %v3499 = vadd.f32 %v3140, %v3498
          %v3500 = vpop.f32.mrb[0].mxu0
          %3501 = vmatprep.mubr.f32.mxu0 0.0
          %3502 = vmatmul.mubr.f32.gmra.mrb[0].mxu0 %v3114
          %v3503 = vpop.f32.mrb[0].mxu0
          %v3504 = vadd.f32 %v3140, %v3503
          %v3505 = vpop.f32.mrb[0].mxu0
          %3506 = vmatprep.mubr.f32.mxu0 0.0
          %3507 = vmatmul.mubr.f32.gmra.mrb[0].mxu0 %v3115
          %v3508 = vpop.f32.mrb[0].mxu0
          %v3509 = vadd.f32 %v3140, %v3508
          %v3510 = vpop.f32.mrb[0].mxu0
          %3511 = vmatprep.mubr.f32.mxu0 0.0
          %3512 = vmatmul.mubr.f32.gmra.mrb[0].mxu0 %v3116
          %v3513 = vpop.f32.mrb[0].mxu0
          %v3514 = vadd.f32 %v3140, %v3513
          %v3515 = vpop.f32.mrb[0].mxu0
          %3516 = vmatprep.mubr.f32.mxu0 0.0
          %3517 = vmatmul.mubr.f32.gmra.mrb[0].mxu0 %v3117
          %v3518 = vpop.f32.mrb[0].mxu0
          %v3519 = vadd.f32 %v3140, %v3518
          %v3520 = vpop.f32.mrb[0].mxu0
          %3521 = vmatprep.mubr.f32.mxu0 0.0
          %3522 = vmatmul.mubr.f32.gmra.mrb[0].mxu0 %v3118
          %v3523 = vpop.f32.mrb[0].mxu0
          %v3524 = vadd.f32 %v3140, %v3523
          %v3525 = vpop.f32.mrb[0].mxu0
          %3526 = vdwg.mxu0
          %v3527 = vmax.f32 %v3209, 0.0
          %v3528 = vmax.f32 %v3214, 0.0
          %v3529 = vmax.f32 %v3219, 0.0
          %v3530 = vmax.f32 %v3224, 0.0
          %v3531 = vmax.f32 %v3229, 0.0
          %v3532 = vmax.f32 %v3234, 0.0
          %v3533 = vmax.f32 %v3239, 0.0
          %v3534 = vmax.f32 %v3244, 0.0
          %v3535 = vmax.f32 %v3249, 0.0
          %v3536 = vmax.f32 %v3254, 0.0
          %v3537 = vmax.f32 %v3259, 0.0
          %v3538 = vmax.f32 %v3264, 0.0
          %v3539 = vmax.f32 %v3269, 0.0
          %v3540 = vmax.f32 %v3274, 0.0
          %v3541 = vmax.f32 %v3279, 0.0
          %v3542 = vmax.f32 %v3284, 0.0
          %v3543 = vmax.f32 %v3289, 0.0
          %v3544 = vmax.f32 %v3294, 0.0
          %v3545 = vmax.f32 %v3299, 0.0
          %v3546 = vmax.f32 %v3304, 0.0
          %v3547 = vmax.f32 %v3309, 0.0
          %v3548 = vmax.f32 %v3314, 0.0
          %v3549 = vmax.f32 %v3319, 0.0
          %v3550 = vmax.f32 %v3324, 0.0
          %v3551 = vmax.f32 %v3329, 0.0
          %v3552 = vmax.f32 %v3334, 0.0
          %v3553 = vmax.f32 %v3339, 0.0
          %v3554 = vmax.f32 %v3344, 0.0
          %v3555 = vmax.f32 %v3349, 0.0
          %v3556 = vmax.f32 %v3354, 0.0
          %v3557 = vmax.f32 %v3359, 0.0
          %v3558 = vmax.f32 %v3364, 0.0
          %v3559 = vmax.f32 %v3369, 0.0
          %v3560 = vmax.f32 %v3374, 0.0
          %v3561 = vmax.f32 %v3379, 0.0
          %v3562 = vmax.f32 %v3384, 0.0
          %v3563 = vmax.f32 %v3389, 0.0
          %v3564 = vmax.f32 %v3394, 0.0
          %v3565 = vmax.f32 %v3399, 0.0
          %v3566 = vmax.f32 %v3404, 0.0
          %v3567 = vmax.f32 %v3409, 0.0
          %v3568 = vmax.f32 %v3414, 0.0
          %v3569 = vmax.f32 %v3419, 0.0
          %v3570 = vmax.f32 %v3424, 0.0
          %v3571 = vmax.f32 %v3429, 0.0
          %v3572 = vmax.f32 %v3434, 0.0
          %v3573 = vmax.f32 %v3439, 0.0
          %v3574 = vmax.f32 %v3444, 0.0
          %v3575 = vmax.f32 %v3449, 0.0
          %v3576 = vmax.f32 %v3454, 0.0
          %v3577 = vmax.f32 %v3459, 0.0
          %v3578 = vmax.f32 %v3464, 0.0
          %v3579 = vmax.f32 %v3469, 0.0
          %v3580 = vmax.f32 %v3474, 0.0
          %v3581 = vmax.f32 %v3479, 0.0
          %v3582 = vmax.f32 %v3484, 0.0
          %v3583 = vmax.f32 %v3489, 0.0
          %v3584 = vmax.f32 %v3494, 0.0
          %v3585 = vmax.f32 %v3499, 0.0
          %v3586 = vmax.f32 %v3504, 0.0
          %v3587 = vmax.f32 %v3509, 0.0
          %v3588 = vmax.f32 %v3514, 0.0
          %v3589 = vmax.f32 %v3519, 0.0
          %v3590 = vmax.f32 %v3524, 0.0
          %v3591 = vpack.c.bf16 %v3528, %v3527
          %v3592 = vpack.c.bf16 %v3530, %v3529
          %v3593 = vpack.c.bf16 %v3532, %v3531
          %v3594 = vpack.c.bf16 %v3534, %v3533
          %v3595 = vpack.c.bf16 %v3536, %v3535
          %v3596 = vpack.c.bf16 %v3538, %v3537
          %v3597 = vpack.c.bf16 %v3540, %v3539
          %v3598 = vpack.c.bf16 %v3542, %v3541
          %v3599 = vpack.c.bf16 %v3544, %v3543
          %v3600 = vpack.c.bf16 %v3546, %v3545
          %v3601 = vpack.c.bf16 %v3548, %v3547
          %v3602 = vpack.c.bf16 %v3550, %v3549
          %v3603 = vpack.c.bf16 %v3552, %v3551
          %v3604 = vpack.c.bf16 %v3554, %v3553
          %v3605 = vpack.c.bf16 %v3556, %v3555
          %v3606 = vpack.c.bf16 %v3558, %v3557
          %v3607 = vpack.c.bf16 %v3560, %v3559
          %v3608 = vpack.c.bf16 %v3562, %v3561
          %v3609 = vpack.c.bf16 %v3564, %v3563
          %v3610 = vpack.c.bf16 %v3566, %v3565
          %v3611 = vpack.c.bf16 %v3568, %v3567
          %v3612 = vpack.c.bf16 %v3570, %v3569
          %v3613 = vpack.c.bf16 %v3572, %v3571
          %v3614 = vpack.c.bf16 %v3574, %v3573
          %v3615 = vpack.c.bf16 %v3576, %v3575
          %v3616 = vpack.c.bf16 %v3578, %v3577
          %v3617 = vpack.c.bf16 %v3580, %v3579
          %v3618 = vpack.c.bf16 %v3582, %v3581
          %v3619 = vpack.c.bf16 %v3584, %v3583
          %v3620 = vpack.c.bf16 %v3586, %v3585
          %v3621 = vpack.c.bf16 %v3588, %v3587
          %v3622 = vpack.c.bf16 %v3590, %v3589
          %v3655 = vunpack.c.l.b16 %v3591
          %v3656 = vunpack.c.h.b16 %v3591
          %v3657 = vunpack.c.l.b16 %v3592
          %v3658 = vunpack.c.h.b16 %v3592
          %v3659 = vunpack.c.l.b16 %v3593
          %v3660 = vunpack.c.h.b16 %v3593
          %v3661 = vunpack.c.l.b16 %v3594
          %v3662 = vunpack.c.h.b16 %v3594
          %v3663 = vunpack.c.l.b16 %v3595
          %v3664 = vunpack.c.h.b16 %v3595
          %v3665 = vunpack.c.l.b16 %v3596
          %v3666 = vunpack.c.h.b16 %v3596
          %v3667 = vunpack.c.l.b16 %v3597
          %v3668 = vunpack.c.h.b16 %v3597
          %v3669 = vunpack.c.l.b16 %v3598
          %v3670 = vunpack.c.h.b16 %v3598
          %v3671 = vunpack.c.l.b16 %v3599
          %v3672 = vunpack.c.h.b16 %v3599
          %v3673 = vunpack.c.l.b16 %v3600
          %v3674 = vunpack.c.h.b16 %v3600
          %v3675 = vunpack.c.l.b16 %v3601
          %v3676 = vunpack.c.h.b16 %v3601
          %v3677 = vunpack.c.l.b16 %v3602
          %v3678 = vunpack.c.h.b16 %v3602
          %v3679 = vunpack.c.l.b16 %v3603
          %v3680 = vunpack.c.h.b16 %v3603
          %v3681 = vunpack.c.l.b16 %v3604
          %v3682 = vunpack.c.h.b16 %v3604
          %v3683 = vunpack.c.l.b16 %v3605
          %v3684 = vunpack.c.h.b16 %v3605
          %v3685 = vunpack.c.l.b16 %v3606
          %v3686 = vunpack.c.h.b16 %v3606
          %v3687 = vunpack.c.l.b16 %v3607
          %v3688 = vunpack.c.h.b16 %v3607
          %v3689 = vunpack.c.l.b16 %v3608
          %v3690 = vunpack.c.h.b16 %v3608
          %v3691 = vunpack.c.l.b16 %v3609
          %v3692 = vunpack.c.h.b16 %v3609
          %v3693 = vunpack.c.l.b16 %v3610
          %v3694 = vunpack.c.h.b16 %v3610
          %v3695 = vunpack.c.l.b16 %v3611
          %v3696 = vunpack.c.h.b16 %v3611
          %v3697 = vunpack.c.l.b16 %v3612
          %v3698 = vunpack.c.h.b16 %v3612
          %v3699 = vunpack.c.l.b16 %v3613
          %v3700 = vunpack.c.h.b16 %v3613
          %v3701 = vunpack.c.l.b16 %v3614
          %v3702 = vunpack.c.h.b16 %v3614
          %v3703 = vunpack.c.l.b16 %v3615
          %v3704 = vunpack.c.h.b16 %v3615
          %v3705 = vunpack.c.l.b16 %v3616
          %v3706 = vunpack.c.h.b16 %v3616
          %v3707 = vunpack.c.l.b16 %v3617
          %v3708 = vunpack.c.h.b16 %v3617
          %v3709 = vunpack.c.l.b16 %v3618
          %v3710 = vunpack.c.h.b16 %v3618
          %v3711 = vunpack.c.l.b16 %v3619
          %v3712 = vunpack.c.h.b16 %v3619
          %v3713 = vunpack.c.l.b16 %v3620
          %v3714 = vunpack.c.h.b16 %v3620
          %v3715 = vunpack.c.l.b16 %v3621
          %v3716 = vunpack.c.h.b16 %v3621
          %v3717 = vunpack.c.l.b16 %v3622
          %v3718 = vunpack.c.h.b16 %v3622
          %v3719 = vpack.c.b16 %v3655, %v3655
          %v3720 = vpack.c.b16 %v3656, %v3656
          %v3721 = vpack.c.b16 %v3657, %v3657
          %v3722 = vpack.c.b16 %v3658, %v3658
          %v3723 = vpack.c.b16 %v3659, %v3659
          %v3724 = vpack.c.b16 %v3660, %v3660
          %v3725 = vpack.c.b16 %v3661, %v3661
          %v3726 = vpack.c.b16 %v3662, %v3662
          %v3727 = vpack.c.b16 %v3663, %v3663
          %v3728 = vpack.c.b16 %v3664, %v3664
          %v3729 = vpack.c.b16 %v3665, %v3665
          %v3730 = vpack.c.b16 %v3666, %v3666
          %v3731 = vpack.c.b16 %v3667, %v3667
          %v3732 = vpack.c.b16 %v3668, %v3668
          %v3733 = vpack.c.b16 %v3669, %v3669
          %v3734 = vpack.c.b16 %v3670, %v3670
          %v3735 = vpack.c.b16 %v3671, %v3671
          %v3736 = vpack.c.b16 %v3672, %v3672
          %v3737 = vpack.c.b16 %v3673, %v3673
          %v3738 = vpack.c.b16 %v3674, %v3674
          %v3739 = vpack.c.b16 %v3675, %v3675
          %v3740 = vpack.c.b16 %v3676, %v3676
          %v3741 = vpack.c.b16 %v3677, %v3677
          %v3742 = vpack.c.b16 %v3678, %v3678
          %v3743 = vpack.c.b16 %v3679, %v3679
          %v3744 = vpack.c.b16 %v3680, %v3680
          %v3745 = vpack.c.b16 %v3681, %v3681
          %v3746 = vpack.c.b16 %v3682, %v3682
          %v3747 = vpack.c.b16 %v3683, %v3683
          %v3748 = vpack.c.b16 %v3684, %v3684
          %v3749 = vpack.c.b16 %v3685, %v3685
          %v3750 = vpack.c.b16 %v3686, %v3686
          %v3751 = vpack.c.b16 %v3687, %v3687
          %v3752 = vpack.c.b16 %v3688, %v3688
          %v3753 = vpack.c.b16 %v3689, %v3689
          %v3754 = vpack.c.b16 %v3690, %v3690
          %v3755 = vpack.c.b16 %v3691, %v3691
          %v3756 = vpack.c.b16 %v3692, %v3692
          %v3757 = vpack.c.b16 %v3693, %v3693
          %v3758 = vpack.c.b16 %v3694, %v3694
          %v3759 = vpack.c.b16 %v3695, %v3695
          %v3760 = vpack.c.b16 %v3696, %v3696
          %v3761 = vpack.c.b16 %v3697, %v3697
          %v3762 = vpack.c.b16 %v3698, %v3698
          %v3763 = vpack.c.b16 %v3699, %v3699
          %v3764 = vpack.c.b16 %v3700, %v3700
          %v3765 = vpack.c.b16 %v3701, %v3701
          %v3766 = vpack.c.b16 %v3702, %v3702
          %v3767 = vpack.c.b16 %v3703, %v3703
          %v3768 = vpack.c.b16 %v3704, %v3704
          %v3769 = vpack.c.b16 %v3705, %v3705
          %v3770 = vpack.c.b16 %v3706, %v3706
          %v3771 = vpack.c.b16 %v3707, %v3707
          %v3772 = vpack.c.b16 %v3708, %v3708
          %v3773 = vpack.c.b16 %v3709, %v3709
          %v3774 = vpack.c.b16 %v3710, %v3710
          %v3775 = vpack.c.b16 %v3711, %v3711
          %v3776 = vpack.c.b16 %v3712, %v3712
          %v3777 = vpack.c.b16 %v3713, %v3713
          %v3778 = vpack.c.b16 %v3714, %v3714
          %v3779 = vpack.c.b16 %v3715, %v3715
          %v3780 = vpack.c.b16 %v3716, %v3716
          %v3781 = vpack.c.b16 %v3717, %v3717
          %v3782 = vpack.c.b16 %v3718, %v3718
          %3847 = vst [vmem:[%s610] sm:$0xf] %v3719
          %3848 = vst [vmem:[%s610 + $0x4] sm:$0xf] %v3720
          %3849 = vst [vmem:[%s610 + $0x8] sm:$0xf] %v3721
          %3850 = vst [vmem:[%s610 + $0xc] sm:$0xf] %v3722
          %3851 = vst [vmem:[%s610 + $0x10] sm:$0xf] %v3723
          %3852 = vst [vmem:[%s610 + $0x14] sm:$0xf] %v3724
          %3853 = vst [vmem:[%s610 + $0x18] sm:$0xf] %v3725
          %3854 = vst [vmem:[%s610 + $0x1c] sm:$0xf] %v3726
          %3855 = vst [vmem:[%s610 + $0x20] sm:$0xf] %v3727
          %3856 = vst [vmem:[%s610 + $0x24] sm:$0xf] %v3728
          %3857 = vst [vmem:[%s610 + $0x28] sm:$0xf] %v3729
          %3858 = vst [vmem:[%s610 + $0x2c] sm:$0xf] %v3730
          %3859 = vst [vmem:[%s610 + $0x30] sm:$0xf] %v3731
          %3860 = vst [vmem:[%s610 + $0x34] sm:$0xf] %v3732
          %3861 = vst [vmem:[%s610 + $0x38] sm:$0xf] %v3733
          %3862 = vst [vmem:[%s610 + $0x3c] sm:$0xf] %v3734
          %3863 = vst [vmem:[%s610 + $0x40] sm:$0xf] %v3735
          %3864 = vst [vmem:[%s610 + $0x44] sm:$0xf] %v3736
          %3865 = vst [vmem:[%s610 + $0x48] sm:$0xf] %v3737
          %3866 = vst [vmem:[%s610 + $0x4c] sm:$0xf] %v3738
          %3867 = vst [vmem:[%s610 + $0x50] sm:$0xf] %v3739
          %3868 = vst [vmem:[%s610 + $0x54] sm:$0xf] %v3740
          %3869 = vst [vmem:[%s610 + $0x58] sm:$0xf] %v3741
          %3870 = vst [vmem:[%s610 + $0x5c] sm:$0xf] %v3742
          %3871 = vst [vmem:[%s610 + $0x60] sm:$0xf] %v3743
          %3872 = vst [vmem:[%s610 + $0x64] sm:$0xf] %v3744
          %3873 = vst [vmem:[%s610 + $0x68] sm:$0xf] %v3745
          %3874 = vst [vmem:[%s610 + $0x6c] sm:$0xf] %v3746
          %3875 = vst [vmem:[%s610 + $0x70] sm:$0xf] %v3747
          %3876 = vst [vmem:[%s610 + $0x74] sm:$0xf] %v3748
          %3877 = vst [vmem:[%s610 + $0x78] sm:$0xf] %v3749
          %3878 = vst [vmem:[%s610 + $0x7c] sm:$0xf] %v3750
          %3879 = vst [vmem:[%s610 + $0x80] sm:$0xf] %v3751
          %3880 = vst [vmem:[%s610 + $0x84] sm:$0xf] %v3752
          %3881 = vst [vmem:[%s610 + $0x88] sm:$0xf] %v3753
          %3882 = vst [vmem:[%s610 + $0x8c] sm:$0xf] %v3754
          %3883 = vst [vmem:[%s610 + $0x90] sm:$0xf] %v3755
          %3884 = vst [vmem:[%s610 + $0x94] sm:$0xf] %v3756
          %3885 = vst [vmem:[%s610 + $0x98] sm:$0xf] %v3757
          %3886 = vst [vmem:[%s610 + $0x9c] sm:$0xf] %v3758
          %3887 = vst [vmem:[%s610 + $0xa0] sm:$0xf] %v3759
          %3888 = vst [vmem:[%s610 + $0xa4] sm:$0xf] %v3760
          %3889 = vst [vmem:[%s610 + $0xa8] sm:$0xf] %v3761
          %3890 = vst [vmem:[%s610 + $0xac] sm:$0xf] %v3762
          %3891 = vst [vmem:[%s610 + $0xb0] sm:$0xf] %v3763
          %3892 = vst [vmem:[%s610 + $0xb4] sm:$0xf] %v3764
          %3893 = vst [vmem:[%s610 + $0xb8] sm:$0xf] %v3765
          %3894 = vst [vmem:[%s610 + $0xbc] sm:$0xf] %v3766
          %3895 = vst [vmem:[%s610 + $0xc0] sm:$0xf] %v3767
          %3896 = vst [vmem:[%s610 + $0xc4] sm:$0xf] %v3768
          %3897 = vst [vmem:[%s610 + $0xc8] sm:$0xf] %v3769
          %3898 = vst [vmem:[%s610 + $0xcc] sm:$0xf] %v3770
          %3899 = vst [vmem:[%s610 + $0xd0] sm:$0xf] %v3771
          %3900 = vst [vmem:[%s610 + $0xd4] sm:$0xf] %v3772
          %3901 = vst [vmem:[%s610 + $0xd8] sm:$0xf] %v3773
          %3902 = vst [vmem:[%s610 + $0xdc] sm:$0xf] %v3774
          %3903 = vst [vmem:[%s610 + $0xe0] sm:$0xf] %v3775
          %3904 = vst [vmem:[%s610 + $0xe4] sm:$0xf] %v3776
          %3905 = vst [vmem:[%s610 + $0xe8] sm:$0xf] %v3777
          %3906 = vst [vmem:[%s610 + $0xec] sm:$0xf] %v3778
          %3907 = vst [vmem:[%s610 + $0xf0] sm:$0xf] %v3779
          %3908 = vst [vmem:[%s610 + $0xf4] sm:$0xf] %v3780
          %3909 = vst [vmem:[%s610 + $0xf8] sm:$0xf] %v3781
          %3910 = vst [vmem:[%s610 + $0xfc] sm:$0xf] %v3782
        $region75: #{hyper_gnn_conv.2} parent=62 // pred_fallthru
          _
        %s3911 = smul.u32 64, %s21
        %p3912 = scmp.lt.s32.totalorder %s3911, 63
        %s3913 = scalar_select %p3912, %s3911, 63
        %s3914 = smul.addr %s3913, 4
        %s3915 = scalar_lea.vmem %s6, %s3914
        // Predicated region
        $region76: #{hyper_gnn_conv.2} parent=62 // pred_check
          %p3916 = pneg %p195
        $region77: #{hyper_gnn_conv.2} parent=62 // pred_check_branch
          %3918 = sbr.rel (%p3916) target = $region79
        $region78: #{hyper_gnn_conv.2} parent=62 // pred_region
          %s3919 = smul.u32 64, %s21
        $region79: #{hyper_gnn_conv.2} parent=62 // pred_fallthru
          _
        // Predicated region
        $region80: #{hyper_gnn_conv.2} parent=62 // pred_check
          %p3920 = pneg %p195
        $region81: #{hyper_gnn_conv.2} parent=62 // pred_check_branch
          %3922 = sbr.rel (%p3920) target = $region83
        $region82: #{hyper_gnn_conv.2} parent=62 // pred_region
          %s3923 = smul.u32 64, %s21
          %p3924 = scmp.lt.s32.totalorder %s3923, 63
          %s3925 = scalar_select %p3924, %s3923, 63
          %s3926 = smul.addr %s3925, 4
          %s3927 = scalar_lea.vmem %s6, %s3926
        $region83: #{hyper_gnn_conv.2} parent=62 // pred_fallthru
          _
      $region63: #{hyper_gnn_conv.2} parent=5 // pred_fallthru
        _
      %p3928 = scmp.le.s32.totalorder 2, %s12
      // Predicated region
      $region84: #{hyper_gnn_conv.2} parent=5 // pred_check
        %p3929 = pneg %p3928
      $region85: #{hyper_gnn_conv.2} parent=5 // pred_check_branch
        %3931 = sbr.rel (%p3929) target = $region87
      $region86: #{hyper_gnn_conv.2} parent=5 // pred_region
        %s3932 = ssub.s32 %s12, 2
      $region87: #{hyper_gnn_conv.2} parent=5 // pred_fallthru
        _
    $region6: #{hyper_gnn_conv.2} parent=1 // loop_footer
      %s16 = sadd.s32 1, %s12
    $region7: #{hyper_gnn_conv.2} parent=1 // loop_footer_branch
      %11 = sbr.rel target = $region3
    $region8: #{hyper_gnn_conv.2} parent=1 // loop_exit
      _

</llo_original>
